<compile_context>
chip_gen: v7x
topology: tpu7x:2x2x1
jax: 0.10.0
libtpu: 0.0.40
codegen_flags: <defaults>
</compile_context>

<pallas_src>
import jax
import jax.numpy as jnp
from jax.experimental import pallas as pl
from jax.experimental.pallas import tpu as pltpu  # noqa: F401  (TPU backend)

# --- small, module-consistent shapes -----------------------------------------
B = 2          # batch
S = 8          # sequence length
D = 32         # d_model ("size" of the EncoderLayer)
H = 4          # attention heads
DK = D // H    # per-head dim
DFF = 64       # feed-forward hidden dim
EPS = 1e-5     # torch nn.LayerNorm default eps


def _layernorm(x, g, b):
    # x: [N, D], g/b: [1, D]   (biased variance, as in torch.nn.LayerNorm)
    mu = jnp.mean(x, axis=-1, keepdims=True)
    var = jnp.mean((x - mu) ** 2, axis=-1, keepdims=True)
    return (x - mu) * jax.lax.rsqrt(var + EPS) * g + b


def encoder_layer_kernel(
    x_ref, mb_ref, rkt_ref, rv_ref,
    wqkv_ref, bqkv_ref, wo_ref, bo_ref,
    g1_ref, be1_ref, g2_ref, be2_ref,
    w1_ref, bw1_ref, w2_ref, bw2_ref,
    out_ref, attn_ref,
):
    x = x_ref[...]                       # [B*S, D]
    rk_t = rkt_ref[...]                  # [S, DK, S]  (pre-transposed rel-key emb)
    rv = rv_ref[...]                     # [S, S, DK]

    # ---------------- sublayer 0: x + SelfAttn(LayerNorm(x)) -----------------
    xn = _layernorm(x, g1_ref[...], be1_ref[...])

    # fused QKV projection: single full-width matmul + packed bias
    qkv = jnp.dot(xn, wqkv_ref[...], preferred_element_type=jnp.float32) + bqkv_ref[...]
    q = qkv[:, :D]
    k = qkv[:, D:2 * D]
    v = qkv[:, 2 * D:]

    scale = 1.0 / jnp.sqrt(jnp.float32(DK))

    head_cat = []     # per-batch [S, D] head-concatenated attention values
    attn_rows = []    # per-batch [S, H*S] lane-dense attention weights
    for b in range(B):                   # static unroll over the (tiny) batch
        lo, hi = b * S, (b + 1) * S
        q_s = q[lo:hi].reshape(S, H, DK)          # [S(q), H, DK]
        k_s = k[lo:hi].reshape(S, H, DK)          # [S(k), H, DK]
        v_s = v[lo:hi].reshape(S, H, DK)          # [S(k), H, DK]

        # content-content scores, batched over heads (no transposes needed)
        sc = jnp.einsum('qhd,khd->qhk', q_s, k_s,
                        preferred_element_type=jnp.float32)        # [S, H, S]
        # content-relative-key scores, batched over query positions
        rel = jnp.einsum('qhd,qdk->qhk', q_s, rk_t,
                         preferred_element_type=jnp.float32)       # [S, H, S]

        # scale + additive mask bias (loop-invariant, precomputed in wrapper)
        sc = (sc + rel) * scale + mb_ref[b][:, None, :]            # broadcast over H

        # softmax over keys (max-subtracted; exact denominator)
        sc = sc - jnp.max(sc, axis=-1, keepdims=True)
        e = jnp.exp(sc)
        p = e / jnp.sum(e, axis=-1, keepdims=True)                 # [S, H, S]

        # weighted values: content term + relative-value term, both on the MXU
        cv = jnp.einsum('qhk,khd->qhd', p, v_s,
                        preferred_element_type=jnp.float32)        # [S, H, DK]
        rvv = jnp.einsum('qhk,qkd->qhd', p, rv,
                         preferred_element_type=jnp.float32)       # [S, H, DK]
        oh = cv + rvv                                              # [S, H, DK]

        head_cat.append(oh.reshape(S, D))            # heads concatenated on lanes
        attn_rows.append(p.reshape(S, H * S))        # lane-dense attn rows

    concat = jnp.concatenate(head_cat, axis=0)       # [B*S, D]
    attn_ref[...] = jnp.concatenate(attn_rows, axis=0)   # single wide store

    # fused output projection: single full-width matmul for the whole batch slab
    attn_out = jnp.dot(concat, wo_ref[...],
                       preferred_element_type=jnp.float32) + bo_ref[...]
    code = x + attn_out                  # residual (dropout = identity)

    # ------------- sublayer 1: code + FeedForward(LayerNorm(code)) -----------
    cn = _layernorm(code, g2_ref[...], be2_ref[...])
    hid = jnp.maximum(
        jnp.dot(cn, w1_ref[...], preferred_element_type=jnp.float32) + bw1_ref[...], 0.0)
    ff = jnp.dot(hid, w2_ref[...], preferred_element_type=jnp.float32) + bw2_ref[...]
    out_ref[...] = code + ff             # residual (dropout = identity)


def encoder_layer(x, mask, rel_k, rel_v, params):
    """x: [B,S,D] f32; mask: [B,1,S,S] f32; rel_k/rel_v: [S,S,DK] f32."""
    x_flat = x.reshape(B * S, D)                         # fold batch into one slab
    mask_bias = (mask[:, 0, :, :] - 1.0) * 1e9           # [B, S, S] additive bias
    rk_t = jnp.transpose(rel_k, (0, 2, 1))               # [S, DK, S]

    args = (
        x_flat, mask_bias, rk_t, rel_v,
        params["wqkv"], params["bqkv"], params["wo"], params["bo"],
        params["g1"], params["be1"], params["g2"], params["be2"],
        params["w1"], params["bw1"], params["w2"], params["bw2"],
    )

    # Single invocation (no grid): all operands are whole-array VMEM blocks;
    # total footprint is tens of KiB, far under every chip's VMEM limit.
    out_flat, attn_flat = pl.pallas_call(
        encoder_layer_kernel,
        out_shape=(
            jax.ShapeDtypeStruct((B * S, D), jnp.float32),        # encoder output
            jax.ShapeDtypeStruct((B * S, H * S), jnp.float32),    # attn weights (lane-dense)
        ),
    )(*args)

    out = out_flat.reshape(B, S, D)
    attn = attn_flat.reshape(B, S, H, S).transpose(0, 2, 1, 3)    # [B, H, S, S]
    return out, attn


def init_params(key):
    ks = jax.random.split(key, 12)
    scale = 0.05
    wq = scale * jax.random.normal(ks[0], (D, D), jnp.float32)
    wk = scale * jax.random.normal(ks[1], (D, D), jnp.float32)
    wv = scale * jax.random.normal(ks[2], (D, D), jnp.float32)
    wo = scale * jax.random.normal(ks[3], (D, D), jnp.float32)
    bq = scale * jax.random.normal(ks[4], (D,), jnp.float32)
    bk = scale * jax.random.normal(ks[5], (D,), jnp.float32)
    bv = scale * jax.random.normal(ks[6], (D,), jnp.float32)
    bo = scale * jax.random.normal(ks[7], (D,), jnp.float32)
    w1 = scale * jax.random.normal(ks[8], (D, DFF), jnp.float32)
    bw1 = scale * jax.random.normal(ks[9], (DFF,), jnp.float32)
    w2 = scale * jax.random.normal(ks[10], (DFF, D), jnp.float32)
    bw2 = scale * jax.random.normal(ks[11], (D,), jnp.float32)

    # packed layouts used by the kernel (head h occupies columns h*DK:(h+1)*DK)
    wqkv = jnp.concatenate([wq, wk, wv], axis=1)          # [D, 3D]
    bqkv = jnp.concatenate([bq, bk, bv]).reshape(1, 3 * D)

    return {
        "wqkv": wqkv, "bqkv": bqkv,
        "wo": wo, "bo": bo.reshape(1, D),
        "g1": jnp.ones((1, D), jnp.float32), "be1": jnp.zeros((1, D), jnp.float32),
        "g2": jnp.ones((1, D), jnp.float32), "be2": jnp.zeros((1, D), jnp.float32),
        "w1": w1, "bw1": bw1.reshape(1, DFF),
        "w2": w2, "bw2": bw2.reshape(1, D),
    }


if __name__ == "__main__":
    key = jax.random.PRNGKey(0)
    kx, krk, krv, kp = jax.random.split(key, 4)

    code = jax.random.normal(kx, (B, S, D), jnp.float32)
    # causal mask [B, 1, S, S] (1 = attend, 0 = masked)
    causal = (jnp.arange(S)[None, :] <= jnp.arange(S)[:, None]).astype(jnp.float32)
    mask = jnp.broadcast_to(causal[None, None], (B, 1, S, S))
    relative_k_emb = 0.05 * jax.random.normal(krk, (S, S, DK), jnp.float32)
    relative_v_emb = 0.05 * jax.random.normal(krv, (S, S, DK), jnp.float32)

    params = init_params(kp)

    out, attn = encoder_layer(code, mask, relative_k_emb, relative_v_emb, params)
    out, attn = jax.block_until_ready(out), jax.block_until_ready(attn)

    assert out.shape == (B, S, D) and attn.shape == (B, H, S, S)
    assert bool(jnp.all(jnp.isfinite(out))) and bool(jnp.all(jnp.isfinite(attn)))
    # attention rows must sum to ~1 (exact softmax denominator)
    assert bool(jnp.allclose(jnp.sum(attn, axis=-1), 1.0, atol=2e-3))
    # masked (future) positions must carry ~zero attention
    assert bool(jnp.all(attn * (1.0 - causal)[None, None] < 1e-3))

    print("KERNEL_OK")
</pallas_src>

<mosaic_0001>
module attributes {stable_mosaic.version = 11 : i64} {
  func.func @encoder_layer_kernel(%arg0: memref<16x32xf32, #tpu.memory_space<vmem>>, %arg1: memref<2x8x8xf32, #tpu.memory_space<vmem>>, %arg2: memref<8x8x8xf32, #tpu.memory_space<vmem>>, %arg3: memref<8x8x8xf32, #tpu.memory_space<vmem>>, %arg4: memref<32x96xf32, #tpu.memory_space<vmem>>, %arg5: memref<1x96xf32, #tpu.memory_space<vmem>>, %arg6: memref<32x32xf32, #tpu.memory_space<vmem>>, %arg7: memref<1x32xf32, #tpu.memory_space<vmem>>, %arg8: memref<1x32xf32, #tpu.memory_space<vmem>>, %arg9: memref<1x32xf32, #tpu.memory_space<vmem>>, %arg10: memref<1x32xf32, #tpu.memory_space<vmem>>, %arg11: memref<1x32xf32, #tpu.memory_space<vmem>>, %arg12: memref<32x64xf32, #tpu.memory_space<vmem>>, %arg13: memref<1x64xf32, #tpu.memory_space<vmem>>, %arg14: memref<64x32xf32, #tpu.memory_space<vmem>>, %arg15: memref<1x32xf32, #tpu.memory_space<vmem>>, %arg16: memref<16x32xf32, #tpu.memory_space<vmem>>, %arg17: memref<16x32xf32, #tpu.memory_space<vmem>>) attributes {dimension_semantics = [], scalar_prefetch = 0 : i64, scratch_operands = 0 : i64, tpu.core_type = #tpu.core_type<tc>} {
    %c0 = arith.constant 0 : index
    %c0_0 = arith.constant 0 : index
    %0 = vector.load %arg0[%c0, %c0_0] : memref<16x32xf32, #tpu.memory_space<vmem>>, vector<16x32xf32>
    %c0_1 = arith.constant 0 : index
    %c0_2 = arith.constant 0 : index
    %c0_3 = arith.constant 0 : index
    %1 = vector.load %arg2[%c0_1, %c0_2, %c0_3] : memref<8x8x8xf32, #tpu.memory_space<vmem>>, vector<8x8x8xf32>
    %c0_4 = arith.constant 0 : index
    %c0_5 = arith.constant 0 : index
    %c0_6 = arith.constant 0 : index
    %2 = vector.load %arg3[%c0_4, %c0_5, %c0_6] : memref<8x8x8xf32, #tpu.memory_space<vmem>>, vector<8x8x8xf32>
    %c0_7 = arith.constant 0 : index
    %c0_8 = arith.constant 0 : index
    %3 = vector.load %arg8[%c0_7, %c0_8] : memref<1x32xf32, #tpu.memory_space<vmem>>, vector<1x32xf32>
    %c0_9 = arith.constant 0 : index
    %c0_10 = arith.constant 0 : index
    %4 = vector.load %arg9[%c0_9, %c0_10] : memref<1x32xf32, #tpu.memory_space<vmem>>, vector<1x32xf32>
    %cst = arith.constant dense<0.000000e+00> : vector<16xf32>
    %5 = vector.multi_reduction <add>, %0, %cst [1] : vector<16x32xf32> to vector<16xf32>
    %6 = vector.shape_cast %5 : vector<16xf32> to vector<16x1xf32>
    %cst_11 = arith.constant 3.200000e+01 : f32
    %7 = vector.broadcast %cst_11 : f32 to vector<16x1xf32>
    %8 = arith.divf %6, %7 : vector<16x1xf32>
    %9 = vector.broadcast %8 : vector<16x1xf32> to vector<16x32xf32>
    %10 = arith.subf %0, %9 : vector<16x32xf32>
    %11 = arith.mulf %10, %10 : vector<16x32xf32>
    %cst_12 = arith.constant dense<0.000000e+00> : vector<16xf32>
    %12 = vector.multi_reduction <add>, %11, %cst_12 [1] : vector<16x32xf32> to vector<16xf32>
    %13 = vector.shape_cast %12 : vector<16xf32> to vector<16x1xf32>
    %cst_13 = arith.constant 3.200000e+01 : f32
    %14 = vector.broadcast %cst_13 : f32 to vector<16x1xf32>
    %15 = arith.divf %13, %14 : vector<16x1xf32>
    %16 = vector.broadcast %8 : vector<16x1xf32> to vector<16x32xf32>
    %17 = arith.subf %0, %16 : vector<16x32xf32>
    %cst_14 = arith.constant 9.99999974E-6 : f32
    %18 = vector.broadcast %cst_14 : f32 to vector<16x1xf32>
    %19 = arith.addf %15, %18 : vector<16x1xf32>
    %20 = math.rsqrt %19 : vector<16x1xf32>
    %21 = vector.broadcast %20 : vector<16x1xf32> to vector<16x32xf32>
    %22 = arith.mulf %17, %21 : vector<16x32xf32>
    %23 = vector.broadcast %3 : vector<1x32xf32> to vector<16x32xf32>
    %24 = arith.mulf %22, %23 : vector<16x32xf32>
    %25 = vector.broadcast %4 : vector<1x32xf32> to vector<16x32xf32>
    %26 = arith.addf %24, %25 : vector<16x32xf32>
    %c0_15 = arith.constant 0 : index
    %c0_16 = arith.constant 0 : index
    %27 = vector.load %arg4[%c0_15, %c0_16] : memref<32x96xf32, #tpu.memory_space<vmem>>, vector<32x96xf32>
    %cst_17 = arith.constant dense<0.000000e+00> : vector<16x96xf32>
    %28 = tpu.matmul %26, %27, %cst_17 {dimension_numbers = #tpu.dot_dimension_numbers<[1], [0], [0], [1], [0, 0, 1, 1], [], []>} : vector<16x32xf32>, vector<32x96xf32>, vector<16x96xf32> -> vector<16x96xf32>
    %c0_18 = arith.constant 0 : index
    %c0_19 = arith.constant 0 : index
    %29 = vector.load %arg5[%c0_18, %c0_19] : memref<1x96xf32, #tpu.memory_space<vmem>>, vector<1x96xf32>
    %30 = vector.broadcast %29 : vector<1x96xf32> to vector<16x96xf32>
    %31 = arith.addf %28, %30 : vector<16x96xf32>
    %32 = vector.extract_strided_slice %31 {offsets = [0, 0], sizes = [16, 32], strides = [1, 1]} : vector<16x96xf32> to vector<16x32xf32>
    %33 = vector.extract_strided_slice %31 {offsets = [0, 32], sizes = [16, 32], strides = [1, 1]} : vector<16x96xf32> to vector<16x32xf32>
    %34 = vector.extract_strided_slice %31 {offsets = [0, 64], sizes = [16, 32], strides = [1, 1]} : vector<16x96xf32> to vector<16x32xf32>
    %cst_20 = arith.constant 8.000000e+00 : f32
    %35 = math.sqrt %cst_20 : f32
    %cst_21 = arith.constant 1.000000e+00 : f32
    %36 = arith.divf %cst_21, %35 : f32
    %37 = vector.extract_strided_slice %32 {offsets = [0, 0], sizes = [8, 32], strides = [1, 1]} : vector<16x32xf32> to vector<8x32xf32>
    %38 = vector.shape_cast %37 : vector<8x32xf32> to vector<8x4x8xf32>
    %39 = vector.extract_strided_slice %33 {offsets = [0, 0], sizes = [8, 32], strides = [1, 1]} : vector<16x32xf32> to vector<8x32xf32>
    %40 = vector.shape_cast %39 : vector<8x32xf32> to vector<8x4x8xf32>
    %41 = vector.extract_strided_slice %34 {offsets = [0, 0], sizes = [8, 32], strides = [1, 1]} : vector<16x32xf32> to vector<8x32xf32>
    %42 = vector.shape_cast %41 : vector<8x32xf32> to vector<8x4x8xf32>
    "tpu.trace_start"() <{level = 10 : i32, message = "qhd,khd->qhk"}> : () -> ()
    %cst_22 = arith.constant dense<0.000000e+00> : vector<4x8x8xf32>
    %43 = tpu.matmul %40, %38, %cst_22 {dimension_numbers = #tpu.dot_dimension_numbers<[2], [2], [0], [0], [0, 1, 0, 0, 1, 0], [1], [1]>} : vector<8x4x8xf32>, vector<8x4x8xf32>, vector<4x8x8xf32> -> vector<4x8x8xf32>
    %44 = tpu.transpose %43, [2, 0, 1] : vector<4x8x8xf32> -> vector<8x4x8xf32>
    "tpu.trace_stop"() : () -> ()
    "tpu.trace_start"() <{level = 10 : i32, message = "qhd,qdk->qhk"}> : () -> ()
    %cst_23 = arith.constant dense<0.000000e+00> : vector<8x4x8xf32>
    %45 = tpu.matmul %38, %1, %cst_23 {dimension_numbers = #tpu.dot_dimension_numbers<[2], [1], [1], [2], [0, 0, 0, 1, 1, 2], [0], [0]>} : vector<8x4x8xf32>, vector<8x8x8xf32>, vector<8x4x8xf32> -> vector<8x4x8xf32>
    "tpu.trace_stop"() : () -> ()
    %46 = arith.addf %44, %45 : vector<8x4x8xf32>
    %47 = vector.broadcast %36 : f32 to vector<8x4x8xf32>
    %48 = arith.mulf %46, %47 : vector<8x4x8xf32>
    %c0_24 = arith.constant 0 : index
    %c0_25 = arith.constant 0 : index
    %c0_26 = arith.constant 0 : index
    %49 = vector.load %arg1[%c0_24, %c0_25, %c0_26] : memref<2x8x8xf32, #tpu.memory_space<vmem>>, vector<1x8x8xf32>
    %50 = vector.shape_cast %49 : vector<1x8x8xf32> to vector<8x8xf32>
    %51 = vector.shape_cast %50 : vector<8x8xf32> to vector<8x1x8xf32>
    %52 = vector.broadcast %51 : vector<8x1x8xf32> to vector<8x4x8xf32>
    %53 = arith.addf %48, %52 : vector<8x4x8xf32>
    %cst_27 = arith.constant dense<0xFF800000> : vector<8x4xf32>
    %54 = vector.multi_reduction <maximumf>, %53, %cst_27 [2] : vector<8x4x8xf32> to vector<8x4xf32>
    %55 = vector.shape_cast %54 : vector<8x4xf32> to vector<8x4x1xf32>
    %56 = vector.broadcast %55 : vector<8x4x1xf32> to vector<8x4x8xf32>
    %57 = arith.subf %53, %56 : vector<8x4x8xf32>
    %58 = math.exp %57 : vector<8x4x8xf32>
    %cst_28 = arith.constant dense<0.000000e+00> : vector<8x4xf32>
    %59 = vector.multi_reduction <add>, %58, %cst_28 [2] : vector<8x4x8xf32> to vector<8x4xf32>
    %60 = vector.shape_cast %59 : vector<8x4xf32> to vector<8x4x1xf32>
    %61 = vector.broadcast %60 : vector<8x4x1xf32> to vector<8x4x8xf32>
    %62 = arith.divf %58, %61 : vector<8x4x8xf32>
    "tpu.trace_start"() <{level = 10 : i32, message = "qhk,khd->qhd"}> : () -> ()
    %cst_29 = arith.constant dense<0.000000e+00> : vector<4x8x8xf32>
    %63 = tpu.matmul %42, %62, %cst_29 {dimension_numbers = #tpu.dot_dimension_numbers<[0], [2], [2], [0], [0, 1, 0, 2, 1, 0], [1], [1]>} : vector<8x4x8xf32>, vector<8x4x8xf32>, vector<4x8x8xf32> -> vector<4x8x8xf32>
    %64 = tpu.transpose %63, [2, 0, 1] : vector<4x8x8xf32> -> vector<8x4x8xf32>
    "tpu.trace_stop"() : () -> ()
    "tpu.trace_start"() <{level = 10 : i32, message = "qhk,qkd->qhd"}> : () -> ()
    %cst_30 = arith.constant dense<0.000000e+00> : vector<8x4x8xf32>
    %65 = tpu.matmul %62, %2, %cst_30 {dimension_numbers = #tpu.dot_dimension_numbers<[2], [1], [1], [2], [0, 0, 0, 1, 1, 2], [0], [0]>} : vector<8x4x8xf32>, vector<8x8x8xf32>, vector<8x4x8xf32> -> vector<8x4x8xf32>
    "tpu.trace_stop"() : () -> ()
    %66 = arith.addf %64, %65 : vector<8x4x8xf32>
    %67 = vector.shape_cast %66 : vector<8x4x8xf32> to vector<8x32xf32>
    %68 = vector.shape_cast %62 : vector<8x4x8xf32> to vector<8x32xf32>
    %69 = vector.extract_strided_slice %32 {offsets = [8, 0], sizes = [8, 32], strides = [1, 1]} : vector<16x32xf32> to vector<8x32xf32>
    %70 = vector.shape_cast %69 : vector<8x32xf32> to vector<8x4x8xf32>
    %71 = vector.extract_strided_slice %33 {offsets = [8, 0], sizes = [8, 32], strides = [1, 1]} : vector<16x32xf32> to vector<8x32xf32>
    %72 = vector.shape_cast %71 : vector<8x32xf32> to vector<8x4x8xf32>
    %73 = vector.extract_strided_slice %34 {offsets = [8, 0], sizes = [8, 32], strides = [1, 1]} : vector<16x32xf32> to vector<8x32xf32>
    %74 = vector.shape_cast %73 : vector<8x32xf32> to vector<8x4x8xf32>
    "tpu.trace_start"() <{level = 10 : i32, message = "qhd,khd->qhk"}> : () -> ()
    %cst_31 = arith.constant dense<0.000000e+00> : vector<4x8x8xf32>
    %75 = tpu.matmul %72, %70, %cst_31 {dimension_numbers = #tpu.dot_dimension_numbers<[2], [2], [0], [0], [0, 1, 0, 0, 1, 0], [1], [1]>} : vector<8x4x8xf32>, vector<8x4x8xf32>, vector<4x8x8xf32> -> vector<4x8x8xf32>
    %76 = tpu.transpose %75, [2, 0, 1] : vector<4x8x8xf32> -> vector<8x4x8xf32>
    "tpu.trace_stop"() : () -> ()
    "tpu.trace_start"() <{level = 10 : i32, message = "qhd,qdk->qhk"}> : () -> ()
    %cst_32 = arith.constant dense<0.000000e+00> : vector<8x4x8xf32>
    %77 = tpu.matmul %70, %1, %cst_32 {dimension_numbers = #tpu.dot_dimension_numbers<[2], [1], [1], [2], [0, 0, 0, 1, 1, 2], [0], [0]>} : vector<8x4x8xf32>, vector<8x8x8xf32>, vector<8x4x8xf32> -> vector<8x4x8xf32>
    "tpu.trace_stop"() : () -> ()
    %78 = arith.addf %76, %77 : vector<8x4x8xf32>
    %79 = vector.broadcast %36 : f32 to vector<8x4x8xf32>
    %80 = arith.mulf %78, %79 : vector<8x4x8xf32>
    %c1 = arith.constant 1 : index
    %c0_33 = arith.constant 0 : index
    %c0_34 = arith.constant 0 : index
    %81 = vector.load %arg1[%c1, %c0_33, %c0_34] : memref<2x8x8xf32, #tpu.memory_space<vmem>>, vector<1x8x8xf32>
    %82 = vector.shape_cast %81 : vector<1x8x8xf32> to vector<8x8xf32>
    %83 = vector.shape_cast %82 : vector<8x8xf32> to vector<8x1x8xf32>
    %84 = vector.broadcast %83 : vector<8x1x8xf32> to vector<8x4x8xf32>
    %85 = arith.addf %80, %84 : vector<8x4x8xf32>
    %cst_35 = arith.constant dense<0xFF800000> : vector<8x4xf32>
    %86 = vector.multi_reduction <maximumf>, %85, %cst_35 [2] : vector<8x4x8xf32> to vector<8x4xf32>
    %87 = vector.shape_cast %86 : vector<8x4xf32> to vector<8x4x1xf32>
    %88 = vector.broadcast %87 : vector<8x4x1xf32> to vector<8x4x8xf32>
    %89 = arith.subf %85, %88 : vector<8x4x8xf32>
    %90 = math.exp %89 : vector<8x4x8xf32>
    %cst_36 = arith.constant dense<0.000000e+00> : vector<8x4xf32>
    %91 = vector.multi_reduction <add>, %90, %cst_36 [2] : vector<8x4x8xf32> to vector<8x4xf32>
    %92 = vector.shape_cast %91 : vector<8x4xf32> to vector<8x4x1xf32>
    %93 = vector.broadcast %92 : vector<8x4x1xf32> to vector<8x4x8xf32>
    %94 = arith.divf %90, %93 : vector<8x4x8xf32>
    "tpu.trace_start"() <{level = 10 : i32, message = "qhk,khd->qhd"}> : () -> ()
    %cst_37 = arith.constant dense<0.000000e+00> : vector<4x8x8xf32>
    %95 = tpu.matmul %74, %94, %cst_37 {dimension_numbers = #tpu.dot_dimension_numbers<[0], [2], [2], [0], [0, 1, 0, 2, 1, 0], [1], [1]>} : vector<8x4x8xf32>, vector<8x4x8xf32>, vector<4x8x8xf32> -> vector<4x8x8xf32>
    %96 = tpu.transpose %95, [2, 0, 1] : vector<4x8x8xf32> -> vector<8x4x8xf32>
    "tpu.trace_stop"() : () -> ()
    "tpu.trace_start"() <{level = 10 : i32, message = "qhk,qkd->qhd"}> : () -> ()
    %cst_38 = arith.constant dense<0.000000e+00> : vector<8x4x8xf32>
    %97 = tpu.matmul %94, %2, %cst_38 {dimension_numbers = #tpu.dot_dimension_numbers<[2], [1], [1], [2], [0, 0, 0, 1, 1, 2], [0], [0]>} : vector<8x4x8xf32>, vector<8x8x8xf32>, vector<8x4x8xf32> -> vector<8x4x8xf32>
    "tpu.trace_stop"() : () -> ()
    %98 = arith.addf %96, %97 : vector<8x4x8xf32>
    %99 = vector.shape_cast %98 : vector<8x4x8xf32> to vector<8x32xf32>
    %100 = vector.shape_cast %94 : vector<8x4x8xf32> to vector<8x32xf32>
    %101 = tpu.concatenate %67, %99 in 0 : vector<8x32xf32>, vector<8x32xf32> -> vector<16x32xf32>
    %102 = tpu.concatenate %68, %100 in 0 : vector<8x32xf32>, vector<8x32xf32> -> vector<16x32xf32>
    %c0_39 = arith.constant 0 : index
    %c0_40 = arith.constant 0 : index
    %103 = vector.load %arg17[%c0_39, %c0_40] : memref<16x32xf32, #tpu.memory_space<vmem>>, vector<16x32xf32>
    tpu.vector_store %arg17[%c0_39, %c0_40], %102 {strides = array<i32>} : memref<16x32xf32, #tpu.memory_space<vmem>>, vector<16x32xf32>,
    %c0_41 = arith.constant 0 : index
    %c0_42 = arith.constant 0 : index
    %104 = vector.load %arg6[%c0_41, %c0_42] : memref<32x32xf32, #tpu.memory_space<vmem>>, vector<32x32xf32>
    %cst_43 = arith.constant dense<0.000000e+00> : vector<16x32xf32>
    %105 = tpu.matmul %101, %104, %cst_43 {dimension_numbers = #tpu.dot_dimension_numbers<[1], [0], [0], [1], [0, 0, 1, 1], [], []>} : vector<16x32xf32>, vector<32x32xf32>, vector<16x32xf32> -> vector<16x32xf32>
    %c0_44 = arith.constant 0 : index
    %c0_45 = arith.constant 0 : index
    %106 = vector.load %arg7[%c0_44, %c0_45] : memref<1x32xf32, #tpu.memory_space<vmem>>, vector<1x32xf32>
    %107 = vector.broadcast %106 : vector<1x32xf32> to vector<16x32xf32>
    %108 = arith.addf %105, %107 : vector<16x32xf32>
    %109 = arith.addf %0, %108 : vector<16x32xf32>
    %c0_46 = arith.constant 0 : index
    %c0_47 = arith.constant 0 : index
    %110 = vector.load %arg10[%c0_46, %c0_47] : memref<1x32xf32, #tpu.memory_space<vmem>>, vector<1x32xf32>
    %c0_48 = arith.constant 0 : index
    %c0_49 = arith.constant 0 : index
    %111 = vector.load %arg11[%c0_48, %c0_49] : memref<1x32xf32, #tpu.memory_space<vmem>>, vector<1x32xf32>
    %cst_50 = arith.constant dense<0.000000e+00> : vector<16xf32>
    %112 = vector.multi_reduction <add>, %109, %cst_50 [1] : vector<16x32xf32> to vector<16xf32>
    %113 = vector.shape_cast %112 : vector<16xf32> to vector<16x1xf32>
    %cst_51 = arith.constant 3.200000e+01 : f32
    %114 = vector.broadcast %cst_51 : f32 to vector<16x1xf32>
    %115 = arith.divf %113, %114 : vector<16x1xf32>
    %116 = vector.broadcast %115 : vector<16x1xf32> to vector<16x32xf32>
    %117 = arith.subf %109, %116 : vector<16x32xf32>
    %118 = arith.mulf %117, %117 : vector<16x32xf32>
    %cst_52 = arith.constant dense<0.000000e+00> : vector<16xf32>
    %119 = vector.multi_reduction <add>, %118, %cst_52 [1] : vector<16x32xf32> to vector<16xf32>
    %120 = vector.shape_cast %119 : vector<16xf32> to vector<16x1xf32>
    %cst_53 = arith.constant 3.200000e+01 : f32
    %121 = vector.broadcast %cst_53 : f32 to vector<16x1xf32>
    %122 = arith.divf %120, %121 : vector<16x1xf32>
    %123 = vector.broadcast %115 : vector<16x1xf32> to vector<16x32xf32>
    %124 = arith.subf %109, %123 : vector<16x32xf32>
    %cst_54 = arith.constant 9.99999974E-6 : f32
    %125 = vector.broadcast %cst_54 : f32 to vector<16x1xf32>
    %126 = arith.addf %122, %125 : vector<16x1xf32>
    %127 = math.rsqrt %126 : vector<16x1xf32>
    %128 = vector.broadcast %127 : vector<16x1xf32> to vector<16x32xf32>
    %129 = arith.mulf %124, %128 : vector<16x32xf32>
    %130 = vector.broadcast %110 : vector<1x32xf32> to vector<16x32xf32>
    %131 = arith.mulf %129, %130 : vector<16x32xf32>
    %132 = vector.broadcast %111 : vector<1x32xf32> to vector<16x32xf32>
    %133 = arith.addf %131, %132 : vector<16x32xf32>
    %c0_55 = arith.constant 0 : index
    %c0_56 = arith.constant 0 : index
    %134 = vector.load %arg12[%c0_55, %c0_56] : memref<32x64xf32, #tpu.memory_space<vmem>>, vector<32x64xf32>
    %cst_57 = arith.constant dense<0.000000e+00> : vector<16x64xf32>
    %135 = tpu.matmul %133, %134, %cst_57 {dimension_numbers = #tpu.dot_dimension_numbers<[1], [0], [0], [1], [0, 0, 1, 1], [], []>} : vector<16x32xf32>, vector<32x64xf32>, vector<16x64xf32> -> vector<16x64xf32>
    %c0_58 = arith.constant 0 : index
    %c0_59 = arith.constant 0 : index
    %136 = vector.load %arg13[%c0_58, %c0_59] : memref<1x64xf32, #tpu.memory_space<vmem>>, vector<1x64xf32>
    %137 = vector.broadcast %136 : vector<1x64xf32> to vector<16x64xf32>
    %138 = arith.addf %135, %137 : vector<16x64xf32>
    %cst_60 = arith.constant 0.000000e+00 : f32
    %139 = vector.broadcast %cst_60 : f32 to vector<16x64xf32>
    %140 = arith.maximumf %138, %139 : vector<16x64xf32>
    %c0_61 = arith.constant 0 : index
    %c0_62 = arith.constant 0 : index
    %141 = vector.load %arg14[%c0_61, %c0_62] : memref<64x32xf32, #tpu.memory_space<vmem>>, vector<64x32xf32>
    %cst_63 = arith.constant dense<0.000000e+00> : vector<16x32xf32>
    %142 = tpu.matmul %140, %141, %cst_63 {dimension_numbers = #tpu.dot_dimension_numbers<[1], [0], [0], [1], [0, 0, 1, 1], [], []>} : vector<16x64xf32>, vector<64x32xf32>, vector<16x32xf32> -> vector<16x32xf32>
    %c0_64 = arith.constant 0 : index
    %c0_65 = arith.constant 0 : index
    %143 = vector.load %arg15[%c0_64, %c0_65] : memref<1x32xf32, #tpu.memory_space<vmem>>, vector<1x32xf32>
    %144 = vector.broadcast %143 : vector<1x32xf32> to vector<16x32xf32>
    %145 = arith.addf %142, %144 : vector<16x32xf32>
    %146 = arith.addf %109, %145 : vector<16x32xf32>
    %c0_66 = arith.constant 0 : index
    %c0_67 = arith.constant 0 : index
    %147 = vector.load %arg16[%c0_66, %c0_67] : memref<16x32xf32, #tpu.memory_space<vmem>>, vector<16x32xf32>
    tpu.vector_store %arg16[%c0_66, %c0_67], %146 {strides = array<i32>} : memref<16x32xf32, #tpu.memory_space<vmem>>, vector<16x32xf32>,
    return
  }
}

</mosaic_0001>

<llo_original>
// kernel: tpu_custom_call.1
$region0: #{tpu_custom_call.1}
  #allocation0 [shape = 'u32[]', space=smem, size = 0x4, offset = 0x4, fixed_abs, tag = 'smem constant byte address 0x4 - core index']
  #allocation1 [shape = 'u32[144,128]{1,0:T(1,128)}', space=vmem, size = 0x12000, scoped, tag = 'internal scratch']
  %s0 = inlined_call_operand.hbm [shape: f32[16,32], index: 0, kind: input, shape index: {}]
  %s1 = inlined_call_operand.hbm [shape: f32[2,8,8], index: 1, kind: input, shape index: {}]
  %s2 = inlined_call_operand.vmem [shape: f32[8,8,8], index: 2, kind: input, shape index: {}]
  %s3 = inlined_call_operand.hbm [shape: f32[8,8,8], index: 3, kind: input, shape index: {}]
  %s4 = inlined_call_operand.vmem [shape: f32[32,96], index: 4, kind: input, shape index: {}]
  %s5 = inlined_call_operand.vmem [shape: f32[1,96], index: 5, kind: input, shape index: {}]
  %s6 = inlined_call_operand.hbm [shape: f32[32,32], index: 6, kind: input, shape index: {}]
  %s7 = inlined_call_operand.vmem [shape: f32[1,32], index: 7, kind: input, shape index: {}]
  %s8 = inlined_call_operand.vmem [shape: f32[1,32], index: 8, kind: input, shape index: {}]
  %s9 = inlined_call_operand.vmem [shape: f32[1,32], index: 9, kind: input, shape index: {}]
  %s10 = inlined_call_operand.vmem [shape: f32[1,32], index: 10, kind: input, shape index: {}]
  %s11 = inlined_call_operand.vmem [shape: f32[1,32], index: 11, kind: input, shape index: {}]
  %s12 = inlined_call_operand.hbm [shape: f32[32,64], index: 12, kind: input, shape index: {}]
  %s13 = inlined_call_operand.vmem [shape: f32[1,64], index: 13, kind: input, shape index: {}]
  %s14 = inlined_call_operand.vmem [shape: f32[64,32], index: 14, kind: input, shape index: {}]
  %s15 = inlined_call_operand.vmem [shape: f32[1,32], index: 15, kind: input, shape index: {}]
  %s16 = inlined_call_operand.hbm [shape: f32[16,32], index: 16, kind: output, shape index: {0}]
  %s17 = inlined_call_operand.hbm [shape: f32[16,32], index: 17, kind: output, shape index: {1}]
  %18 = xla_tuple %s16, %s17
  %s19 = sld [smem:[#allocation0]]
  $region102: #{tpu_custom_call.1} parent=0
    _
  %s21 = ssub.s32 1, %s19
  %s22 = scalar_select 0, %s21, %s19
  $region1: #{tpu_custom_call.1} parent=0
    #allocation2 [shape = 'u8[8192]{0}', space=vmem, size = 0x2000, scoped, tag = 'input window, operand 0, single buffered']
    #allocation3 [shape = 's32[1]{0}', space=sflag, size = 0x4, scoped, tag = 'scoped memory for tpu_custom_call.1']
    #allocation4 [shape = 's32[1]{0}', space=sflag, size = 0x4, scoped, tag = 'scoped memory for tpu_custom_call.1']
    #allocation5 [shape = 'u8[8192]{0}', space=vmem, size = 0x2000, scoped, tag = 'input window, operand 1, single buffered']
    #allocation6 [shape = 's32[1]{0}', space=sflag, size = 0x4, scoped, tag = 'scoped memory for tpu_custom_call.1']
    #allocation7 [shape = 'u8[32768]{0}', space=vmem, size = 0x8000, scoped, tag = 'input window, operand 3, single buffered']
    #allocation8 [shape = 'u8[16384]{0}', space=vmem, size = 0x4000, scoped, tag = 'input window, operand 6, single buffered']
    #allocation9 [shape = 's32[1]{0}', space=sflag, size = 0x4, scoped, tag = 'scoped memory for tpu_custom_call.1']
    #allocation10 [shape = 'u8[16384]{0}', space=vmem, size = 0x4000, scoped, tag = 'input window, operand 12, single buffered']
    #allocation11 [shape = 'u8[8192]{0}', space=vmem, size = 0x2000, scoped, tag = 'output window, operand 0, single buffered']
    #allocation12 [shape = 'u8[8192]{0}', space=vmem, size = 0x2000, scoped, tag = 'output window, operand 1, single buffered']
    #allocation13 [shape = 's32[1]{0}', space=sflag, size = 0x4, scoped, tag = 'scoped memory for tpu_custom_call.1']
    %23 = vsyncpa [#allocation3], 0
    %24 = vsyncpa [#allocation6], 0
    %25 = vsyncpa [#allocation9], 0
    %26 = vsyncpa [#allocation4], 0
    %27 = vsyncpa [#allocation13], 0
    // Predicated region
    $region2: #{tpu_custom_call.1} parent=1 // pred_check
      _
    $region3: #{tpu_custom_call.1} parent=1 // pred_check_branch
      %29 = sbr.rel (0) target = $region5
    $region4: #{tpu_custom_call.1} parent=1 // pred_region
      %s31 = ssub.s32 256, 256
      %32 = vsyncadd [#allocation3], %s31
      %s33 = sshll.u32 [#allocation2], 4
      %s34 = int_to_ptr.vmem [resolvable:$true] %s33
      %39 = dma.hbm_to_vmem [thread:$0]  %s0, 256, %s34, [#allocation3], 128, 128, 8
    $region5: #{tpu_custom_call.1} parent=1 // pred_fallthru
      _
    // Predicated region
    $region6: #{tpu_custom_call.1} parent=1 // pred_check
      _
    $region7: #{tpu_custom_call.1} parent=1 // pred_check_branch
      %41 = sbr.rel (0) target = $region9
    $region8: #{tpu_custom_call.1} parent=1 // pred_region
      %s43 = ssub.s32 256, 256
      %44 = vsyncadd [#allocation6], %s43
      %s45 = sshll.u32 [#allocation5], 4
      %s46 = int_to_ptr.vmem [resolvable:$true] %s45
      %51 = dma.hbm_to_vmem [thread:$0]  %s1, 256, %s46, [#allocation6], 128, 128, 8
    $region9: #{tpu_custom_call.1} parent=1 // pred_fallthru
      _
    // Predicated region
    $region10: #{tpu_custom_call.1} parent=1 // pred_check
      _
    $region11: #{tpu_custom_call.1} parent=1 // pred_check_branch
      %53 = sbr.rel (0) target = $region13
    $region12: #{tpu_custom_call.1} parent=1 // pred_region
      _
    $region13: #{tpu_custom_call.1} parent=1 // pred_fallthru
      _
    // Predicated region
    $region14: #{tpu_custom_call.1} parent=1 // pred_check
      _
    $region15: #{tpu_custom_call.1} parent=1 // pred_check_branch
      %55 = sbr.rel (0) target = $region17
    $region16: #{tpu_custom_call.1} parent=1 // pred_region
      %s57 = ssub.s32 1024, 1024
      %58 = vsyncadd [#allocation6], %s57
      %s59 = sshll.u32 [#allocation7], 4
      %s60 = int_to_ptr.vmem [resolvable:$true] %s59
      %65 = dma.hbm_to_vmem [thread:$0]  %s3, 1024, %s60, [#allocation6], 128, 128, 8
    $region17: #{tpu_custom_call.1} parent=1 // pred_fallthru
      _
    // Predicated region
    $region18: #{tpu_custom_call.1} parent=1 // pred_check
      _
    $region19: #{tpu_custom_call.1} parent=1 // pred_check_branch
      %67 = sbr.rel (0) target = $region21
    $region20: #{tpu_custom_call.1} parent=1 // pred_region
      _
    $region21: #{tpu_custom_call.1} parent=1 // pred_fallthru
      _
    // Predicated region
    $region22: #{tpu_custom_call.1} parent=1 // pred_check
      _
    $region23: #{tpu_custom_call.1} parent=1 // pred_check_branch
      %69 = sbr.rel (0) target = $region25
    $region24: #{tpu_custom_call.1} parent=1 // pred_region
      _
    $region25: #{tpu_custom_call.1} parent=1 // pred_fallthru
      _
    // Predicated region
    $region26: #{tpu_custom_call.1} parent=1 // pred_check
      _
    $region27: #{tpu_custom_call.1} parent=1 // pred_check_branch
      %71 = sbr.rel (0) target = $region29
    $region28: #{tpu_custom_call.1} parent=1 // pred_region
      %s73 = ssub.s32 512, 512
      %74 = vsyncadd [#allocation9], %s73
      %s75 = sshll.u32 [#allocation8], 4
      %s76 = int_to_ptr.vmem [resolvable:$true] %s75
      %81 = dma.hbm_to_vmem [thread:$0]  %s6, 512, %s76, [#allocation9], 128, 128, 8
    $region29: #{tpu_custom_call.1} parent=1 // pred_fallthru
      _
    // Predicated region
    $region30: #{tpu_custom_call.1} parent=1 // pred_check
      _
    $region31: #{tpu_custom_call.1} parent=1 // pred_check_branch
      %83 = sbr.rel (0) target = $region33
    $region32: #{tpu_custom_call.1} parent=1 // pred_region
      _
    $region33: #{tpu_custom_call.1} parent=1 // pred_fallthru
      _
    // Predicated region
    $region34: #{tpu_custom_call.1} parent=1 // pred_check
      _
    $region35: #{tpu_custom_call.1} parent=1 // pred_check_branch
      %85 = sbr.rel (0) target = $region37
    $region36: #{tpu_custom_call.1} parent=1 // pred_region
      _
    $region37: #{tpu_custom_call.1} parent=1 // pred_fallthru
      _
    // Predicated region
    $region38: #{tpu_custom_call.1} parent=1 // pred_check
      _
    $region39: #{tpu_custom_call.1} parent=1 // pred_check_branch
      %87 = sbr.rel (0) target = $region41
    $region40: #{tpu_custom_call.1} parent=1 // pred_region
      _
    $region41: #{tpu_custom_call.1} parent=1 // pred_fallthru
      _
    // Predicated region
    $region42: #{tpu_custom_call.1} parent=1 // pred_check
      _
    $region43: #{tpu_custom_call.1} parent=1 // pred_check_branch
      %89 = sbr.rel (0) target = $region45
    $region44: #{tpu_custom_call.1} parent=1 // pred_region
      _
    $region45: #{tpu_custom_call.1} parent=1 // pred_fallthru
      _
    // Predicated region
    $region46: #{tpu_custom_call.1} parent=1 // pred_check
      _
    $region47: #{tpu_custom_call.1} parent=1 // pred_check_branch
      %91 = sbr.rel (0) target = $region49
    $region48: #{tpu_custom_call.1} parent=1 // pred_region
      _
    $region49: #{tpu_custom_call.1} parent=1 // pred_fallthru
      _
    // Predicated region
    $region50: #{tpu_custom_call.1} parent=1 // pred_check
      _
    $region51: #{tpu_custom_call.1} parent=1 // pred_check_branch
      %93 = sbr.rel (0) target = $region53
    $region52: #{tpu_custom_call.1} parent=1 // pred_region
      %s95 = ssub.s32 512, 512
      %96 = vsyncadd [#allocation9], %s95
      %s97 = sshll.u32 [#allocation10], 4
      %s98 = int_to_ptr.vmem [resolvable:$true] %s97
      %103 = dma.hbm_to_vmem [thread:$0]  %s12, 512, %s98, [#allocation9], 128, 128, 8
    $region53: #{tpu_custom_call.1} parent=1 // pred_fallthru
      _
    // Predicated region
    $region54: #{tpu_custom_call.1} parent=1 // pred_check
      _
    $region55: #{tpu_custom_call.1} parent=1 // pred_check_branch
      %105 = sbr.rel (0) target = $region57
    $region56: #{tpu_custom_call.1} parent=1 // pred_region
      _
    $region57: #{tpu_custom_call.1} parent=1 // pred_fallthru
      _
    // Predicated region
    $region58: #{tpu_custom_call.1} parent=1 // pred_check
      _
    $region59: #{tpu_custom_call.1} parent=1 // pred_check_branch
      %107 = sbr.rel (0) target = $region61
    $region60: #{tpu_custom_call.1} parent=1 // pred_region
      _
    $region61: #{tpu_custom_call.1} parent=1 // pred_fallthru
      _
    // Predicated region
    $region62: #{tpu_custom_call.1} parent=1 // pred_check
      _
    $region63: #{tpu_custom_call.1} parent=1 // pred_check_branch
      %109 = sbr.rel (0) target = $region65
    $region64: #{tpu_custom_call.1} parent=1 // pred_region
      _
    $region65: #{tpu_custom_call.1} parent=1 // pred_fallthru
      _
    // Predicated region
    $region66: #{tpu_custom_call.1} parent=1 // pred_check
      _
    $region67: #{tpu_custom_call.1} parent=1 // pred_check_branch
      %111 = sbr.rel (0) target = $region69
    $region68: #{tpu_custom_call.1} parent=1 // pred_region
      %112 = dma.done [#allocation3], 256
    $region69: #{tpu_custom_call.1} parent=1 // pred_fallthru
      _
    // Predicated region
    $region70: #{tpu_custom_call.1} parent=1 // pred_check
      _
    $region71: #{tpu_custom_call.1} parent=1 // pred_check_branch
      %114 = sbr.rel (0) target = $region73
    $region72: #{tpu_custom_call.1} parent=1 // pred_region
      %115 = dma.done [#allocation6], 256
    $region73: #{tpu_custom_call.1} parent=1 // pred_fallthru
      _
    // Predicated region
    $region74: #{tpu_custom_call.1} parent=1 // pred_check
      _
    $region75: #{tpu_custom_call.1} parent=1 // pred_check_branch
      %117 = sbr.rel (0) target = $region77
    $region76: #{tpu_custom_call.1} parent=1 // pred_region
      %118 = dma.done [#allocation6], 1024
    $region77: #{tpu_custom_call.1} parent=1 // pred_fallthru
      _
    // Predicated region
    $region78: #{tpu_custom_call.1} parent=1 // pred_check
      _
    $region79: #{tpu_custom_call.1} parent=1 // pred_check_branch
      %120 = sbr.rel (0) target = $region81
    $region80: #{tpu_custom_call.1} parent=1 // pred_region
      %121 = dma.done [#allocation9], 512
    $region81: #{tpu_custom_call.1} parent=1 // pred_fallthru
      _
    // Predicated region
    $region82: #{tpu_custom_call.1} parent=1 // pred_check
      _
    $region83: #{tpu_custom_call.1} parent=1 // pred_check_branch
      %123 = sbr.rel (0) target = $region85
    $region84: #{tpu_custom_call.1} parent=1 // pred_region
      %124 = dma.done [#allocation9], 512
    $region85: #{tpu_custom_call.1} parent=1 // pred_fallthru
      _
    %v125 = vld [vmem:[#allocation2] sm:$0xff]
    %v126 = vld [vmem:[#allocation2 + $0x8] sm:$0xff]
    %v127 = vld [vmem:[%s2] sm:$0xff]
    %v128 = vld [vmem:[%s2 + $0x8] sm:$0xff]
    %v129 = vld [vmem:[%s2 + $0x10] sm:$0xff]
    %v130 = vld [vmem:[%s2 + $0x18] sm:$0xff]
    %v131 = vld [vmem:[%s2 + $0x20] sm:$0xff]
    %v132 = vld [vmem:[%s2 + $0x28] sm:$0xff]
    %v133 = vld [vmem:[%s2 + $0x30] sm:$0xff]
    %v134 = vld [vmem:[%s2 + $0x38] sm:$0xff]
    %v135 = vld [vmem:[#allocation7] sm:$0xff]
    %v136 = vld [vmem:[#allocation7 + $0x8] sm:$0xff]
    %v137 = vld [vmem:[#allocation7 + $0x10] sm:$0xff]
    %v138 = vld [vmem:[#allocation7 + $0x18] sm:$0xff]
    %v139 = vld [vmem:[#allocation7 + $0x20] sm:$0xff]
    %v140 = vld [vmem:[#allocation7 + $0x28] sm:$0xff]
    %v141 = vld [vmem:[#allocation7 + $0x30] sm:$0xff]
    %v142 = vld [vmem:[#allocation7 + $0x38] sm:$0xff]
    %v143 = vld [vmem:[%s8] sm:$0x1]
    %v144 = vld [vmem:[%s9] sm:$0x1]
    %vm145 = vcmask 261120
    %v146 = vsel %vm145, %v125, 0.0
    %147 = vadd.xlane.f32.xlu0 %v146
    %v148 = vpop.xlane.xlu0 %147
    %v149 = vsel %vm145, %v126, 0.0
    %150 = vadd.xlane.f32.xlu0 %v149
    %v151 = vpop.xlane.xlu0 %150
    %v152 = vrcp.pop 32.0
    %v153 = vmul.f32 %v148, %v152
    %v154 = vmul.f32 %v151, %v152
    %v155 = vsub.f32 %v125, %v153
    %v156 = vsub.f32 %v126, %v154
    %v157 = vmul.f32 %v155, %v155
    %v158 = vmul.f32 %v156, %v156
    %v159 = vsel %vm145, %v157, 0.0
    %160 = vadd.xlane.f32.xlu0 %v159
    %v161 = vpop.xlane.xlu0 %160
    %v162 = vsel %vm145, %v158, 0.0
    %163 = vadd.xlane.f32.xlu0 %v162
    %v164 = vpop.xlane.xlu0 %163
    %v165 = vmul.f32 %v161, %v152
    %v166 = vmul.f32 %v164, %v152
    %v167 = vadd.f32 %v165, 1e-05
    %v168 = vadd.f32 %v166, 1e-05
    %v169 = vrsqrt.pop %v167
    %v170 = vrsqrt.pop %v168
    %v171 = vmul.f32 %v155, %v169
    %v172 = vmul.f32 %v156, %v170
    %v174 = vlaneseq
    %v175 = vshrl.u32 %v174, 7
    %v176 = vsub.s32 0, %v175
    %v177 = vrot.slane %v143, %v176
    %v179 = vmul.f32 %v171, %v177
    %v180 = vmul.f32 %v172, %v177
    %v182 = vlaneseq
    %v183 = vshrl.u32 %v182, 7
    %v184 = vsub.s32 0, %v183
    %v185 = vrot.slane %v144, %v184
    %v187 = vadd.f32 %v179, %v185
    %v188 = vadd.f32 %v180, %v185
    %v189 = vld [vmem:[%s4] sm:$0xff]
    %v190 = vld [vmem:[%s4 + $0x8] sm:$0xff]
    %v191 = vld [vmem:[%s4 + $0x10] sm:$0xff]
    %v192 = vld [vmem:[%s4 + $0x18] sm:$0xff]
    %v193 = vld [vmem:[%s5] sm:$0x1]
    %v195 = vlaneseq
    %v196 = vshrl.u32 %v195, 7
    %v197 = vsub.s32 0, %v196
    %v198 = vrot.slane %v193, %v197
    %v201 = vsel %vm145, %v187, 0
    %v204 = vsel %vm145, %v188, 0
    %206 = vmatprep.subr.mxu0 0.0
    %207 = vmatpush1.msra.mxu0 %v189
    %208 = vmatprep.subr.mxu0 0.0
    %209 = vmatpush1.msra.mxu0 %v190
    %210 = vmatprep.subr.mxu0 0.0
    %211 = vmatpush1.msra.mxu0 %v191
    %212 = vmatprep.subr.mxu0 0.0
    %213 = vmatpush1.msra.mxu0 %v192
    %214 = vmatprep.subr.mxu0 0.0
    %215 = vmatpush1.msra.mxu0 0.0
    %216 = vmatprep.subr.mxu0 0.0
    %217 = vmatpush1.msra.mxu0 0.0
    %218 = vmatprep.subr.mxu0 0.0
    %219 = vmatpush1.msra.mxu0 0.0
    %220 = vmatprep.subr.mxu0 0.0
    %221 = vmatpush1.msra.mxu0 0.0
    %222 = vmatprep.subr.mxu0 0.0
    %223 = vmatpush1.msra.mxu0 0.0
    %224 = vmatprep.subr.mxu0 0.0
    %225 = vmatpush1.msra.mxu0 0.0
    %226 = vmatprep.subr.mxu0 0.0
    %227 = vmatpush1.msra.mxu0 0.0
    %228 = vmatprep.subr.mxu0 0.0
    %229 = vmatpush1.msra.mxu0 0.0
    %230 = vmatprep.subr.mxu0 0.0
    %231 = vmatpush1.msra.mxu0 0.0
    %232 = vmatprep.subr.mxu0 0.0
    %233 = vmatpush1.msra.mxu0 0.0
    %234 = vmatprep.subr.mxu0 0.0
    %235 = vmatpush1.msra.mxu0 0.0
    %236 = vmatprep.subr.mxu0 0.0
    %237 = vmatpush1.msra.mxu0 0.0
    %238 = vmatprep.subr.mxu0 0.0
    %239 = vmatpush1.msra.mxu0 0.0
    %240 = vmatprep.subr.mxu0 0.0
    %241 = vmatpush1.msra.mxu0 0.0
    %242 = vmatprep.subr.mxu0 0.0
    %243 = vmatpush1.msra.mxu0 0.0
    %244 = vmatprep.subr.mxu0 0.0
    %245 = vmatpush1.msra.mxu0 0.0
    %246 = vmatprep.subr.mxu0 0.0
    %247 = vmatpush1.msra.mxu0 0.0
    %248 = vmatprep.subr.mxu0 0.0
    %249 = vmatpush1.msra.mxu0 0.0
    %250 = vmatprep.subr.mxu0 0.0
    %251 = vmatpush1.msra.mxu0 0.0
    %252 = vmatprep.subr.mxu0 0.0
    %253 = vmatpush1.msra.mxu0 0.0
    %254 = vmatprep.subr.mxu0 0.0
    %255 = vmatpush1.msra.mxu0 0.0
    %256 = vmatprep.subr.mxu0 0.0
    %257 = vmatpush1.msra.mxu0 0.0
    %258 = vmatprep.subr.mxu0 0.0
    %259 = vmatpush1.msra.mxu0 0.0
    %260 = vmatprep.subr.mxu0 0.0
    %261 = vmatpush1.msra.mxu0 0.0
    %262 = vmatprep.subr.mxu0 0.0
    %263 = vmatpush1.msra.mxu0 0.0
    %264 = vmatprep.subr.mxu0 0.0
    %265 = vmatpush1.msra.mxu0 0.0
    %266 = vmatprep.subr.mxu0 0.0
    %267 = vmatpush1.msra.mxu0 0.0
    %268 = vmatprep.subr.mxu0 0.0
    %269 = vmatpush1.msra.mxu0 0.0
    %270 = vmatprep.mubr.f32.mxu0 0.0
    %271 = vmatmul.mubr.f32.gmra.mrb[0].mxu0 %v201
    %v272 = vpop.f32.mrb[0].mxu0
    %v273 = vadd.f32 %v198, %v272
    %v274 = vpop.f32.mrb[0].mxu0
    %275 = vmatprep.mubr.f32.mxu0 0.0
    %276 = vmatmul.mubr.f32.gmra.mrb[0].mxu0 %v204
    %v277 = vpop.f32.mrb[0].mxu0
    %v278 = vadd.f32 %v198, %v277
    %v279 = vpop.f32.mrb[0].mxu0
    %280 = vdwg.mxu0
    %282 = vrot.lane.b32.xlu0 %v273, 120
    %v283 = vpop.permute.xlu0 %282
    %285 = vrot.lane.b32.xlu0 %v273, 112
    %v286 = vpop.permute.xlu0 %285
    %288 = vrot.lane.b32.xlu0 %v273, 104
    %v289 = vpop.permute.xlu0 %288
    %v291 = vcombine.low %v273, %v286
    %v292 = vcombine.high %v273, %v286
    %v294 = vunpack.c.l.s4 1983009808
    %v295 = vunpack.c.0.s8 %v294
    %v296 = vlaneseq
    %v297 = vshrl.u32 %v296, 7
    %v298 = vsub.s32 %v295, %v297
    %v299 = vrot.slane %v291, %v298
    %v301 = vunpack.c.l.s4 1983009808
    %v302 = vunpack.c.0.s8 %v301
    %v303 = vlaneseq
    %v304 = vshrl.u32 %v303, 7
    %v305 = vsub.s32 %v302, %v304
    %v306 = vrot.slane %v292, %v305
    %v307 = vcombine.low %v283, %v289
    %v308 = vcombine.high %v283, %v289
    %v310 = vunpack.c.l.s4 1983009808
    %v311 = vunpack.c.0.s8 %v310
    %v312 = vlaneseq
    %v313 = vshrl.u32 %v312, 7
    %v314 = vsub.s32 %v311, %v313
    %v315 = vrot.slane %v307, %v314
    %v317 = vunpack.c.l.s4 1983009808
    %v318 = vunpack.c.0.s8 %v317
    %v319 = vlaneseq
    %v320 = vshrl.u32 %v319, 7
    %v321 = vsub.s32 %v318, %v320
    %v322 = vrot.slane %v308, %v321
    %v323 = vcombine.low %v299, %v315
    %v324 = vcombine.high %v299, %v315
    %v326 = vunpack.c.l.s4 1934713408
    %v327 = vunpack.c.0.s8 %v326
    %v328 = vlaneseq
    %v329 = vshrl.u32 %v328, 7
    %v330 = vsub.s32 %v327, %v329
    %v331 = vrot.slane %v323, %v330
    %v333 = vunpack.c.l.s4 1934713408
    %v334 = vunpack.c.0.s8 %v333
    %v335 = vlaneseq
    %v336 = vshrl.u32 %v335, 7
    %v337 = vsub.s32 %v334, %v336
    %v338 = vrot.slane %v324, %v337
    %v339 = vcombine.low %v306, %v322
    %v340 = vcombine.high %v306, %v322
    %v342 = vunpack.c.l.s4 1934713408
    %v343 = vunpack.c.0.s8 %v342
    %v344 = vlaneseq
    %v345 = vshrl.u32 %v344, 7
    %v346 = vsub.s32 %v343, %v345
    %v347 = vrot.slane %v339, %v346
    %v349 = vunpack.c.l.s4 1934713408
    %v350 = vunpack.c.0.s8 %v349
    %v351 = vlaneseq
    %v352 = vshrl.u32 %v351, 7
    %v353 = vsub.s32 %v350, %v352
    %v354 = vrot.slane %v340, %v353
    %v355 = vcombine.high %v331, 0.0
    %v356 = vcombine.high %v338, 0.0
    %v357 = vcombine.high %v347, 0.0
    %v358 = vcombine.high %v354, 0.0
    %359 = vxpose.xlu0.b32.start [1/16] %v273, 128
    %360 = vxpose.xlu0.b32.cont [2/16] 0.0, 128
    %361 = vxpose.xlu0.b32.cont [3/16] 0.0, 128
    %362 = vxpose.xlu0.b32.cont [4/16] 0.0, 128
    %363 = vxpose.xlu0.b32.cont [5/16] 0.0, 128
    %364 = vxpose.xlu0.b32.cont [6/16] 0.0, 128
    %365 = vxpose.xlu0.b32.cont [7/16] 0.0, 128
    %366 = vxpose.xlu0.b32.cont [8/16] 0.0, 128
    %367 = vxpose.xlu0.b32.cont [9/16] 0.0, 128
    %368 = vxpose.xlu0.b32.cont [10/16] 0.0, 128
    %369 = vxpose.xlu0.b32.cont [11/16] 0.0, 128
    %370 = vxpose.xlu0.b32.cont [12/16] 0.0, 128
    %371 = vxpose.xlu0.b32.cont [13/16] 0.0, 128
    %372 = vxpose.xlu0.b32.cont [14/16] 0.0, 128
    %373 = vxpose.xlu0.b32.cont [15/16] 0.0, 128
    %374 = vxpose.xlu0.b32.end [16/16] 0.0, 128
    %v375 = vpop.trf.xlu0
    %v376 = vpop.trf.xlu0
    %v377 = vpop.trf.xlu0
    %v378 = vpop.trf.xlu0
    %v379 = vpop.trf.xlu0
    %v380 = vpop.trf.xlu0
    %v381 = vpop.trf.xlu0
    %v382 = vpop.trf.xlu0
    %v383 = vpop.trf.xlu0
    %v384 = vpop.trf.xlu0
    %v385 = vpop.trf.xlu0
    %v386 = vpop.trf.xlu0
    %v387 = vpop.trf.xlu0
    %v388 = vpop.trf.xlu0
    %v389 = vpop.trf.xlu0
    %v390 = vpop.trf.xlu0
    %391 = vxpose.xlu0.b32.start [1/16] %v283, 128
    %392 = vxpose.xlu0.b32.cont [2/16] 0.0, 128
    %393 = vxpose.xlu0.b32.cont [3/16] 0.0, 128
    %394 = vxpose.xlu0.b32.cont [4/16] 0.0, 128
    %395 = vxpose.xlu0.b32.cont [5/16] 0.0, 128
    %396 = vxpose.xlu0.b32.cont [6/16] 0.0, 128
    %397 = vxpose.xlu0.b32.cont [7/16] 0.0, 128
    %398 = vxpose.xlu0.b32.cont [8/16] 0.0, 128
    %399 = vxpose.xlu0.b32.cont [9/16] 0.0, 128
    %400 = vxpose.xlu0.b32.cont [10/16] 0.0, 128
    %401 = vxpose.xlu0.b32.cont [11/16] 0.0, 128
    %402 = vxpose.xlu0.b32.cont [12/16] 0.0, 128
    %403 = vxpose.xlu0.b32.cont [13/16] 0.0, 128
    %404 = vxpose.xlu0.b32.cont [14/16] 0.0, 128
    %405 = vxpose.xlu0.b32.cont [15/16] 0.0, 128
    %406 = vxpose.xlu0.b32.end [16/16] 0.0, 128
    %v407 = vpop.trf.xlu0
    %v408 = vpop.trf.xlu0
    %v409 = vpop.trf.xlu0
    %v410 = vpop.trf.xlu0
    %v411 = vpop.trf.xlu0
    %v412 = vpop.trf.xlu0
    %v413 = vpop.trf.xlu0
    %v414 = vpop.trf.xlu0
    %v415 = vpop.trf.xlu0
    %v416 = vpop.trf.xlu0
    %v417 = vpop.trf.xlu0
    %v418 = vpop.trf.xlu0
    %v419 = vpop.trf.xlu0
    %v420 = vpop.trf.xlu0
    %v421 = vpop.trf.xlu0
    %v422 = vpop.trf.xlu0
    %423 = vxpose.xlu0.b32.start [1/16] %v286, 128
    %424 = vxpose.xlu0.b32.cont [2/16] 0.0, 128
    %425 = vxpose.xlu0.b32.cont [3/16] 0.0, 128
    %426 = vxpose.xlu0.b32.cont [4/16] 0.0, 128
    %427 = vxpose.xlu0.b32.cont [5/16] 0.0, 128
    %428 = vxpose.xlu0.b32.cont [6/16] 0.0, 128
    %429 = vxpose.xlu0.b32.cont [7/16] 0.0, 128
    %430 = vxpose.xlu0.b32.cont [8/16] 0.0, 128
    %431 = vxpose.xlu0.b32.cont [9/16] 0.0, 128
    %432 = vxpose.xlu0.b32.cont [10/16] 0.0, 128
    %433 = vxpose.xlu0.b32.cont [11/16] 0.0, 128
    %434 = vxpose.xlu0.b32.cont [12/16] 0.0, 128
    %435 = vxpose.xlu0.b32.cont [13/16] 0.0, 128
    %436 = vxpose.xlu0.b32.cont [14/16] 0.0, 128
    %437 = vxpose.xlu0.b32.cont [15/16] 0.0, 128
    %438 = vxpose.xlu0.b32.end [16/16] 0.0, 128
    %v439 = vpop.trf.xlu0
    %v440 = vpop.trf.xlu0
    %v441 = vpop.trf.xlu0
    %v442 = vpop.trf.xlu0
    %v443 = vpop.trf.xlu0
    %v444 = vpop.trf.xlu0
    %v445 = vpop.trf.xlu0
    %v446 = vpop.trf.xlu0
    %v447 = vpop.trf.xlu0
    %v448 = vpop.trf.xlu0
    %v449 = vpop.trf.xlu0
    %v450 = vpop.trf.xlu0
    %v451 = vpop.trf.xlu0
    %v452 = vpop.trf.xlu0
    %v453 = vpop.trf.xlu0
    %v454 = vpop.trf.xlu0
    %455 = vxpose.xlu0.b32.start [1/16] %v289, 128
    %456 = vxpose.xlu0.b32.cont [2/16] 0.0, 128
    %457 = vxpose.xlu0.b32.cont [3/16] 0.0, 128
    %458 = vxpose.xlu0.b32.cont [4/16] 0.0, 128
    %459 = vxpose.xlu0.b32.cont [5/16] 0.0, 128
    %460 = vxpose.xlu0.b32.cont [6/16] 0.0, 128
    %461 = vxpose.xlu0.b32.cont [7/16] 0.0, 128
    %462 = vxpose.xlu0.b32.cont [8/16] 0.0, 128
    %463 = vxpose.xlu0.b32.cont [9/16] 0.0, 128
    %464 = vxpose.xlu0.b32.cont [10/16] 0.0, 128
    %465 = vxpose.xlu0.b32.cont [11/16] 0.0, 128
    %466 = vxpose.xlu0.b32.cont [12/16] 0.0, 128
    %467 = vxpose.xlu0.b32.cont [13/16] 0.0, 128
    %468 = vxpose.xlu0.b32.cont [14/16] 0.0, 128
    %469 = vxpose.xlu0.b32.cont [15/16] 0.0, 128
    %470 = vxpose.xlu0.b32.end [16/16] 0.0, 128
    %v471 = vpop.trf.xlu0
    %v472 = vpop.trf.xlu0
    %v473 = vpop.trf.xlu0
    %v474 = vpop.trf.xlu0
    %v475 = vpop.trf.xlu0
    %v476 = vpop.trf.xlu0
    %v477 = vpop.trf.xlu0
    %v478 = vpop.trf.xlu0
    %v479 = vpop.trf.xlu0
    %v480 = vpop.trf.xlu0
    %v481 = vpop.trf.xlu0
    %v482 = vpop.trf.xlu0
    %v483 = vpop.trf.xlu0
    %v484 = vpop.trf.xlu0
    %v485 = vpop.trf.xlu0
    %v486 = vpop.trf.xlu0
    %487 = vrot.lane.b32.xlu0 %v273, 96
    %v488 = vpop.permute.xlu0 %487
    %vm489 = vcmask 64512
    %v490 = vsel %vm489, %v488, 0
    %492 = vmatprep.subr.mxu0 0.0
    %493 = vmatpush1.msra.mxu0 %v375
    %494 = vmatprep.subr.mxu0 0.0
    %495 = vmatpush1.msra.mxu0 0.0
    %496 = vmatprep.subr.mxu0 0.0
    %497 = vmatpush1.msra.mxu0 0.0
    %498 = vmatprep.subr.mxu0 0.0
    %499 = vmatpush1.msra.mxu0 0.0
    %500 = vmatprep.subr.mxu0 0.0
    %501 = vmatpush1.msra.mxu0 0.0
    %502 = vmatprep.subr.mxu0 0.0
    %503 = vmatpush1.msra.mxu0 0.0
    %504 = vmatprep.subr.mxu0 0.0
    %505 = vmatpush1.msra.mxu0 0.0
    %506 = vmatprep.subr.mxu0 0.0
    %507 = vmatpush1.msra.mxu0 0.0
    %508 = vmatprep.subr.mxu0 0.0
    %509 = vmatpush1.msra.mxu0 0.0
    %510 = vmatprep.subr.mxu0 0.0
    %511 = vmatpush1.msra.mxu0 0.0
    %512 = vmatprep.subr.mxu0 0.0
    %513 = vmatpush1.msra.mxu0 0.0
    %514 = vmatprep.subr.mxu0 0.0
    %515 = vmatpush1.msra.mxu0 0.0
    %516 = vmatprep.subr.mxu0 0.0
    %517 = vmatpush1.msra.mxu0 0.0
    %518 = vmatprep.subr.mxu0 0.0
    %519 = vmatpush1.msra.mxu0 0.0
    %520 = vmatprep.subr.mxu0 0.0
    %521 = vmatpush1.msra.mxu0 0.0
    %522 = vmatprep.subr.mxu0 0.0
    %523 = vmatpush1.msra.mxu0 0.0
    %524 = vmatprep.subr.mxu0 0.0
    %525 = vmatpush1.msra.mxu0 0.0
    %526 = vmatprep.subr.mxu0 0.0
    %527 = vmatpush1.msra.mxu0 0.0
    %528 = vmatprep.subr.mxu0 0.0
    %529 = vmatpush1.msra.mxu0 0.0
    %530 = vmatprep.subr.mxu0 0.0
    %531 = vmatpush1.msra.mxu0 0.0
    %532 = vmatprep.subr.mxu0 0.0
    %533 = vmatpush1.msra.mxu0 0.0
    %534 = vmatprep.subr.mxu0 0.0
    %535 = vmatpush1.msra.mxu0 0.0
    %536 = vmatprep.subr.mxu0 0.0
    %537 = vmatpush1.msra.mxu0 0.0
    %538 = vmatprep.subr.mxu0 0.0
    %539 = vmatpush1.msra.mxu0 0.0
    %540 = vmatprep.subr.mxu0 0.0
    %541 = vmatpush1.msra.mxu0 0.0
    %542 = vmatprep.subr.mxu0 0.0
    %543 = vmatpush1.msra.mxu0 0.0
    %544 = vmatprep.subr.mxu0 0.0
    %545 = vmatpush1.msra.mxu0 0.0
    %546 = vmatprep.subr.mxu0 0.0
    %547 = vmatpush1.msra.mxu0 0.0
    %548 = vmatprep.subr.mxu0 0.0
    %549 = vmatpush1.msra.mxu0 0.0
    %550 = vmatprep.subr.mxu0 0.0
    %551 = vmatpush1.msra.mxu0 0.0
    %552 = vmatprep.subr.mxu0 0.0
    %553 = vmatpush1.msra.mxu0 0.0
    %554 = vmatprep.subr.mxu0 0.0
    %555 = vmatpush1.msra.mxu0 0.0
    %556 = vmatprep.mubr.f32.mxu0 0.0
    %557 = vmatmul.mubr.f32.gmra.mrb[0].mxu0 %v490
    %v558 = vpop.f32.mrb[0].mxu0
    %v559 = vadd.f32 0.0, %v558
    %v560 = vpop.f32.mrb[0].mxu0
    %561 = vdwg.mxu0
    %562 = vrot.lane.b32.xlu0 %v283, 96
    %v563 = vpop.permute.xlu0 %562
    %v564 = vsel %vm489, %v563, 0
    %566 = vmatprep.subr.mxu0 0.0
    %567 = vmatpush1.msra.mxu0 %v407
    %568 = vmatprep.subr.mxu0 0.0
    %569 = vmatpush1.msra.mxu0 0.0
    %570 = vmatprep.subr.mxu0 0.0
    %571 = vmatpush1.msra.mxu0 0.0
    %572 = vmatprep.subr.mxu0 0.0
    %573 = vmatpush1.msra.mxu0 0.0
    %574 = vmatprep.subr.mxu0 0.0
    %575 = vmatpush1.msra.mxu0 0.0
    %576 = vmatprep.subr.mxu0 0.0
    %577 = vmatpush1.msra.mxu0 0.0
    %578 = vmatprep.subr.mxu0 0.0
    %579 = vmatpush1.msra.mxu0 0.0
    %580 = vmatprep.subr.mxu0 0.0
    %581 = vmatpush1.msra.mxu0 0.0
    %582 = vmatprep.subr.mxu0 0.0
    %583 = vmatpush1.msra.mxu0 0.0
    %584 = vmatprep.subr.mxu0 0.0
    %585 = vmatpush1.msra.mxu0 0.0
    %586 = vmatprep.subr.mxu0 0.0
    %587 = vmatpush1.msra.mxu0 0.0
    %588 = vmatprep.subr.mxu0 0.0
    %589 = vmatpush1.msra.mxu0 0.0
    %590 = vmatprep.subr.mxu0 0.0
    %591 = vmatpush1.msra.mxu0 0.0
    %592 = vmatprep.subr.mxu0 0.0
    %593 = vmatpush1.msra.mxu0 0.0
    %594 = vmatprep.subr.mxu0 0.0
    %595 = vmatpush1.msra.mxu0 0.0
    %596 = vmatprep.subr.mxu0 0.0
    %597 = vmatpush1.msra.mxu0 0.0
    %598 = vmatprep.subr.mxu0 0.0
    %599 = vmatpush1.msra.mxu0 0.0
    %600 = vmatprep.subr.mxu0 0.0
    %601 = vmatpush1.msra.mxu0 0.0
    %602 = vmatprep.subr.mxu0 0.0
    %603 = vmatpush1.msra.mxu0 0.0
    %604 = vmatprep.subr.mxu0 0.0
    %605 = vmatpush1.msra.mxu0 0.0
    %606 = vmatprep.subr.mxu0 0.0
    %607 = vmatpush1.msra.mxu0 0.0
    %608 = vmatprep.subr.mxu0 0.0
    %609 = vmatpush1.msra.mxu0 0.0
    %610 = vmatprep.subr.mxu0 0.0
    %611 = vmatpush1.msra.mxu0 0.0
    %612 = vmatprep.subr.mxu0 0.0
    %613 = vmatpush1.msra.mxu0 0.0
    %614 = vmatprep.subr.mxu0 0.0
    %615 = vmatpush1.msra.mxu0 0.0
    %616 = vmatprep.subr.mxu0 0.0
    %617 = vmatpush1.msra.mxu0 0.0
    %618 = vmatprep.subr.mxu0 0.0
    %619 = vmatpush1.msra.mxu0 0.0
    %620 = vmatprep.subr.mxu0 0.0
    %621 = vmatpush1.msra.mxu0 0.0
    %622 = vmatprep.subr.mxu0 0.0
    %623 = vmatpush1.msra.mxu0 0.0
    %624 = vmatprep.subr.mxu0 0.0
    %625 = vmatpush1.msra.mxu0 0.0
    %626 = vmatprep.subr.mxu0 0.0
    %627 = vmatpush1.msra.mxu0 0.0
    %628 = vmatprep.subr.mxu0 0.0
    %629 = vmatpush1.msra.mxu0 0.0
    %630 = vmatprep.mubr.f32.mxu0 0.0
    %631 = vmatmul.mubr.f32.gmra.mrb[0].mxu0 %v564
    %v632 = vpop.f32.mrb[0].mxu0
    %v633 = vadd.f32 0.0, %v632
    %v634 = vpop.f32.mrb[0].mxu0
    %635 = vdwg.mxu0
    %636 = vrot.lane.b32.xlu0 %v286, 96
    %v637 = vpop.permute.xlu0 %636
    %v638 = vsel %vm489, %v637, 0
    %640 = vmatprep.subr.mxu0 0.0
    %641 = vmatpush1.msra.mxu0 %v439
    %642 = vmatprep.subr.mxu0 0.0
    %643 = vmatpush1.msra.mxu0 0.0
    %644 = vmatprep.subr.mxu0 0.0
    %645 = vmatpush1.msra.mxu0 0.0
    %646 = vmatprep.subr.mxu0 0.0
    %647 = vmatpush1.msra.mxu0 0.0
    %648 = vmatprep.subr.mxu0 0.0
    %649 = vmatpush1.msra.mxu0 0.0
    %650 = vmatprep.subr.mxu0 0.0
    %651 = vmatpush1.msra.mxu0 0.0
    %652 = vmatprep.subr.mxu0 0.0
    %653 = vmatpush1.msra.mxu0 0.0
    %654 = vmatprep.subr.mxu0 0.0
    %655 = vmatpush1.msra.mxu0 0.0
    %656 = vmatprep.subr.mxu0 0.0
    %657 = vmatpush1.msra.mxu0 0.0
    %658 = vmatprep.subr.mxu0 0.0
    %659 = vmatpush1.msra.mxu0 0.0
    %660 = vmatprep.subr.mxu0 0.0
    %661 = vmatpush1.msra.mxu0 0.0
    %662 = vmatprep.subr.mxu0 0.0
    %663 = vmatpush1.msra.mxu0 0.0
    %664 = vmatprep.subr.mxu0 0.0
    %665 = vmatpush1.msra.mxu0 0.0
    %666 = vmatprep.subr.mxu0 0.0
    %667 = vmatpush1.msra.mxu0 0.0
    %668 = vmatprep.subr.mxu0 0.0
    %669 = vmatpush1.msra.mxu0 0.0
    %670 = vmatprep.subr.mxu0 0.0
    %671 = vmatpush1.msra.mxu0 0.0
    %672 = vmatprep.subr.mxu0 0.0
    %673 = vmatpush1.msra.mxu0 0.0
    %674 = vmatprep.subr.mxu0 0.0
    %675 = vmatpush1.msra.mxu0 0.0
    %676 = vmatprep.subr.mxu0 0.0
    %677 = vmatpush1.msra.mxu0 0.0
    %678 = vmatprep.subr.mxu0 0.0
    %679 = vmatpush1.msra.mxu0 0.0
    %680 = vmatprep.subr.mxu0 0.0
    %681 = vmatpush1.msra.mxu0 0.0
    %682 = vmatprep.subr.mxu0 0.0
    %683 = vmatpush1.msra.mxu0 0.0
    %684 = vmatprep.subr.mxu0 0.0
    %685 = vmatpush1.msra.mxu0 0.0
    %686 = vmatprep.subr.mxu0 0.0
    %687 = vmatpush1.msra.mxu0 0.0
    %688 = vmatprep.subr.mxu0 0.0
    %689 = vmatpush1.msra.mxu0 0.0
    %690 = vmatprep.subr.mxu0 0.0
    %691 = vmatpush1.msra.mxu0 0.0
    %692 = vmatprep.subr.mxu0 0.0
    %693 = vmatpush1.msra.mxu0 0.0
    %694 = vmatprep.subr.mxu0 0.0
    %695 = vmatpush1.msra.mxu0 0.0
    %696 = vmatprep.subr.mxu0 0.0
    %697 = vmatpush1.msra.mxu0 0.0
    %698 = vmatprep.subr.mxu0 0.0
    %699 = vmatpush1.msra.mxu0 0.0
    %700 = vmatprep.subr.mxu0 0.0
    %701 = vmatpush1.msra.mxu0 0.0
    %702 = vmatprep.subr.mxu0 0.0
    %703 = vmatpush1.msra.mxu0 0.0
    %704 = vmatprep.mubr.f32.mxu0 0.0
    %705 = vmatmul.mubr.f32.gmra.mrb[0].mxu0 %v638
    %v706 = vpop.f32.mrb[0].mxu0
    %v707 = vadd.f32 0.0, %v706
    %v708 = vpop.f32.mrb[0].mxu0
    %709 = vdwg.mxu0
    %710 = vrot.lane.b32.xlu0 %v289, 96
    %v711 = vpop.permute.xlu0 %710
    %v712 = vsel %vm489, %v711, 0
    %714 = vmatprep.subr.mxu0 0.0
    %715 = vmatpush1.msra.mxu0 %v471
    %716 = vmatprep.subr.mxu0 0.0
    %717 = vmatpush1.msra.mxu0 0.0
    %718 = vmatprep.subr.mxu0 0.0
    %719 = vmatpush1.msra.mxu0 0.0
    %720 = vmatprep.subr.mxu0 0.0
    %721 = vmatpush1.msra.mxu0 0.0
    %722 = vmatprep.subr.mxu0 0.0
    %723 = vmatpush1.msra.mxu0 0.0
    %724 = vmatprep.subr.mxu0 0.0
    %725 = vmatpush1.msra.mxu0 0.0
    %726 = vmatprep.subr.mxu0 0.0
    %727 = vmatpush1.msra.mxu0 0.0
    %728 = vmatprep.subr.mxu0 0.0
    %729 = vmatpush1.msra.mxu0 0.0
    %730 = vmatprep.subr.mxu0 0.0
    %731 = vmatpush1.msra.mxu0 0.0
    %732 = vmatprep.subr.mxu0 0.0
    %733 = vmatpush1.msra.mxu0 0.0
    %734 = vmatprep.subr.mxu0 0.0
    %735 = vmatpush1.msra.mxu0 0.0
    %736 = vmatprep.subr.mxu0 0.0
    %737 = vmatpush1.msra.mxu0 0.0
    %738 = vmatprep.subr.mxu0 0.0
    %739 = vmatpush1.msra.mxu0 0.0
    %740 = vmatprep.subr.mxu0 0.0
    %741 = vmatpush1.msra.mxu0 0.0
    %742 = vmatprep.subr.mxu0 0.0
    %743 = vmatpush1.msra.mxu0 0.0
    %744 = vmatprep.subr.mxu0 0.0
    %745 = vmatpush1.msra.mxu0 0.0
    %746 = vmatprep.subr.mxu0 0.0
    %747 = vmatpush1.msra.mxu0 0.0
    %748 = vmatprep.subr.mxu0 0.0
    %749 = vmatpush1.msra.mxu0 0.0
    %750 = vmatprep.subr.mxu0 0.0
    %751 = vmatpush1.msra.mxu0 0.0
    %752 = vmatprep.subr.mxu0 0.0
    %753 = vmatpush1.msra.mxu0 0.0
    %754 = vmatprep.subr.mxu0 0.0
    %755 = vmatpush1.msra.mxu0 0.0
    %756 = vmatprep.subr.mxu0 0.0
    %757 = vmatpush1.msra.mxu0 0.0
    %758 = vmatprep.subr.mxu0 0.0
    %759 = vmatpush1.msra.mxu0 0.0
    %760 = vmatprep.subr.mxu0 0.0
    %761 = vmatpush1.msra.mxu0 0.0
    %762 = vmatprep.subr.mxu0 0.0
    %763 = vmatpush1.msra.mxu0 0.0
    %764 = vmatprep.subr.mxu0 0.0
    %765 = vmatpush1.msra.mxu0 0.0
    %766 = vmatprep.subr.mxu0 0.0
    %767 = vmatpush1.msra.mxu0 0.0
    %768 = vmatprep.subr.mxu0 0.0
    %769 = vmatpush1.msra.mxu0 0.0
    %770 = vmatprep.subr.mxu0 0.0
    %771 = vmatpush1.msra.mxu0 0.0
    %772 = vmatprep.subr.mxu0 0.0
    %773 = vmatpush1.msra.mxu0 0.0
    %774 = vmatprep.subr.mxu0 0.0
    %775 = vmatpush1.msra.mxu0 0.0
    %776 = vmatprep.subr.mxu0 0.0
    %777 = vmatpush1.msra.mxu0 0.0
    %778 = vmatprep.mubr.f32.mxu0 0.0
    %779 = vmatmul.mubr.f32.gmra.mrb[0].mxu0 %v712
    %v780 = vpop.f32.mrb[0].mxu0
    %v781 = vadd.f32 0.0, %v780
    %v782 = vpop.f32.mrb[0].mxu0
    %783 = vdwg.mxu0
    %784 = vxpose.xlu0.b32.start [1/16] %v559, 128
    %785 = vxpose.xlu0.b32.cont [2/16] 0.0, 128
    %786 = vxpose.xlu0.b32.cont [3/16] 0.0, 128
    %787 = vxpose.xlu0.b32.cont [4/16] 0.0, 128
    %788 = vxpose.xlu0.b32.cont [5/16] 0.0, 128
    %789 = vxpose.xlu0.b32.cont [6/16] 0.0, 128
    %790 = vxpose.xlu0.b32.cont [7/16] 0.0, 128
    %791 = vxpose.xlu0.b32.cont [8/16] 0.0, 128
    %792 = vxpose.xlu0.b32.cont [9/16] 0.0, 128
    %793 = vxpose.xlu0.b32.cont [10/16] 0.0, 128
    %794 = vxpose.xlu0.b32.cont [11/16] 0.0, 128
    %795 = vxpose.xlu0.b32.cont [12/16] 0.0, 128
    %796 = vxpose.xlu0.b32.cont [13/16] 0.0, 128
    %797 = vxpose.xlu0.b32.cont [14/16] 0.0, 128
    %798 = vxpose.xlu0.b32.cont [15/16] 0.0, 128
    %799 = vxpose.xlu0.b32.end [16/16] 0.0, 128
    %v800 = vpop.trf.xlu0
    %v801 = vpop.trf.xlu0
    %v802 = vpop.trf.xlu0
    %v803 = vpop.trf.xlu0
    %v804 = vpop.trf.xlu0
    %v805 = vpop.trf.xlu0
    %v806 = vpop.trf.xlu0
    %v807 = vpop.trf.xlu0
    %v808 = vpop.trf.xlu0
    %v809 = vpop.trf.xlu0
    %v810 = vpop.trf.xlu0
    %v811 = vpop.trf.xlu0
    %v812 = vpop.trf.xlu0
    %v813 = vpop.trf.xlu0
    %v814 = vpop.trf.xlu0
    %v815 = vpop.trf.xlu0
    %816 = vxpose.xlu0.b32.start [1/16] %v633, 128
    %817 = vxpose.xlu0.b32.cont [2/16] 0.0, 128
    %818 = vxpose.xlu0.b32.cont [3/16] 0.0, 128
    %819 = vxpose.xlu0.b32.cont [4/16] 0.0, 128
    %820 = vxpose.xlu0.b32.cont [5/16] 0.0, 128
    %821 = vxpose.xlu0.b32.cont [6/16] 0.0, 128
    %822 = vxpose.xlu0.b32.cont [7/16] 0.0, 128
    %823 = vxpose.xlu0.b32.cont [8/16] 0.0, 128
    %824 = vxpose.xlu0.b32.cont [9/16] 0.0, 128
    %825 = vxpose.xlu0.b32.cont [10/16] 0.0, 128
    %826 = vxpose.xlu0.b32.cont [11/16] 0.0, 128
    %827 = vxpose.xlu0.b32.cont [12/16] 0.0, 128
    %828 = vxpose.xlu0.b32.cont [13/16] 0.0, 128
    %829 = vxpose.xlu0.b32.cont [14/16] 0.0, 128
    %830 = vxpose.xlu0.b32.cont [15/16] 0.0, 128
    %831 = vxpose.xlu0.b32.end [16/16] 0.0, 128
    %v832 = vpop.trf.xlu0
    %v833 = vpop.trf.xlu0
    %v834 = vpop.trf.xlu0
    %v835 = vpop.trf.xlu0
    %v836 = vpop.trf.xlu0
    %v837 = vpop.trf.xlu0
    %v838 = vpop.trf.xlu0
    %v839 = vpop.trf.xlu0
    %v840 = vpop.trf.xlu0
    %v841 = vpop.trf.xlu0
    %v842 = vpop.trf.xlu0
    %v843 = vpop.trf.xlu0
    %v844 = vpop.trf.xlu0
    %v845 = vpop.trf.xlu0
    %v846 = vpop.trf.xlu0
    %v847 = vpop.trf.xlu0
    %848 = vxpose.xlu0.b32.start [1/16] %v707, 128
    %849 = vxpose.xlu0.b32.cont [2/16] 0.0, 128
    %850 = vxpose.xlu0.b32.cont [3/16] 0.0, 128
    %851 = vxpose.xlu0.b32.cont [4/16] 0.0, 128
    %852 = vxpose.xlu0.b32.cont [5/16] 0.0, 128
    %853 = vxpose.xlu0.b32.cont [6/16] 0.0, 128
    %854 = vxpose.xlu0.b32.cont [7/16] 0.0, 128
    %855 = vxpose.xlu0.b32.cont [8/16] 0.0, 128
    %856 = vxpose.xlu0.b32.cont [9/16] 0.0, 128
    %857 = vxpose.xlu0.b32.cont [10/16] 0.0, 128
    %858 = vxpose.xlu0.b32.cont [11/16] 0.0, 128
    %859 = vxpose.xlu0.b32.cont [12/16] 0.0, 128
    %860 = vxpose.xlu0.b32.cont [13/16] 0.0, 128
    %861 = vxpose.xlu0.b32.cont [14/16] 0.0, 128
    %862 = vxpose.xlu0.b32.cont [15/16] 0.0, 128
    %863 = vxpose.xlu0.b32.end [16/16] 0.0, 128
    %v864 = vpop.trf.xlu0
    %v865 = vpop.trf.xlu0
    %v866 = vpop.trf.xlu0
    %v867 = vpop.trf.xlu0
    %v868 = vpop.trf.xlu0
    %v869 = vpop.trf.xlu0
    %v870 = vpop.trf.xlu0
    %v871 = vpop.trf.xlu0
    %v872 = vpop.trf.xlu0
    %v873 = vpop.trf.xlu0
    %v874 = vpop.trf.xlu0
    %v875 = vpop.trf.xlu0
    %v876 = vpop.trf.xlu0
    %v877 = vpop.trf.xlu0
    %v878 = vpop.trf.xlu0
    %v879 = vpop.trf.xlu0
    %880 = vxpose.xlu0.b32.start [1/16] %v781, 128
    %881 = vxpose.xlu0.b32.cont [2/16] 0.0, 128
    %882 = vxpose.xlu0.b32.cont [3/16] 0.0, 128
    %883 = vxpose.xlu0.b32.cont [4/16] 0.0, 128
    %884 = vxpose.xlu0.b32.cont [5/16] 0.0, 128
    %885 = vxpose.xlu0.b32.cont [6/16] 0.0, 128
    %886 = vxpose.xlu0.b32.cont [7/16] 0.0, 128
    %887 = vxpose.xlu0.b32.cont [8/16] 0.0, 128
    %888 = vxpose.xlu0.b32.cont [9/16] 0.0, 128
    %889 = vxpose.xlu0.b32.cont [10/16] 0.0, 128
    %890 = vxpose.xlu0.b32.cont [11/16] 0.0, 128
    %891 = vxpose.xlu0.b32.cont [12/16] 0.0, 128
    %892 = vxpose.xlu0.b32.cont [13/16] 0.0, 128
    %893 = vxpose.xlu0.b32.cont [14/16] 0.0, 128
    %894 = vxpose.xlu0.b32.cont [15/16] 0.0, 128
    %895 = vxpose.xlu0.b32.end [16/16] 0.0, 128
    %v896 = vpop.trf.xlu0
    %v897 = vpop.trf.xlu0
    %v898 = vpop.trf.xlu0
    %v899 = vpop.trf.xlu0
    %v900 = vpop.trf.xlu0
    %v901 = vpop.trf.xlu0
    %v902 = vpop.trf.xlu0
    %v903 = vpop.trf.xlu0
    %v904 = vpop.trf.xlu0
    %v905 = vpop.trf.xlu0
    %v906 = vpop.trf.xlu0
    %v907 = vpop.trf.xlu0
    %v908 = vpop.trf.xlu0
    %v909 = vpop.trf.xlu0
    %v910 = vpop.trf.xlu0
    %v911 = vpop.trf.xlu0
    %v912 = vcombine.low %v800, %v864
    %v913 = vcombine.high %v800, %v864
    %v915 = vunpack.c.l.s4 1983009808
    %v916 = vunpack.c.0.s8 %v915
    %v917 = vlaneseq
    %v918 = vshrl.u32 %v917, 7
    %v919 = vsub.s32 %v916, %v918
    %v920 = vrot.slane %v912, %v919
    %v922 = vunpack.c.l.s4 1983009808
    %v923 = vunpack.c.0.s8 %v922
    %v924 = vlaneseq
    %v925 = vshrl.u32 %v924, 7
    %v926 = vsub.s32 %v923, %v925
    %v927 = vrot.slane %v913, %v926
    %v928 = vcombine.low %v832, %v896
    %v929 = vcombine.high %v832, %v896
    %v931 = vunpack.c.l.s4 1983009808
    %v932 = vunpack.c.0.s8 %v931
    %v933 = vlaneseq
    %v934 = vshrl.u32 %v933, 7
    %v935 = vsub.s32 %v932, %v934
    %v936 = vrot.slane %v928, %v935
    %v938 = vunpack.c.l.s4 1983009808
    %v939 = vunpack.c.0.s8 %v938
    %v940 = vlaneseq
    %v941 = vshrl.u32 %v940, 7
    %v942 = vsub.s32 %v939, %v941
    %v943 = vrot.slane %v929, %v942
    %v944 = vcombine.low %v920, %v936
    %v945 = vcombine.high %v920, %v936
    %v947 = vunpack.c.l.s4 1934713408
    %v948 = vunpack.c.0.s8 %v947
    %v949 = vlaneseq
    %v950 = vshrl.u32 %v949, 7
    %v951 = vsub.s32 %v948, %v950
    %v952 = vrot.slane %v944, %v951
    %v954 = vunpack.c.l.s4 1934713408
    %v955 = vunpack.c.0.s8 %v954
    %v956 = vlaneseq
    %v957 = vshrl.u32 %v956, 7
    %v958 = vsub.s32 %v955, %v957
    %v959 = vrot.slane %v945, %v958
    %v960 = vcombine.low %v927, %v943
    %v961 = vcombine.high %v927, %v943
    %v963 = vunpack.c.l.s4 1934713408
    %v964 = vunpack.c.0.s8 %v963
    %v965 = vlaneseq
    %v966 = vshrl.u32 %v965, 7
    %v967 = vsub.s32 %v964, %v966
    %v968 = vrot.slane %v960, %v967
    %v970 = vunpack.c.l.s4 1934713408
    %v971 = vunpack.c.0.s8 %v970
    %v972 = vlaneseq
    %v973 = vshrl.u32 %v972, 7
    %v974 = vsub.s32 %v971, %v973
    %v975 = vrot.slane %v961, %v974
    %v976 = vcombine.high %v952, 0.0
    %v977 = vcombine.high %v959, 0.0
    %v978 = vcombine.high %v968, 0.0
    %v979 = vcombine.high %v975, 0.0
    %v981 = vsel %vm489, %v331, 0
    %983 = vmatprep.subr.mxu0 0.0
    %984 = vmatpush1.msra.mxu0 %v127
    %985 = vmatprep.subr.mxu0 0.0
    %986 = vmatpush1.msra.mxu0 0.0
    %987 = vmatprep.subr.mxu0 0.0
    %988 = vmatpush1.msra.mxu0 0.0
    %989 = vmatprep.subr.mxu0 0.0
    %990 = vmatpush1.msra.mxu0 0.0
    %991 = vmatprep.subr.mxu0 0.0
    %992 = vmatpush1.msra.mxu0 0.0
    %993 = vmatprep.subr.mxu0 0.0
    %994 = vmatpush1.msra.mxu0 0.0
    %995 = vmatprep.subr.mxu0 0.0
    %996 = vmatpush1.msra.mxu0 0.0
    %997 = vmatprep.subr.mxu0 0.0
    %998 = vmatpush1.msra.mxu0 0.0
    %999 = vmatprep.subr.mxu0 0.0
    %1000 = vmatpush1.msra.mxu0 0.0
    %1001 = vmatprep.subr.mxu0 0.0
    %1002 = vmatpush1.msra.mxu0 0.0
    %1003 = vmatprep.subr.mxu0 0.0
    %1004 = vmatpush1.msra.mxu0 0.0
    %1005 = vmatprep.subr.mxu0 0.0
    %1006 = vmatpush1.msra.mxu0 0.0
    %1007 = vmatprep.subr.mxu0 0.0
    %1008 = vmatpush1.msra.mxu0 0.0
    %1009 = vmatprep.subr.mxu0 0.0
    %1010 = vmatpush1.msra.mxu0 0.0
    %1011 = vmatprep.subr.mxu0 0.0
    %1012 = vmatpush1.msra.mxu0 0.0
    %1013 = vmatprep.subr.mxu0 0.0
    %1014 = vmatpush1.msra.mxu0 0.0
    %1015 = vmatprep.subr.mxu0 0.0
    %1016 = vmatpush1.msra.mxu0 0.0
    %1017 = vmatprep.subr.mxu0 0.0
    %1018 = vmatpush1.msra.mxu0 0.0
    %1019 = vmatprep.subr.mxu0 0.0
    %1020 = vmatpush1.msra.mxu0 0.0
    %1021 = vmatprep.subr.mxu0 0.0
    %1022 = vmatpush1.msra.mxu0 0.0
    %1023 = vmatprep.subr.mxu0 0.0
    %1024 = vmatpush1.msra.mxu0 0.0
    %1025 = vmatprep.subr.mxu0 0.0
    %1026 = vmatpush1.msra.mxu0 0.0
    %1027 = vmatprep.subr.mxu0 0.0
    %1028 = vmatpush1.msra.mxu0 0.0
    %1029 = vmatprep.subr.mxu0 0.0
    %1030 = vmatpush1.msra.mxu0 0.0
    %1031 = vmatprep.subr.mxu0 0.0
    %1032 = vmatpush1.msra.mxu0 0.0
    %1033 = vmatprep.subr.mxu0 0.0
    %1034 = vmatpush1.msra.mxu0 0.0
    %1035 = vmatprep.subr.mxu0 0.0
    %1036 = vmatpush1.msra.mxu0 0.0
    %1037 = vmatprep.subr.mxu0 0.0
    %1038 = vmatpush1.msra.mxu0 0.0
    %1039 = vmatprep.subr.mxu0 0.0
    %1040 = vmatpush1.msra.mxu0 0.0
    %1041 = vmatprep.subr.mxu0 0.0
    %1042 = vmatpush1.msra.mxu0 0.0
    %1043 = vmatprep.subr.mxu0 0.0
    %1044 = vmatpush1.msra.mxu0 0.0
    %1045 = vmatprep.subr.mxu0 0.0
    %1046 = vmatpush1.msra.mxu0 0.0
    %1047 = vmatprep.mubr.f32.mxu0 0.0
    %1048 = vmatmul.mubr.f32.gmra.mrb[0].mxu0 %v981
    %v1049 = vpop.f32.mrb[0].mxu0
    %v1050 = vadd.f32 0.0, %v1049
    %v1051 = vpop.f32.mrb[0].mxu0
    %1052 = vdwg.mxu0
    %v1054 = vsel %vm489, %v355, 0
    %1056 = vmatprep.subr.mxu0 0.0
    %1057 = vmatpush1.msra.mxu0 %v128
    %1058 = vmatprep.subr.mxu0 0.0
    %1059 = vmatpush1.msra.mxu0 0.0
    %1060 = vmatprep.subr.mxu0 0.0
    %1061 = vmatpush1.msra.mxu0 0.0
    %1062 = vmatprep.subr.mxu0 0.0
    %1063 = vmatpush1.msra.mxu0 0.0
    %1064 = vmatprep.subr.mxu0 0.0
    %1065 = vmatpush1.msra.mxu0 0.0
    %1066 = vmatprep.subr.mxu0 0.0
    %1067 = vmatpush1.msra.mxu0 0.0
    %1068 = vmatprep.subr.mxu0 0.0
    %1069 = vmatpush1.msra.mxu0 0.0
    %1070 = vmatprep.subr.mxu0 0.0
    %1071 = vmatpush1.msra.mxu0 0.0
    %1072 = vmatprep.subr.mxu0 0.0
    %1073 = vmatpush1.msra.mxu0 0.0
    %1074 = vmatprep.subr.mxu0 0.0
    %1075 = vmatpush1.msra.mxu0 0.0
    %1076 = vmatprep.subr.mxu0 0.0
    %1077 = vmatpush1.msra.mxu0 0.0
    %1078 = vmatprep.subr.mxu0 0.0
    %1079 = vmatpush1.msra.mxu0 0.0
    %1080 = vmatprep.subr.mxu0 0.0
    %1081 = vmatpush1.msra.mxu0 0.0
    %1082 = vmatprep.subr.mxu0 0.0
    %1083 = vmatpush1.msra.mxu0 0.0
    %1084 = vmatprep.subr.mxu0 0.0
    %1085 = vmatpush1.msra.mxu0 0.0
    %1086 = vmatprep.subr.mxu0 0.0
    %1087 = vmatpush1.msra.mxu0 0.0
    %1088 = vmatprep.subr.mxu0 0.0
    %1089 = vmatpush1.msra.mxu0 0.0
    %1090 = vmatprep.subr.mxu0 0.0
    %1091 = vmatpush1.msra.mxu0 0.0
    %1092 = vmatprep.subr.mxu0 0.0
    %1093 = vmatpush1.msra.mxu0 0.0
    %1094 = vmatprep.subr.mxu0 0.0
    %1095 = vmatpush1.msra.mxu0 0.0
    %1096 = vmatprep.subr.mxu0 0.0
    %1097 = vmatpush1.msra.mxu0 0.0
    %1098 = vmatprep.subr.mxu0 0.0
    %1099 = vmatpush1.msra.mxu0 0.0
    %1100 = vmatprep.subr.mxu0 0.0
    %1101 = vmatpush1.msra.mxu0 0.0
    %1102 = vmatprep.subr.mxu0 0.0
    %1103 = vmatpush1.msra.mxu0 0.0
    %1104 = vmatprep.subr.mxu0 0.0
    %1105 = vmatpush1.msra.mxu0 0.0
    %1106 = vmatprep.subr.mxu0 0.0
    %1107 = vmatpush1.msra.mxu0 0.0
    %1108 = vmatprep.subr.mxu0 0.0
    %1109 = vmatpush1.msra.mxu0 0.0
    %1110 = vmatprep.subr.mxu0 0.0
    %1111 = vmatpush1.msra.mxu0 0.0
    %1112 = vmatprep.subr.mxu0 0.0
    %1113 = vmatpush1.msra.mxu0 0.0
    %1114 = vmatprep.subr.mxu0 0.0
    %1115 = vmatpush1.msra.mxu0 0.0
    %1116 = vmatprep.subr.mxu0 0.0
    %1117 = vmatpush1.msra.mxu0 0.0
    %1118 = vmatprep.subr.mxu0 0.0
    %1119 = vmatpush1.msra.mxu0 0.0
    %1120 = vmatprep.mubr.f32.mxu0 0.0
    %1121 = vmatmul.mubr.f32.gmra.mrb[0].mxu0 %v1054
    %v1122 = vpop.f32.mrb[0].mxu0
    %v1123 = vadd.f32 0.0, %v1122
    %v1124 = vpop.f32.mrb[0].mxu0
    %1125 = vdwg.mxu0
    %v1127 = vsel %vm489, %v338, 0
    %1129 = vmatprep.subr.mxu0 0.0
    %1130 = vmatpush1.msra.mxu0 %v129
    %1131 = vmatprep.subr.mxu0 0.0
    %1132 = vmatpush1.msra.mxu0 0.0
    %1133 = vmatprep.subr.mxu0 0.0
    %1134 = vmatpush1.msra.mxu0 0.0
    %1135 = vmatprep.subr.mxu0 0.0
    %1136 = vmatpush1.msra.mxu0 0.0
    %1137 = vmatprep.subr.mxu0 0.0
    %1138 = vmatpush1.msra.mxu0 0.0
    %1139 = vmatprep.subr.mxu0 0.0
    %1140 = vmatpush1.msra.mxu0 0.0
    %1141 = vmatprep.subr.mxu0 0.0
    %1142 = vmatpush1.msra.mxu0 0.0
    %1143 = vmatprep.subr.mxu0 0.0
    %1144 = vmatpush1.msra.mxu0 0.0
    %1145 = vmatprep.subr.mxu0 0.0
    %1146 = vmatpush1.msra.mxu0 0.0
    %1147 = vmatprep.subr.mxu0 0.0
    %1148 = vmatpush1.msra.mxu0 0.0
    %1149 = vmatprep.subr.mxu0 0.0
    %1150 = vmatpush1.msra.mxu0 0.0
    %1151 = vmatprep.subr.mxu0 0.0
    %1152 = vmatpush1.msra.mxu0 0.0
    %1153 = vmatprep.subr.mxu0 0.0
    %1154 = vmatpush1.msra.mxu0 0.0
    %1155 = vmatprep.subr.mxu0 0.0
    %1156 = vmatpush1.msra.mxu0 0.0
    %1157 = vmatprep.subr.mxu0 0.0
    %1158 = vmatpush1.msra.mxu0 0.0
    %1159 = vmatprep.subr.mxu0 0.0
    %1160 = vmatpush1.msra.mxu0 0.0
    %1161 = vmatprep.subr.mxu0 0.0
    %1162 = vmatpush1.msra.mxu0 0.0
    %1163 = vmatprep.subr.mxu0 0.0
    %1164 = vmatpush1.msra.mxu0 0.0
    %1165 = vmatprep.subr.mxu0 0.0
    %1166 = vmatpush1.msra.mxu0 0.0
    %1167 = vmatprep.subr.mxu0 0.0
    %1168 = vmatpush1.msra.mxu0 0.0
    %1169 = vmatprep.subr.mxu0 0.0
    %1170 = vmatpush1.msra.mxu0 0.0
    %1171 = vmatprep.subr.mxu0 0.0
    %1172 = vmatpush1.msra.mxu0 0.0
    %1173 = vmatprep.subr.mxu0 0.0
    %1174 = vmatpush1.msra.mxu0 0.0
    %1175 = vmatprep.subr.mxu0 0.0
    %1176 = vmatpush1.msra.mxu0 0.0
    %1177 = vmatprep.subr.mxu0 0.0
    %1178 = vmatpush1.msra.mxu0 0.0
    %1179 = vmatprep.subr.mxu0 0.0
    %1180 = vmatpush1.msra.mxu0 0.0
    %1181 = vmatprep.subr.mxu0 0.0
    %1182 = vmatpush1.msra.mxu0 0.0
    %1183 = vmatprep.subr.mxu0 0.0
    %1184 = vmatpush1.msra.mxu0 0.0
    %1185 = vmatprep.subr.mxu0 0.0
    %1186 = vmatpush1.msra.mxu0 0.0
    %1187 = vmatprep.subr.mxu0 0.0
    %1188 = vmatpush1.msra.mxu0 0.0
    %1189 = vmatprep.subr.mxu0 0.0
    %1190 = vmatpush1.msra.mxu0 0.0
    %1191 = vmatprep.subr.mxu0 0.0
    %1192 = vmatpush1.msra.mxu0 0.0
    %1193 = vmatprep.mubr.f32.mxu0 0.0
    %1194 = vmatmul.mubr.f32.gmra.mrb[0].mxu0 %v1127
    %v1195 = vpop.f32.mrb[0].mxu0
    %v1196 = vadd.f32 0.0, %v1195
    %v1197 = vpop.f32.mrb[0].mxu0
    %1198 = vdwg.mxu0
    %v1200 = vsel %vm489, %v356, 0
    %1202 = vmatprep.subr.mxu0 0.0
    %1203 = vmatpush1.msra.mxu0 %v130
    %1204 = vmatprep.subr.mxu0 0.0
    %1205 = vmatpush1.msra.mxu0 0.0
    %1206 = vmatprep.subr.mxu0 0.0
    %1207 = vmatpush1.msra.mxu0 0.0
    %1208 = vmatprep.subr.mxu0 0.0
    %1209 = vmatpush1.msra.mxu0 0.0
    %1210 = vmatprep.subr.mxu0 0.0
    %1211 = vmatpush1.msra.mxu0 0.0
    %1212 = vmatprep.subr.mxu0 0.0
    %1213 = vmatpush1.msra.mxu0 0.0
    %1214 = vmatprep.subr.mxu0 0.0
    %1215 = vmatpush1.msra.mxu0 0.0
    %1216 = vmatprep.subr.mxu0 0.0
    %1217 = vmatpush1.msra.mxu0 0.0
    %1218 = vmatprep.subr.mxu0 0.0
    %1219 = vmatpush1.msra.mxu0 0.0
    %1220 = vmatprep.subr.mxu0 0.0
    %1221 = vmatpush1.msra.mxu0 0.0
    %1222 = vmatprep.subr.mxu0 0.0
    %1223 = vmatpush1.msra.mxu0 0.0
    %1224 = vmatprep.subr.mxu0 0.0
    %1225 = vmatpush1.msra.mxu0 0.0
    %1226 = vmatprep.subr.mxu0 0.0
    %1227 = vmatpush1.msra.mxu0 0.0
    %1228 = vmatprep.subr.mxu0 0.0
    %1229 = vmatpush1.msra.mxu0 0.0
    %1230 = vmatprep.subr.mxu0 0.0
    %1231 = vmatpush1.msra.mxu0 0.0
    %1232 = vmatprep.subr.mxu0 0.0
    %1233 = vmatpush1.msra.mxu0 0.0
    %1234 = vmatprep.subr.mxu0 0.0
    %1235 = vmatpush1.msra.mxu0 0.0
    %1236 = vmatprep.subr.mxu0 0.0
    %1237 = vmatpush1.msra.mxu0 0.0
    %1238 = vmatprep.subr.mxu0 0.0
    %1239 = vmatpush1.msra.mxu0 0.0
    %1240 = vmatprep.subr.mxu0 0.0
    %1241 = vmatpush1.msra.mxu0 0.0
    %1242 = vmatprep.subr.mxu0 0.0
    %1243 = vmatpush1.msra.mxu0 0.0
    %1244 = vmatprep.subr.mxu0 0.0
    %1245 = vmatpush1.msra.mxu0 0.0
    %1246 = vmatprep.subr.mxu0 0.0
    %1247 = vmatpush1.msra.mxu0 0.0
    %1248 = vmatprep.subr.mxu0 0.0
    %1249 = vmatpush1.msra.mxu0 0.0
    %1250 = vmatprep.subr.mxu0 0.0
    %1251 = vmatpush1.msra.mxu0 0.0
    %1252 = vmatprep.subr.mxu0 0.0
    %1253 = vmatpush1.msra.mxu0 0.0
    %1254 = vmatprep.subr.mxu0 0.0
    %1255 = vmatpush1.msra.mxu0 0.0
    %1256 = vmatprep.subr.mxu0 0.0
    %1257 = vmatpush1.msra.mxu0 0.0
    %1258 = vmatprep.subr.mxu0 0.0
    %1259 = vmatpush1.msra.mxu0 0.0
    %1260 = vmatprep.subr.mxu0 0.0
    %1261 = vmatpush1.msra.mxu0 0.0
    %1262 = vmatprep.subr.mxu0 0.0
    %1263 = vmatpush1.msra.mxu0 0.0
    %1264 = vmatprep.subr.mxu0 0.0
    %1265 = vmatpush1.msra.mxu0 0.0
    %1266 = vmatprep.mubr.f32.mxu0 0.0
    %1267 = vmatmul.mubr.f32.gmra.mrb[0].mxu0 %v1200
    %v1268 = vpop.f32.mrb[0].mxu0
    %v1269 = vadd.f32 0.0, %v1268
    %v1270 = vpop.f32.mrb[0].mxu0
    %1271 = vdwg.mxu0
    %v1273 = vsel %vm489, %v347, 0
    %1275 = vmatprep.subr.mxu0 0.0
    %1276 = vmatpush1.msra.mxu0 %v131
    %1277 = vmatprep.subr.mxu0 0.0
    %1278 = vmatpush1.msra.mxu0 0.0
    %1279 = vmatprep.subr.mxu0 0.0
    %1280 = vmatpush1.msra.mxu0 0.0
    %1281 = vmatprep.subr.mxu0 0.0
    %1282 = vmatpush1.msra.mxu0 0.0
    %1283 = vmatprep.subr.mxu0 0.0
    %1284 = vmatpush1.msra.mxu0 0.0
    %1285 = vmatprep.subr.mxu0 0.0
    %1286 = vmatpush1.msra.mxu0 0.0
    %1287 = vmatprep.subr.mxu0 0.0
    %1288 = vmatpush1.msra.mxu0 0.0
    %1289 = vmatprep.subr.mxu0 0.0
    %1290 = vmatpush1.msra.mxu0 0.0
    %1291 = vmatprep.subr.mxu0 0.0
    %1292 = vmatpush1.msra.mxu0 0.0
    %1293 = vmatprep.subr.mxu0 0.0
    %1294 = vmatpush1.msra.mxu0 0.0
    %1295 = vmatprep.subr.mxu0 0.0
    %1296 = vmatpush1.msra.mxu0 0.0
    %1297 = vmatprep.subr.mxu0 0.0
    %1298 = vmatpush1.msra.mxu0 0.0
    %1299 = vmatprep.subr.mxu0 0.0
    %1300 = vmatpush1.msra.mxu0 0.0
    %1301 = vmatprep.subr.mxu0 0.0
    %1302 = vmatpush1.msra.mxu0 0.0
    %1303 = vmatprep.subr.mxu0 0.0
    %1304 = vmatpush1.msra.mxu0 0.0
    %1305 = vmatprep.subr.mxu0 0.0
    %1306 = vmatpush1.msra.mxu0 0.0
    %1307 = vmatprep.subr.mxu0 0.0
    %1308 = vmatpush1.msra.mxu0 0.0
    %1309 = vmatprep.subr.mxu0 0.0
    %1310 = vmatpush1.msra.mxu0 0.0
    %1311 = vmatprep.subr.mxu0 0.0
    %1312 = vmatpush1.msra.mxu0 0.0
    %1313 = vmatprep.subr.mxu0 0.0
    %1314 = vmatpush1.msra.mxu0 0.0
    %1315 = vmatprep.subr.mxu0 0.0
    %1316 = vmatpush1.msra.mxu0 0.0
    %1317 = vmatprep.subr.mxu0 0.0
    %1318 = vmatpush1.msra.mxu0 0.0
    %1319 = vmatprep.subr.mxu0 0.0
    %1320 = vmatpush1.msra.mxu0 0.0
    %1321 = vmatprep.subr.mxu0 0.0
    %1322 = vmatpush1.msra.mxu0 0.0
    %1323 = vmatprep.subr.mxu0 0.0
    %1324 = vmatpush1.msra.mxu0 0.0
    %1325 = vmatprep.subr.mxu0 0.0
    %1326 = vmatpush1.msra.mxu0 0.0
    %1327 = vmatprep.subr.mxu0 0.0
    %1328 = vmatpush1.msra.mxu0 0.0
    %1329 = vmatprep.subr.mxu0 0.0
    %1330 = vmatpush1.msra.mxu0 0.0
    %1331 = vmatprep.subr.mxu0 0.0
    %1332 = vmatpush1.msra.mxu0 0.0
    %1333 = vmatprep.subr.mxu0 0.0
    %1334 = vmatpush1.msra.mxu0 0.0
    %1335 = vmatprep.subr.mxu0 0.0
    %1336 = vmatpush1.msra.mxu0 0.0
    %1337 = vmatprep.subr.mxu0 0.0
    %1338 = vmatpush1.msra.mxu0 0.0
    %1339 = vmatprep.mubr.f32.mxu0 0.0
    %1340 = vmatmul.mubr.f32.gmra.mrb[0].mxu0 %v1273
    %v1341 = vpop.f32.mrb[0].mxu0
    %v1342 = vadd.f32 0.0, %v1341
    %v1343 = vpop.f32.mrb[0].mxu0
    %1344 = vdwg.mxu0
    %v1346 = vsel %vm489, %v357, 0
    %1348 = vmatprep.subr.mxu0 0.0
    %1349 = vmatpush1.msra.mxu0 %v132
    %1350 = vmatprep.subr.mxu0 0.0
    %1351 = vmatpush1.msra.mxu0 0.0
    %1352 = vmatprep.subr.mxu0 0.0
    %1353 = vmatpush1.msra.mxu0 0.0
    %1354 = vmatprep.subr.mxu0 0.0
    %1355 = vmatpush1.msra.mxu0 0.0
    %1356 = vmatprep.subr.mxu0 0.0
    %1357 = vmatpush1.msra.mxu0 0.0
    %1358 = vmatprep.subr.mxu0 0.0
    %1359 = vmatpush1.msra.mxu0 0.0
    %1360 = vmatprep.subr.mxu0 0.0
    %1361 = vmatpush1.msra.mxu0 0.0
    %1362 = vmatprep.subr.mxu0 0.0
    %1363 = vmatpush1.msra.mxu0 0.0
    %1364 = vmatprep.subr.mxu0 0.0
    %1365 = vmatpush1.msra.mxu0 0.0
    %1366 = vmatprep.subr.mxu0 0.0
    %1367 = vmatpush1.msra.mxu0 0.0
    %1368 = vmatprep.subr.mxu0 0.0
    %1369 = vmatpush1.msra.mxu0 0.0
    %1370 = vmatprep.subr.mxu0 0.0
    %1371 = vmatpush1.msra.mxu0 0.0
    %1372 = vmatprep.subr.mxu0 0.0
    %1373 = vmatpush1.msra.mxu0 0.0
    %1374 = vmatprep.subr.mxu0 0.0
    %1375 = vmatpush1.msra.mxu0 0.0
    %1376 = vmatprep.subr.mxu0 0.0
    %1377 = vmatpush1.msra.mxu0 0.0
    %1378 = vmatprep.subr.mxu0 0.0
    %1379 = vmatpush1.msra.mxu0 0.0
    %1380 = vmatprep.subr.mxu0 0.0
    %1381 = vmatpush1.msra.mxu0 0.0
    %1382 = vmatprep.subr.mxu0 0.0
    %1383 = vmatpush1.msra.mxu0 0.0
    %1384 = vmatprep.subr.mxu0 0.0
    %1385 = vmatpush1.msra.mxu0 0.0
    %1386 = vmatprep.subr.mxu0 0.0
    %1387 = vmatpush1.msra.mxu0 0.0
    %1388 = vmatprep.subr.mxu0 0.0
    %1389 = vmatpush1.msra.mxu0 0.0
    %1390 = vmatprep.subr.mxu0 0.0
    %1391 = vmatpush1.msra.mxu0 0.0
    %1392 = vmatprep.subr.mxu0 0.0
    %1393 = vmatpush1.msra.mxu0 0.0
    %1394 = vmatprep.subr.mxu0 0.0
    %1395 = vmatpush1.msra.mxu0 0.0
    %1396 = vmatprep.subr.mxu0 0.0
    %1397 = vmatpush1.msra.mxu0 0.0
    %1398 = vmatprep.subr.mxu0 0.0
    %1399 = vmatpush1.msra.mxu0 0.0
    %1400 = vmatprep.subr.mxu0 0.0
    %1401 = vmatpush1.msra.mxu0 0.0
    %1402 = vmatprep.subr.mxu0 0.0
    %1403 = vmatpush1.msra.mxu0 0.0
    %1404 = vmatprep.subr.mxu0 0.0
    %1405 = vmatpush1.msra.mxu0 0.0
    %1406 = vmatprep.subr.mxu0 0.0
    %1407 = vmatpush1.msra.mxu0 0.0
    %1408 = vmatprep.subr.mxu0 0.0
    %1409 = vmatpush1.msra.mxu0 0.0
    %1410 = vmatprep.subr.mxu0 0.0
    %1411 = vmatpush1.msra.mxu0 0.0
    %1412 = vmatprep.mubr.f32.mxu0 0.0
    %1413 = vmatmul.mubr.f32.gmra.mrb[0].mxu0 %v1346
    %v1414 = vpop.f32.mrb[0].mxu0
    %v1415 = vadd.f32 0.0, %v1414
    %v1416 = vpop.f32.mrb[0].mxu0
    %1417 = vdwg.mxu0
    %v1419 = vsel %vm489, %v354, 0
    %1421 = vmatprep.subr.mxu0 0.0
    %1422 = vmatpush1.msra.mxu0 %v133
    %1423 = vmatprep.subr.mxu0 0.0
    %1424 = vmatpush1.msra.mxu0 0.0
    %1425 = vmatprep.subr.mxu0 0.0
    %1426 = vmatpush1.msra.mxu0 0.0
    %1427 = vmatprep.subr.mxu0 0.0
    %1428 = vmatpush1.msra.mxu0 0.0
    %1429 = vmatprep.subr.mxu0 0.0
    %1430 = vmatpush1.msra.mxu0 0.0
    %1431 = vmatprep.subr.mxu0 0.0
    %1432 = vmatpush1.msra.mxu0 0.0
    %1433 = vmatprep.subr.mxu0 0.0
    %1434 = vmatpush1.msra.mxu0 0.0
    %1435 = vmatprep.subr.mxu0 0.0
    %1436 = vmatpush1.msra.mxu0 0.0
    %1437 = vmatprep.subr.mxu0 0.0
    %1438 = vmatpush1.msra.mxu0 0.0
    %1439 = vmatprep.subr.mxu0 0.0
    %1440 = vmatpush1.msra.mxu0 0.0
    %1441 = vmatprep.subr.mxu0 0.0
    %1442 = vmatpush1.msra.mxu0 0.0
    %1443 = vmatprep.subr.mxu0 0.0
    %1444 = vmatpush1.msra.mxu0 0.0
    %1445 = vmatprep.subr.mxu0 0.0
    %1446 = vmatpush1.msra.mxu0 0.0
    %1447 = vmatprep.subr.mxu0 0.0
    %1448 = vmatpush1.msra.mxu0 0.0
    %1449 = vmatprep.subr.mxu0 0.0
    %1450 = vmatpush1.msra.mxu0 0.0
    %1451 = vmatprep.subr.mxu0 0.0
    %1452 = vmatpush1.msra.mxu0 0.0
    %1453 = vmatprep.subr.mxu0 0.0
    %1454 = vmatpush1.msra.mxu0 0.0
    %1455 = vmatprep.subr.mxu0 0.0
    %1456 = vmatpush1.msra.mxu0 0.0
    %1457 = vmatprep.subr.mxu0 0.0
    %1458 = vmatpush1.msra.mxu0 0.0
    %1459 = vmatprep.subr.mxu0 0.0
    %1460 = vmatpush1.msra.mxu0 0.0
    %1461 = vmatprep.subr.mxu0 0.0
    %1462 = vmatpush1.msra.mxu0 0.0
    %1463 = vmatprep.subr.mxu0 0.0
    %1464 = vmatpush1.msra.mxu0 0.0
    %1465 = vmatprep.subr.mxu0 0.0
    %1466 = vmatpush1.msra.mxu0 0.0
    %1467 = vmatprep.subr.mxu0 0.0
    %1468 = vmatpush1.msra.mxu0 0.0
    %1469 = vmatprep.subr.mxu0 0.0
    %1470 = vmatpush1.msra.mxu0 0.0
    %1471 = vmatprep.subr.mxu0 0.0
    %1472 = vmatpush1.msra.mxu0 0.0
    %1473 = vmatprep.subr.mxu0 0.0
    %1474 = vmatpush1.msra.mxu0 0.0
    %1475 = vmatprep.subr.mxu0 0.0
    %1476 = vmatpush1.msra.mxu0 0.0
    %1477 = vmatprep.subr.mxu0 0.0
    %1478 = vmatpush1.msra.mxu0 0.0
    %1479 = vmatprep.subr.mxu0 0.0
    %1480 = vmatpush1.msra.mxu0 0.0
    %1481 = vmatprep.subr.mxu0 0.0
    %1482 = vmatpush1.msra.mxu0 0.0
    %1483 = vmatprep.subr.mxu0 0.0
    %1484 = vmatpush1.msra.mxu0 0.0
    %1485 = vmatprep.mubr.f32.mxu0 0.0
    %1486 = vmatmul.mubr.f32.gmra.mrb[0].mxu0 %v1419
    %v1487 = vpop.f32.mrb[0].mxu0
    %v1488 = vadd.f32 0.0, %v1487
    %v1489 = vpop.f32.mrb[0].mxu0
    %1490 = vdwg.mxu0
    %v1492 = vsel %vm489, %v358, 0
    %1494 = vmatprep.subr.mxu0 0.0
    %1495 = vmatpush1.msra.mxu0 %v134
    %1496 = vmatprep.subr.mxu0 0.0
    %1497 = vmatpush1.msra.mxu0 0.0
    %1498 = vmatprep.subr.mxu0 0.0
    %1499 = vmatpush1.msra.mxu0 0.0
    %1500 = vmatprep.subr.mxu0 0.0
    %1501 = vmatpush1.msra.mxu0 0.0
    %1502 = vmatprep.subr.mxu0 0.0
    %1503 = vmatpush1.msra.mxu0 0.0
    %1504 = vmatprep.subr.mxu0 0.0
    %1505 = vmatpush1.msra.mxu0 0.0
    %1506 = vmatprep.subr.mxu0 0.0
    %1507 = vmatpush1.msra.mxu0 0.0
    %1508 = vmatprep.subr.mxu0 0.0
    %1509 = vmatpush1.msra.mxu0 0.0
    %1510 = vmatprep.subr.mxu0 0.0
    %1511 = vmatpush1.msra.mxu0 0.0
    %1512 = vmatprep.subr.mxu0 0.0
    %1513 = vmatpush1.msra.mxu0 0.0
    %1514 = vmatprep.subr.mxu0 0.0
    %1515 = vmatpush1.msra.mxu0 0.0
    %1516 = vmatprep.subr.mxu0 0.0
    %1517 = vmatpush1.msra.mxu0 0.0
    %1518 = vmatprep.subr.mxu0 0.0
    %1519 = vmatpush1.msra.mxu0 0.0
    %1520 = vmatprep.subr.mxu0 0.0
    %1521 = vmatpush1.msra.mxu0 0.0
    %1522 = vmatprep.subr.mxu0 0.0
    %1523 = vmatpush1.msra.mxu0 0.0
    %1524 = vmatprep.subr.mxu0 0.0
    %1525 = vmatpush1.msra.mxu0 0.0
    %1526 = vmatprep.subr.mxu0 0.0
    %1527 = vmatpush1.msra.mxu0 0.0
    %1528 = vmatprep.subr.mxu0 0.0
    %1529 = vmatpush1.msra.mxu0 0.0
    %1530 = vmatprep.subr.mxu0 0.0
    %1531 = vmatpush1.msra.mxu0 0.0
    %1532 = vmatprep.subr.mxu0 0.0
    %1533 = vmatpush1.msra.mxu0 0.0
    %1534 = vmatprep.subr.mxu0 0.0
    %1535 = vmatpush1.msra.mxu0 0.0
    %1536 = vmatprep.subr.mxu0 0.0
    %1537 = vmatpush1.msra.mxu0 0.0
    %1538 = vmatprep.subr.mxu0 0.0
    %1539 = vmatpush1.msra.mxu0 0.0
    %1540 = vmatprep.subr.mxu0 0.0
    %1541 = vmatpush1.msra.mxu0 0.0
    %1542 = vmatprep.subr.mxu0 0.0
    %1543 = vmatpush1.msra.mxu0 0.0
    %1544 = vmatprep.subr.mxu0 0.0
    %1545 = vmatpush1.msra.mxu0 0.0
    %1546 = vmatprep.subr.mxu0 0.0
    %1547 = vmatpush1.msra.mxu0 0.0
    %1548 = vmatprep.subr.mxu0 0.0
    %1549 = vmatpush1.msra.mxu0 0.0
    %1550 = vmatprep.subr.mxu0 0.0
    %1551 = vmatpush1.msra.mxu0 0.0
    %1552 = vmatprep.subr.mxu0 0.0
    %1553 = vmatpush1.msra.mxu0 0.0
    %1554 = vmatprep.subr.mxu0 0.0
    %1555 = vmatpush1.msra.mxu0 0.0
    %1556 = vmatprep.subr.mxu0 0.0
    %1557 = vmatpush1.msra.mxu0 0.0
    %1558 = vmatprep.mubr.f32.mxu0 0.0
    %1559 = vmatmul.mubr.f32.gmra.mrb[0].mxu0 %v1492
    %v1560 = vpop.f32.mrb[0].mxu0
    %v1561 = vadd.f32 0.0, %v1560
    %v1562 = vpop.f32.mrb[0].mxu0
    %1563 = vdwg.mxu0
    %v1564 = vadd.f32 %v952, %v1050
    %v1565 = vadd.f32 %v976, %v1123
    %v1566 = vadd.f32 %v959, %v1196
    %v1567 = vadd.f32 %v977, %v1269
    %v1568 = vadd.f32 %v968, %v1342
    %v1569 = vadd.f32 %v978, %v1415
    %v1570 = vadd.f32 %v975, %v1488
    %v1571 = vadd.f32 %v979, %v1561
    %v1572 = vmul.f32 %v1564, 0.35355338
    %v1573 = vmul.f32 %v1565, 0.35355338
    %v1574 = vmul.f32 %v1566, 0.35355338
    %v1575 = vmul.f32 %v1567, 0.35355338
    %v1576 = vmul.f32 %v1568, 0.35355338
    %v1577 = vmul.f32 %v1569, 0.35355338
    %v1578 = vmul.f32 %v1570, 0.35355338
    %v1579 = vmul.f32 %v1571, 0.35355338
    %v1580 = vld [vmem:[#allocation5] sm:$0xff]
    %v1582 = vcombine.high %v1580, %v1580
    %v1584 = vunpack.c.l.s4 1966171168
    %v1585 = vunpack.c.0.s8 %v1584
    %v1586 = vlaneseq
    %v1587 = vshrl.u32 %v1586, 7
    %v1588 = vsub.s32 %v1585, %v1587
    %v1589 = vrot.slane %v1580, %v1588
    %v1591 = vunpack.c.l.s4 1966171168
    %v1592 = vunpack.c.0.s8 %v1591
    %v1593 = vlaneseq
    %v1594 = vshrl.u32 %v1593, 7
    %v1595 = vsub.s32 %v1592, %v1594
    %v1596 = vrot.slane %v1582, %v1595
    %v1597 = vcombine.high %v1589, %v1589
    %v1598 = vcombine.high %v1596, %v1596
    %v1600 = vunpack.c.l.s4 1966171168
    %v1601 = vunpack.c.0.s8 %v1600
    %v1602 = vlaneseq
    %v1603 = vshrl.u32 %v1602, 7
    %v1604 = vsub.s32 %v1601, %v1603
    %v1605 = vrot.slane %v1589, %v1604
    %v1607 = vunpack.c.l.s4 1966171168
    %v1608 = vunpack.c.0.s8 %v1607
    %v1609 = vlaneseq
    %v1610 = vshrl.u32 %v1609, 7
    %v1611 = vsub.s32 %v1608, %v1610
    %v1612 = vrot.slane %v1596, %v1611
    %v1614 = vunpack.c.l.s4 1966171168
    %v1615 = vunpack.c.0.s8 %v1614
    %v1616 = vlaneseq
    %v1617 = vshrl.u32 %v1616, 7
    %v1618 = vsub.s32 %v1615, %v1617
    %v1619 = vrot.slane %v1597, %v1618
    %v1621 = vunpack.c.l.s4 1966171168
    %v1622 = vunpack.c.0.s8 %v1621
    %v1623 = vlaneseq
    %v1624 = vshrl.u32 %v1623, 7
    %v1625 = vsub.s32 %v1622, %v1624
    %v1626 = vrot.slane %v1598, %v1625
    %v1627 = vcombine.high %v1605, %v1605
    %v1628 = vcombine.high %v1612, %v1612
    %v1629 = vcombine.high %v1619, %v1619
    %v1630 = vcombine.high %v1626, %v1626
    %v1631 = vlaneseq
    %v1632 = vshrl.u32 %v1631, 7
    %v1633 = vsub.s32 0, %v1632
    %v1634 = vrot.slane %v1605, %v1633
    %v1635 = vlaneseq
    %v1636 = vshrl.u32 %v1635, 7
    %v1637 = vsub.s32 0, %v1636
    %v1638 = vrot.slane %v1619, %v1637
    %v1639 = vlaneseq
    %v1640 = vshrl.u32 %v1639, 7
    %v1641 = vsub.s32 0, %v1640
    %v1642 = vrot.slane %v1627, %v1641
    %v1643 = vlaneseq
    %v1644 = vshrl.u32 %v1643, 7
    %v1645 = vsub.s32 0, %v1644
    %v1646 = vrot.slane %v1629, %v1645
    %v1647 = vlaneseq
    %v1648 = vshrl.u32 %v1647, 7
    %v1649 = vsub.s32 0, %v1648
    %v1650 = vrot.slane %v1612, %v1649
    %v1651 = vlaneseq
    %v1652 = vshrl.u32 %v1651, 7
    %v1653 = vsub.s32 0, %v1652
    %v1654 = vrot.slane %v1626, %v1653
    %v1655 = vlaneseq
    %v1656 = vshrl.u32 %v1655, 7
    %v1657 = vsub.s32 0, %v1656
    %v1658 = vrot.slane %v1628, %v1657
    %v1659 = vlaneseq
    %v1660 = vshrl.u32 %v1659, 7
    %v1661 = vsub.s32 0, %v1660
    %v1662 = vrot.slane %v1630, %v1661
    %v1671 = vadd.f32 %v1572, %v1634
    %v1672 = vadd.f32 %v1573, %v1638
    %v1673 = vadd.f32 %v1574, %v1642
    %v1674 = vadd.f32 %v1575, %v1646
    %v1675 = vadd.f32 %v1576, %v1650
    %v1676 = vadd.f32 %v1577, %v1654
    %v1677 = vadd.f32 %v1578, %v1658
    %v1678 = vadd.f32 %v1579, %v1662
    %vm1679 = vcmask 60416
    %v1680 = vsel %vm1679, %v1671, -inf
    %1681 = vmax.xlane.f32.xlu0 %v1680
    %v1682 = vpop.xlane.xlu0 %1681
    %v1683 = vsel %vm1679, %v1672, -inf
    %1684 = vmax.xlane.f32.xlu0 %v1683
    %v1685 = vpop.xlane.xlu0 %1684
    %v1686 = vsel %vm1679, %v1673, -inf
    %1687 = vmax.xlane.f32.xlu0 %v1686
    %v1688 = vpop.xlane.xlu0 %1687
    %v1689 = vsel %vm1679, %v1674, -inf
    %1690 = vmax.xlane.f32.xlu0 %v1689
    %v1691 = vpop.xlane.xlu0 %1690
    %v1692 = vsel %vm1679, %v1675, -inf
    %1693 = vmax.xlane.f32.xlu0 %v1692
    %v1694 = vpop.xlane.xlu0 %1693
    %v1695 = vsel %vm1679, %v1676, -inf
    %1696 = vmax.xlane.f32.xlu0 %v1695
    %v1697 = vpop.xlane.xlu0 %1696
    %v1698 = vsel %vm1679, %v1677, -inf
    %1699 = vmax.xlane.f32.xlu0 %v1698
    %v1700 = vpop.xlane.xlu0 %1699
    %v1701 = vsel %vm1679, %v1678, -inf
    %1702 = vmax.xlane.f32.xlu0 %v1701
    %v1703 = vpop.xlane.xlu0 %1702
    %v1704 = vsub.f32 %v1671, %v1682
    %v1705 = vsub.f32 %v1672, %v1685
    %v1706 = vsub.f32 %v1673, %v1688
    %v1707 = vsub.f32 %v1674, %v1691
    %v1708 = vsub.f32 %v1675, %v1694
    %v1709 = vsub.f32 %v1676, %v1697
    %v1710 = vsub.f32 %v1677, %v1700
    %v1711 = vsub.f32 %v1678, %v1703
    %v1712 = vmul.f32 %v1704, 1.442695
    %v1713 = vpow.pop %v1712
    %v1714 = vmul.f32 %v1705, 1.442695
    %v1715 = vpow.pop %v1714
    %v1716 = vmul.f32 %v1706, 1.442695
    %v1717 = vpow.pop %v1716
    %v1718 = vmul.f32 %v1707, 1.442695
    %v1719 = vpow.pop %v1718
    %v1720 = vmul.f32 %v1708, 1.442695
    %v1721 = vpow.pop %v1720
    %v1722 = vmul.f32 %v1709, 1.442695
    %v1723 = vpow.pop %v1722
    %v1724 = vmul.f32 %v1710, 1.442695
    %v1725 = vpow.pop %v1724
    %v1726 = vmul.f32 %v1711, 1.442695
    %v1727 = vpow.pop %v1726
    %v1728 = vsel %vm1679, %v1713, 0.0
    %1729 = vadd.xlane.f32.xlu0 %v1728
    %v1730 = vpop.xlane.xlu0 %1729
    %v1731 = vsel %vm1679, %v1715, 0.0
    %1732 = vadd.xlane.f32.xlu0 %v1731
    %v1733 = vpop.xlane.xlu0 %1732
    %v1734 = vsel %vm1679, %v1717, 0.0
    %1735 = vadd.xlane.f32.xlu0 %v1734
    %v1736 = vpop.xlane.xlu0 %1735
    %v1737 = vsel %vm1679, %v1719, 0.0
    %1738 = vadd.xlane.f32.xlu0 %v1737
    %v1739 = vpop.xlane.xlu0 %1738
    %v1740 = vsel %vm1679, %v1721, 0.0
    %1741 = vadd.xlane.f32.xlu0 %v1740
    %v1742 = vpop.xlane.xlu0 %1741
    %v1743 = vsel %vm1679, %v1723, 0.0
    %1744 = vadd.xlane.f32.xlu0 %v1743
    %v1745 = vpop.xlane.xlu0 %1744
    %v1746 = vsel %vm1679, %v1725, 0.0
    %1747 = vadd.xlane.f32.xlu0 %v1746
    %v1748 = vpop.xlane.xlu0 %1747
    %v1749 = vsel %vm1679, %v1727, 0.0
    %1750 = vadd.xlane.f32.xlu0 %v1749
    %v1751 = vpop.xlane.xlu0 %1750
    %v1752 = vrcp.pop %v1730
    %v1753 = vmul.f32 %v1713, %v1752
    %v1754 = vrcp.pop %v1733
    %v1755 = vmul.f32 %v1715, %v1754
    %v1756 = vrcp.pop %v1736
    %v1757 = vmul.f32 %v1717, %v1756
    %v1758 = vrcp.pop %v1739
    %v1759 = vmul.f32 %v1719, %v1758
    %v1760 = vrcp.pop %v1742
    %v1761 = vmul.f32 %v1721, %v1760
    %v1762 = vrcp.pop %v1745
    %v1763 = vmul.f32 %v1723, %v1762
    %v1764 = vrcp.pop %v1748
    %v1765 = vmul.f32 %v1725, %v1764
    %v1766 = vrcp.pop %v1751
    %v1767 = vmul.f32 %v1727, %v1766
    %1768 = vrot.lane.b32.xlu0 %v273, 64
    %v1769 = vpop.permute.xlu0 %1768
    %1770 = vrot.lane.b32.xlu0 %v283, 64
    %v1771 = vpop.permute.xlu0 %1770
    %1772 = vrot.lane.b32.xlu0 %v286, 64
    %v1773 = vpop.permute.xlu0 %1772
    %1774 = vrot.lane.b32.xlu0 %v289, 64
    %v1775 = vpop.permute.xlu0 %1774
    %1780 = vxpose.xlu0.b32.start [1/16] %v1769, 128
    %1781 = vxpose.xlu0.b32.cont [2/16] 0.0, 128
    %1782 = vxpose.xlu0.b32.cont [3/16] 0.0, 128
    %1783 = vxpose.xlu0.b32.cont [4/16] 0.0, 128
    %1784 = vxpose.xlu0.b32.cont [5/16] 0.0, 128
    %1785 = vxpose.xlu0.b32.cont [6/16] 0.0, 128
    %1786 = vxpose.xlu0.b32.cont [7/16] 0.0, 128
    %1787 = vxpose.xlu0.b32.cont [8/16] 0.0, 128
    %1788 = vxpose.xlu0.b32.cont [9/16] 0.0, 128
    %1789 = vxpose.xlu0.b32.cont [10/16] 0.0, 128
    %1790 = vxpose.xlu0.b32.cont [11/16] 0.0, 128
    %1791 = vxpose.xlu0.b32.cont [12/16] 0.0, 128
    %1792 = vxpose.xlu0.b32.cont [13/16] 0.0, 128
    %1793 = vxpose.xlu0.b32.cont [14/16] 0.0, 128
    %1794 = vxpose.xlu0.b32.cont [15/16] 0.0, 128
    %1795 = vxpose.xlu0.b32.end [16/16] 0.0, 128
    %v1796 = vpop.trf.xlu0
    %v1797 = vpop.trf.xlu0
    %v1798 = vpop.trf.xlu0
    %v1799 = vpop.trf.xlu0
    %v1800 = vpop.trf.xlu0
    %v1801 = vpop.trf.xlu0
    %v1802 = vpop.trf.xlu0
    %v1803 = vpop.trf.xlu0
    %v1804 = vpop.trf.xlu0
    %v1805 = vpop.trf.xlu0
    %v1806 = vpop.trf.xlu0
    %v1807 = vpop.trf.xlu0
    %v1808 = vpop.trf.xlu0
    %v1809 = vpop.trf.xlu0
    %v1810 = vpop.trf.xlu0
    %v1811 = vpop.trf.xlu0
    %1812 = vxpose.xlu0.b32.start [1/16] %v1771, 128
    %1813 = vxpose.xlu0.b32.cont [2/16] 0.0, 128
    %1814 = vxpose.xlu0.b32.cont [3/16] 0.0, 128
    %1815 = vxpose.xlu0.b32.cont [4/16] 0.0, 128
    %1816 = vxpose.xlu0.b32.cont [5/16] 0.0, 128
    %1817 = vxpose.xlu0.b32.cont [6/16] 0.0, 128
    %1818 = vxpose.xlu0.b32.cont [7/16] 0.0, 128
    %1819 = vxpose.xlu0.b32.cont [8/16] 0.0, 128
    %1820 = vxpose.xlu0.b32.cont [9/16] 0.0, 128
    %1821 = vxpose.xlu0.b32.cont [10/16] 0.0, 128
    %1822 = vxpose.xlu0.b32.cont [11/16] 0.0, 128
    %1823 = vxpose.xlu0.b32.cont [12/16] 0.0, 128
    %1824 = vxpose.xlu0.b32.cont [13/16] 0.0, 128
    %1825 = vxpose.xlu0.b32.cont [14/16] 0.0, 128
    %1826 = vxpose.xlu0.b32.cont [15/16] 0.0, 128
    %1827 = vxpose.xlu0.b32.end [16/16] 0.0, 128
    %v1828 = vpop.trf.xlu0
    %v1829 = vpop.trf.xlu0
    %v1830 = vpop.trf.xlu0
    %v1831 = vpop.trf.xlu0
    %v1832 = vpop.trf.xlu0
    %v1833 = vpop.trf.xlu0
    %v1834 = vpop.trf.xlu0
    %v1835 = vpop.trf.xlu0
    %v1836 = vpop.trf.xlu0
    %v1837 = vpop.trf.xlu0
    %v1838 = vpop.trf.xlu0
    %v1839 = vpop.trf.xlu0
    %v1840 = vpop.trf.xlu0
    %v1841 = vpop.trf.xlu0
    %v1842 = vpop.trf.xlu0
    %v1843 = vpop.trf.xlu0
    %1844 = vxpose.xlu0.b32.start [1/16] %v1773, 128
    %1845 = vxpose.xlu0.b32.cont [2/16] 0.0, 128
    %1846 = vxpose.xlu0.b32.cont [3/16] 0.0, 128
    %1847 = vxpose.xlu0.b32.cont [4/16] 0.0, 128
    %1848 = vxpose.xlu0.b32.cont [5/16] 0.0, 128
    %1849 = vxpose.xlu0.b32.cont [6/16] 0.0, 128
    %1850 = vxpose.xlu0.b32.cont [7/16] 0.0, 128
    %1851 = vxpose.xlu0.b32.cont [8/16] 0.0, 128
    %1852 = vxpose.xlu0.b32.cont [9/16] 0.0, 128
    %1853 = vxpose.xlu0.b32.cont [10/16] 0.0, 128
    %1854 = vxpose.xlu0.b32.cont [11/16] 0.0, 128
    %1855 = vxpose.xlu0.b32.cont [12/16] 0.0, 128
    %1856 = vxpose.xlu0.b32.cont [13/16] 0.0, 128
    %1857 = vxpose.xlu0.b32.cont [14/16] 0.0, 128
    %1858 = vxpose.xlu0.b32.cont [15/16] 0.0, 128
    %1859 = vxpose.xlu0.b32.end [16/16] 0.0, 128
    %v1860 = vpop.trf.xlu0
    %v1861 = vpop.trf.xlu0
    %v1862 = vpop.trf.xlu0
    %v1863 = vpop.trf.xlu0
    %v1864 = vpop.trf.xlu0
    %v1865 = vpop.trf.xlu0
    %v1866 = vpop.trf.xlu0
    %v1867 = vpop.trf.xlu0
    %v1868 = vpop.trf.xlu0
    %v1869 = vpop.trf.xlu0
    %v1870 = vpop.trf.xlu0
    %v1871 = vpop.trf.xlu0
    %v1872 = vpop.trf.xlu0
    %v1873 = vpop.trf.xlu0
    %v1874 = vpop.trf.xlu0
    %v1875 = vpop.trf.xlu0
    %1876 = vxpose.xlu0.b32.start [1/16] %v1775, 128
    %1877 = vxpose.xlu0.b32.cont [2/16] 0.0, 128
    %1878 = vxpose.xlu0.b32.cont [3/16] 0.0, 128
    %1879 = vxpose.xlu0.b32.cont [4/16] 0.0, 128
    %1880 = vxpose.xlu0.b32.cont [5/16] 0.0, 128
    %1881 = vxpose.xlu0.b32.cont [6/16] 0.0, 128
    %1882 = vxpose.xlu0.b32.cont [7/16] 0.0, 128
    %1883 = vxpose.xlu0.b32.cont [8/16] 0.0, 128
    %1884 = vxpose.xlu0.b32.cont [9/16] 0.0, 128
    %1885 = vxpose.xlu0.b32.cont [10/16] 0.0, 128
    %1886 = vxpose.xlu0.b32.cont [11/16] 0.0, 128
    %1887 = vxpose.xlu0.b32.cont [12/16] 0.0, 128
    %1888 = vxpose.xlu0.b32.cont [13/16] 0.0, 128
    %1889 = vxpose.xlu0.b32.cont [14/16] 0.0, 128
    %1890 = vxpose.xlu0.b32.cont [15/16] 0.0, 128
    %1891 = vxpose.xlu0.b32.end [16/16] 0.0, 128
    %v1892 = vpop.trf.xlu0
    %v1893 = vpop.trf.xlu0
    %v1894 = vpop.trf.xlu0
    %v1895 = vpop.trf.xlu0
    %v1896 = vpop.trf.xlu0
    %v1897 = vpop.trf.xlu0
    %v1898 = vpop.trf.xlu0
    %v1899 = vpop.trf.xlu0
    %v1900 = vpop.trf.xlu0
    %v1901 = vpop.trf.xlu0
    %v1902 = vpop.trf.xlu0
    %v1903 = vpop.trf.xlu0
    %v1904 = vpop.trf.xlu0
    %v1905 = vpop.trf.xlu0
    %v1906 = vpop.trf.xlu0
    %v1907 = vpop.trf.xlu0
    %1908 = vxpose.xlu0.b32.start [1/16] %v1753, 128
    %1909 = vxpose.xlu0.b32.cont [2/16] 0.0, 128
    %1910 = vxpose.xlu0.b32.cont [3/16] 0.0, 128
    %1911 = vxpose.xlu0.b32.cont [4/16] 0.0, 128
    %1912 = vxpose.xlu0.b32.cont [5/16] 0.0, 128
    %1913 = vxpose.xlu0.b32.cont [6/16] 0.0, 128
    %1914 = vxpose.xlu0.b32.cont [7/16] 0.0, 128
    %1915 = vxpose.xlu0.b32.cont [8/16] 0.0, 128
    %1916 = vxpose.xlu0.b32.cont [9/16] 0.0, 128
    %1917 = vxpose.xlu0.b32.cont [10/16] 0.0, 128
    %1918 = vxpose.xlu0.b32.cont [11/16] 0.0, 128
    %1919 = vxpose.xlu0.b32.cont [12/16] 0.0, 128
    %1920 = vxpose.xlu0.b32.cont [13/16] 0.0, 128
    %1921 = vxpose.xlu0.b32.cont [14/16] 0.0, 128
    %1922 = vxpose.xlu0.b32.cont [15/16] 0.0, 128
    %1923 = vxpose.xlu0.b32.end [16/16] 0.0, 128
    %v1924 = vpop.trf.xlu0
    %v1925 = vpop.trf.xlu0
    %v1926 = vpop.trf.xlu0
    %v1927 = vpop.trf.xlu0
    %v1928 = vpop.trf.xlu0
    %v1929 = vpop.trf.xlu0
    %v1930 = vpop.trf.xlu0
    %v1931 = vpop.trf.xlu0
    %v1932 = vpop.trf.xlu0
    %v1933 = vpop.trf.xlu0
    %v1934 = vpop.trf.xlu0
    %v1935 = vpop.trf.xlu0
    %v1936 = vpop.trf.xlu0
    %v1937 = vpop.trf.xlu0
    %v1938 = vpop.trf.xlu0
    %v1939 = vpop.trf.xlu0
    %1940 = vxpose.xlu0.b32.start [1/16] %v1755, 128
    %1941 = vxpose.xlu0.b32.cont [2/16] 0.0, 128
    %1942 = vxpose.xlu0.b32.cont [3/16] 0.0, 128
    %1943 = vxpose.xlu0.b32.cont [4/16] 0.0, 128
    %1944 = vxpose.xlu0.b32.cont [5/16] 0.0, 128
    %1945 = vxpose.xlu0.b32.cont [6/16] 0.0, 128
    %1946 = vxpose.xlu0.b32.cont [7/16] 0.0, 128
    %1947 = vxpose.xlu0.b32.cont [8/16] 0.0, 128
    %1948 = vxpose.xlu0.b32.cont [9/16] 0.0, 128
    %1949 = vxpose.xlu0.b32.cont [10/16] 0.0, 128
    %1950 = vxpose.xlu0.b32.cont [11/16] 0.0, 128
    %1951 = vxpose.xlu0.b32.cont [12/16] 0.0, 128
    %1952 = vxpose.xlu0.b32.cont [13/16] 0.0, 128
    %1953 = vxpose.xlu0.b32.cont [14/16] 0.0, 128
    %1954 = vxpose.xlu0.b32.cont [15/16] 0.0, 128
    %1955 = vxpose.xlu0.b32.end [16/16] 0.0, 128
    %v1956 = vpop.trf.xlu0
    %v1957 = vpop.trf.xlu0
    %v1958 = vpop.trf.xlu0
    %v1959 = vpop.trf.xlu0
    %v1960 = vpop.trf.xlu0
    %v1961 = vpop.trf.xlu0
    %v1962 = vpop.trf.xlu0
    %v1963 = vpop.trf.xlu0
    %v1964 = vpop.trf.xlu0
    %v1965 = vpop.trf.xlu0
    %v1966 = vpop.trf.xlu0
    %v1967 = vpop.trf.xlu0
    %v1968 = vpop.trf.xlu0
    %v1969 = vpop.trf.xlu0
    %v1970 = vpop.trf.xlu0
    %v1971 = vpop.trf.xlu0
    %1972 = vxpose.xlu0.b32.start [1/16] %v1757, 128
    %1973 = vxpose.xlu0.b32.cont [2/16] 0.0, 128
    %1974 = vxpose.xlu0.b32.cont [3/16] 0.0, 128
    %1975 = vxpose.xlu0.b32.cont [4/16] 0.0, 128
    %1976 = vxpose.xlu0.b32.cont [5/16] 0.0, 128
    %1977 = vxpose.xlu0.b32.cont [6/16] 0.0, 128
    %1978 = vxpose.xlu0.b32.cont [7/16] 0.0, 128
    %1979 = vxpose.xlu0.b32.cont [8/16] 0.0, 128
    %1980 = vxpose.xlu0.b32.cont [9/16] 0.0, 128
    %1981 = vxpose.xlu0.b32.cont [10/16] 0.0, 128
    %1982 = vxpose.xlu0.b32.cont [11/16] 0.0, 128
    %1983 = vxpose.xlu0.b32.cont [12/16] 0.0, 128
    %1984 = vxpose.xlu0.b32.cont [13/16] 0.0, 128
    %1985 = vxpose.xlu0.b32.cont [14/16] 0.0, 128
    %1986 = vxpose.xlu0.b32.cont [15/16] 0.0, 128
    %1987 = vxpose.xlu0.b32.end [16/16] 0.0, 128
    %v1988 = vpop.trf.xlu0
    %v1989 = vpop.trf.xlu0
    %v1990 = vpop.trf.xlu0
    %v1991 = vpop.trf.xlu0
    %v1992 = vpop.trf.xlu0
    %v1993 = vpop.trf.xlu0
    %v1994 = vpop.trf.xlu0
    %v1995 = vpop.trf.xlu0
    %v1996 = vpop.trf.xlu0
    %v1997 = vpop.trf.xlu0
    %v1998 = vpop.trf.xlu0
    %v1999 = vpop.trf.xlu0
    %v2000 = vpop.trf.xlu0
    %v2001 = vpop.trf.xlu0
    %v2002 = vpop.trf.xlu0
    %v2003 = vpop.trf.xlu0
    %2004 = vxpose.xlu0.b32.start [1/16] %v1759, 128
    %2005 = vxpose.xlu0.b32.cont [2/16] 0.0, 128
    %2006 = vxpose.xlu0.b32.cont [3/16] 0.0, 128
    %2007 = vxpose.xlu0.b32.cont [4/16] 0.0, 128
    %2008 = vxpose.xlu0.b32.cont [5/16] 0.0, 128
    %2009 = vxpose.xlu0.b32.cont [6/16] 0.0, 128
    %2010 = vxpose.xlu0.b32.cont [7/16] 0.0, 128
    %2011 = vxpose.xlu0.b32.cont [8/16] 0.0, 128
    %2012 = vxpose.xlu0.b32.cont [9/16] 0.0, 128
    %2013 = vxpose.xlu0.b32.cont [10/16] 0.0, 128
    %2014 = vxpose.xlu0.b32.cont [11/16] 0.0, 128
    %2015 = vxpose.xlu0.b32.cont [12/16] 0.0, 128
    %2016 = vxpose.xlu0.b32.cont [13/16] 0.0, 128
    %2017 = vxpose.xlu0.b32.cont [14/16] 0.0, 128
    %2018 = vxpose.xlu0.b32.cont [15/16] 0.0, 128
    %2019 = vxpose.xlu0.b32.end [16/16] 0.0, 128
    %v2020 = vpop.trf.xlu0
    %v2021 = vpop.trf.xlu0
    %v2022 = vpop.trf.xlu0
    %v2023 = vpop.trf.xlu0
    %v2024 = vpop.trf.xlu0
    %v2025 = vpop.trf.xlu0
    %v2026 = vpop.trf.xlu0
    %v2027 = vpop.trf.xlu0
    %v2028 = vpop.trf.xlu0
    %v2029 = vpop.trf.xlu0
    %v2030 = vpop.trf.xlu0
    %v2031 = vpop.trf.xlu0
    %v2032 = vpop.trf.xlu0
    %v2033 = vpop.trf.xlu0
    %v2034 = vpop.trf.xlu0
    %v2035 = vpop.trf.xlu0
    %2036 = vxpose.xlu0.b32.start [1/16] %v1761, 128
    %2037 = vxpose.xlu0.b32.cont [2/16] 0.0, 128
    %2038 = vxpose.xlu0.b32.cont [3/16] 0.0, 128
    %2039 = vxpose.xlu0.b32.cont [4/16] 0.0, 128
    %2040 = vxpose.xlu0.b32.cont [5/16] 0.0, 128
    %2041 = vxpose.xlu0.b32.cont [6/16] 0.0, 128
    %2042 = vxpose.xlu0.b32.cont [7/16] 0.0, 128
    %2043 = vxpose.xlu0.b32.cont [8/16] 0.0, 128
    %2044 = vxpose.xlu0.b32.cont [9/16] 0.0, 128
    %2045 = vxpose.xlu0.b32.cont [10/16] 0.0, 128
    %2046 = vxpose.xlu0.b32.cont [11/16] 0.0, 128
    %2047 = vxpose.xlu0.b32.cont [12/16] 0.0, 128
    %2048 = vxpose.xlu0.b32.cont [13/16] 0.0, 128
    %2049 = vxpose.xlu0.b32.cont [14/16] 0.0, 128
    %2050 = vxpose.xlu0.b32.cont [15/16] 0.0, 128
    %2051 = vxpose.xlu0.b32.end [16/16] 0.0, 128
    %v2052 = vpop.trf.xlu0
    %v2053 = vpop.trf.xlu0
    %v2054 = vpop.trf.xlu0
    %v2055 = vpop.trf.xlu0
    %v2056 = vpop.trf.xlu0
    %v2057 = vpop.trf.xlu0
    %v2058 = vpop.trf.xlu0
    %v2059 = vpop.trf.xlu0
    %v2060 = vpop.trf.xlu0
    %v2061 = vpop.trf.xlu0
    %v2062 = vpop.trf.xlu0
    %v2063 = vpop.trf.xlu0
    %v2064 = vpop.trf.xlu0
    %v2065 = vpop.trf.xlu0
    %v2066 = vpop.trf.xlu0
    %v2067 = vpop.trf.xlu0
    %2068 = vxpose.xlu0.b32.start [1/16] %v1763, 128
    %2069 = vxpose.xlu0.b32.cont [2/16] 0.0, 128
    %2070 = vxpose.xlu0.b32.cont [3/16] 0.0, 128
    %2071 = vxpose.xlu0.b32.cont [4/16] 0.0, 128
    %2072 = vxpose.xlu0.b32.cont [5/16] 0.0, 128
    %2073 = vxpose.xlu0.b32.cont [6/16] 0.0, 128
    %2074 = vxpose.xlu0.b32.cont [7/16] 0.0, 128
    %2075 = vxpose.xlu0.b32.cont [8/16] 0.0, 128
    %2076 = vxpose.xlu0.b32.cont [9/16] 0.0, 128
    %2077 = vxpose.xlu0.b32.cont [10/16] 0.0, 128
    %2078 = vxpose.xlu0.b32.cont [11/16] 0.0, 128
    %2079 = vxpose.xlu0.b32.cont [12/16] 0.0, 128
    %2080 = vxpose.xlu0.b32.cont [13/16] 0.0, 128
    %2081 = vxpose.xlu0.b32.cont [14/16] 0.0, 128
    %2082 = vxpose.xlu0.b32.cont [15/16] 0.0, 128
    %2083 = vxpose.xlu0.b32.end [16/16] 0.0, 128
    %v2084 = vpop.trf.xlu0
    %v2085 = vpop.trf.xlu0
    %v2086 = vpop.trf.xlu0
    %v2087 = vpop.trf.xlu0
    %v2088 = vpop.trf.xlu0
    %v2089 = vpop.trf.xlu0
    %v2090 = vpop.trf.xlu0
    %v2091 = vpop.trf.xlu0
    %v2092 = vpop.trf.xlu0
    %v2093 = vpop.trf.xlu0
    %v2094 = vpop.trf.xlu0
    %v2095 = vpop.trf.xlu0
    %v2096 = vpop.trf.xlu0
    %v2097 = vpop.trf.xlu0
    %v2098 = vpop.trf.xlu0
    %v2099 = vpop.trf.xlu0
    %2100 = vxpose.xlu0.b32.start [1/16] %v1765, 128
    %2101 = vxpose.xlu0.b32.cont [2/16] 0.0, 128
    %2102 = vxpose.xlu0.b32.cont [3/16] 0.0, 128
    %2103 = vxpose.xlu0.b32.cont [4/16] 0.0, 128
    %2104 = vxpose.xlu0.b32.cont [5/16] 0.0, 128
    %2105 = vxpose.xlu0.b32.cont [6/16] 0.0, 128
    %2106 = vxpose.xlu0.b32.cont [7/16] 0.0, 128
    %2107 = vxpose.xlu0.b32.cont [8/16] 0.0, 128
    %2108 = vxpose.xlu0.b32.cont [9/16] 0.0, 128
    %2109 = vxpose.xlu0.b32.cont [10/16] 0.0, 128
    %2110 = vxpose.xlu0.b32.cont [11/16] 0.0, 128
    %2111 = vxpose.xlu0.b32.cont [12/16] 0.0, 128
    %2112 = vxpose.xlu0.b32.cont [13/16] 0.0, 128
    %2113 = vxpose.xlu0.b32.cont [14/16] 0.0, 128
    %2114 = vxpose.xlu0.b32.cont [15/16] 0.0, 128
    %2115 = vxpose.xlu0.b32.end [16/16] 0.0, 128
    %v2116 = vpop.trf.xlu0
    %v2117 = vpop.trf.xlu0
    %v2118 = vpop.trf.xlu0
    %v2119 = vpop.trf.xlu0
    %v2120 = vpop.trf.xlu0
    %v2121 = vpop.trf.xlu0
    %v2122 = vpop.trf.xlu0
    %v2123 = vpop.trf.xlu0
    %v2124 = vpop.trf.xlu0
    %v2125 = vpop.trf.xlu0
    %v2126 = vpop.trf.xlu0
    %v2127 = vpop.trf.xlu0
    %v2128 = vpop.trf.xlu0
    %v2129 = vpop.trf.xlu0
    %v2130 = vpop.trf.xlu0
    %v2131 = vpop.trf.xlu0
    %2132 = vxpose.xlu0.b32.start [1/16] %v1767, 128
    %2133 = vxpose.xlu0.b32.cont [2/16] 0.0, 128
    %2134 = vxpose.xlu0.b32.cont [3/16] 0.0, 128
    %2135 = vxpose.xlu0.b32.cont [4/16] 0.0, 128
    %2136 = vxpose.xlu0.b32.cont [5/16] 0.0, 128
    %2137 = vxpose.xlu0.b32.cont [6/16] 0.0, 128
    %2138 = vxpose.xlu0.b32.cont [7/16] 0.0, 128
    %2139 = vxpose.xlu0.b32.cont [8/16] 0.0, 128
    %2140 = vxpose.xlu0.b32.cont [9/16] 0.0, 128
    %2141 = vxpose.xlu0.b32.cont [10/16] 0.0, 128
    %2142 = vxpose.xlu0.b32.cont [11/16] 0.0, 128
    %2143 = vxpose.xlu0.b32.cont [12/16] 0.0, 128
    %2144 = vxpose.xlu0.b32.cont [13/16] 0.0, 128
    %2145 = vxpose.xlu0.b32.cont [14/16] 0.0, 128
    %2146 = vxpose.xlu0.b32.cont [15/16] 0.0, 128
    %2147 = vxpose.xlu0.b32.end [16/16] 0.0, 128
    %v2148 = vpop.trf.xlu0
    %v2149 = vpop.trf.xlu0
    %v2150 = vpop.trf.xlu0
    %v2151 = vpop.trf.xlu0
    %v2152 = vpop.trf.xlu0
    %v2153 = vpop.trf.xlu0
    %v2154 = vpop.trf.xlu0
    %v2155 = vpop.trf.xlu0
    %v2156 = vpop.trf.xlu0
    %v2157 = vpop.trf.xlu0
    %v2158 = vpop.trf.xlu0
    %v2159 = vpop.trf.xlu0
    %v2160 = vpop.trf.xlu0
    %v2161 = vpop.trf.xlu0
    %v2162 = vpop.trf.xlu0
    %v2163 = vpop.trf.xlu0
    %v2164 = vcombine.low %v1924, %v1988
    %v2165 = vcombine.high %v1924, %v1988
    %v2167 = vunpack.c.l.s4 1983009808
    %v2168 = vunpack.c.0.s8 %v2167
    %v2169 = vlaneseq
    %v2170 = vshrl.u32 %v2169, 7
    %v2171 = vsub.s32 %v2168, %v2170
    %v2172 = vrot.slane %v2164, %v2171
    %v2174 = vunpack.c.l.s4 1983009808
    %v2175 = vunpack.c.0.s8 %v2174
    %v2176 = vlaneseq
    %v2177 = vshrl.u32 %v2176, 7
    %v2178 = vsub.s32 %v2175, %v2177
    %v2179 = vrot.slane %v2165, %v2178
    %v2180 = vcombine.low %v1956, %v2020
    %v2181 = vcombine.high %v1956, %v2020
    %v2183 = vunpack.c.l.s4 1983009808
    %v2184 = vunpack.c.0.s8 %v2183
    %v2185 = vlaneseq
    %v2186 = vshrl.u32 %v2185, 7
    %v2187 = vsub.s32 %v2184, %v2186
    %v2188 = vrot.slane %v2180, %v2187
    %v2190 = vunpack.c.l.s4 1983009808
    %v2191 = vunpack.c.0.s8 %v2190
    %v2192 = vlaneseq
    %v2193 = vshrl.u32 %v2192, 7
    %v2194 = vsub.s32 %v2191, %v2193
    %v2195 = vrot.slane %v2181, %v2194
    %v2196 = vcombine.low %v2052, %v2116
    %v2197 = vcombine.high %v2052, %v2116
    %v2199 = vunpack.c.l.s4 1983009808
    %v2200 = vunpack.c.0.s8 %v2199
    %v2201 = vlaneseq
    %v2202 = vshrl.u32 %v2201, 7
    %v2203 = vsub.s32 %v2200, %v2202
    %v2204 = vrot.slane %v2196, %v2203
    %v2206 = vunpack.c.l.s4 1983009808
    %v2207 = vunpack.c.0.s8 %v2206
    %v2208 = vlaneseq
    %v2209 = vshrl.u32 %v2208, 7
    %v2210 = vsub.s32 %v2207, %v2209
    %v2211 = vrot.slane %v2197, %v2210
    %v2212 = vcombine.low %v2084, %v2148
    %v2213 = vcombine.high %v2084, %v2148
    %v2215 = vunpack.c.l.s4 1983009808
    %v2216 = vunpack.c.0.s8 %v2215
    %v2217 = vlaneseq
    %v2218 = vshrl.u32 %v2217, 7
    %v2219 = vsub.s32 %v2216, %v2218
    %v2220 = vrot.slane %v2212, %v2219
    %v2222 = vunpack.c.l.s4 1983009808
    %v2223 = vunpack.c.0.s8 %v2222
    %v2224 = vlaneseq
    %v2225 = vshrl.u32 %v2224, 7
    %v2226 = vsub.s32 %v2223, %v2225
    %v2227 = vrot.slane %v2213, %v2226
    %v2228 = vcombine.low %v2172, %v2188
    %v2229 = vcombine.high %v2172, %v2188
    %v2231 = vunpack.c.l.s4 1934713408
    %v2232 = vunpack.c.0.s8 %v2231
    %v2233 = vlaneseq
    %v2234 = vshrl.u32 %v2233, 7
    %v2235 = vsub.s32 %v2232, %v2234
    %v2236 = vrot.slane %v2228, %v2235
    %v2238 = vunpack.c.l.s4 1934713408
    %v2239 = vunpack.c.0.s8 %v2238
    %v2240 = vlaneseq
    %v2241 = vshrl.u32 %v2240, 7
    %v2242 = vsub.s32 %v2239, %v2241
    %v2243 = vrot.slane %v2229, %v2242
    %v2244 = vcombine.low %v2179, %v2195
    %v2245 = vcombine.high %v2179, %v2195
    %v2247 = vunpack.c.l.s4 1934713408
    %v2248 = vunpack.c.0.s8 %v2247
    %v2249 = vlaneseq
    %v2250 = vshrl.u32 %v2249, 7
    %v2251 = vsub.s32 %v2248, %v2250
    %v2252 = vrot.slane %v2244, %v2251
    %v2254 = vunpack.c.l.s4 1934713408
    %v2255 = vunpack.c.0.s8 %v2254
    %v2256 = vlaneseq
    %v2257 = vshrl.u32 %v2256, 7
    %v2258 = vsub.s32 %v2255, %v2257
    %v2259 = vrot.slane %v2245, %v2258
    %v2260 = vcombine.low %v2204, %v2220
    %v2261 = vcombine.high %v2204, %v2220
    %v2263 = vunpack.c.l.s4 1934713408
    %v2264 = vunpack.c.0.s8 %v2263
    %v2265 = vlaneseq
    %v2266 = vshrl.u32 %v2265, 7
    %v2267 = vsub.s32 %v2264, %v2266
    %v2268 = vrot.slane %v2260, %v2267
    %v2270 = vunpack.c.l.s4 1934713408
    %v2271 = vunpack.c.0.s8 %v2270
    %v2272 = vlaneseq
    %v2273 = vshrl.u32 %v2272, 7
    %v2274 = vsub.s32 %v2271, %v2273
    %v2275 = vrot.slane %v2261, %v2274
    %v2276 = vcombine.low %v2211, %v2227
    %v2277 = vcombine.high %v2211, %v2227
    %v2279 = vunpack.c.l.s4 1934713408
    %v2280 = vunpack.c.0.s8 %v2279
    %v2281 = vlaneseq
    %v2282 = vshrl.u32 %v2281, 7
    %v2283 = vsub.s32 %v2280, %v2282
    %v2284 = vrot.slane %v2276, %v2283
    %v2286 = vunpack.c.l.s4 1934713408
    %v2287 = vunpack.c.0.s8 %v2286
    %v2288 = vlaneseq
    %v2289 = vshrl.u32 %v2288, 7
    %v2290 = vsub.s32 %v2287, %v2289
    %v2291 = vrot.slane %v2277, %v2290
    %v2292 = vcombine.low %v2236, %v2268
    %v2293 = vcombine.high %v2236, %v2268
    %v2294 = vcombine.low %v2243, %v2275
    %v2295 = vcombine.high %v2243, %v2275
    %v2296 = vcombine.low %v2252, %v2284
    %v2297 = vcombine.high %v2252, %v2284
    %v2298 = vcombine.low %v2259, %v2291
    %v2299 = vcombine.high %v2259, %v2291
    %2300 = vxpose.xlu0.b32.start [1/16] %v2292, 128
    %2301 = vxpose.xlu0.b32.cont [2/16] 0.0, 128
    %2302 = vxpose.xlu0.b32.cont [3/16] 0.0, 128
    %2303 = vxpose.xlu0.b32.cont [4/16] 0.0, 128
    %2304 = vxpose.xlu0.b32.cont [5/16] 0.0, 128
    %2305 = vxpose.xlu0.b32.cont [6/16] 0.0, 128
    %2306 = vxpose.xlu0.b32.cont [7/16] 0.0, 128
    %2307 = vxpose.xlu0.b32.cont [8/16] 0.0, 128
    %2308 = vxpose.xlu0.b32.cont [9/16] 0.0, 128
    %2309 = vxpose.xlu0.b32.cont [10/16] 0.0, 128
    %2310 = vxpose.xlu0.b32.cont [11/16] 0.0, 128
    %2311 = vxpose.xlu0.b32.cont [12/16] 0.0, 128
    %2312 = vxpose.xlu0.b32.cont [13/16] 0.0, 128
    %2313 = vxpose.xlu0.b32.cont [14/16] 0.0, 128
    %2314 = vxpose.xlu0.b32.cont [15/16] 0.0, 128
    %2315 = vxpose.xlu0.b32.end [16/16] 0.0, 128
    %v2316 = vpop.trf.xlu0
    %v2317 = vpop.trf.xlu0
    %v2318 = vpop.trf.xlu0
    %v2319 = vpop.trf.xlu0
    %v2320 = vpop.trf.xlu0
    %v2321 = vpop.trf.xlu0
    %v2322 = vpop.trf.xlu0
    %v2323 = vpop.trf.xlu0
    %v2324 = vpop.trf.xlu0
    %v2325 = vpop.trf.xlu0
    %v2326 = vpop.trf.xlu0
    %v2327 = vpop.trf.xlu0
    %v2328 = vpop.trf.xlu0
    %v2329 = vpop.trf.xlu0
    %v2330 = vpop.trf.xlu0
    %v2331 = vpop.trf.xlu0
    %2332 = vxpose.xlu0.b32.start [1/16] %v2293, 128
    %2333 = vxpose.xlu0.b32.cont [2/16] 0.0, 128
    %2334 = vxpose.xlu0.b32.cont [3/16] 0.0, 128
    %2335 = vxpose.xlu0.b32.cont [4/16] 0.0, 128
    %2336 = vxpose.xlu0.b32.cont [5/16] 0.0, 128
    %2337 = vxpose.xlu0.b32.cont [6/16] 0.0, 128
    %2338 = vxpose.xlu0.b32.cont [7/16] 0.0, 128
    %2339 = vxpose.xlu0.b32.cont [8/16] 0.0, 128
    %2340 = vxpose.xlu0.b32.cont [9/16] 0.0, 128
    %2341 = vxpose.xlu0.b32.cont [10/16] 0.0, 128
    %2342 = vxpose.xlu0.b32.cont [11/16] 0.0, 128
    %2343 = vxpose.xlu0.b32.cont [12/16] 0.0, 128
    %2344 = vxpose.xlu0.b32.cont [13/16] 0.0, 128
    %2345 = vxpose.xlu0.b32.cont [14/16] 0.0, 128
    %2346 = vxpose.xlu0.b32.cont [15/16] 0.0, 128
    %2347 = vxpose.xlu0.b32.end [16/16] 0.0, 128
    %v2348 = vpop.trf.xlu0
    %v2349 = vpop.trf.xlu0
    %v2350 = vpop.trf.xlu0
    %v2351 = vpop.trf.xlu0
    %v2352 = vpop.trf.xlu0
    %v2353 = vpop.trf.xlu0
    %v2354 = vpop.trf.xlu0
    %v2355 = vpop.trf.xlu0
    %v2356 = vpop.trf.xlu0
    %v2357 = vpop.trf.xlu0
    %v2358 = vpop.trf.xlu0
    %v2359 = vpop.trf.xlu0
    %v2360 = vpop.trf.xlu0
    %v2361 = vpop.trf.xlu0
    %v2362 = vpop.trf.xlu0
    %v2363 = vpop.trf.xlu0
    %2364 = vxpose.xlu0.b32.start [1/16] %v2294, 128
    %2365 = vxpose.xlu0.b32.cont [2/16] 0.0, 128
    %2366 = vxpose.xlu0.b32.cont [3/16] 0.0, 128
    %2367 = vxpose.xlu0.b32.cont [4/16] 0.0, 128
    %2368 = vxpose.xlu0.b32.cont [5/16] 0.0, 128
    %2369 = vxpose.xlu0.b32.cont [6/16] 0.0, 128
    %2370 = vxpose.xlu0.b32.cont [7/16] 0.0, 128
    %2371 = vxpose.xlu0.b32.cont [8/16] 0.0, 128
    %2372 = vxpose.xlu0.b32.cont [9/16] 0.0, 128
    %2373 = vxpose.xlu0.b32.cont [10/16] 0.0, 128
    %2374 = vxpose.xlu0.b32.cont [11/16] 0.0, 128
    %2375 = vxpose.xlu0.b32.cont [12/16] 0.0, 128
    %2376 = vxpose.xlu0.b32.cont [13/16] 0.0, 128
    %2377 = vxpose.xlu0.b32.cont [14/16] 0.0, 128
    %2378 = vxpose.xlu0.b32.cont [15/16] 0.0, 128
    %2379 = vxpose.xlu0.b32.end [16/16] 0.0, 128
    %v2380 = vpop.trf.xlu0
    %v2381 = vpop.trf.xlu0
    %v2382 = vpop.trf.xlu0
    %v2383 = vpop.trf.xlu0
    %v2384 = vpop.trf.xlu0
    %v2385 = vpop.trf.xlu0
    %v2386 = vpop.trf.xlu0
    %v2387 = vpop.trf.xlu0
    %v2388 = vpop.trf.xlu0
    %v2389 = vpop.trf.xlu0
    %v2390 = vpop.trf.xlu0
    %v2391 = vpop.trf.xlu0
    %v2392 = vpop.trf.xlu0
    %v2393 = vpop.trf.xlu0
    %v2394 = vpop.trf.xlu0
    %v2395 = vpop.trf.xlu0
    %2396 = vxpose.xlu0.b32.start [1/16] %v2295, 128
    %2397 = vxpose.xlu0.b32.cont [2/16] 0.0, 128
    %2398 = vxpose.xlu0.b32.cont [3/16] 0.0, 128
    %2399 = vxpose.xlu0.b32.cont [4/16] 0.0, 128
    %2400 = vxpose.xlu0.b32.cont [5/16] 0.0, 128
    %2401 = vxpose.xlu0.b32.cont [6/16] 0.0, 128
    %2402 = vxpose.xlu0.b32.cont [7/16] 0.0, 128
    %2403 = vxpose.xlu0.b32.cont [8/16] 0.0, 128
    %2404 = vxpose.xlu0.b32.cont [9/16] 0.0, 128
    %2405 = vxpose.xlu0.b32.cont [10/16] 0.0, 128
    %2406 = vxpose.xlu0.b32.cont [11/16] 0.0, 128
    %2407 = vxpose.xlu0.b32.cont [12/16] 0.0, 128
    %2408 = vxpose.xlu0.b32.cont [13/16] 0.0, 128
    %2409 = vxpose.xlu0.b32.cont [14/16] 0.0, 128
    %2410 = vxpose.xlu0.b32.cont [15/16] 0.0, 128
    %2411 = vxpose.xlu0.b32.end [16/16] 0.0, 128
    %v2412 = vpop.trf.xlu0
    %v2413 = vpop.trf.xlu0
    %v2414 = vpop.trf.xlu0
    %v2415 = vpop.trf.xlu0
    %v2416 = vpop.trf.xlu0
    %v2417 = vpop.trf.xlu0
    %v2418 = vpop.trf.xlu0
    %v2419 = vpop.trf.xlu0
    %v2420 = vpop.trf.xlu0
    %v2421 = vpop.trf.xlu0
    %v2422 = vpop.trf.xlu0
    %v2423 = vpop.trf.xlu0
    %v2424 = vpop.trf.xlu0
    %v2425 = vpop.trf.xlu0
    %v2426 = vpop.trf.xlu0
    %v2427 = vpop.trf.xlu0
    %2428 = vxpose.xlu0.b32.start [1/16] %v2296, 128
    %2429 = vxpose.xlu0.b32.cont [2/16] 0.0, 128
    %2430 = vxpose.xlu0.b32.cont [3/16] 0.0, 128
    %2431 = vxpose.xlu0.b32.cont [4/16] 0.0, 128
    %2432 = vxpose.xlu0.b32.cont [5/16] 0.0, 128
    %2433 = vxpose.xlu0.b32.cont [6/16] 0.0, 128
    %2434 = vxpose.xlu0.b32.cont [7/16] 0.0, 128
    %2435 = vxpose.xlu0.b32.cont [8/16] 0.0, 128
    %2436 = vxpose.xlu0.b32.cont [9/16] 0.0, 128
    %2437 = vxpose.xlu0.b32.cont [10/16] 0.0, 128
    %2438 = vxpose.xlu0.b32.cont [11/16] 0.0, 128
    %2439 = vxpose.xlu0.b32.cont [12/16] 0.0, 128
    %2440 = vxpose.xlu0.b32.cont [13/16] 0.0, 128
    %2441 = vxpose.xlu0.b32.cont [14/16] 0.0, 128
    %2442 = vxpose.xlu0.b32.cont [15/16] 0.0, 128
    %2443 = vxpose.xlu0.b32.end [16/16] 0.0, 128
    %v2444 = vpop.trf.xlu0
    %v2445 = vpop.trf.xlu0
    %v2446 = vpop.trf.xlu0
    %v2447 = vpop.trf.xlu0
    %v2448 = vpop.trf.xlu0
    %v2449 = vpop.trf.xlu0
    %v2450 = vpop.trf.xlu0
    %v2451 = vpop.trf.xlu0
    %v2452 = vpop.trf.xlu0
    %v2453 = vpop.trf.xlu0
    %v2454 = vpop.trf.xlu0
    %v2455 = vpop.trf.xlu0
    %v2456 = vpop.trf.xlu0
    %v2457 = vpop.trf.xlu0
    %v2458 = vpop.trf.xlu0
    %v2459 = vpop.trf.xlu0
    %2460 = vxpose.xlu0.b32.start [1/16] %v2297, 128
    %2461 = vxpose.xlu0.b32.cont [2/16] 0.0, 128
    %2462 = vxpose.xlu0.b32.cont [3/16] 0.0, 128
    %2463 = vxpose.xlu0.b32.cont [4/16] 0.0, 128
    %2464 = vxpose.xlu0.b32.cont [5/16] 0.0, 128
    %2465 = vxpose.xlu0.b32.cont [6/16] 0.0, 128
    %2466 = vxpose.xlu0.b32.cont [7/16] 0.0, 128
    %2467 = vxpose.xlu0.b32.cont [8/16] 0.0, 128
    %2468 = vxpose.xlu0.b32.cont [9/16] 0.0, 128
    %2469 = vxpose.xlu0.b32.cont [10/16] 0.0, 128
    %2470 = vxpose.xlu0.b32.cont [11/16] 0.0, 128
    %2471 = vxpose.xlu0.b32.cont [12/16] 0.0, 128
    %2472 = vxpose.xlu0.b32.cont [13/16] 0.0, 128
    %2473 = vxpose.xlu0.b32.cont [14/16] 0.0, 128
    %2474 = vxpose.xlu0.b32.cont [15/16] 0.0, 128
    %2475 = vxpose.xlu0.b32.end [16/16] 0.0, 128
    %v2476 = vpop.trf.xlu0
    %v2477 = vpop.trf.xlu0
    %v2478 = vpop.trf.xlu0
    %v2479 = vpop.trf.xlu0
    %v2480 = vpop.trf.xlu0
    %v2481 = vpop.trf.xlu0
    %v2482 = vpop.trf.xlu0
    %v2483 = vpop.trf.xlu0
    %v2484 = vpop.trf.xlu0
    %v2485 = vpop.trf.xlu0
    %v2486 = vpop.trf.xlu0
    %v2487 = vpop.trf.xlu0
    %v2488 = vpop.trf.xlu0
    %v2489 = vpop.trf.xlu0
    %v2490 = vpop.trf.xlu0
    %v2491 = vpop.trf.xlu0
    %2492 = vxpose.xlu0.b32.start [1/16] %v2298, 128
    %2493 = vxpose.xlu0.b32.cont [2/16] 0.0, 128
    %2494 = vxpose.xlu0.b32.cont [3/16] 0.0, 128
    %2495 = vxpose.xlu0.b32.cont [4/16] 0.0, 128
    %2496 = vxpose.xlu0.b32.cont [5/16] 0.0, 128
    %2497 = vxpose.xlu0.b32.cont [6/16] 0.0, 128
    %2498 = vxpose.xlu0.b32.cont [7/16] 0.0, 128
    %2499 = vxpose.xlu0.b32.cont [8/16] 0.0, 128
    %2500 = vxpose.xlu0.b32.cont [9/16] 0.0, 128
    %2501 = vxpose.xlu0.b32.cont [10/16] 0.0, 128
    %2502 = vxpose.xlu0.b32.cont [11/16] 0.0, 128
    %2503 = vxpose.xlu0.b32.cont [12/16] 0.0, 128
    %2504 = vxpose.xlu0.b32.cont [13/16] 0.0, 128
    %2505 = vxpose.xlu0.b32.cont [14/16] 0.0, 128
    %2506 = vxpose.xlu0.b32.cont [15/16] 0.0, 128
    %2507 = vxpose.xlu0.b32.end [16/16] 0.0, 128
    %v2508 = vpop.trf.xlu0
    %v2509 = vpop.trf.xlu0
    %v2510 = vpop.trf.xlu0
    %v2511 = vpop.trf.xlu0
    %v2512 = vpop.trf.xlu0
    %v2513 = vpop.trf.xlu0
    %v2514 = vpop.trf.xlu0
    %v2515 = vpop.trf.xlu0
    %v2516 = vpop.trf.xlu0
    %v2517 = vpop.trf.xlu0
    %v2518 = vpop.trf.xlu0
    %v2519 = vpop.trf.xlu0
    %v2520 = vpop.trf.xlu0
    %v2521 = vpop.trf.xlu0
    %v2522 = vpop.trf.xlu0
    %v2523 = vpop.trf.xlu0
    %2524 = vxpose.xlu0.b32.start [1/16] %v2299, 128
    %2525 = vxpose.xlu0.b32.cont [2/16] 0.0, 128
    %2526 = vxpose.xlu0.b32.cont [3/16] 0.0, 128
    %2527 = vxpose.xlu0.b32.cont [4/16] 0.0, 128
    %2528 = vxpose.xlu0.b32.cont [5/16] 0.0, 128
    %2529 = vxpose.xlu0.b32.cont [6/16] 0.0, 128
    %2530 = vxpose.xlu0.b32.cont [7/16] 0.0, 128
    %2531 = vxpose.xlu0.b32.cont [8/16] 0.0, 128
    %2532 = vxpose.xlu0.b32.cont [9/16] 0.0, 128
    %2533 = vxpose.xlu0.b32.cont [10/16] 0.0, 128
    %2534 = vxpose.xlu0.b32.cont [11/16] 0.0, 128
    %2535 = vxpose.xlu0.b32.cont [12/16] 0.0, 128
    %2536 = vxpose.xlu0.b32.cont [13/16] 0.0, 128
    %2537 = vxpose.xlu0.b32.cont [14/16] 0.0, 128
    %2538 = vxpose.xlu0.b32.cont [15/16] 0.0, 128
    %2539 = vxpose.xlu0.b32.end [16/16] 0.0, 128
    %v2540 = vpop.trf.xlu0
    %v2541 = vpop.trf.xlu0
    %v2542 = vpop.trf.xlu0
    %v2543 = vpop.trf.xlu0
    %v2544 = vpop.trf.xlu0
    %v2545 = vpop.trf.xlu0
    %v2546 = vpop.trf.xlu0
    %v2547 = vpop.trf.xlu0
    %v2548 = vpop.trf.xlu0
    %v2549 = vpop.trf.xlu0
    %v2550 = vpop.trf.xlu0
    %v2551 = vpop.trf.xlu0
    %v2552 = vpop.trf.xlu0
    %v2553 = vpop.trf.xlu0
    %v2554 = vpop.trf.xlu0
    %v2555 = vpop.trf.xlu0
    %v2556 = vcombine.low %v2316, %v2380
    %v2558 = vunpack.c.l.s4 1983009808
    %v2559 = vunpack.c.0.s8 %v2558
    %v2560 = vlaneseq
    %v2561 = vshrl.u32 %v2560, 7
    %v2562 = vsub.s32 %v2559, %v2561
    %v2563 = vrot.slane %v2556, %v2562
    %v2564 = vcombine.low %v2348, %v2412
    %v2566 = vunpack.c.l.s4 1983009808
    %v2567 = vunpack.c.0.s8 %v2566
    %v2568 = vlaneseq
    %v2569 = vshrl.u32 %v2568, 7
    %v2570 = vsub.s32 %v2567, %v2569
    %v2571 = vrot.slane %v2564, %v2570
    %v2572 = vcombine.low %v2444, %v2508
    %v2574 = vunpack.c.l.s4 1983009808
    %v2575 = vunpack.c.0.s8 %v2574
    %v2576 = vlaneseq
    %v2577 = vshrl.u32 %v2576, 7
    %v2578 = vsub.s32 %v2575, %v2577
    %v2579 = vrot.slane %v2572, %v2578
    %v2580 = vcombine.low %v2476, %v2540
    %v2582 = vunpack.c.l.s4 1983009808
    %v2583 = vunpack.c.0.s8 %v2582
    %v2584 = vlaneseq
    %v2585 = vshrl.u32 %v2584, 7
    %v2586 = vsub.s32 %v2583, %v2585
    %v2587 = vrot.slane %v2580, %v2586
    %v2588 = vcombine.low %v2563, %v2571
    %v2589 = vcombine.high %v2563, %v2571
    %v2591 = vunpack.c.l.s4 1934713408
    %v2592 = vunpack.c.0.s8 %v2591
    %v2593 = vlaneseq
    %v2594 = vshrl.u32 %v2593, 7
    %v2595 = vsub.s32 %v2592, %v2594
    %v2596 = vrot.slane %v2588, %v2595
    %v2598 = vunpack.c.l.s4 1934713408
    %v2599 = vunpack.c.0.s8 %v2598
    %v2600 = vlaneseq
    %v2601 = vshrl.u32 %v2600, 7
    %v2602 = vsub.s32 %v2599, %v2601
    %v2603 = vrot.slane %v2589, %v2602
    %v2604 = vcombine.low %v2579, %v2587
    %v2605 = vcombine.high %v2579, %v2587
    %v2607 = vunpack.c.l.s4 1934713408
    %v2608 = vunpack.c.0.s8 %v2607
    %v2609 = vlaneseq
    %v2610 = vshrl.u32 %v2609, 7
    %v2611 = vsub.s32 %v2608, %v2610
    %v2612 = vrot.slane %v2604, %v2611
    %v2614 = vunpack.c.l.s4 1934713408
    %v2615 = vunpack.c.0.s8 %v2614
    %v2616 = vlaneseq
    %v2617 = vshrl.u32 %v2616, 7
    %v2618 = vsub.s32 %v2615, %v2617
    %v2619 = vrot.slane %v2605, %v2618
    %v2620 = vcombine.low %v2596, %v2612
    %v2621 = vcombine.high %v2596, %v2612
    %v2622 = vcombine.low %v2603, %v2619
    %v2623 = vcombine.high %v2603, %v2619
    %v2625 = vsel %vm489, %v1796, 0
    %2627 = vmatprep.subr.mxu0 0.0
    %2628 = vmatpush1.msra.mxu0 %v2620
    %2629 = vmatprep.subr.mxu0 0.0
    %2630 = vmatpush1.msra.mxu0 0.0
    %2631 = vmatprep.subr.mxu0 0.0
    %2632 = vmatpush1.msra.mxu0 0.0
    %2633 = vmatprep.subr.mxu0 0.0
    %2634 = vmatpush1.msra.mxu0 0.0
    %2635 = vmatprep.subr.mxu0 0.0
    %2636 = vmatpush1.msra.mxu0 0.0
    %2637 = vmatprep.subr.mxu0 0.0
    %2638 = vmatpush1.msra.mxu0 0.0
    %2639 = vmatprep.subr.mxu0 0.0
    %2640 = vmatpush1.msra.mxu0 0.0
    %2641 = vmatprep.subr.mxu0 0.0
    %2642 = vmatpush1.msra.mxu0 0.0
    %2643 = vmatprep.subr.mxu0 0.0
    %2644 = vmatpush1.msra.mxu0 0.0
    %2645 = vmatprep.subr.mxu0 0.0
    %2646 = vmatpush1.msra.mxu0 0.0
    %2647 = vmatprep.subr.mxu0 0.0
    %2648 = vmatpush1.msra.mxu0 0.0
    %2649 = vmatprep.subr.mxu0 0.0
    %2650 = vmatpush1.msra.mxu0 0.0
    %2651 = vmatprep.subr.mxu0 0.0
    %2652 = vmatpush1.msra.mxu0 0.0
    %2653 = vmatprep.subr.mxu0 0.0
    %2654 = vmatpush1.msra.mxu0 0.0
    %2655 = vmatprep.subr.mxu0 0.0
    %2656 = vmatpush1.msra.mxu0 0.0
    %2657 = vmatprep.subr.mxu0 0.0
    %2658 = vmatpush1.msra.mxu0 0.0
    %2659 = vmatprep.subr.mxu0 0.0
    %2660 = vmatpush1.msra.mxu0 0.0
    %2661 = vmatprep.subr.mxu0 0.0
    %2662 = vmatpush1.msra.mxu0 0.0
    %2663 = vmatprep.subr.mxu0 0.0
    %2664 = vmatpush1.msra.mxu0 0.0
    %2665 = vmatprep.subr.mxu0 0.0
    %2666 = vmatpush1.msra.mxu0 0.0
    %2667 = vmatprep.subr.mxu0 0.0
    %2668 = vmatpush1.msra.mxu0 0.0
    %2669 = vmatprep.subr.mxu0 0.0
    %2670 = vmatpush1.msra.mxu0 0.0
    %2671 = vmatprep.subr.mxu0 0.0
    %2672 = vmatpush1.msra.mxu0 0.0
    %2673 = vmatprep.subr.mxu0 0.0
    %2674 = vmatpush1.msra.mxu0 0.0
    %2675 = vmatprep.subr.mxu0 0.0
    %2676 = vmatpush1.msra.mxu0 0.0
    %2677 = vmatprep.subr.mxu0 0.0
    %2678 = vmatpush1.msra.mxu0 0.0
    %2679 = vmatprep.subr.mxu0 0.0
    %2680 = vmatpush1.msra.mxu0 0.0
    %2681 = vmatprep.subr.mxu0 0.0
    %2682 = vmatpush1.msra.mxu0 0.0
    %2683 = vmatprep.subr.mxu0 0.0
    %2684 = vmatpush1.msra.mxu0 0.0
    %2685 = vmatprep.subr.mxu0 0.0
    %2686 = vmatpush1.msra.mxu0 0.0
    %2687 = vmatprep.subr.mxu0 0.0
    %2688 = vmatpush1.msra.mxu0 0.0
    %2689 = vmatprep.subr.mxu0 0.0
    %2690 = vmatpush1.msra.mxu0 0.0
    %2691 = vmatprep.mubr.f32.mxu0 0.0
    %2692 = vmatmul.mubr.f32.gmra.mrb[0].mxu0 %v2625
    %v2693 = vpop.f32.mrb[0].mxu0
    %v2694 = vadd.f32 0.0, %v2693
    %v2695 = vpop.f32.mrb[0].mxu0
    %2696 = vdwg.mxu0
    %v2698 = vsel %vm489, %v1828, 0
    %2700 = vmatprep.subr.mxu0 0.0
    %2701 = vmatpush1.msra.mxu0 %v2621
    %2702 = vmatprep.subr.mxu0 0.0
    %2703 = vmatpush1.msra.mxu0 0.0
    %2704 = vmatprep.subr.mxu0 0.0
    %2705 = vmatpush1.msra.mxu0 0.0
    %2706 = vmatprep.subr.mxu0 0.0
    %2707 = vmatpush1.msra.mxu0 0.0
    %2708 = vmatprep.subr.mxu0 0.0
    %2709 = vmatpush1.msra.mxu0 0.0
    %2710 = vmatprep.subr.mxu0 0.0
    %2711 = vmatpush1.msra.mxu0 0.0
    %2712 = vmatprep.subr.mxu0 0.0
    %2713 = vmatpush1.msra.mxu0 0.0
    %2714 = vmatprep.subr.mxu0 0.0
    %2715 = vmatpush1.msra.mxu0 0.0
    %2716 = vmatprep.subr.mxu0 0.0
    %2717 = vmatpush1.msra.mxu0 0.0
    %2718 = vmatprep.subr.mxu0 0.0
    %2719 = vmatpush1.msra.mxu0 0.0
    %2720 = vmatprep.subr.mxu0 0.0
    %2721 = vmatpush1.msra.mxu0 0.0
    %2722 = vmatprep.subr.mxu0 0.0
    %2723 = vmatpush1.msra.mxu0 0.0
    %2724 = vmatprep.subr.mxu0 0.0
    %2725 = vmatpush1.msra.mxu0 0.0
    %2726 = vmatprep.subr.mxu0 0.0
    %2727 = vmatpush1.msra.mxu0 0.0
    %2728 = vmatprep.subr.mxu0 0.0
    %2729 = vmatpush1.msra.mxu0 0.0
    %2730 = vmatprep.subr.mxu0 0.0
    %2731 = vmatpush1.msra.mxu0 0.0
    %2732 = vmatprep.subr.mxu0 0.0
    %2733 = vmatpush1.msra.mxu0 0.0
    %2734 = vmatprep.subr.mxu0 0.0
    %2735 = vmatpush1.msra.mxu0 0.0
    %2736 = vmatprep.subr.mxu0 0.0
    %2737 = vmatpush1.msra.mxu0 0.0
    %2738 = vmatprep.subr.mxu0 0.0
    %2739 = vmatpush1.msra.mxu0 0.0
    %2740 = vmatprep.subr.mxu0 0.0
    %2741 = vmatpush1.msra.mxu0 0.0
    %2742 = vmatprep.subr.mxu0 0.0
    %2743 = vmatpush1.msra.mxu0 0.0
    %2744 = vmatprep.subr.mxu0 0.0
    %2745 = vmatpush1.msra.mxu0 0.0
    %2746 = vmatprep.subr.mxu0 0.0
    %2747 = vmatpush1.msra.mxu0 0.0
    %2748 = vmatprep.subr.mxu0 0.0
    %2749 = vmatpush1.msra.mxu0 0.0
    %2750 = vmatprep.subr.mxu0 0.0
    %2751 = vmatpush1.msra.mxu0 0.0
    %2752 = vmatprep.subr.mxu0 0.0
    %2753 = vmatpush1.msra.mxu0 0.0
    %2754 = vmatprep.subr.mxu0 0.0
    %2755 = vmatpush1.msra.mxu0 0.0
    %2756 = vmatprep.subr.mxu0 0.0
    %2757 = vmatpush1.msra.mxu0 0.0
    %2758 = vmatprep.subr.mxu0 0.0
    %2759 = vmatpush1.msra.mxu0 0.0
    %2760 = vmatprep.subr.mxu0 0.0
    %2761 = vmatpush1.msra.mxu0 0.0
    %2762 = vmatprep.subr.mxu0 0.0
    %2763 = vmatpush1.msra.mxu0 0.0
    %2764 = vmatprep.mubr.f32.mxu0 0.0
    %2765 = vmatmul.mubr.f32.gmra.mrb[0].mxu0 %v2698
    %v2766 = vpop.f32.mrb[0].mxu0
    %v2767 = vadd.f32 0.0, %v2766
    %v2768 = vpop.f32.mrb[0].mxu0
    %2769 = vdwg.mxu0
    %v2771 = vsel %vm489, %v1860, 0
    %2773 = vmatprep.subr.mxu0 0.0
    %2774 = vmatpush1.msra.mxu0 %v2622
    %2775 = vmatprep.subr.mxu0 0.0
    %2776 = vmatpush1.msra.mxu0 0.0
    %2777 = vmatprep.subr.mxu0 0.0
    %2778 = vmatpush1.msra.mxu0 0.0
    %2779 = vmatprep.subr.mxu0 0.0
    %2780 = vmatpush1.msra.mxu0 0.0
    %2781 = vmatprep.subr.mxu0 0.0
    %2782 = vmatpush1.msra.mxu0 0.0
    %2783 = vmatprep.subr.mxu0 0.0
    %2784 = vmatpush1.msra.mxu0 0.0
    %2785 = vmatprep.subr.mxu0 0.0
    %2786 = vmatpush1.msra.mxu0 0.0
    %2787 = vmatprep.subr.mxu0 0.0
    %2788 = vmatpush1.msra.mxu0 0.0
    %2789 = vmatprep.subr.mxu0 0.0
    %2790 = vmatpush1.msra.mxu0 0.0
    %2791 = vmatprep.subr.mxu0 0.0
    %2792 = vmatpush1.msra.mxu0 0.0
    %2793 = vmatprep.subr.mxu0 0.0
    %2794 = vmatpush1.msra.mxu0 0.0
    %2795 = vmatprep.subr.mxu0 0.0
    %2796 = vmatpush1.msra.mxu0 0.0
    %2797 = vmatprep.subr.mxu0 0.0
    %2798 = vmatpush1.msra.mxu0 0.0
    %2799 = vmatprep.subr.mxu0 0.0
    %2800 = vmatpush1.msra.mxu0 0.0
    %2801 = vmatprep.subr.mxu0 0.0
    %2802 = vmatpush1.msra.mxu0 0.0
    %2803 = vmatprep.subr.mxu0 0.0
    %2804 = vmatpush1.msra.mxu0 0.0
    %2805 = vmatprep.subr.mxu0 0.0
    %2806 = vmatpush1.msra.mxu0 0.0
    %2807 = vmatprep.subr.mxu0 0.0
    %2808 = vmatpush1.msra.mxu0 0.0
    %2809 = vmatprep.subr.mxu0 0.0
    %2810 = vmatpush1.msra.mxu0 0.0
    %2811 = vmatprep.subr.mxu0 0.0
    %2812 = vmatpush1.msra.mxu0 0.0
    %2813 = vmatprep.subr.mxu0 0.0
    %2814 = vmatpush1.msra.mxu0 0.0
    %2815 = vmatprep.subr.mxu0 0.0
    %2816 = vmatpush1.msra.mxu0 0.0
    %2817 = vmatprep.subr.mxu0 0.0
    %2818 = vmatpush1.msra.mxu0 0.0
    %2819 = vmatprep.subr.mxu0 0.0
    %2820 = vmatpush1.msra.mxu0 0.0
    %2821 = vmatprep.subr.mxu0 0.0
    %2822 = vmatpush1.msra.mxu0 0.0
    %2823 = vmatprep.subr.mxu0 0.0
    %2824 = vmatpush1.msra.mxu0 0.0
    %2825 = vmatprep.subr.mxu0 0.0
    %2826 = vmatpush1.msra.mxu0 0.0
    %2827 = vmatprep.subr.mxu0 0.0
    %2828 = vmatpush1.msra.mxu0 0.0
    %2829 = vmatprep.subr.mxu0 0.0
    %2830 = vmatpush1.msra.mxu0 0.0
    %2831 = vmatprep.subr.mxu0 0.0
    %2832 = vmatpush1.msra.mxu0 0.0
    %2833 = vmatprep.subr.mxu0 0.0
    %2834 = vmatpush1.msra.mxu0 0.0
    %2835 = vmatprep.subr.mxu0 0.0
    %2836 = vmatpush1.msra.mxu0 0.0
    %2837 = vmatprep.mubr.f32.mxu0 0.0
    %2838 = vmatmul.mubr.f32.gmra.mrb[0].mxu0 %v2771
    %v2839 = vpop.f32.mrb[0].mxu0
    %v2840 = vadd.f32 0.0, %v2839
    %v2841 = vpop.f32.mrb[0].mxu0
    %2842 = vdwg.mxu0
    %v2844 = vsel %vm489, %v1892, 0
    %2846 = vmatprep.subr.mxu0 0.0
    %2847 = vmatpush1.msra.mxu0 %v2623
    %2848 = vmatprep.subr.mxu0 0.0
    %2849 = vmatpush1.msra.mxu0 0.0
    %2850 = vmatprep.subr.mxu0 0.0
    %2851 = vmatpush1.msra.mxu0 0.0
    %2852 = vmatprep.subr.mxu0 0.0
    %2853 = vmatpush1.msra.mxu0 0.0
    %2854 = vmatprep.subr.mxu0 0.0
    %2855 = vmatpush1.msra.mxu0 0.0
    %2856 = vmatprep.subr.mxu0 0.0
    %2857 = vmatpush1.msra.mxu0 0.0
    %2858 = vmatprep.subr.mxu0 0.0
    %2859 = vmatpush1.msra.mxu0 0.0
    %2860 = vmatprep.subr.mxu0 0.0
    %2861 = vmatpush1.msra.mxu0 0.0
    %2862 = vmatprep.subr.mxu0 0.0
    %2863 = vmatpush1.msra.mxu0 0.0
    %2864 = vmatprep.subr.mxu0 0.0
    %2865 = vmatpush1.msra.mxu0 0.0
    %2866 = vmatprep.subr.mxu0 0.0
    %2867 = vmatpush1.msra.mxu0 0.0
    %2868 = vmatprep.subr.mxu0 0.0
    %2869 = vmatpush1.msra.mxu0 0.0
    %2870 = vmatprep.subr.mxu0 0.0
    %2871 = vmatpush1.msra.mxu0 0.0
    %2872 = vmatprep.subr.mxu0 0.0
    %2873 = vmatpush1.msra.mxu0 0.0
    %2874 = vmatprep.subr.mxu0 0.0
    %2875 = vmatpush1.msra.mxu0 0.0
    %2876 = vmatprep.subr.mxu0 0.0
    %2877 = vmatpush1.msra.mxu0 0.0
    %2878 = vmatprep.subr.mxu0 0.0
    %2879 = vmatpush1.msra.mxu0 0.0
    %2880 = vmatprep.subr.mxu0 0.0
    %2881 = vmatpush1.msra.mxu0 0.0
    %2882 = vmatprep.subr.mxu0 0.0
    %2883 = vmatpush1.msra.mxu0 0.0
    %2884 = vmatprep.subr.mxu0 0.0
    %2885 = vmatpush1.msra.mxu0 0.0
    %2886 = vmatprep.subr.mxu0 0.0
    %2887 = vmatpush1.msra.mxu0 0.0
    %2888 = vmatprep.subr.mxu0 0.0
    %2889 = vmatpush1.msra.mxu0 0.0
    %2890 = vmatprep.subr.mxu0 0.0
    %2891 = vmatpush1.msra.mxu0 0.0
    %2892 = vmatprep.subr.mxu0 0.0
    %2893 = vmatpush1.msra.mxu0 0.0
    %2894 = vmatprep.subr.mxu0 0.0
    %2895 = vmatpush1.msra.mxu0 0.0
    %2896 = vmatprep.subr.mxu0 0.0
    %2897 = vmatpush1.msra.mxu0 0.0
    %2898 = vmatprep.subr.mxu0 0.0
    %2899 = vmatpush1.msra.mxu0 0.0
    %2900 = vmatprep.subr.mxu0 0.0
    %2901 = vmatpush1.msra.mxu0 0.0
    %2902 = vmatprep.subr.mxu0 0.0
    %2903 = vmatpush1.msra.mxu0 0.0
    %2904 = vmatprep.subr.mxu0 0.0
    %2905 = vmatpush1.msra.mxu0 0.0
    %2906 = vmatprep.subr.mxu0 0.0
    %2907 = vmatpush1.msra.mxu0 0.0
    %2908 = vmatprep.subr.mxu0 0.0
    %2909 = vmatpush1.msra.mxu0 0.0
    %2910 = vmatprep.mubr.f32.mxu0 0.0
    %2911 = vmatmul.mubr.f32.gmra.mrb[0].mxu0 %v2844
    %v2912 = vpop.f32.mrb[0].mxu0
    %v2913 = vadd.f32 0.0, %v2912
    %v2914 = vpop.f32.mrb[0].mxu0
    %2915 = vdwg.mxu0
    %2916 = vxpose.xlu0.b32.start [1/16] %v2694, 128
    %2917 = vxpose.xlu0.b32.cont [2/16] 0.0, 128
    %2918 = vxpose.xlu0.b32.cont [3/16] 0.0, 128
    %2919 = vxpose.xlu0.b32.cont [4/16] 0.0, 128
    %2920 = vxpose.xlu0.b32.cont [5/16] 0.0, 128
    %2921 = vxpose.xlu0.b32.cont [6/16] 0.0, 128
    %2922 = vxpose.xlu0.b32.cont [7/16] 0.0, 128
    %2923 = vxpose.xlu0.b32.cont [8/16] 0.0, 128
    %2924 = vxpose.xlu0.b32.cont [9/16] 0.0, 128
    %2925 = vxpose.xlu0.b32.cont [10/16] 0.0, 128
    %2926 = vxpose.xlu0.b32.cont [11/16] 0.0, 128
    %2927 = vxpose.xlu0.b32.cont [12/16] 0.0, 128
    %2928 = vxpose.xlu0.b32.cont [13/16] 0.0, 128
    %2929 = vxpose.xlu0.b32.cont [14/16] 0.0, 128
    %2930 = vxpose.xlu0.b32.cont [15/16] 0.0, 128
    %2931 = vxpose.xlu0.b32.end [16/16] 0.0, 128
    %v2932 = vpop.trf.xlu0
    %v2933 = vpop.trf.xlu0
    %v2934 = vpop.trf.xlu0
    %v2935 = vpop.trf.xlu0
    %v2936 = vpop.trf.xlu0
    %v2937 = vpop.trf.xlu0
    %v2938 = vpop.trf.xlu0
    %v2939 = vpop.trf.xlu0
    %v2940 = vpop.trf.xlu0
    %v2941 = vpop.trf.xlu0
    %v2942 = vpop.trf.xlu0
    %v2943 = vpop.trf.xlu0
    %v2944 = vpop.trf.xlu0
    %v2945 = vpop.trf.xlu0
    %v2946 = vpop.trf.xlu0
    %v2947 = vpop.trf.xlu0
    %2948 = vxpose.xlu0.b32.start [1/16] %v2767, 128
    %2949 = vxpose.xlu0.b32.cont [2/16] 0.0, 128
    %2950 = vxpose.xlu0.b32.cont [3/16] 0.0, 128
    %2951 = vxpose.xlu0.b32.cont [4/16] 0.0, 128
    %2952 = vxpose.xlu0.b32.cont [5/16] 0.0, 128
    %2953 = vxpose.xlu0.b32.cont [6/16] 0.0, 128
    %2954 = vxpose.xlu0.b32.cont [7/16] 0.0, 128
    %2955 = vxpose.xlu0.b32.cont [8/16] 0.0, 128
    %2956 = vxpose.xlu0.b32.cont [9/16] 0.0, 128
    %2957 = vxpose.xlu0.b32.cont [10/16] 0.0, 128
    %2958 = vxpose.xlu0.b32.cont [11/16] 0.0, 128
    %2959 = vxpose.xlu0.b32.cont [12/16] 0.0, 128
    %2960 = vxpose.xlu0.b32.cont [13/16] 0.0, 128
    %2961 = vxpose.xlu0.b32.cont [14/16] 0.0, 128
    %2962 = vxpose.xlu0.b32.cont [15/16] 0.0, 128
    %2963 = vxpose.xlu0.b32.end [16/16] 0.0, 128
    %v2964 = vpop.trf.xlu0
    %v2965 = vpop.trf.xlu0
    %v2966 = vpop.trf.xlu0
    %v2967 = vpop.trf.xlu0
    %v2968 = vpop.trf.xlu0
    %v2969 = vpop.trf.xlu0
    %v2970 = vpop.trf.xlu0
    %v2971 = vpop.trf.xlu0
    %v2972 = vpop.trf.xlu0
    %v2973 = vpop.trf.xlu0
    %v2974 = vpop.trf.xlu0
    %v2975 = vpop.trf.xlu0
    %v2976 = vpop.trf.xlu0
    %v2977 = vpop.trf.xlu0
    %v2978 = vpop.trf.xlu0
    %v2979 = vpop.trf.xlu0
    %2980 = vxpose.xlu0.b32.start [1/16] %v2840, 128
    %2981 = vxpose.xlu0.b32.cont [2/16] 0.0, 128
    %2982 = vxpose.xlu0.b32.cont [3/16] 0.0, 128
    %2983 = vxpose.xlu0.b32.cont [4/16] 0.0, 128
    %2984 = vxpose.xlu0.b32.cont [5/16] 0.0, 128
    %2985 = vxpose.xlu0.b32.cont [6/16] 0.0, 128
    %2986 = vxpose.xlu0.b32.cont [7/16] 0.0, 128
    %2987 = vxpose.xlu0.b32.cont [8/16] 0.0, 128
    %2988 = vxpose.xlu0.b32.cont [9/16] 0.0, 128
    %2989 = vxpose.xlu0.b32.cont [10/16] 0.0, 128
    %2990 = vxpose.xlu0.b32.cont [11/16] 0.0, 128
    %2991 = vxpose.xlu0.b32.cont [12/16] 0.0, 128
    %2992 = vxpose.xlu0.b32.cont [13/16] 0.0, 128
    %2993 = vxpose.xlu0.b32.cont [14/16] 0.0, 128
    %2994 = vxpose.xlu0.b32.cont [15/16] 0.0, 128
    %2995 = vxpose.xlu0.b32.end [16/16] 0.0, 128
    %v2996 = vpop.trf.xlu0
    %v2997 = vpop.trf.xlu0
    %v2998 = vpop.trf.xlu0
    %v2999 = vpop.trf.xlu0
    %v3000 = vpop.trf.xlu0
    %v3001 = vpop.trf.xlu0
    %v3002 = vpop.trf.xlu0
    %v3003 = vpop.trf.xlu0
    %v3004 = vpop.trf.xlu0
    %v3005 = vpop.trf.xlu0
    %v3006 = vpop.trf.xlu0
    %v3007 = vpop.trf.xlu0
    %v3008 = vpop.trf.xlu0
    %v3009 = vpop.trf.xlu0
    %v3010 = vpop.trf.xlu0
    %v3011 = vpop.trf.xlu0
    %3012 = vxpose.xlu0.b32.start [1/16] %v2913, 128
    %3013 = vxpose.xlu0.b32.cont [2/16] 0.0, 128
    %3014 = vxpose.xlu0.b32.cont [3/16] 0.0, 128
    %3015 = vxpose.xlu0.b32.cont [4/16] 0.0, 128
    %3016 = vxpose.xlu0.b32.cont [5/16] 0.0, 128
    %3017 = vxpose.xlu0.b32.cont [6/16] 0.0, 128
    %3018 = vxpose.xlu0.b32.cont [7/16] 0.0, 128
    %3019 = vxpose.xlu0.b32.cont [8/16] 0.0, 128
    %3020 = vxpose.xlu0.b32.cont [9/16] 0.0, 128
    %3021 = vxpose.xlu0.b32.cont [10/16] 0.0, 128
    %3022 = vxpose.xlu0.b32.cont [11/16] 0.0, 128
    %3023 = vxpose.xlu0.b32.cont [12/16] 0.0, 128
    %3024 = vxpose.xlu0.b32.cont [13/16] 0.0, 128
    %3025 = vxpose.xlu0.b32.cont [14/16] 0.0, 128
    %3026 = vxpose.xlu0.b32.cont [15/16] 0.0, 128
    %3027 = vxpose.xlu0.b32.end [16/16] 0.0, 128
    %v3028 = vpop.trf.xlu0
    %v3029 = vpop.trf.xlu0
    %v3030 = vpop.trf.xlu0
    %v3031 = vpop.trf.xlu0
    %v3032 = vpop.trf.xlu0
    %v3033 = vpop.trf.xlu0
    %v3034 = vpop.trf.xlu0
    %v3035 = vpop.trf.xlu0
    %v3036 = vpop.trf.xlu0
    %v3037 = vpop.trf.xlu0
    %v3038 = vpop.trf.xlu0
    %v3039 = vpop.trf.xlu0
    %v3040 = vpop.trf.xlu0
    %v3041 = vpop.trf.xlu0
    %v3042 = vpop.trf.xlu0
    %v3043 = vpop.trf.xlu0
    %v3044 = vcombine.low %v2932, %v2996
    %v3045 = vcombine.high %v2932, %v2996
    %v3047 = vunpack.c.l.s4 1983009808
    %v3048 = vunpack.c.0.s8 %v3047
    %v3049 = vlaneseq
    %v3050 = vshrl.u32 %v3049, 7
    %v3051 = vsub.s32 %v3048, %v3050
    %v3052 = vrot.slane %v3044, %v3051
    %v3054 = vunpack.c.l.s4 1983009808
    %v3055 = vunpack.c.0.s8 %v3054
    %v3056 = vlaneseq
    %v3057 = vshrl.u32 %v3056, 7
    %v3058 = vsub.s32 %v3055, %v3057
    %v3059 = vrot.slane %v3045, %v3058
    %v3060 = vcombine.low %v2964, %v3028
    %v3061 = vcombine.high %v2964, %v3028
    %v3063 = vunpack.c.l.s4 1983009808
    %v3064 = vunpack.c.0.s8 %v3063
    %v3065 = vlaneseq
    %v3066 = vshrl.u32 %v3065, 7
    %v3067 = vsub.s32 %v3064, %v3066
    %v3068 = vrot.slane %v3060, %v3067
    %v3070 = vunpack.c.l.s4 1983009808
    %v3071 = vunpack.c.0.s8 %v3070
    %v3072 = vlaneseq
    %v3073 = vshrl.u32 %v3072, 7
    %v3074 = vsub.s32 %v3071, %v3073
    %v3075 = vrot.slane %v3061, %v3074
    %v3076 = vcombine.low %v3052, %v3068
    %v3077 = vcombine.high %v3052, %v3068
    %v3079 = vunpack.c.l.s4 1934713408
    %v3080 = vunpack.c.0.s8 %v3079
    %v3081 = vlaneseq
    %v3082 = vshrl.u32 %v3081, 7
    %v3083 = vsub.s32 %v3080, %v3082
    %v3084 = vrot.slane %v3076, %v3083
    %v3086 = vunpack.c.l.s4 1934713408
    %v3087 = vunpack.c.0.s8 %v3086
    %v3088 = vlaneseq
    %v3089 = vshrl.u32 %v3088, 7
    %v3090 = vsub.s32 %v3087, %v3089
    %v3091 = vrot.slane %v3077, %v3090
    %v3092 = vcombine.low %v3059, %v3075
    %v3093 = vcombine.high %v3059, %v3075
    %v3095 = vunpack.c.l.s4 1934713408
    %v3096 = vunpack.c.0.s8 %v3095
    %v3097 = vlaneseq
    %v3098 = vshrl.u32 %v3097, 7
    %v3099 = vsub.s32 %v3096, %v3098
    %v3100 = vrot.slane %v3092, %v3099
    %v3102 = vunpack.c.l.s4 1934713408
    %v3103 = vunpack.c.0.s8 %v3102
    %v3104 = vlaneseq
    %v3105 = vshrl.u32 %v3104, 7
    %v3106 = vsub.s32 %v3103, %v3105
    %v3107 = vrot.slane %v3093, %v3106
    %v3108 = vcombine.high %v3084, 0.0
    %v3109 = vcombine.high %v3091, 0.0
    %v3110 = vcombine.high %v3100, 0.0
    %v3111 = vcombine.high %v3107, 0.0
    %v3113 = vsel %vm489, %v1753, 0
    %3115 = vmatprep.subr.mxu0 0.0
    %3116 = vmatpush1.msra.mxu0 %v135
    %3117 = vmatprep.subr.mxu0 0.0
    %3118 = vmatpush1.msra.mxu0 0.0
    %3119 = vmatprep.subr.mxu0 0.0
    %3120 = vmatpush1.msra.mxu0 0.0
    %3121 = vmatprep.subr.mxu0 0.0
    %3122 = vmatpush1.msra.mxu0 0.0
    %3123 = vmatprep.subr.mxu0 0.0
    %3124 = vmatpush1.msra.mxu0 0.0
    %3125 = vmatprep.subr.mxu0 0.0
    %3126 = vmatpush1.msra.mxu0 0.0
    %3127 = vmatprep.subr.mxu0 0.0
    %3128 = vmatpush1.msra.mxu0 0.0
    %3129 = vmatprep.subr.mxu0 0.0
    %3130 = vmatpush1.msra.mxu0 0.0
    %3131 = vmatprep.subr.mxu0 0.0
    %3132 = vmatpush1.msra.mxu0 0.0
    %3133 = vmatprep.subr.mxu0 0.0
    %3134 = vmatpush1.msra.mxu0 0.0
    %3135 = vmatprep.subr.mxu0 0.0
    %3136 = vmatpush1.msra.mxu0 0.0
    %3137 = vmatprep.subr.mxu0 0.0
    %3138 = vmatpush1.msra.mxu0 0.0
    %3139 = vmatprep.subr.mxu0 0.0
    %3140 = vmatpush1.msra.mxu0 0.0
    %3141 = vmatprep.subr.mxu0 0.0
    %3142 = vmatpush1.msra.mxu0 0.0
    %3143 = vmatprep.subr.mxu0 0.0
    %3144 = vmatpush1.msra.mxu0 0.0
    %3145 = vmatprep.subr.mxu0 0.0
    %3146 = vmatpush1.msra.mxu0 0.0
    %3147 = vmatprep.subr.mxu0 0.0
    %3148 = vmatpush1.msra.mxu0 0.0
    %3149 = vmatprep.subr.mxu0 0.0
    %3150 = vmatpush1.msra.mxu0 0.0
    %3151 = vmatprep.subr.mxu0 0.0
    %3152 = vmatpush1.msra.mxu0 0.0
    %3153 = vmatprep.subr.mxu0 0.0
    %3154 = vmatpush1.msra.mxu0 0.0
    %3155 = vmatprep.subr.mxu0 0.0
    %3156 = vmatpush1.msra.mxu0 0.0
    %3157 = vmatprep.subr.mxu0 0.0
    %3158 = vmatpush1.msra.mxu0 0.0
    %3159 = vmatprep.subr.mxu0 0.0
    %3160 = vmatpush1.msra.mxu0 0.0
    %3161 = vmatprep.subr.mxu0 0.0
    %3162 = vmatpush1.msra.mxu0 0.0
    %3163 = vmatprep.subr.mxu0 0.0
    %3164 = vmatpush1.msra.mxu0 0.0
    %3165 = vmatprep.subr.mxu0 0.0
    %3166 = vmatpush1.msra.mxu0 0.0
    %3167 = vmatprep.subr.mxu0 0.0
    %3168 = vmatpush1.msra.mxu0 0.0
    %3169 = vmatprep.subr.mxu0 0.0
    %3170 = vmatpush1.msra.mxu0 0.0
    %3171 = vmatprep.subr.mxu0 0.0
    %3172 = vmatpush1.msra.mxu0 0.0
    %3173 = vmatprep.subr.mxu0 0.0
    %3174 = vmatpush1.msra.mxu0 0.0
    %3175 = vmatprep.subr.mxu0 0.0
    %3176 = vmatpush1.msra.mxu0 0.0
    %3177 = vmatprep.subr.mxu0 0.0
    %3178 = vmatpush1.msra.mxu0 0.0
    %3179 = vmatprep.mubr.f32.mxu0 0.0
    %3180 = vmatmul.mubr.f32.gmra.mrb[0].mxu0 %v3113
    %v3181 = vpop.f32.mrb[0].mxu0
    %v3182 = vadd.f32 0.0, %v3181
    %v3183 = vpop.f32.mrb[0].mxu0
    %3184 = vdwg.mxu0
    %v3186 = vsel %vm489, %v1755, 0
    %3188 = vmatprep.subr.mxu0 0.0
    %3189 = vmatpush1.msra.mxu0 %v136
    %3190 = vmatprep.subr.mxu0 0.0
    %3191 = vmatpush1.msra.mxu0 0.0
    %3192 = vmatprep.subr.mxu0 0.0
    %3193 = vmatpush1.msra.mxu0 0.0
    %3194 = vmatprep.subr.mxu0 0.0
    %3195 = vmatpush1.msra.mxu0 0.0
    %3196 = vmatprep.subr.mxu0 0.0
    %3197 = vmatpush1.msra.mxu0 0.0
    %3198 = vmatprep.subr.mxu0 0.0
    %3199 = vmatpush1.msra.mxu0 0.0
    %3200 = vmatprep.subr.mxu0 0.0
    %3201 = vmatpush1.msra.mxu0 0.0
    %3202 = vmatprep.subr.mxu0 0.0
    %3203 = vmatpush1.msra.mxu0 0.0
    %3204 = vmatprep.subr.mxu0 0.0
    %3205 = vmatpush1.msra.mxu0 0.0
    %3206 = vmatprep.subr.mxu0 0.0
    %3207 = vmatpush1.msra.mxu0 0.0
    %3208 = vmatprep.subr.mxu0 0.0
    %3209 = vmatpush1.msra.mxu0 0.0
    %3210 = vmatprep.subr.mxu0 0.0
    %3211 = vmatpush1.msra.mxu0 0.0
    %3212 = vmatprep.subr.mxu0 0.0
    %3213 = vmatpush1.msra.mxu0 0.0
    %3214 = vmatprep.subr.mxu0 0.0
    %3215 = vmatpush1.msra.mxu0 0.0
    %3216 = vmatprep.subr.mxu0 0.0
    %3217 = vmatpush1.msra.mxu0 0.0
    %3218 = vmatprep.subr.mxu0 0.0
    %3219 = vmatpush1.msra.mxu0 0.0
    %3220 = vmatprep.subr.mxu0 0.0
    %3221 = vmatpush1.msra.mxu0 0.0
    %3222 = vmatprep.subr.mxu0 0.0
    %3223 = vmatpush1.msra.mxu0 0.0
    %3224 = vmatprep.subr.mxu0 0.0
    %3225 = vmatpush1.msra.mxu0 0.0
    %3226 = vmatprep.subr.mxu0 0.0
    %3227 = vmatpush1.msra.mxu0 0.0
    %3228 = vmatprep.subr.mxu0 0.0
    %3229 = vmatpush1.msra.mxu0 0.0
    %3230 = vmatprep.subr.mxu0 0.0
    %3231 = vmatpush1.msra.mxu0 0.0
    %3232 = vmatprep.subr.mxu0 0.0
    %3233 = vmatpush1.msra.mxu0 0.0
    %3234 = vmatprep.subr.mxu0 0.0
    %3235 = vmatpush1.msra.mxu0 0.0
    %3236 = vmatprep.subr.mxu0 0.0
    %3237 = vmatpush1.msra.mxu0 0.0
    %3238 = vmatprep.subr.mxu0 0.0
    %3239 = vmatpush1.msra.mxu0 0.0
    %3240 = vmatprep.subr.mxu0 0.0
    %3241 = vmatpush1.msra.mxu0 0.0
    %3242 = vmatprep.subr.mxu0 0.0
    %3243 = vmatpush1.msra.mxu0 0.0
    %3244 = vmatprep.subr.mxu0 0.0
    %3245 = vmatpush1.msra.mxu0 0.0
    %3246 = vmatprep.subr.mxu0 0.0
    %3247 = vmatpush1.msra.mxu0 0.0
    %3248 = vmatprep.subr.mxu0 0.0
    %3249 = vmatpush1.msra.mxu0 0.0
    %3250 = vmatprep.subr.mxu0 0.0
    %3251 = vmatpush1.msra.mxu0 0.0
    %3252 = vmatprep.mubr.f32.mxu0 0.0
    %3253 = vmatmul.mubr.f32.gmra.mrb[0].mxu0 %v3186
    %v3254 = vpop.f32.mrb[0].mxu0
    %v3255 = vadd.f32 0.0, %v3254
    %v3256 = vpop.f32.mrb[0].mxu0
    %3257 = vdwg.mxu0
    %v3259 = vsel %vm489, %v1757, 0
    %3261 = vmatprep.subr.mxu0 0.0
    %3262 = vmatpush1.msra.mxu0 %v137
    %3263 = vmatprep.subr.mxu0 0.0
    %3264 = vmatpush1.msra.mxu0 0.0
    %3265 = vmatprep.subr.mxu0 0.0
    %3266 = vmatpush1.msra.mxu0 0.0
    %3267 = vmatprep.subr.mxu0 0.0
    %3268 = vmatpush1.msra.mxu0 0.0
    %3269 = vmatprep.subr.mxu0 0.0
    %3270 = vmatpush1.msra.mxu0 0.0
    %3271 = vmatprep.subr.mxu0 0.0
    %3272 = vmatpush1.msra.mxu0 0.0
    %3273 = vmatprep.subr.mxu0 0.0
    %3274 = vmatpush1.msra.mxu0 0.0
    %3275 = vmatprep.subr.mxu0 0.0
    %3276 = vmatpush1.msra.mxu0 0.0
    %3277 = vmatprep.subr.mxu0 0.0
    %3278 = vmatpush1.msra.mxu0 0.0
    %3279 = vmatprep.subr.mxu0 0.0
    %3280 = vmatpush1.msra.mxu0 0.0
    %3281 = vmatprep.subr.mxu0 0.0
    %3282 = vmatpush1.msra.mxu0 0.0
    %3283 = vmatprep.subr.mxu0 0.0
    %3284 = vmatpush1.msra.mxu0 0.0
    %3285 = vmatprep.subr.mxu0 0.0
    %3286 = vmatpush1.msra.mxu0 0.0
    %3287 = vmatprep.subr.mxu0 0.0
    %3288 = vmatpush1.msra.mxu0 0.0
    %3289 = vmatprep.subr.mxu0 0.0
    %3290 = vmatpush1.msra.mxu0 0.0
    %3291 = vmatprep.subr.mxu0 0.0
    %3292 = vmatpush1.msra.mxu0 0.0
    %3293 = vmatprep.subr.mxu0 0.0
    %3294 = vmatpush1.msra.mxu0 0.0
    %3295 = vmatprep.subr.mxu0 0.0
    %3296 = vmatpush1.msra.mxu0 0.0
    %3297 = vmatprep.subr.mxu0 0.0
    %3298 = vmatpush1.msra.mxu0 0.0
    %3299 = vmatprep.subr.mxu0 0.0
    %3300 = vmatpush1.msra.mxu0 0.0
    %3301 = vmatprep.subr.mxu0 0.0
    %3302 = vmatpush1.msra.mxu0 0.0
    %3303 = vmatprep.subr.mxu0 0.0
    %3304 = vmatpush1.msra.mxu0 0.0
    %3305 = vmatprep.subr.mxu0 0.0
    %3306 = vmatpush1.msra.mxu0 0.0
    %3307 = vmatprep.subr.mxu0 0.0
    %3308 = vmatpush1.msra.mxu0 0.0
    %3309 = vmatprep.subr.mxu0 0.0
    %3310 = vmatpush1.msra.mxu0 0.0
    %3311 = vmatprep.subr.mxu0 0.0
    %3312 = vmatpush1.msra.mxu0 0.0
    %3313 = vmatprep.subr.mxu0 0.0
    %3314 = vmatpush1.msra.mxu0 0.0
    %3315 = vmatprep.subr.mxu0 0.0
    %3316 = vmatpush1.msra.mxu0 0.0
    %3317 = vmatprep.subr.mxu0 0.0
    %3318 = vmatpush1.msra.mxu0 0.0
    %3319 = vmatprep.subr.mxu0 0.0
    %3320 = vmatpush1.msra.mxu0 0.0
    %3321 = vmatprep.subr.mxu0 0.0
    %3322 = vmatpush1.msra.mxu0 0.0
    %3323 = vmatprep.subr.mxu0 0.0
    %3324 = vmatpush1.msra.mxu0 0.0
    %3325 = vmatprep.mubr.f32.mxu0 0.0
    %3326 = vmatmul.mubr.f32.gmra.mrb[0].mxu0 %v3259
    %v3327 = vpop.f32.mrb[0].mxu0
    %v3328 = vadd.f32 0.0, %v3327
    %v3329 = vpop.f32.mrb[0].mxu0
    %3330 = vdwg.mxu0
    %v3332 = vsel %vm489, %v1759, 0
    %3334 = vmatprep.subr.mxu0 0.0
    %3335 = vmatpush1.msra.mxu0 %v138
    %3336 = vmatprep.subr.mxu0 0.0
    %3337 = vmatpush1.msra.mxu0 0.0
    %3338 = vmatprep.subr.mxu0 0.0
    %3339 = vmatpush1.msra.mxu0 0.0
    %3340 = vmatprep.subr.mxu0 0.0
    %3341 = vmatpush1.msra.mxu0 0.0
    %3342 = vmatprep.subr.mxu0 0.0
    %3343 = vmatpush1.msra.mxu0 0.0
    %3344 = vmatprep.subr.mxu0 0.0
    %3345 = vmatpush1.msra.mxu0 0.0
    %3346 = vmatprep.subr.mxu0 0.0
    %3347 = vmatpush1.msra.mxu0 0.0
    %3348 = vmatprep.subr.mxu0 0.0
    %3349 = vmatpush1.msra.mxu0 0.0
    %3350 = vmatprep.subr.mxu0 0.0
    %3351 = vmatpush1.msra.mxu0 0.0
    %3352 = vmatprep.subr.mxu0 0.0
    %3353 = vmatpush1.msra.mxu0 0.0
    %3354 = vmatprep.subr.mxu0 0.0
    %3355 = vmatpush1.msra.mxu0 0.0
    %3356 = vmatprep.subr.mxu0 0.0
    %3357 = vmatpush1.msra.mxu0 0.0
    %3358 = vmatprep.subr.mxu0 0.0
    %3359 = vmatpush1.msra.mxu0 0.0
    %3360 = vmatprep.subr.mxu0 0.0
    %3361 = vmatpush1.msra.mxu0 0.0
    %3362 = vmatprep.subr.mxu0 0.0
    %3363 = vmatpush1.msra.mxu0 0.0
    %3364 = vmatprep.subr.mxu0 0.0
    %3365 = vmatpush1.msra.mxu0 0.0
    %3366 = vmatprep.subr.mxu0 0.0
    %3367 = vmatpush1.msra.mxu0 0.0
    %3368 = vmatprep.subr.mxu0 0.0
    %3369 = vmatpush1.msra.mxu0 0.0
    %3370 = vmatprep.subr.mxu0 0.0
    %3371 = vmatpush1.msra.mxu0 0.0
    %3372 = vmatprep.subr.mxu0 0.0
    %3373 = vmatpush1.msra.mxu0 0.0
    %3374 = vmatprep.subr.mxu0 0.0
    %3375 = vmatpush1.msra.mxu0 0.0
    %3376 = vmatprep.subr.mxu0 0.0
    %3377 = vmatpush1.msra.mxu0 0.0
    %3378 = vmatprep.subr.mxu0 0.0
    %3379 = vmatpush1.msra.mxu0 0.0
    %3380 = vmatprep.subr.mxu0 0.0
    %3381 = vmatpush1.msra.mxu0 0.0
    %3382 = vmatprep.subr.mxu0 0.0
    %3383 = vmatpush1.msra.mxu0 0.0
    %3384 = vmatprep.subr.mxu0 0.0
    %3385 = vmatpush1.msra.mxu0 0.0
    %3386 = vmatprep.subr.mxu0 0.0
    %3387 = vmatpush1.msra.mxu0 0.0
    %3388 = vmatprep.subr.mxu0 0.0
    %3389 = vmatpush1.msra.mxu0 0.0
    %3390 = vmatprep.subr.mxu0 0.0
    %3391 = vmatpush1.msra.mxu0 0.0
    %3392 = vmatprep.subr.mxu0 0.0
    %3393 = vmatpush1.msra.mxu0 0.0
    %3394 = vmatprep.subr.mxu0 0.0
    %3395 = vmatpush1.msra.mxu0 0.0
    %3396 = vmatprep.subr.mxu0 0.0
    %3397 = vmatpush1.msra.mxu0 0.0
    %3398 = vmatprep.mubr.f32.mxu0 0.0
    %3399 = vmatmul.mubr.f32.gmra.mrb[0].mxu0 %v3332
    %v3400 = vpop.f32.mrb[0].mxu0
    %v3401 = vadd.f32 0.0, %v3400
    %v3402 = vpop.f32.mrb[0].mxu0
    %3403 = vdwg.mxu0
    %v3405 = vsel %vm489, %v1761, 0
    %3407 = vmatprep.subr.mxu0 0.0
    %3408 = vmatpush1.msra.mxu0 %v139
    %3409 = vmatprep.subr.mxu0 0.0
    %3410 = vmatpush1.msra.mxu0 0.0
    %3411 = vmatprep.subr.mxu0 0.0
    %3412 = vmatpush1.msra.mxu0 0.0
    %3413 = vmatprep.subr.mxu0 0.0
    %3414 = vmatpush1.msra.mxu0 0.0
    %3415 = vmatprep.subr.mxu0 0.0
    %3416 = vmatpush1.msra.mxu0 0.0
    %3417 = vmatprep.subr.mxu0 0.0
    %3418 = vmatpush1.msra.mxu0 0.0
    %3419 = vmatprep.subr.mxu0 0.0
    %3420 = vmatpush1.msra.mxu0 0.0
    %3421 = vmatprep.subr.mxu0 0.0
    %3422 = vmatpush1.msra.mxu0 0.0
    %3423 = vmatprep.subr.mxu0 0.0
    %3424 = vmatpush1.msra.mxu0 0.0
    %3425 = vmatprep.subr.mxu0 0.0
    %3426 = vmatpush1.msra.mxu0 0.0
    %3427 = vmatprep.subr.mxu0 0.0
    %3428 = vmatpush1.msra.mxu0 0.0
    %3429 = vmatprep.subr.mxu0 0.0
    %3430 = vmatpush1.msra.mxu0 0.0
    %3431 = vmatprep.subr.mxu0 0.0
    %3432 = vmatpush1.msra.mxu0 0.0
    %3433 = vmatprep.subr.mxu0 0.0
    %3434 = vmatpush1.msra.mxu0 0.0
    %3435 = vmatprep.subr.mxu0 0.0
    %3436 = vmatpush1.msra.mxu0 0.0
    %3437 = vmatprep.subr.mxu0 0.0
    %3438 = vmatpush1.msra.mxu0 0.0
    %3439 = vmatprep.subr.mxu0 0.0
    %3440 = vmatpush1.msra.mxu0 0.0
    %3441 = vmatprep.subr.mxu0 0.0
    %3442 = vmatpush1.msra.mxu0 0.0
    %3443 = vmatprep.subr.mxu0 0.0
    %3444 = vmatpush1.msra.mxu0 0.0
    %3445 = vmatprep.subr.mxu0 0.0
    %3446 = vmatpush1.msra.mxu0 0.0
    %3447 = vmatprep.subr.mxu0 0.0
    %3448 = vmatpush1.msra.mxu0 0.0
    %3449 = vmatprep.subr.mxu0 0.0
    %3450 = vmatpush1.msra.mxu0 0.0
    %3451 = vmatprep.subr.mxu0 0.0
    %3452 = vmatpush1.msra.mxu0 0.0
    %3453 = vmatprep.subr.mxu0 0.0
    %3454 = vmatpush1.msra.mxu0 0.0
    %3455 = vmatprep.subr.mxu0 0.0
    %3456 = vmatpush1.msra.mxu0 0.0
    %3457 = vmatprep.subr.mxu0 0.0
    %3458 = vmatpush1.msra.mxu0 0.0
    %3459 = vmatprep.subr.mxu0 0.0
    %3460 = vmatpush1.msra.mxu0 0.0
    %3461 = vmatprep.subr.mxu0 0.0
    %3462 = vmatpush1.msra.mxu0 0.0
    %3463 = vmatprep.subr.mxu0 0.0
    %3464 = vmatpush1.msra.mxu0 0.0
    %3465 = vmatprep.subr.mxu0 0.0
    %3466 = vmatpush1.msra.mxu0 0.0
    %3467 = vmatprep.subr.mxu0 0.0
    %3468 = vmatpush1.msra.mxu0 0.0
    %3469 = vmatprep.subr.mxu0 0.0
    %3470 = vmatpush1.msra.mxu0 0.0
    %3471 = vmatprep.mubr.f32.mxu0 0.0
    %3472 = vmatmul.mubr.f32.gmra.mrb[0].mxu0 %v3405
    %v3473 = vpop.f32.mrb[0].mxu0
    %v3474 = vadd.f32 0.0, %v3473
    %v3475 = vpop.f32.mrb[0].mxu0
    %3476 = vdwg.mxu0
    %v3478 = vsel %vm489, %v1763, 0
    %3480 = vmatprep.subr.mxu0 0.0
    %3481 = vmatpush1.msra.mxu0 %v140
    %3482 = vmatprep.subr.mxu0 0.0
    %3483 = vmatpush1.msra.mxu0 0.0
    %3484 = vmatprep.subr.mxu0 0.0
    %3485 = vmatpush1.msra.mxu0 0.0
    %3486 = vmatprep.subr.mxu0 0.0
    %3487 = vmatpush1.msra.mxu0 0.0
    %3488 = vmatprep.subr.mxu0 0.0
    %3489 = vmatpush1.msra.mxu0 0.0
    %3490 = vmatprep.subr.mxu0 0.0
    %3491 = vmatpush1.msra.mxu0 0.0
    %3492 = vmatprep.subr.mxu0 0.0
    %3493 = vmatpush1.msra.mxu0 0.0
    %3494 = vmatprep.subr.mxu0 0.0
    %3495 = vmatpush1.msra.mxu0 0.0
    %3496 = vmatprep.subr.mxu0 0.0
    %3497 = vmatpush1.msra.mxu0 0.0
    %3498 = vmatprep.subr.mxu0 0.0
    %3499 = vmatpush1.msra.mxu0 0.0
    %3500 = vmatprep.subr.mxu0 0.0
    %3501 = vmatpush1.msra.mxu0 0.0
    %3502 = vmatprep.subr.mxu0 0.0
    %3503 = vmatpush1.msra.mxu0 0.0
    %3504 = vmatprep.subr.mxu0 0.0
    %3505 = vmatpush1.msra.mxu0 0.0
    %3506 = vmatprep.subr.mxu0 0.0
    %3507 = vmatpush1.msra.mxu0 0.0
    %3508 = vmatprep.subr.mxu0 0.0
    %3509 = vmatpush1.msra.mxu0 0.0
    %3510 = vmatprep.subr.mxu0 0.0
    %3511 = vmatpush1.msra.mxu0 0.0
    %3512 = vmatprep.subr.mxu0 0.0
    %3513 = vmatpush1.msra.mxu0 0.0
    %3514 = vmatprep.subr.mxu0 0.0
    %3515 = vmatpush1.msra.mxu0 0.0
    %3516 = vmatprep.subr.mxu0 0.0
    %3517 = vmatpush1.msra.mxu0 0.0
    %3518 = vmatprep.subr.mxu0 0.0
    %3519 = vmatpush1.msra.mxu0 0.0
    %3520 = vmatprep.subr.mxu0 0.0
    %3521 = vmatpush1.msra.mxu0 0.0
    %3522 = vmatprep.subr.mxu0 0.0
    %3523 = vmatpush1.msra.mxu0 0.0
    %3524 = vmatprep.subr.mxu0 0.0
    %3525 = vmatpush1.msra.mxu0 0.0
    %3526 = vmatprep.subr.mxu0 0.0
    %3527 = vmatpush1.msra.mxu0 0.0
    %3528 = vmatprep.subr.mxu0 0.0
    %3529 = vmatpush1.msra.mxu0 0.0
    %3530 = vmatprep.subr.mxu0 0.0
    %3531 = vmatpush1.msra.mxu0 0.0
    %3532 = vmatprep.subr.mxu0 0.0
    %3533 = vmatpush1.msra.mxu0 0.0
    %3534 = vmatprep.subr.mxu0 0.0
    %3535 = vmatpush1.msra.mxu0 0.0
    %3536 = vmatprep.subr.mxu0 0.0
    %3537 = vmatpush1.msra.mxu0 0.0
    %3538 = vmatprep.subr.mxu0 0.0
    %3539 = vmatpush1.msra.mxu0 0.0
    %3540 = vmatprep.subr.mxu0 0.0
    %3541 = vmatpush1.msra.mxu0 0.0
    %3542 = vmatprep.subr.mxu0 0.0
    %3543 = vmatpush1.msra.mxu0 0.0
    %3544 = vmatprep.mubr.f32.mxu0 0.0
    %3545 = vmatmul.mubr.f32.gmra.mrb[0].mxu0 %v3478
    %v3546 = vpop.f32.mrb[0].mxu0
    %v3547 = vadd.f32 0.0, %v3546
    %v3548 = vpop.f32.mrb[0].mxu0
    %3549 = vdwg.mxu0
    %v3551 = vsel %vm489, %v1765, 0
    %3553 = vmatprep.subr.mxu0 0.0
    %3554 = vmatpush1.msra.mxu0 %v141
    %3555 = vmatprep.subr.mxu0 0.0
    %3556 = vmatpush1.msra.mxu0 0.0
    %3557 = vmatprep.subr.mxu0 0.0
    %3558 = vmatpush1.msra.mxu0 0.0
    %3559 = vmatprep.subr.mxu0 0.0
    %3560 = vmatpush1.msra.mxu0 0.0
    %3561 = vmatprep.subr.mxu0 0.0
    %3562 = vmatpush1.msra.mxu0 0.0
    %3563 = vmatprep.subr.mxu0 0.0
    %3564 = vmatpush1.msra.mxu0 0.0
    %3565 = vmatprep.subr.mxu0 0.0
    %3566 = vmatpush1.msra.mxu0 0.0
    %3567 = vmatprep.subr.mxu0 0.0
    %3568 = vmatpush1.msra.mxu0 0.0
    %3569 = vmatprep.subr.mxu0 0.0
    %3570 = vmatpush1.msra.mxu0 0.0
    %3571 = vmatprep.subr.mxu0 0.0
    %3572 = vmatpush1.msra.mxu0 0.0
    %3573 = vmatprep.subr.mxu0 0.0
    %3574 = vmatpush1.msra.mxu0 0.0
    %3575 = vmatprep.subr.mxu0 0.0
    %3576 = vmatpush1.msra.mxu0 0.0
    %3577 = vmatprep.subr.mxu0 0.0
    %3578 = vmatpush1.msra.mxu0 0.0
    %3579 = vmatprep.subr.mxu0 0.0
    %3580 = vmatpush1.msra.mxu0 0.0
    %3581 = vmatprep.subr.mxu0 0.0
    %3582 = vmatpush1.msra.mxu0 0.0
    %3583 = vmatprep.subr.mxu0 0.0
    %3584 = vmatpush1.msra.mxu0 0.0
    %3585 = vmatprep.subr.mxu0 0.0
    %3586 = vmatpush1.msra.mxu0 0.0
    %3587 = vmatprep.subr.mxu0 0.0
    %3588 = vmatpush1.msra.mxu0 0.0
    %3589 = vmatprep.subr.mxu0 0.0
    %3590 = vmatpush1.msra.mxu0 0.0
    %3591 = vmatprep.subr.mxu0 0.0
    %3592 = vmatpush1.msra.mxu0 0.0
    %3593 = vmatprep.subr.mxu0 0.0
    %3594 = vmatpush1.msra.mxu0 0.0
    %3595 = vmatprep.subr.mxu0 0.0
    %3596 = vmatpush1.msra.mxu0 0.0
    %3597 = vmatprep.subr.mxu0 0.0
    %3598 = vmatpush1.msra.mxu0 0.0
    %3599 = vmatprep.subr.mxu0 0.0
    %3600 = vmatpush1.msra.mxu0 0.0
    %3601 = vmatprep.subr.mxu0 0.0
    %3602 = vmatpush1.msra.mxu0 0.0
    %3603 = vmatprep.subr.mxu0 0.0
    %3604 = vmatpush1.msra.mxu0 0.0
    %3605 = vmatprep.subr.mxu0 0.0
    %3606 = vmatpush1.msra.mxu0 0.0
    %3607 = vmatprep.subr.mxu0 0.0
    %3608 = vmatpush1.msra.mxu0 0.0
    %3609 = vmatprep.subr.mxu0 0.0
    %3610 = vmatpush1.msra.mxu0 0.0
    %3611 = vmatprep.subr.mxu0 0.0
    %3612 = vmatpush1.msra.mxu0 0.0
    %3613 = vmatprep.subr.mxu0 0.0
    %3614 = vmatpush1.msra.mxu0 0.0
    %3615 = vmatprep.subr.mxu0 0.0
    %3616 = vmatpush1.msra.mxu0 0.0
    %3617 = vmatprep.mubr.f32.mxu0 0.0
    %3618 = vmatmul.mubr.f32.gmra.mrb[0].mxu0 %v3551
    %v3619 = vpop.f32.mrb[0].mxu0
    %v3620 = vadd.f32 0.0, %v3619
    %v3621 = vpop.f32.mrb[0].mxu0
    %3622 = vdwg.mxu0
    %v3624 = vsel %vm489, %v1767, 0
    %3626 = vmatprep.subr.mxu0 0.0
    %3627 = vmatpush1.msra.mxu0 %v142
    %3628 = vmatprep.subr.mxu0 0.0
    %3629 = vmatpush1.msra.mxu0 0.0
    %3630 = vmatprep.subr.mxu0 0.0
    %3631 = vmatpush1.msra.mxu0 0.0
    %3632 = vmatprep.subr.mxu0 0.0
    %3633 = vmatpush1.msra.mxu0 0.0
    %3634 = vmatprep.subr.mxu0 0.0
    %3635 = vmatpush1.msra.mxu0 0.0
    %3636 = vmatprep.subr.mxu0 0.0
    %3637 = vmatpush1.msra.mxu0 0.0
    %3638 = vmatprep.subr.mxu0 0.0
    %3639 = vmatpush1.msra.mxu0 0.0
    %3640 = vmatprep.subr.mxu0 0.0
    %3641 = vmatpush1.msra.mxu0 0.0
    %3642 = vmatprep.subr.mxu0 0.0
    %3643 = vmatpush1.msra.mxu0 0.0
    %3644 = vmatprep.subr.mxu0 0.0
    %3645 = vmatpush1.msra.mxu0 0.0
    %3646 = vmatprep.subr.mxu0 0.0
    %3647 = vmatpush1.msra.mxu0 0.0
    %3648 = vmatprep.subr.mxu0 0.0
    %3649 = vmatpush1.msra.mxu0 0.0
    %3650 = vmatprep.subr.mxu0 0.0
    %3651 = vmatpush1.msra.mxu0 0.0
    %3652 = vmatprep.subr.mxu0 0.0
    %3653 = vmatpush1.msra.mxu0 0.0
    %3654 = vmatprep.subr.mxu0 0.0
    %3655 = vmatpush1.msra.mxu0 0.0
    %3656 = vmatprep.subr.mxu0 0.0
    %3657 = vmatpush1.msra.mxu0 0.0
    %3658 = vmatprep.subr.mxu0 0.0
    %3659 = vmatpush1.msra.mxu0 0.0
    %3660 = vmatprep.subr.mxu0 0.0
    %3661 = vmatpush1.msra.mxu0 0.0
    %3662 = vmatprep.subr.mxu0 0.0
    %3663 = vmatpush1.msra.mxu0 0.0
    %3664 = vmatprep.subr.mxu0 0.0
    %3665 = vmatpush1.msra.mxu0 0.0
    %3666 = vmatprep.subr.mxu0 0.0
    %3667 = vmatpush1.msra.mxu0 0.0
    %3668 = vmatprep.subr.mxu0 0.0
    %3669 = vmatpush1.msra.mxu0 0.0
    %3670 = vmatprep.subr.mxu0 0.0
    %3671 = vmatpush1.msra.mxu0 0.0
    %3672 = vmatprep.subr.mxu0 0.0
    %3673 = vmatpush1.msra.mxu0 0.0
    %3674 = vmatprep.subr.mxu0 0.0
    %3675 = vmatpush1.msra.mxu0 0.0
    %3676 = vmatprep.subr.mxu0 0.0
    %3677 = vmatpush1.msra.mxu0 0.0
    %3678 = vmatprep.subr.mxu0 0.0
    %3679 = vmatpush1.msra.mxu0 0.0
    %3680 = vmatprep.subr.mxu0 0.0
    %3681 = vmatpush1.msra.mxu0 0.0
    %3682 = vmatprep.subr.mxu0 0.0
    %3683 = vmatpush1.msra.mxu0 0.0
    %3684 = vmatprep.subr.mxu0 0.0
    %3685 = vmatpush1.msra.mxu0 0.0
    %3686 = vmatprep.subr.mxu0 0.0
    %3687 = vmatpush1.msra.mxu0 0.0
    %3688 = vmatprep.subr.mxu0 0.0
    %3689 = vmatpush1.msra.mxu0 0.0
    %3690 = vmatprep.mubr.f32.mxu0 0.0
    %3691 = vmatmul.mubr.f32.gmra.mrb[0].mxu0 %v3624
    %v3692 = vpop.f32.mrb[0].mxu0
    %v3693 = vadd.f32 0.0, %v3692
    %v3694 = vpop.f32.mrb[0].mxu0
    %3695 = vdwg.mxu0
    %v3696 = vadd.f32 %v3084, %v3182
    %v3697 = vadd.f32 %v3108, %v3255
    %v3698 = vadd.f32 %v3091, %v3328
    %v3699 = vadd.f32 %v3109, %v3401
    %v3700 = vadd.f32 %v3100, %v3474
    %v3701 = vadd.f32 %v3110, %v3547
    %v3702 = vadd.f32 %v3107, %v3620
    %v3703 = vadd.f32 %v3111, %v3693
    %v3704 = vcombine.low %v3696, %v3698
    %v3706 = vunpack.c.l.s4 1983009808
    %v3707 = vunpack.c.0.s8 %v3706
    %v3708 = vlaneseq
    %v3709 = vshrl.u32 %v3708, 7
    %v3710 = vsub.s32 %v3707, %v3709
    %v3711 = vrot.slane %v3704, %v3710
    %v3712 = vcombine.low %v3697, %v3699
    %v3714 = vunpack.c.l.s4 1983009808
    %v3715 = vunpack.c.0.s8 %v3714
    %v3716 = vlaneseq
    %v3717 = vshrl.u32 %v3716, 7
    %v3718 = vsub.s32 %v3715, %v3717
    %v3719 = vrot.slane %v3712, %v3718
    %v3720 = vcombine.low %v3700, %v3702
    %v3722 = vunpack.c.l.s4 1983009808
    %v3723 = vunpack.c.0.s8 %v3722
    %v3724 = vlaneseq
    %v3725 = vshrl.u32 %v3724, 7
    %v3726 = vsub.s32 %v3723, %v3725
    %v3727 = vrot.slane %v3720, %v3726
    %v3728 = vcombine.low %v3701, %v3703
    %v3730 = vunpack.c.l.s4 1983009808
    %v3731 = vunpack.c.0.s8 %v3730
    %v3732 = vlaneseq
    %v3733 = vshrl.u32 %v3732, 7
    %v3734 = vsub.s32 %v3731, %v3733
    %v3735 = vrot.slane %v3728, %v3734
    %v3736 = vcombine.low %v3711, %v3719
    %v3737 = vcombine.high %v3711, %v3719
    %v3739 = vunpack.c.l.s4 1934713408
    %v3740 = vunpack.c.0.s8 %v3739
    %v3741 = vlaneseq
    %v3742 = vshrl.u32 %v3741, 7
    %v3743 = vsub.s32 %v3740, %v3742
    %v3744 = vrot.slane %v3736, %v3743
    %v3746 = vunpack.c.l.s4 1934713408
    %v3747 = vunpack.c.0.s8 %v3746
    %v3748 = vlaneseq
    %v3749 = vshrl.u32 %v3748, 7
    %v3750 = vsub.s32 %v3747, %v3749
    %v3751 = vrot.slane %v3737, %v3750
    %v3752 = vcombine.low %v3727, %v3735
    %v3753 = vcombine.high %v3727, %v3735
    %v3755 = vunpack.c.l.s4 1934713408
    %v3756 = vunpack.c.0.s8 %v3755
    %v3757 = vlaneseq
    %v3758 = vshrl.u32 %v3757, 7
    %v3759 = vsub.s32 %v3756, %v3758
    %v3760 = vrot.slane %v3752, %v3759
    %v3762 = vunpack.c.l.s4 1934713408
    %v3763 = vunpack.c.0.s8 %v3762
    %v3764 = vlaneseq
    %v3765 = vshrl.u32 %v3764, 7
    %v3766 = vsub.s32 %v3763, %v3765
    %v3767 = vrot.slane %v3753, %v3766
    %v3768 = vcombine.low %v3744, %v3760
    %v3769 = vcombine.high %v3744, %v3760
    %v3770 = vcombine.low %v3751, %v3767
    %v3771 = vcombine.high %v3751, %v3767
    %3773 = vrot.lane.b32.xlu0 %v3769, 8
    %v3774 = vpop.permute.xlu0 %3773
    %3777 = vrot.lane.b32.xlu0 %v3770, 16
    %v3778 = vpop.permute.xlu0 %3777
    %3781 = vrot.lane.b32.xlu0 %v3771, 24
    %v3782 = vpop.permute.xlu0 %3781
    %v3784 = vsel %vm489, %v3768, %v3774
    %vm3785 = vcmask 130048
    %v3786 = vsel %vm3785, %v3784, %v3778
    %vm3787 = vcmask 195584
    %v3788 = vsel %vm3787, %v3786, %v3782
    %v3789 = vcombine.low %v1753, %v1757
    %v3791 = vunpack.c.l.s4 1983009808
    %v3792 = vunpack.c.0.s8 %v3791
    %v3793 = vlaneseq
    %v3794 = vshrl.u32 %v3793, 7
    %v3795 = vsub.s32 %v3792, %v3794
    %v3796 = vrot.slane %v3789, %v3795
    %v3797 = vcombine.low %v1755, %v1759
    %v3799 = vunpack.c.l.s4 1983009808
    %v3800 = vunpack.c.0.s8 %v3799
    %v3801 = vlaneseq
    %v3802 = vshrl.u32 %v3801, 7
    %v3803 = vsub.s32 %v3800, %v3802
    %v3804 = vrot.slane %v3797, %v3803
    %v3805 = vcombine.low %v1761, %v1765
    %v3807 = vunpack.c.l.s4 1983009808
    %v3808 = vunpack.c.0.s8 %v3807
    %v3809 = vlaneseq
    %v3810 = vshrl.u32 %v3809, 7
    %v3811 = vsub.s32 %v3808, %v3810
    %v3812 = vrot.slane %v3805, %v3811
    %v3813 = vcombine.low %v1763, %v1767
    %v3815 = vunpack.c.l.s4 1983009808
    %v3816 = vunpack.c.0.s8 %v3815
    %v3817 = vlaneseq
    %v3818 = vshrl.u32 %v3817, 7
    %v3819 = vsub.s32 %v3816, %v3818
    %v3820 = vrot.slane %v3813, %v3819
    %v3821 = vcombine.low %v3796, %v3804
    %v3822 = vcombine.high %v3796, %v3804
    %v3824 = vunpack.c.l.s4 1934713408
    %v3825 = vunpack.c.0.s8 %v3824
    %v3826 = vlaneseq
    %v3827 = vshrl.u32 %v3826, 7
    %v3828 = vsub.s32 %v3825, %v3827
    %v3829 = vrot.slane %v3821, %v3828
    %v3831 = vunpack.c.l.s4 1934713408
    %v3832 = vunpack.c.0.s8 %v3831
    %v3833 = vlaneseq
    %v3834 = vshrl.u32 %v3833, 7
    %v3835 = vsub.s32 %v3832, %v3834
    %v3836 = vrot.slane %v3822, %v3835
    %v3837 = vcombine.low %v3812, %v3820
    %v3838 = vcombine.high %v3812, %v3820
    %v3840 = vunpack.c.l.s4 1934713408
    %v3841 = vunpack.c.0.s8 %v3840
    %v3842 = vlaneseq
    %v3843 = vshrl.u32 %v3842, 7
    %v3844 = vsub.s32 %v3841, %v3843
    %v3845 = vrot.slane %v3837, %v3844
    %v3847 = vunpack.c.l.s4 1934713408
    %v3848 = vunpack.c.0.s8 %v3847
    %v3849 = vlaneseq
    %v3850 = vshrl.u32 %v3849, 7
    %v3851 = vsub.s32 %v3848, %v3850
    %v3852 = vrot.slane %v3838, %v3851
    %v3853 = vcombine.low %v3829, %v3845
    %v3854 = vcombine.high %v3829, %v3845
    %v3855 = vcombine.low %v3836, %v3852
    %v3856 = vcombine.high %v3836, %v3852
    %3858 = vrot.lane.b32.xlu0 %v3854, 8
    %v3859 = vpop.permute.xlu0 %3858
    %3862 = vrot.lane.b32.xlu0 %v3855, 16
    %v3863 = vpop.permute.xlu0 %3862
    %3866 = vrot.lane.b32.xlu0 %v3856, 24
    %v3867 = vpop.permute.xlu0 %3866
    %v3869 = vsel %vm489, %v3853, %v3859
    %v3870 = vsel %vm3785, %v3869, %v3863
    %v3871 = vsel %vm3787, %v3870, %v3867
    %3873 = vrot.lane.b32.xlu0 %v278, 120
    %v3874 = vpop.permute.xlu0 %3873
    %3876 = vrot.lane.b32.xlu0 %v278, 112
    %v3877 = vpop.permute.xlu0 %3876
    %3879 = vrot.lane.b32.xlu0 %v278, 104
    %v3880 = vpop.permute.xlu0 %3879
    %v3882 = vcombine.low %v278, %v3877
    %v3883 = vcombine.high %v278, %v3877
    %v3885 = vunpack.c.l.s4 1983009808
    %v3886 = vunpack.c.0.s8 %v3885
    %v3887 = vlaneseq
    %v3888 = vshrl.u32 %v3887, 7
    %v3889 = vsub.s32 %v3886, %v3888
    %v3890 = vrot.slane %v3882, %v3889
    %v3892 = vunpack.c.l.s4 1983009808
    %v3893 = vunpack.c.0.s8 %v3892
    %v3894 = vlaneseq
    %v3895 = vshrl.u32 %v3894, 7
    %v3896 = vsub.s32 %v3893, %v3895
    %v3897 = vrot.slane %v3883, %v3896
    %v3898 = vcombine.low %v3874, %v3880
    %v3899 = vcombine.high %v3874, %v3880
    %v3901 = vunpack.c.l.s4 1983009808
    %v3902 = vunpack.c.0.s8 %v3901
    %v3903 = vlaneseq
    %v3904 = vshrl.u32 %v3903, 7
    %v3905 = vsub.s32 %v3902, %v3904
    %v3906 = vrot.slane %v3898, %v3905
    %v3908 = vunpack.c.l.s4 1983009808
    %v3909 = vunpack.c.0.s8 %v3908
    %v3910 = vlaneseq
    %v3911 = vshrl.u32 %v3910, 7
    %v3912 = vsub.s32 %v3909, %v3911
    %v3913 = vrot.slane %v3899, %v3912
    %v3914 = vcombine.low %v3890, %v3906
    %v3915 = vcombine.high %v3890, %v3906
    %v3917 = vunpack.c.l.s4 1934713408
    %v3918 = vunpack.c.0.s8 %v3917
    %v3919 = vlaneseq
    %v3920 = vshrl.u32 %v3919, 7
    %v3921 = vsub.s32 %v3918, %v3920
    %v3922 = vrot.slane %v3914, %v3921
    %v3924 = vunpack.c.l.s4 1934713408
    %v3925 = vunpack.c.0.s8 %v3924
    %v3926 = vlaneseq
    %v3927 = vshrl.u32 %v3926, 7
    %v3928 = vsub.s32 %v3925, %v3927
    %v3929 = vrot.slane %v3915, %v3928
    %v3930 = vcombine.low %v3897, %v3913
    %v3931 = vcombine.high %v3897, %v3913
    %v3933 = vunpack.c.l.s4 1934713408
    %v3934 = vunpack.c.0.s8 %v3933
    %v3935 = vlaneseq
    %v3936 = vshrl.u32 %v3935, 7
    %v3937 = vsub.s32 %v3934, %v3936
    %v3938 = vrot.slane %v3930, %v3937
    %v3940 = vunpack.c.l.s4 1934713408
    %v3941 = vunpack.c.0.s8 %v3940
    %v3942 = vlaneseq
    %v3943 = vshrl.u32 %v3942, 7
    %v3944 = vsub.s32 %v3941, %v3943
    %v3945 = vrot.slane %v3931, %v3944
    %v3946 = vcombine.high %v3922, 0.0
    %v3947 = vcombine.high %v3929, 0.0
    %v3948 = vcombine.high %v3938, 0.0
    %v3949 = vcombine.high %v3945, 0.0
    %3950 = vxpose.xlu0.b32.start [1/16] %v278, 128
    %3951 = vxpose.xlu0.b32.cont [2/16] 0.0, 128
    %3952 = vxpose.xlu0.b32.cont [3/16] 0.0, 128
    %3953 = vxpose.xlu0.b32.cont [4/16] 0.0, 128
    %3954 = vxpose.xlu0.b32.cont [5/16] 0.0, 128
    %3955 = vxpose.xlu0.b32.cont [6/16] 0.0, 128
    %3956 = vxpose.xlu0.b32.cont [7/16] 0.0, 128
    %3957 = vxpose.xlu0.b32.cont [8/16] 0.0, 128
    %3958 = vxpose.xlu0.b32.cont [9/16] 0.0, 128
    %3959 = vxpose.xlu0.b32.cont [10/16] 0.0, 128
    %3960 = vxpose.xlu0.b32.cont [11/16] 0.0, 128
    %3961 = vxpose.xlu0.b32.cont [12/16] 0.0, 128
    %3962 = vxpose.xlu0.b32.cont [13/16] 0.0, 128
    %3963 = vxpose.xlu0.b32.cont [14/16] 0.0, 128
    %3964 = vxpose.xlu0.b32.cont [15/16] 0.0, 128
    %3965 = vxpose.xlu0.b32.end [16/16] 0.0, 128
    %v3966 = vpop.trf.xlu0
    %v3967 = vpop.trf.xlu0
    %v3968 = vpop.trf.xlu0
    %v3969 = vpop.trf.xlu0
    %v3970 = vpop.trf.xlu0
    %v3971 = vpop.trf.xlu0
    %v3972 = vpop.trf.xlu0
    %v3973 = vpop.trf.xlu0
    %v3974 = vpop.trf.xlu0
    %v3975 = vpop.trf.xlu0
    %v3976 = vpop.trf.xlu0
    %v3977 = vpop.trf.xlu0
    %v3978 = vpop.trf.xlu0
    %v3979 = vpop.trf.xlu0
    %v3980 = vpop.trf.xlu0
    %v3981 = vpop.trf.xlu0
    %3982 = vxpose.xlu0.b32.start [1/16] %v3874, 128
    %3983 = vxpose.xlu0.b32.cont [2/16] 0.0, 128
    %3984 = vxpose.xlu0.b32.cont [3/16] 0.0, 128
    %3985 = vxpose.xlu0.b32.cont [4/16] 0.0, 128
    %3986 = vxpose.xlu0.b32.cont [5/16] 0.0, 128
    %3987 = vxpose.xlu0.b32.cont [6/16] 0.0, 128
    %3988 = vxpose.xlu0.b32.cont [7/16] 0.0, 128
    %3989 = vxpose.xlu0.b32.cont [8/16] 0.0, 128
    %3990 = vxpose.xlu0.b32.cont [9/16] 0.0, 128
    %3991 = vxpose.xlu0.b32.cont [10/16] 0.0, 128
    %3992 = vxpose.xlu0.b32.cont [11/16] 0.0, 128
    %3993 = vxpose.xlu0.b32.cont [12/16] 0.0, 128
    %3994 = vxpose.xlu0.b32.cont [13/16] 0.0, 128
    %3995 = vxpose.xlu0.b32.cont [14/16] 0.0, 128
    %3996 = vxpose.xlu0.b32.cont [15/16] 0.0, 128
    %3997 = vxpose.xlu0.b32.end [16/16] 0.0, 128
    %v3998 = vpop.trf.xlu0
    %v3999 = vpop.trf.xlu0
    %v4000 = vpop.trf.xlu0
    %v4001 = vpop.trf.xlu0
    %v4002 = vpop.trf.xlu0
    %v4003 = vpop.trf.xlu0
    %v4004 = vpop.trf.xlu0
    %v4005 = vpop.trf.xlu0
    %v4006 = vpop.trf.xlu0
    %v4007 = vpop.trf.xlu0
    %v4008 = vpop.trf.xlu0
    %v4009 = vpop.trf.xlu0
    %v4010 = vpop.trf.xlu0
    %v4011 = vpop.trf.xlu0
    %v4012 = vpop.trf.xlu0
    %v4013 = vpop.trf.xlu0
    %4014 = vxpose.xlu0.b32.start [1/16] %v3877, 128
    %4015 = vxpose.xlu0.b32.cont [2/16] 0.0, 128
    %4016 = vxpose.xlu0.b32.cont [3/16] 0.0, 128
    %4017 = vxpose.xlu0.b32.cont [4/16] 0.0, 128
    %4018 = vxpose.xlu0.b32.cont [5/16] 0.0, 128
    %4019 = vxpose.xlu0.b32.cont [6/16] 0.0, 128
    %4020 = vxpose.xlu0.b32.cont [7/16] 0.0, 128
    %4021 = vxpose.xlu0.b32.cont [8/16] 0.0, 128
    %4022 = vxpose.xlu0.b32.cont [9/16] 0.0, 128
    %4023 = vxpose.xlu0.b32.cont [10/16] 0.0, 128
    %4024 = vxpose.xlu0.b32.cont [11/16] 0.0, 128
    %4025 = vxpose.xlu0.b32.cont [12/16] 0.0, 128
    %4026 = vxpose.xlu0.b32.cont [13/16] 0.0, 128
    %4027 = vxpose.xlu0.b32.cont [14/16] 0.0, 128
    %4028 = vxpose.xlu0.b32.cont [15/16] 0.0, 128
    %4029 = vxpose.xlu0.b32.end [16/16] 0.0, 128
    %v4030 = vpop.trf.xlu0
    %v4031 = vpop.trf.xlu0
    %v4032 = vpop.trf.xlu0
    %v4033 = vpop.trf.xlu0
    %v4034 = vpop.trf.xlu0
    %v4035 = vpop.trf.xlu0
    %v4036 = vpop.trf.xlu0
    %v4037 = vpop.trf.xlu0
    %v4038 = vpop.trf.xlu0
    %v4039 = vpop.trf.xlu0
    %v4040 = vpop.trf.xlu0
    %v4041 = vpop.trf.xlu0
    %v4042 = vpop.trf.xlu0
    %v4043 = vpop.trf.xlu0
    %v4044 = vpop.trf.xlu0
    %v4045 = vpop.trf.xlu0
    %4046 = vxpose.xlu0.b32.start [1/16] %v3880, 128
    %4047 = vxpose.xlu0.b32.cont [2/16] 0.0, 128
    %4048 = vxpose.xlu0.b32.cont [3/16] 0.0, 128
    %4049 = vxpose.xlu0.b32.cont [4/16] 0.0, 128
    %4050 = vxpose.xlu0.b32.cont [5/16] 0.0, 128
    %4051 = vxpose.xlu0.b32.cont [6/16] 0.0, 128
    %4052 = vxpose.xlu0.b32.cont [7/16] 0.0, 128
    %4053 = vxpose.xlu0.b32.cont [8/16] 0.0, 128
    %4054 = vxpose.xlu0.b32.cont [9/16] 0.0, 128
    %4055 = vxpose.xlu0.b32.cont [10/16] 0.0, 128
    %4056 = vxpose.xlu0.b32.cont [11/16] 0.0, 128
    %4057 = vxpose.xlu0.b32.cont [12/16] 0.0, 128
    %4058 = vxpose.xlu0.b32.cont [13/16] 0.0, 128
    %4059 = vxpose.xlu0.b32.cont [14/16] 0.0, 128
    %4060 = vxpose.xlu0.b32.cont [15/16] 0.0, 128
    %4061 = vxpose.xlu0.b32.end [16/16] 0.0, 128
    %v4062 = vpop.trf.xlu0
    %v4063 = vpop.trf.xlu0
    %v4064 = vpop.trf.xlu0
    %v4065 = vpop.trf.xlu0
    %v4066 = vpop.trf.xlu0
    %v4067 = vpop.trf.xlu0
    %v4068 = vpop.trf.xlu0
    %v4069 = vpop.trf.xlu0
    %v4070 = vpop.trf.xlu0
    %v4071 = vpop.trf.xlu0
    %v4072 = vpop.trf.xlu0
    %v4073 = vpop.trf.xlu0
    %v4074 = vpop.trf.xlu0
    %v4075 = vpop.trf.xlu0
    %v4076 = vpop.trf.xlu0
    %v4077 = vpop.trf.xlu0
    %4078 = vrot.lane.b32.xlu0 %v278, 96
    %v4079 = vpop.permute.xlu0 %4078
    %v4080 = vsel %vm489, %v4079, 0
    %4082 = vmatprep.subr.mxu0 0.0
    %4083 = vmatpush1.msra.mxu0 %v3966
    %4084 = vmatprep.subr.mxu0 0.0
    %4085 = vmatpush1.msra.mxu0 0.0
    %4086 = vmatprep.subr.mxu0 0.0
    %4087 = vmatpush1.msra.mxu0 0.0
    %4088 = vmatprep.subr.mxu0 0.0
    %4089 = vmatpush1.msra.mxu0 0.0
    %4090 = vmatprep.subr.mxu0 0.0
    %4091 = vmatpush1.msra.mxu0 0.0
    %4092 = vmatprep.subr.mxu0 0.0
    %4093 = vmatpush1.msra.mxu0 0.0
    %4094 = vmatprep.subr.mxu0 0.0
    %4095 = vmatpush1.msra.mxu0 0.0
    %4096 = vmatprep.subr.mxu0 0.0
    %4097 = vmatpush1.msra.mxu0 0.0
    %4098 = vmatprep.subr.mxu0 0.0
    %4099 = vmatpush1.msra.mxu0 0.0
    %4100 = vmatprep.subr.mxu0 0.0
    %4101 = vmatpush1.msra.mxu0 0.0
    %4102 = vmatprep.subr.mxu0 0.0
    %4103 = vmatpush1.msra.mxu0 0.0
    %4104 = vmatprep.subr.mxu0 0.0
    %4105 = vmatpush1.msra.mxu0 0.0
    %4106 = vmatprep.subr.mxu0 0.0
    %4107 = vmatpush1.msra.mxu0 0.0
    %4108 = vmatprep.subr.mxu0 0.0
    %4109 = vmatpush1.msra.mxu0 0.0
    %4110 = vmatprep.subr.mxu0 0.0
    %4111 = vmatpush1.msra.mxu0 0.0
    %4112 = vmatprep.subr.mxu0 0.0
    %4113 = vmatpush1.msra.mxu0 0.0
    %4114 = vmatprep.subr.mxu0 0.0
    %4115 = vmatpush1.msra.mxu0 0.0
    %4116 = vmatprep.subr.mxu0 0.0
    %4117 = vmatpush1.msra.mxu0 0.0
    %4118 = vmatprep.subr.mxu0 0.0
    %4119 = vmatpush1.msra.mxu0 0.0
    %4120 = vmatprep.subr.mxu0 0.0
    %4121 = vmatpush1.msra.mxu0 0.0
    %4122 = vmatprep.subr.mxu0 0.0
    %4123 = vmatpush1.msra.mxu0 0.0
    %4124 = vmatprep.subr.mxu0 0.0
    %4125 = vmatpush1.msra.mxu0 0.0
    %4126 = vmatprep.subr.mxu0 0.0
    %4127 = vmatpush1.msra.mxu0 0.0
    %4128 = vmatprep.subr.mxu0 0.0
    %4129 = vmatpush1.msra.mxu0 0.0
    %4130 = vmatprep.subr.mxu0 0.0
    %4131 = vmatpush1.msra.mxu0 0.0
    %4132 = vmatprep.subr.mxu0 0.0
    %4133 = vmatpush1.msra.mxu0 0.0
    %4134 = vmatprep.subr.mxu0 0.0
    %4135 = vmatpush1.msra.mxu0 0.0
    %4136 = vmatprep.subr.mxu0 0.0
    %4137 = vmatpush1.msra.mxu0 0.0
    %4138 = vmatprep.subr.mxu0 0.0
    %4139 = vmatpush1.msra.mxu0 0.0
    %4140 = vmatprep.subr.mxu0 0.0
    %4141 = vmatpush1.msra.mxu0 0.0
    %4142 = vmatprep.subr.mxu0 0.0
    %4143 = vmatpush1.msra.mxu0 0.0
    %4144 = vmatprep.subr.mxu0 0.0
    %4145 = vmatpush1.msra.mxu0 0.0
    %4146 = vmatprep.mubr.f32.mxu0 0.0
    %4147 = vmatmul.mubr.f32.gmra.mrb[0].mxu0 %v4080
    %v4148 = vpop.f32.mrb[0].mxu0
    %v4149 = vadd.f32 0.0, %v4148
    %v4150 = vpop.f32.mrb[0].mxu0
    %4151 = vdwg.mxu0
    %4152 = vrot.lane.b32.xlu0 %v3874, 96
    %v4153 = vpop.permute.xlu0 %4152
    %v4154 = vsel %vm489, %v4153, 0
    %4156 = vmatprep.subr.mxu0 0.0
    %4157 = vmatpush1.msra.mxu0 %v3998
    %4158 = vmatprep.subr.mxu0 0.0
    %4159 = vmatpush1.msra.mxu0 0.0
    %4160 = vmatprep.subr.mxu0 0.0
    %4161 = vmatpush1.msra.mxu0 0.0
    %4162 = vmatprep.subr.mxu0 0.0
    %4163 = vmatpush1.msra.mxu0 0.0
    %4164 = vmatprep.subr.mxu0 0.0
    %4165 = vmatpush1.msra.mxu0 0.0
    %4166 = vmatprep.subr.mxu0 0.0
    %4167 = vmatpush1.msra.mxu0 0.0
    %4168 = vmatprep.subr.mxu0 0.0
    %4169 = vmatpush1.msra.mxu0 0.0
    %4170 = vmatprep.subr.mxu0 0.0
    %4171 = vmatpush1.msra.mxu0 0.0
    %4172 = vmatprep.subr.mxu0 0.0
    %4173 = vmatpush1.msra.mxu0 0.0
    %4174 = vmatprep.subr.mxu0 0.0
    %4175 = vmatpush1.msra.mxu0 0.0
    %4176 = vmatprep.subr.mxu0 0.0
    %4177 = vmatpush1.msra.mxu0 0.0
    %4178 = vmatprep.subr.mxu0 0.0
    %4179 = vmatpush1.msra.mxu0 0.0
    %4180 = vmatprep.subr.mxu0 0.0
    %4181 = vmatpush1.msra.mxu0 0.0
    %4182 = vmatprep.subr.mxu0 0.0
    %4183 = vmatpush1.msra.mxu0 0.0
    %4184 = vmatprep.subr.mxu0 0.0
    %4185 = vmatpush1.msra.mxu0 0.0
    %4186 = vmatprep.subr.mxu0 0.0
    %4187 = vmatpush1.msra.mxu0 0.0
    %4188 = vmatprep.subr.mxu0 0.0
    %4189 = vmatpush1.msra.mxu0 0.0
    %4190 = vmatprep.subr.mxu0 0.0
    %4191 = vmatpush1.msra.mxu0 0.0
    %4192 = vmatprep.subr.mxu0 0.0
    %4193 = vmatpush1.msra.mxu0 0.0
    %4194 = vmatprep.subr.mxu0 0.0
    %4195 = vmatpush1.msra.mxu0 0.0
    %4196 = vmatprep.subr.mxu0 0.0
    %4197 = vmatpush1.msra.mxu0 0.0
    %4198 = vmatprep.subr.mxu0 0.0
    %4199 = vmatpush1.msra.mxu0 0.0
    %4200 = vmatprep.subr.mxu0 0.0
    %4201 = vmatpush1.msra.mxu0 0.0
    %4202 = vmatprep.subr.mxu0 0.0
    %4203 = vmatpush1.msra.mxu0 0.0
    %4204 = vmatprep.subr.mxu0 0.0
    %4205 = vmatpush1.msra.mxu0 0.0
    %4206 = vmatprep.subr.mxu0 0.0
    %4207 = vmatpush1.msra.mxu0 0.0
    %4208 = vmatprep.subr.mxu0 0.0
    %4209 = vmatpush1.msra.mxu0 0.0
    %4210 = vmatprep.subr.mxu0 0.0
    %4211 = vmatpush1.msra.mxu0 0.0
    %4212 = vmatprep.subr.mxu0 0.0
    %4213 = vmatpush1.msra.mxu0 0.0
    %4214 = vmatprep.subr.mxu0 0.0
    %4215 = vmatpush1.msra.mxu0 0.0
    %4216 = vmatprep.subr.mxu0 0.0
    %4217 = vmatpush1.msra.mxu0 0.0
    %4218 = vmatprep.subr.mxu0 0.0
    %4219 = vmatpush1.msra.mxu0 0.0
    %4220 = vmatprep.mubr.f32.mxu0 0.0
    %4221 = vmatmul.mubr.f32.gmra.mrb[0].mxu0 %v4154
    %v4222 = vpop.f32.mrb[0].mxu0
    %v4223 = vadd.f32 0.0, %v4222
    %v4224 = vpop.f32.mrb[0].mxu0
    %4225 = vdwg.mxu0
    %4226 = vrot.lane.b32.xlu0 %v3877, 96
    %v4227 = vpop.permute.xlu0 %4226
    %v4228 = vsel %vm489, %v4227, 0
    %4230 = vmatprep.subr.mxu0 0.0
    %4231 = vmatpush1.msra.mxu0 %v4030
    %4232 = vmatprep.subr.mxu0 0.0
    %4233 = vmatpush1.msra.mxu0 0.0
    %4234 = vmatprep.subr.mxu0 0.0
    %4235 = vmatpush1.msra.mxu0 0.0
    %4236 = vmatprep.subr.mxu0 0.0
    %4237 = vmatpush1.msra.mxu0 0.0
    %4238 = vmatprep.subr.mxu0 0.0
    %4239 = vmatpush1.msra.mxu0 0.0
    %4240 = vmatprep.subr.mxu0 0.0
    %4241 = vmatpush1.msra.mxu0 0.0
    %4242 = vmatprep.subr.mxu0 0.0
    %4243 = vmatpush1.msra.mxu0 0.0
    %4244 = vmatprep.subr.mxu0 0.0
    %4245 = vmatpush1.msra.mxu0 0.0
    %4246 = vmatprep.subr.mxu0 0.0
    %4247 = vmatpush1.msra.mxu0 0.0
    %4248 = vmatprep.subr.mxu0 0.0
    %4249 = vmatpush1.msra.mxu0 0.0
    %4250 = vmatprep.subr.mxu0 0.0
    %4251 = vmatpush1.msra.mxu0 0.0
    %4252 = vmatprep.subr.mxu0 0.0
    %4253 = vmatpush1.msra.mxu0 0.0
    %4254 = vmatprep.subr.mxu0 0.0
    %4255 = vmatpush1.msra.mxu0 0.0
    %4256 = vmatprep.subr.mxu0 0.0
    %4257 = vmatpush1.msra.mxu0 0.0
    %4258 = vmatprep.subr.mxu0 0.0
    %4259 = vmatpush1.msra.mxu0 0.0
    %4260 = vmatprep.subr.mxu0 0.0
    %4261 = vmatpush1.msra.mxu0 0.0
    %4262 = vmatprep.subr.mxu0 0.0
    %4263 = vmatpush1.msra.mxu0 0.0
    %4264 = vmatprep.subr.mxu0 0.0
    %4265 = vmatpush1.msra.mxu0 0.0
    %4266 = vmatprep.subr.mxu0 0.0
    %4267 = vmatpush1.msra.mxu0 0.0
    %4268 = vmatprep.subr.mxu0 0.0
    %4269 = vmatpush1.msra.mxu0 0.0
    %4270 = vmatprep.subr.mxu0 0.0
    %4271 = vmatpush1.msra.mxu0 0.0
    %4272 = vmatprep.subr.mxu0 0.0
    %4273 = vmatpush1.msra.mxu0 0.0
    %4274 = vmatprep.subr.mxu0 0.0
    %4275 = vmatpush1.msra.mxu0 0.0
    %4276 = vmatprep.subr.mxu0 0.0
    %4277 = vmatpush1.msra.mxu0 0.0
    %4278 = vmatprep.subr.mxu0 0.0
    %4279 = vmatpush1.msra.mxu0 0.0
    %4280 = vmatprep.subr.mxu0 0.0
    %4281 = vmatpush1.msra.mxu0 0.0
    %4282 = vmatprep.subr.mxu0 0.0
    %4283 = vmatpush1.msra.mxu0 0.0
    %4284 = vmatprep.subr.mxu0 0.0
    %4285 = vmatpush1.msra.mxu0 0.0
    %4286 = vmatprep.subr.mxu0 0.0
    %4287 = vmatpush1.msra.mxu0 0.0
    %4288 = vmatprep.subr.mxu0 0.0
    %4289 = vmatpush1.msra.mxu0 0.0
    %4290 = vmatprep.subr.mxu0 0.0
    %4291 = vmatpush1.msra.mxu0 0.0
    %4292 = vmatprep.subr.mxu0 0.0
    %4293 = vmatpush1.msra.mxu0 0.0
    %4294 = vmatprep.mubr.f32.mxu0 0.0
    %4295 = vmatmul.mubr.f32.gmra.mrb[0].mxu0 %v4228
    %v4296 = vpop.f32.mrb[0].mxu0
    %v4297 = vadd.f32 0.0, %v4296
    %v4298 = vpop.f32.mrb[0].mxu0
    %4299 = vdwg.mxu0
    %4300 = vrot.lane.b32.xlu0 %v3880, 96
    %v4301 = vpop.permute.xlu0 %4300
    %v4302 = vsel %vm489, %v4301, 0
    %4304 = vmatprep.subr.mxu0 0.0
    %4305 = vmatpush1.msra.mxu0 %v4062
    %4306 = vmatprep.subr.mxu0 0.0
    %4307 = vmatpush1.msra.mxu0 0.0
    %4308 = vmatprep.subr.mxu0 0.0
    %4309 = vmatpush1.msra.mxu0 0.0
    %4310 = vmatprep.subr.mxu0 0.0
    %4311 = vmatpush1.msra.mxu0 0.0
    %4312 = vmatprep.subr.mxu0 0.0
    %4313 = vmatpush1.msra.mxu0 0.0
    %4314 = vmatprep.subr.mxu0 0.0
    %4315 = vmatpush1.msra.mxu0 0.0
    %4316 = vmatprep.subr.mxu0 0.0
    %4317 = vmatpush1.msra.mxu0 0.0
    %4318 = vmatprep.subr.mxu0 0.0
    %4319 = vmatpush1.msra.mxu0 0.0
    %4320 = vmatprep.subr.mxu0 0.0
    %4321 = vmatpush1.msra.mxu0 0.0
    %4322 = vmatprep.subr.mxu0 0.0
    %4323 = vmatpush1.msra.mxu0 0.0
    %4324 = vmatprep.subr.mxu0 0.0
    %4325 = vmatpush1.msra.mxu0 0.0
    %4326 = vmatprep.subr.mxu0 0.0
    %4327 = vmatpush1.msra.mxu0 0.0
    %4328 = vmatprep.subr.mxu0 0.0
    %4329 = vmatpush1.msra.mxu0 0.0
    %4330 = vmatprep.subr.mxu0 0.0
    %4331 = vmatpush1.msra.mxu0 0.0
    %4332 = vmatprep.subr.mxu0 0.0
    %4333 = vmatpush1.msra.mxu0 0.0
    %4334 = vmatprep.subr.mxu0 0.0
    %4335 = vmatpush1.msra.mxu0 0.0
    %4336 = vmatprep.subr.mxu0 0.0
    %4337 = vmatpush1.msra.mxu0 0.0
    %4338 = vmatprep.subr.mxu0 0.0
    %4339 = vmatpush1.msra.mxu0 0.0
    %4340 = vmatprep.subr.mxu0 0.0
    %4341 = vmatpush1.msra.mxu0 0.0
    %4342 = vmatprep.subr.mxu0 0.0
    %4343 = vmatpush1.msra.mxu0 0.0
    %4344 = vmatprep.subr.mxu0 0.0
    %4345 = vmatpush1.msra.mxu0 0.0
    %4346 = vmatprep.subr.mxu0 0.0
    %4347 = vmatpush1.msra.mxu0 0.0
    %4348 = vmatprep.subr.mxu0 0.0
    %4349 = vmatpush1.msra.mxu0 0.0
    %4350 = vmatprep.subr.mxu0 0.0
    %4351 = vmatpush1.msra.mxu0 0.0
    %4352 = vmatprep.subr.mxu0 0.0
    %4353 = vmatpush1.msra.mxu0 0.0
    %4354 = vmatprep.subr.mxu0 0.0
    %4355 = vmatpush1.msra.mxu0 0.0
    %4356 = vmatprep.subr.mxu0 0.0
    %4357 = vmatpush1.msra.mxu0 0.0
    %4358 = vmatprep.subr.mxu0 0.0
    %4359 = vmatpush1.msra.mxu0 0.0
    %4360 = vmatprep.subr.mxu0 0.0
    %4361 = vmatpush1.msra.mxu0 0.0
    %4362 = vmatprep.subr.mxu0 0.0
    %4363 = vmatpush1.msra.mxu0 0.0
    %4364 = vmatprep.subr.mxu0 0.0
    %4365 = vmatpush1.msra.mxu0 0.0
    %4366 = vmatprep.subr.mxu0 0.0
    %4367 = vmatpush1.msra.mxu0 0.0
    %4368 = vmatprep.mubr.f32.mxu0 0.0
    %4369 = vmatmul.mubr.f32.gmra.mrb[0].mxu0 %v4302
    %v4370 = vpop.f32.mrb[0].mxu0
    %v4371 = vadd.f32 0.0, %v4370
    %v4372 = vpop.f32.mrb[0].mxu0
    %4373 = vdwg.mxu0
    %4374 = vxpose.xlu0.b32.start [1/16] %v4149, 128
    %4375 = vxpose.xlu0.b32.cont [2/16] 0.0, 128
    %4376 = vxpose.xlu0.b32.cont [3/16] 0.0, 128
    %4377 = vxpose.xlu0.b32.cont [4/16] 0.0, 128
    %4378 = vxpose.xlu0.b32.cont [5/16] 0.0, 128
    %4379 = vxpose.xlu0.b32.cont [6/16] 0.0, 128
    %4380 = vxpose.xlu0.b32.cont [7/16] 0.0, 128
    %4381 = vxpose.xlu0.b32.cont [8/16] 0.0, 128
    %4382 = vxpose.xlu0.b32.cont [9/16] 0.0, 128
    %4383 = vxpose.xlu0.b32.cont [10/16] 0.0, 128
    %4384 = vxpose.xlu0.b32.cont [11/16] 0.0, 128
    %4385 = vxpose.xlu0.b32.cont [12/16] 0.0, 128
    %4386 = vxpose.xlu0.b32.cont [13/16] 0.0, 128
    %4387 = vxpose.xlu0.b32.cont [14/16] 0.0, 128
    %4388 = vxpose.xlu0.b32.cont [15/16] 0.0, 128
    %4389 = vxpose.xlu0.b32.end [16/16] 0.0, 128
    %v4390 = vpop.trf.xlu0
    %v4391 = vpop.trf.xlu0
    %v4392 = vpop.trf.xlu0
    %v4393 = vpop.trf.xlu0
    %v4394 = vpop.trf.xlu0
    %v4395 = vpop.trf.xlu0
    %v4396 = vpop.trf.xlu0
    %v4397 = vpop.trf.xlu0
    %v4398 = vpop.trf.xlu0
    %v4399 = vpop.trf.xlu0
    %v4400 = vpop.trf.xlu0
    %v4401 = vpop.trf.xlu0
    %v4402 = vpop.trf.xlu0
    %v4403 = vpop.trf.xlu0
    %v4404 = vpop.trf.xlu0
    %v4405 = vpop.trf.xlu0
    %4406 = vxpose.xlu0.b32.start [1/16] %v4223, 128
    %4407 = vxpose.xlu0.b32.cont [2/16] 0.0, 128
    %4408 = vxpose.xlu0.b32.cont [3/16] 0.0, 128
    %4409 = vxpose.xlu0.b32.cont [4/16] 0.0, 128
    %4410 = vxpose.xlu0.b32.cont [5/16] 0.0, 128
    %4411 = vxpose.xlu0.b32.cont [6/16] 0.0, 128
    %4412 = vxpose.xlu0.b32.cont [7/16] 0.0, 128
    %4413 = vxpose.xlu0.b32.cont [8/16] 0.0, 128
    %4414 = vxpose.xlu0.b32.cont [9/16] 0.0, 128
    %4415 = vxpose.xlu0.b32.cont [10/16] 0.0, 128
    %4416 = vxpose.xlu0.b32.cont [11/16] 0.0, 128
    %4417 = vxpose.xlu0.b32.cont [12/16] 0.0, 128
    %4418 = vxpose.xlu0.b32.cont [13/16] 0.0, 128
    %4419 = vxpose.xlu0.b32.cont [14/16] 0.0, 128
    %4420 = vxpose.xlu0.b32.cont [15/16] 0.0, 128
    %4421 = vxpose.xlu0.b32.end [16/16] 0.0, 128
    %v4422 = vpop.trf.xlu0
    %v4423 = vpop.trf.xlu0
    %v4424 = vpop.trf.xlu0
    %v4425 = vpop.trf.xlu0
    %v4426 = vpop.trf.xlu0
    %v4427 = vpop.trf.xlu0
    %v4428 = vpop.trf.xlu0
    %v4429 = vpop.trf.xlu0
    %v4430 = vpop.trf.xlu0
    %v4431 = vpop.trf.xlu0
    %v4432 = vpop.trf.xlu0
    %v4433 = vpop.trf.xlu0
    %v4434 = vpop.trf.xlu0
    %v4435 = vpop.trf.xlu0
    %v4436 = vpop.trf.xlu0
    %v4437 = vpop.trf.xlu0
    %4438 = vxpose.xlu0.b32.start [1/16] %v4297, 128
    %4439 = vxpose.xlu0.b32.cont [2/16] 0.0, 128
    %4440 = vxpose.xlu0.b32.cont [3/16] 0.0, 128
    %4441 = vxpose.xlu0.b32.cont [4/16] 0.0, 128
    %4442 = vxpose.xlu0.b32.cont [5/16] 0.0, 128
    %4443 = vxpose.xlu0.b32.cont [6/16] 0.0, 128
    %4444 = vxpose.xlu0.b32.cont [7/16] 0.0, 128
    %4445 = vxpose.xlu0.b32.cont [8/16] 0.0, 128
    %4446 = vxpose.xlu0.b32.cont [9/16] 0.0, 128
    %4447 = vxpose.xlu0.b32.cont [10/16] 0.0, 128
    %4448 = vxpose.xlu0.b32.cont [11/16] 0.0, 128
    %4449 = vxpose.xlu0.b32.cont [12/16] 0.0, 128
    %4450 = vxpose.xlu0.b32.cont [13/16] 0.0, 128
    %4451 = vxpose.xlu0.b32.cont [14/16] 0.0, 128
    %4452 = vxpose.xlu0.b32.cont [15/16] 0.0, 128
    %4453 = vxpose.xlu0.b32.end [16/16] 0.0, 128
    %v4454 = vpop.trf.xlu0
    %v4455 = vpop.trf.xlu0
    %v4456 = vpop.trf.xlu0
    %v4457 = vpop.trf.xlu0
    %v4458 = vpop.trf.xlu0
    %v4459 = vpop.trf.xlu0
    %v4460 = vpop.trf.xlu0
    %v4461 = vpop.trf.xlu0
    %v4462 = vpop.trf.xlu0
    %v4463 = vpop.trf.xlu0
    %v4464 = vpop.trf.xlu0
    %v4465 = vpop.trf.xlu0
    %v4466 = vpop.trf.xlu0
    %v4467 = vpop.trf.xlu0
    %v4468 = vpop.trf.xlu0
    %v4469 = vpop.trf.xlu0
    %4470 = vxpose.xlu0.b32.start [1/16] %v4371, 128
    %4471 = vxpose.xlu0.b32.cont [2/16] 0.0, 128
    %4472 = vxpose.xlu0.b32.cont [3/16] 0.0, 128
    %4473 = vxpose.xlu0.b32.cont [4/16] 0.0, 128
    %4474 = vxpose.xlu0.b32.cont [5/16] 0.0, 128
    %4475 = vxpose.xlu0.b32.cont [6/16] 0.0, 128
    %4476 = vxpose.xlu0.b32.cont [7/16] 0.0, 128
    %4477 = vxpose.xlu0.b32.cont [8/16] 0.0, 128
    %4478 = vxpose.xlu0.b32.cont [9/16] 0.0, 128
    %4479 = vxpose.xlu0.b32.cont [10/16] 0.0, 128
    %4480 = vxpose.xlu0.b32.cont [11/16] 0.0, 128
    %4481 = vxpose.xlu0.b32.cont [12/16] 0.0, 128
    %4482 = vxpose.xlu0.b32.cont [13/16] 0.0, 128
    %4483 = vxpose.xlu0.b32.cont [14/16] 0.0, 128
    %4484 = vxpose.xlu0.b32.cont [15/16] 0.0, 128
    %4485 = vxpose.xlu0.b32.end [16/16] 0.0, 128
    %v4486 = vpop.trf.xlu0
    %v4487 = vpop.trf.xlu0
    %v4488 = vpop.trf.xlu0
    %v4489 = vpop.trf.xlu0
    %v4490 = vpop.trf.xlu0
    %v4491 = vpop.trf.xlu0
    %v4492 = vpop.trf.xlu0
    %v4493 = vpop.trf.xlu0
    %v4494 = vpop.trf.xlu0
    %v4495 = vpop.trf.xlu0
    %v4496 = vpop.trf.xlu0
    %v4497 = vpop.trf.xlu0
    %v4498 = vpop.trf.xlu0
    %v4499 = vpop.trf.xlu0
    %v4500 = vpop.trf.xlu0
    %v4501 = vpop.trf.xlu0
    %v4502 = vcombine.low %v4390, %v4454
    %v4503 = vcombine.high %v4390, %v4454
    %v4505 = vunpack.c.l.s4 1983009808
    %v4506 = vunpack.c.0.s8 %v4505
    %v4507 = vlaneseq
    %v4508 = vshrl.u32 %v4507, 7
    %v4509 = vsub.s32 %v4506, %v4508
    %v4510 = vrot.slane %v4502, %v4509
    %v4512 = vunpack.c.l.s4 1983009808
    %v4513 = vunpack.c.0.s8 %v4512
    %v4514 = vlaneseq
    %v4515 = vshrl.u32 %v4514, 7
    %v4516 = vsub.s32 %v4513, %v4515
    %v4517 = vrot.slane %v4503, %v4516
    %v4518 = vcombine.low %v4422, %v4486
    %v4519 = vcombine.high %v4422, %v4486
    %v4521 = vunpack.c.l.s4 1983009808
    %v4522 = vunpack.c.0.s8 %v4521
    %v4523 = vlaneseq
    %v4524 = vshrl.u32 %v4523, 7
    %v4525 = vsub.s32 %v4522, %v4524
    %v4526 = vrot.slane %v4518, %v4525
    %v4528 = vunpack.c.l.s4 1983009808
    %v4529 = vunpack.c.0.s8 %v4528
    %v4530 = vlaneseq
    %v4531 = vshrl.u32 %v4530, 7
    %v4532 = vsub.s32 %v4529, %v4531
    %v4533 = vrot.slane %v4519, %v4532
    %v4534 = vcombine.low %v4510, %v4526
    %v4535 = vcombine.high %v4510, %v4526
    %v4537 = vunpack.c.l.s4 1934713408
    %v4538 = vunpack.c.0.s8 %v4537
    %v4539 = vlaneseq
    %v4540 = vshrl.u32 %v4539, 7
    %v4541 = vsub.s32 %v4538, %v4540
    %v4542 = vrot.slane %v4534, %v4541
    %v4544 = vunpack.c.l.s4 1934713408
    %v4545 = vunpack.c.0.s8 %v4544
    %v4546 = vlaneseq
    %v4547 = vshrl.u32 %v4546, 7
    %v4548 = vsub.s32 %v4545, %v4547
    %v4549 = vrot.slane %v4535, %v4548
    %v4550 = vcombine.low %v4517, %v4533
    %v4551 = vcombine.high %v4517, %v4533
    %v4553 = vunpack.c.l.s4 1934713408
    %v4554 = vunpack.c.0.s8 %v4553
    %v4555 = vlaneseq
    %v4556 = vshrl.u32 %v4555, 7
    %v4557 = vsub.s32 %v4554, %v4556
    %v4558 = vrot.slane %v4550, %v4557
    %v4560 = vunpack.c.l.s4 1934713408
    %v4561 = vunpack.c.0.s8 %v4560
    %v4562 = vlaneseq
    %v4563 = vshrl.u32 %v4562, 7
    %v4564 = vsub.s32 %v4561, %v4563
    %v4565 = vrot.slane %v4551, %v4564
    %v4566 = vcombine.high %v4542, 0.0
    %v4567 = vcombine.high %v4549, 0.0
    %v4568 = vcombine.high %v4558, 0.0
    %v4569 = vcombine.high %v4565, 0.0
    %v4571 = vsel %vm489, %v3922, 0
    %4573 = vmatprep.subr.mxu0 0.0
    %4574 = vmatpush1.msra.mxu0 %v127
    %4575 = vmatprep.subr.mxu0 0.0
    %4576 = vmatpush1.msra.mxu0 0.0
    %4577 = vmatprep.subr.mxu0 0.0
    %4578 = vmatpush1.msra.mxu0 0.0
    %4579 = vmatprep.subr.mxu0 0.0
    %4580 = vmatpush1.msra.mxu0 0.0
    %4581 = vmatprep.subr.mxu0 0.0
    %4582 = vmatpush1.msra.mxu0 0.0
    %4583 = vmatprep.subr.mxu0 0.0
    %4584 = vmatpush1.msra.mxu0 0.0
    %4585 = vmatprep.subr.mxu0 0.0
    %4586 = vmatpush1.msra.mxu0 0.0
    %4587 = vmatprep.subr.mxu0 0.0
    %4588 = vmatpush1.msra.mxu0 0.0
    %4589 = vmatprep.subr.mxu0 0.0
    %4590 = vmatpush1.msra.mxu0 0.0
    %4591 = vmatprep.subr.mxu0 0.0
    %4592 = vmatpush1.msra.mxu0 0.0
    %4593 = vmatprep.subr.mxu0 0.0
    %4594 = vmatpush1.msra.mxu0 0.0
    %4595 = vmatprep.subr.mxu0 0.0
    %4596 = vmatpush1.msra.mxu0 0.0
    %4597 = vmatprep.subr.mxu0 0.0
    %4598 = vmatpush1.msra.mxu0 0.0
    %4599 = vmatprep.subr.mxu0 0.0
    %4600 = vmatpush1.msra.mxu0 0.0
    %4601 = vmatprep.subr.mxu0 0.0
    %4602 = vmatpush1.msra.mxu0 0.0
    %4603 = vmatprep.subr.mxu0 0.0
    %4604 = vmatpush1.msra.mxu0 0.0
    %4605 = vmatprep.subr.mxu0 0.0
    %4606 = vmatpush1.msra.mxu0 0.0
    %4607 = vmatprep.subr.mxu0 0.0
    %4608 = vmatpush1.msra.mxu0 0.0
    %4609 = vmatprep.subr.mxu0 0.0
    %4610 = vmatpush1.msra.mxu0 0.0
    %4611 = vmatprep.subr.mxu0 0.0
    %4612 = vmatpush1.msra.mxu0 0.0
    %4613 = vmatprep.subr.mxu0 0.0
    %4614 = vmatpush1.msra.mxu0 0.0
    %4615 = vmatprep.subr.mxu0 0.0
    %4616 = vmatpush1.msra.mxu0 0.0
    %4617 = vmatprep.subr.mxu0 0.0
    %4618 = vmatpush1.msra.mxu0 0.0
    %4619 = vmatprep.subr.mxu0 0.0
    %4620 = vmatpush1.msra.mxu0 0.0
    %4621 = vmatprep.subr.mxu0 0.0
    %4622 = vmatpush1.msra.mxu0 0.0
    %4623 = vmatprep.subr.mxu0 0.0
    %4624 = vmatpush1.msra.mxu0 0.0
    %4625 = vmatprep.subr.mxu0 0.0
    %4626 = vmatpush1.msra.mxu0 0.0
    %4627 = vmatprep.subr.mxu0 0.0
    %4628 = vmatpush1.msra.mxu0 0.0
    %4629 = vmatprep.subr.mxu0 0.0
    %4630 = vmatpush1.msra.mxu0 0.0
    %4631 = vmatprep.subr.mxu0 0.0
    %4632 = vmatpush1.msra.mxu0 0.0
    %4633 = vmatprep.subr.mxu0 0.0
    %4634 = vmatpush1.msra.mxu0 0.0
    %4635 = vmatprep.subr.mxu0 0.0
    %4636 = vmatpush1.msra.mxu0 0.0
    %4637 = vmatprep.mubr.f32.mxu0 0.0
    %4638 = vmatmul.mubr.f32.gmra.mrb[0].mxu0 %v4571
    %v4639 = vpop.f32.mrb[0].mxu0
    %v4640 = vadd.f32 0.0, %v4639
    %v4641 = vpop.f32.mrb[0].mxu0
    %4642 = vdwg.mxu0
    %v4644 = vsel %vm489, %v3946, 0
    %4646 = vmatprep.subr.mxu0 0.0
    %4647 = vmatpush1.msra.mxu0 %v128
    %4648 = vmatprep.subr.mxu0 0.0
    %4649 = vmatpush1.msra.mxu0 0.0
    %4650 = vmatprep.subr.mxu0 0.0
    %4651 = vmatpush1.msra.mxu0 0.0
    %4652 = vmatprep.subr.mxu0 0.0
    %4653 = vmatpush1.msra.mxu0 0.0
    %4654 = vmatprep.subr.mxu0 0.0
    %4655 = vmatpush1.msra.mxu0 0.0
    %4656 = vmatprep.subr.mxu0 0.0
    %4657 = vmatpush1.msra.mxu0 0.0
    %4658 = vmatprep.subr.mxu0 0.0
    %4659 = vmatpush1.msra.mxu0 0.0
    %4660 = vmatprep.subr.mxu0 0.0
    %4661 = vmatpush1.msra.mxu0 0.0
    %4662 = vmatprep.subr.mxu0 0.0
    %4663 = vmatpush1.msra.mxu0 0.0
    %4664 = vmatprep.subr.mxu0 0.0
    %4665 = vmatpush1.msra.mxu0 0.0
    %4666 = vmatprep.subr.mxu0 0.0
    %4667 = vmatpush1.msra.mxu0 0.0
    %4668 = vmatprep.subr.mxu0 0.0
    %4669 = vmatpush1.msra.mxu0 0.0
    %4670 = vmatprep.subr.mxu0 0.0
    %4671 = vmatpush1.msra.mxu0 0.0
    %4672 = vmatprep.subr.mxu0 0.0
    %4673 = vmatpush1.msra.mxu0 0.0
    %4674 = vmatprep.subr.mxu0 0.0
    %4675 = vmatpush1.msra.mxu0 0.0
    %4676 = vmatprep.subr.mxu0 0.0
    %4677 = vmatpush1.msra.mxu0 0.0
    %4678 = vmatprep.subr.mxu0 0.0
    %4679 = vmatpush1.msra.mxu0 0.0
    %4680 = vmatprep.subr.mxu0 0.0
    %4681 = vmatpush1.msra.mxu0 0.0
    %4682 = vmatprep.subr.mxu0 0.0
    %4683 = vmatpush1.msra.mxu0 0.0
    %4684 = vmatprep.subr.mxu0 0.0
    %4685 = vmatpush1.msra.mxu0 0.0
    %4686 = vmatprep.subr.mxu0 0.0
    %4687 = vmatpush1.msra.mxu0 0.0
    %4688 = vmatprep.subr.mxu0 0.0
    %4689 = vmatpush1.msra.mxu0 0.0
    %4690 = vmatprep.subr.mxu0 0.0
    %4691 = vmatpush1.msra.mxu0 0.0
    %4692 = vmatprep.subr.mxu0 0.0
    %4693 = vmatpush1.msra.mxu0 0.0
    %4694 = vmatprep.subr.mxu0 0.0
    %4695 = vmatpush1.msra.mxu0 0.0
    %4696 = vmatprep.subr.mxu0 0.0
    %4697 = vmatpush1.msra.mxu0 0.0
    %4698 = vmatprep.subr.mxu0 0.0
    %4699 = vmatpush1.msra.mxu0 0.0
    %4700 = vmatprep.subr.mxu0 0.0
    %4701 = vmatpush1.msra.mxu0 0.0
    %4702 = vmatprep.subr.mxu0 0.0
    %4703 = vmatpush1.msra.mxu0 0.0
    %4704 = vmatprep.subr.mxu0 0.0
    %4705 = vmatpush1.msra.mxu0 0.0
    %4706 = vmatprep.subr.mxu0 0.0
    %4707 = vmatpush1.msra.mxu0 0.0
    %4708 = vmatprep.subr.mxu0 0.0
    %4709 = vmatpush1.msra.mxu0 0.0
    %4710 = vmatprep.mubr.f32.mxu0 0.0
    %4711 = vmatmul.mubr.f32.gmra.mrb[0].mxu0 %v4644
    %v4712 = vpop.f32.mrb[0].mxu0
    %v4713 = vadd.f32 0.0, %v4712
    %v4714 = vpop.f32.mrb[0].mxu0
    %4715 = vdwg.mxu0
    %v4717 = vsel %vm489, %v3929, 0
    %4719 = vmatprep.subr.mxu0 0.0
    %4720 = vmatpush1.msra.mxu0 %v129
    %4721 = vmatprep.subr.mxu0 0.0
    %4722 = vmatpush1.msra.mxu0 0.0
    %4723 = vmatprep.subr.mxu0 0.0
    %4724 = vmatpush1.msra.mxu0 0.0
    %4725 = vmatprep.subr.mxu0 0.0
    %4726 = vmatpush1.msra.mxu0 0.0
    %4727 = vmatprep.subr.mxu0 0.0
    %4728 = vmatpush1.msra.mxu0 0.0
    %4729 = vmatprep.subr.mxu0 0.0
    %4730 = vmatpush1.msra.mxu0 0.0
    %4731 = vmatprep.subr.mxu0 0.0
    %4732 = vmatpush1.msra.mxu0 0.0
    %4733 = vmatprep.subr.mxu0 0.0
    %4734 = vmatpush1.msra.mxu0 0.0
    %4735 = vmatprep.subr.mxu0 0.0
    %4736 = vmatpush1.msra.mxu0 0.0
    %4737 = vmatprep.subr.mxu0 0.0
    %4738 = vmatpush1.msra.mxu0 0.0
    %4739 = vmatprep.subr.mxu0 0.0
    %4740 = vmatpush1.msra.mxu0 0.0
    %4741 = vmatprep.subr.mxu0 0.0
    %4742 = vmatpush1.msra.mxu0 0.0
    %4743 = vmatprep.subr.mxu0 0.0
    %4744 = vmatpush1.msra.mxu0 0.0
    %4745 = vmatprep.subr.mxu0 0.0
    %4746 = vmatpush1.msra.mxu0 0.0
    %4747 = vmatprep.subr.mxu0 0.0
    %4748 = vmatpush1.msra.mxu0 0.0
    %4749 = vmatprep.subr.mxu0 0.0
    %4750 = vmatpush1.msra.mxu0 0.0
    %4751 = vmatprep.subr.mxu0 0.0
    %4752 = vmatpush1.msra.mxu0 0.0
    %4753 = vmatprep.subr.mxu0 0.0
    %4754 = vmatpush1.msra.mxu0 0.0
    %4755 = vmatprep.subr.mxu0 0.0
    %4756 = vmatpush1.msra.mxu0 0.0
    %4757 = vmatprep.subr.mxu0 0.0
    %4758 = vmatpush1.msra.mxu0 0.0
    %4759 = vmatprep.subr.mxu0 0.0
    %4760 = vmatpush1.msra.mxu0 0.0
    %4761 = vmatprep.subr.mxu0 0.0
    %4762 = vmatpush1.msra.mxu0 0.0
    %4763 = vmatprep.subr.mxu0 0.0
    %4764 = vmatpush1.msra.mxu0 0.0
    %4765 = vmatprep.subr.mxu0 0.0
    %4766 = vmatpush1.msra.mxu0 0.0
    %4767 = vmatprep.subr.mxu0 0.0
    %4768 = vmatpush1.msra.mxu0 0.0
    %4769 = vmatprep.subr.mxu0 0.0
    %4770 = vmatpush1.msra.mxu0 0.0
    %4771 = vmatprep.subr.mxu0 0.0
    %4772 = vmatpush1.msra.mxu0 0.0
    %4773 = vmatprep.subr.mxu0 0.0
    %4774 = vmatpush1.msra.mxu0 0.0
    %4775 = vmatprep.subr.mxu0 0.0
    %4776 = vmatpush1.msra.mxu0 0.0
    %4777 = vmatprep.subr.mxu0 0.0
    %4778 = vmatpush1.msra.mxu0 0.0
    %4779 = vmatprep.subr.mxu0 0.0
    %4780 = vmatpush1.msra.mxu0 0.0
    %4781 = vmatprep.subr.mxu0 0.0
    %4782 = vmatpush1.msra.mxu0 0.0
    %4783 = vmatprep.mubr.f32.mxu0 0.0
    %4784 = vmatmul.mubr.f32.gmra.mrb[0].mxu0 %v4717
    %v4785 = vpop.f32.mrb[0].mxu0
    %v4786 = vadd.f32 0.0, %v4785
    %v4787 = vpop.f32.mrb[0].mxu0
    %4788 = vdwg.mxu0
    %v4790 = vsel %vm489, %v3947, 0
    %4792 = vmatprep.subr.mxu0 0.0
    %4793 = vmatpush1.msra.mxu0 %v130
    %4794 = vmatprep.subr.mxu0 0.0
    %4795 = vmatpush1.msra.mxu0 0.0
    %4796 = vmatprep.subr.mxu0 0.0
    %4797 = vmatpush1.msra.mxu0 0.0
    %4798 = vmatprep.subr.mxu0 0.0
    %4799 = vmatpush1.msra.mxu0 0.0
    %4800 = vmatprep.subr.mxu0 0.0
    %4801 = vmatpush1.msra.mxu0 0.0
    %4802 = vmatprep.subr.mxu0 0.0
    %4803 = vmatpush1.msra.mxu0 0.0
    %4804 = vmatprep.subr.mxu0 0.0
    %4805 = vmatpush1.msra.mxu0 0.0
    %4806 = vmatprep.subr.mxu0 0.0
    %4807 = vmatpush1.msra.mxu0 0.0
    %4808 = vmatprep.subr.mxu0 0.0
    %4809 = vmatpush1.msra.mxu0 0.0
    %4810 = vmatprep.subr.mxu0 0.0
    %4811 = vmatpush1.msra.mxu0 0.0
    %4812 = vmatprep.subr.mxu0 0.0
    %4813 = vmatpush1.msra.mxu0 0.0
    %4814 = vmatprep.subr.mxu0 0.0
    %4815 = vmatpush1.msra.mxu0 0.0
    %4816 = vmatprep.subr.mxu0 0.0
    %4817 = vmatpush1.msra.mxu0 0.0
    %4818 = vmatprep.subr.mxu0 0.0
    %4819 = vmatpush1.msra.mxu0 0.0
    %4820 = vmatprep.subr.mxu0 0.0
    %4821 = vmatpush1.msra.mxu0 0.0
    %4822 = vmatprep.subr.mxu0 0.0
    %4823 = vmatpush1.msra.mxu0 0.0
    %4824 = vmatprep.subr.mxu0 0.0
    %4825 = vmatpush1.msra.mxu0 0.0
    %4826 = vmatprep.subr.mxu0 0.0
    %4827 = vmatpush1.msra.mxu0 0.0
    %4828 = vmatprep.subr.mxu0 0.0
    %4829 = vmatpush1.msra.mxu0 0.0
    %4830 = vmatprep.subr.mxu0 0.0
    %4831 = vmatpush1.msra.mxu0 0.0
    %4832 = vmatprep.subr.mxu0 0.0
    %4833 = vmatpush1.msra.mxu0 0.0
    %4834 = vmatprep.subr.mxu0 0.0
    %4835 = vmatpush1.msra.mxu0 0.0
    %4836 = vmatprep.subr.mxu0 0.0
    %4837 = vmatpush1.msra.mxu0 0.0
    %4838 = vmatprep.subr.mxu0 0.0
    %4839 = vmatpush1.msra.mxu0 0.0
    %4840 = vmatprep.subr.mxu0 0.0
    %4841 = vmatpush1.msra.mxu0 0.0
    %4842 = vmatprep.subr.mxu0 0.0
    %4843 = vmatpush1.msra.mxu0 0.0
    %4844 = vmatprep.subr.mxu0 0.0
    %4845 = vmatpush1.msra.mxu0 0.0
    %4846 = vmatprep.subr.mxu0 0.0
    %4847 = vmatpush1.msra.mxu0 0.0
    %4848 = vmatprep.subr.mxu0 0.0
    %4849 = vmatpush1.msra.mxu0 0.0
    %4850 = vmatprep.subr.mxu0 0.0
    %4851 = vmatpush1.msra.mxu0 0.0
    %4852 = vmatprep.subr.mxu0 0.0
    %4853 = vmatpush1.msra.mxu0 0.0
    %4854 = vmatprep.subr.mxu0 0.0
    %4855 = vmatpush1.msra.mxu0 0.0
    %4856 = vmatprep.mubr.f32.mxu0 0.0
    %4857 = vmatmul.mubr.f32.gmra.mrb[0].mxu0 %v4790
    %v4858 = vpop.f32.mrb[0].mxu0
    %v4859 = vadd.f32 0.0, %v4858
    %v4860 = vpop.f32.mrb[0].mxu0
    %4861 = vdwg.mxu0
    %v4863 = vsel %vm489, %v3938, 0
    %4865 = vmatprep.subr.mxu0 0.0
    %4866 = vmatpush1.msra.mxu0 %v131
    %4867 = vmatprep.subr.mxu0 0.0
    %4868 = vmatpush1.msra.mxu0 0.0
    %4869 = vmatprep.subr.mxu0 0.0
    %4870 = vmatpush1.msra.mxu0 0.0
    %4871 = vmatprep.subr.mxu0 0.0
    %4872 = vmatpush1.msra.mxu0 0.0
    %4873 = vmatprep.subr.mxu0 0.0
    %4874 = vmatpush1.msra.mxu0 0.0
    %4875 = vmatprep.subr.mxu0 0.0
    %4876 = vmatpush1.msra.mxu0 0.0
    %4877 = vmatprep.subr.mxu0 0.0
    %4878 = vmatpush1.msra.mxu0 0.0
    %4879 = vmatprep.subr.mxu0 0.0
    %4880 = vmatpush1.msra.mxu0 0.0
    %4881 = vmatprep.subr.mxu0 0.0
    %4882 = vmatpush1.msra.mxu0 0.0
    %4883 = vmatprep.subr.mxu0 0.0
    %4884 = vmatpush1.msra.mxu0 0.0
    %4885 = vmatprep.subr.mxu0 0.0
    %4886 = vmatpush1.msra.mxu0 0.0
    %4887 = vmatprep.subr.mxu0 0.0
    %4888 = vmatpush1.msra.mxu0 0.0
    %4889 = vmatprep.subr.mxu0 0.0
    %4890 = vmatpush1.msra.mxu0 0.0
    %4891 = vmatprep.subr.mxu0 0.0
    %4892 = vmatpush1.msra.mxu0 0.0
    %4893 = vmatprep.subr.mxu0 0.0
    %4894 = vmatpush1.msra.mxu0 0.0
    %4895 = vmatprep.subr.mxu0 0.0
    %4896 = vmatpush1.msra.mxu0 0.0
    %4897 = vmatprep.subr.mxu0 0.0
    %4898 = vmatpush1.msra.mxu0 0.0
    %4899 = vmatprep.subr.mxu0 0.0
    %4900 = vmatpush1.msra.mxu0 0.0
    %4901 = vmatprep.subr.mxu0 0.0
    %4902 = vmatpush1.msra.mxu0 0.0
    %4903 = vmatprep.subr.mxu0 0.0
    %4904 = vmatpush1.msra.mxu0 0.0
    %4905 = vmatprep.subr.mxu0 0.0
    %4906 = vmatpush1.msra.mxu0 0.0
    %4907 = vmatprep.subr.mxu0 0.0
    %4908 = vmatpush1.msra.mxu0 0.0
    %4909 = vmatprep.subr.mxu0 0.0
    %4910 = vmatpush1.msra.mxu0 0.0
    %4911 = vmatprep.subr.mxu0 0.0
    %4912 = vmatpush1.msra.mxu0 0.0
    %4913 = vmatprep.subr.mxu0 0.0
    %4914 = vmatpush1.msra.mxu0 0.0
    %4915 = vmatprep.subr.mxu0 0.0
    %4916 = vmatpush1.msra.mxu0 0.0
    %4917 = vmatprep.subr.mxu0 0.0
    %4918 = vmatpush1.msra.mxu0 0.0
    %4919 = vmatprep.subr.mxu0 0.0
    %4920 = vmatpush1.msra.mxu0 0.0
    %4921 = vmatprep.subr.mxu0 0.0
    %4922 = vmatpush1.msra.mxu0 0.0
    %4923 = vmatprep.subr.mxu0 0.0
    %4924 = vmatpush1.msra.mxu0 0.0
    %4925 = vmatprep.subr.mxu0 0.0
    %4926 = vmatpush1.msra.mxu0 0.0
    %4927 = vmatprep.subr.mxu0 0.0
    %4928 = vmatpush1.msra.mxu0 0.0
    %4929 = vmatprep.mubr.f32.mxu0 0.0
    %4930 = vmatmul.mubr.f32.gmra.mrb[0].mxu0 %v4863
    %v4931 = vpop.f32.mrb[0].mxu0
    %v4932 = vadd.f32 0.0, %v4931
    %v4933 = vpop.f32.mrb[0].mxu0
    %4934 = vdwg.mxu0
    %v4936 = vsel %vm489, %v3948, 0
    %4938 = vmatprep.subr.mxu0 0.0
    %4939 = vmatpush1.msra.mxu0 %v132
    %4940 = vmatprep.subr.mxu0 0.0
    %4941 = vmatpush1.msra.mxu0 0.0
    %4942 = vmatprep.subr.mxu0 0.0
    %4943 = vmatpush1.msra.mxu0 0.0
    %4944 = vmatprep.subr.mxu0 0.0
    %4945 = vmatpush1.msra.mxu0 0.0
    %4946 = vmatprep.subr.mxu0 0.0
    %4947 = vmatpush1.msra.mxu0 0.0
    %4948 = vmatprep.subr.mxu0 0.0
    %4949 = vmatpush1.msra.mxu0 0.0
    %4950 = vmatprep.subr.mxu0 0.0
    %4951 = vmatpush1.msra.mxu0 0.0
    %4952 = vmatprep.subr.mxu0 0.0
    %4953 = vmatpush1.msra.mxu0 0.0
    %4954 = vmatprep.subr.mxu0 0.0
    %4955 = vmatpush1.msra.mxu0 0.0
    %4956 = vmatprep.subr.mxu0 0.0
    %4957 = vmatpush1.msra.mxu0 0.0
    %4958 = vmatprep.subr.mxu0 0.0
    %4959 = vmatpush1.msra.mxu0 0.0
    %4960 = vmatprep.subr.mxu0 0.0
    %4961 = vmatpush1.msra.mxu0 0.0
    %4962 = vmatprep.subr.mxu0 0.0
    %4963 = vmatpush1.msra.mxu0 0.0
    %4964 = vmatprep.subr.mxu0 0.0
    %4965 = vmatpush1.msra.mxu0 0.0
    %4966 = vmatprep.subr.mxu0 0.0
    %4967 = vmatpush1.msra.mxu0 0.0
    %4968 = vmatprep.subr.mxu0 0.0
    %4969 = vmatpush1.msra.mxu0 0.0
    %4970 = vmatprep.subr.mxu0 0.0
    %4971 = vmatpush1.msra.mxu0 0.0
    %4972 = vmatprep.subr.mxu0 0.0
    %4973 = vmatpush1.msra.mxu0 0.0
    %4974 = vmatprep.subr.mxu0 0.0
    %4975 = vmatpush1.msra.mxu0 0.0
    %4976 = vmatprep.subr.mxu0 0.0
    %4977 = vmatpush1.msra.mxu0 0.0
    %4978 = vmatprep.subr.mxu0 0.0
    %4979 = vmatpush1.msra.mxu0 0.0
    %4980 = vmatprep.subr.mxu0 0.0
    %4981 = vmatpush1.msra.mxu0 0.0
    %4982 = vmatprep.subr.mxu0 0.0
    %4983 = vmatpush1.msra.mxu0 0.0
    %4984 = vmatprep.subr.mxu0 0.0
    %4985 = vmatpush1.msra.mxu0 0.0
    %4986 = vmatprep.subr.mxu0 0.0
    %4987 = vmatpush1.msra.mxu0 0.0
    %4988 = vmatprep.subr.mxu0 0.0
    %4989 = vmatpush1.msra.mxu0 0.0
    %4990 = vmatprep.subr.mxu0 0.0
    %4991 = vmatpush1.msra.mxu0 0.0
    %4992 = vmatprep.subr.mxu0 0.0
    %4993 = vmatpush1.msra.mxu0 0.0
    %4994 = vmatprep.subr.mxu0 0.0
    %4995 = vmatpush1.msra.mxu0 0.0
    %4996 = vmatprep.subr.mxu0 0.0
    %4997 = vmatpush1.msra.mxu0 0.0
    %4998 = vmatprep.subr.mxu0 0.0
    %4999 = vmatpush1.msra.mxu0 0.0
    %5000 = vmatprep.subr.mxu0 0.0
    %5001 = vmatpush1.msra.mxu0 0.0
    %5002 = vmatprep.mubr.f32.mxu0 0.0
    %5003 = vmatmul.mubr.f32.gmra.mrb[0].mxu0 %v4936
    %v5004 = vpop.f32.mrb[0].mxu0
    %v5005 = vadd.f32 0.0, %v5004
    %v5006 = vpop.f32.mrb[0].mxu0
    %5007 = vdwg.mxu0
    %v5009 = vsel %vm489, %v3945, 0
    %5011 = vmatprep.subr.mxu0 0.0
    %5012 = vmatpush1.msra.mxu0 %v133
    %5013 = vmatprep.subr.mxu0 0.0
    %5014 = vmatpush1.msra.mxu0 0.0
    %5015 = vmatprep.subr.mxu0 0.0
    %5016 = vmatpush1.msra.mxu0 0.0
    %5017 = vmatprep.subr.mxu0 0.0
    %5018 = vmatpush1.msra.mxu0 0.0
    %5019 = vmatprep.subr.mxu0 0.0
    %5020 = vmatpush1.msra.mxu0 0.0
    %5021 = vmatprep.subr.mxu0 0.0
    %5022 = vmatpush1.msra.mxu0 0.0
    %5023 = vmatprep.subr.mxu0 0.0
    %5024 = vmatpush1.msra.mxu0 0.0
    %5025 = vmatprep.subr.mxu0 0.0
    %5026 = vmatpush1.msra.mxu0 0.0
    %5027 = vmatprep.subr.mxu0 0.0
    %5028 = vmatpush1.msra.mxu0 0.0
    %5029 = vmatprep.subr.mxu0 0.0
    %5030 = vmatpush1.msra.mxu0 0.0
    %5031 = vmatprep.subr.mxu0 0.0
    %5032 = vmatpush1.msra.mxu0 0.0
    %5033 = vmatprep.subr.mxu0 0.0
    %5034 = vmatpush1.msra.mxu0 0.0
    %5035 = vmatprep.subr.mxu0 0.0
    %5036 = vmatpush1.msra.mxu0 0.0
    %5037 = vmatprep.subr.mxu0 0.0
    %5038 = vmatpush1.msra.mxu0 0.0
    %5039 = vmatprep.subr.mxu0 0.0
    %5040 = vmatpush1.msra.mxu0 0.0
    %5041 = vmatprep.subr.mxu0 0.0
    %5042 = vmatpush1.msra.mxu0 0.0
    %5043 = vmatprep.subr.mxu0 0.0
    %5044 = vmatpush1.msra.mxu0 0.0
    %5045 = vmatprep.subr.mxu0 0.0
    %5046 = vmatpush1.msra.mxu0 0.0
    %5047 = vmatprep.subr.mxu0 0.0
    %5048 = vmatpush1.msra.mxu0 0.0
    %5049 = vmatprep.subr.mxu0 0.0
    %5050 = vmatpush1.msra.mxu0 0.0
    %5051 = vmatprep.subr.mxu0 0.0
    %5052 = vmatpush1.msra.mxu0 0.0
    %5053 = vmatprep.subr.mxu0 0.0
    %5054 = vmatpush1.msra.mxu0 0.0
    %5055 = vmatprep.subr.mxu0 0.0
    %5056 = vmatpush1.msra.mxu0 0.0
    %5057 = vmatprep.subr.mxu0 0.0
    %5058 = vmatpush1.msra.mxu0 0.0
    %5059 = vmatprep.subr.mxu0 0.0
    %5060 = vmatpush1.msra.mxu0 0.0
    %5061 = vmatprep.subr.mxu0 0.0
    %5062 = vmatpush1.msra.mxu0 0.0
    %5063 = vmatprep.subr.mxu0 0.0
    %5064 = vmatpush1.msra.mxu0 0.0
    %5065 = vmatprep.subr.mxu0 0.0
    %5066 = vmatpush1.msra.mxu0 0.0
    %5067 = vmatprep.subr.mxu0 0.0
    %5068 = vmatpush1.msra.mxu0 0.0
    %5069 = vmatprep.subr.mxu0 0.0
    %5070 = vmatpush1.msra.mxu0 0.0
    %5071 = vmatprep.subr.mxu0 0.0
    %5072 = vmatpush1.msra.mxu0 0.0
    %5073 = vmatprep.subr.mxu0 0.0
    %5074 = vmatpush1.msra.mxu0 0.0
    %5075 = vmatprep.mubr.f32.mxu0 0.0
    %5076 = vmatmul.mubr.f32.gmra.mrb[0].mxu0 %v5009
    %v5077 = vpop.f32.mrb[0].mxu0
    %v5078 = vadd.f32 0.0, %v5077
    %v5079 = vpop.f32.mrb[0].mxu0
    %5080 = vdwg.mxu0
    %v5082 = vsel %vm489, %v3949, 0
    %5084 = vmatprep.subr.mxu0 0.0
    %5085 = vmatpush1.msra.mxu0 %v134
    %5086 = vmatprep.subr.mxu0 0.0
    %5087 = vmatpush1.msra.mxu0 0.0
    %5088 = vmatprep.subr.mxu0 0.0
    %5089 = vmatpush1.msra.mxu0 0.0
    %5090 = vmatprep.subr.mxu0 0.0
    %5091 = vmatpush1.msra.mxu0 0.0
    %5092 = vmatprep.subr.mxu0 0.0
    %5093 = vmatpush1.msra.mxu0 0.0
    %5094 = vmatprep.subr.mxu0 0.0
    %5095 = vmatpush1.msra.mxu0 0.0
    %5096 = vmatprep.subr.mxu0 0.0
    %5097 = vmatpush1.msra.mxu0 0.0
    %5098 = vmatprep.subr.mxu0 0.0
    %5099 = vmatpush1.msra.mxu0 0.0
    %5100 = vmatprep.subr.mxu0 0.0
    %5101 = vmatpush1.msra.mxu0 0.0
    %5102 = vmatprep.subr.mxu0 0.0
    %5103 = vmatpush1.msra.mxu0 0.0
    %5104 = vmatprep.subr.mxu0 0.0
    %5105 = vmatpush1.msra.mxu0 0.0
    %5106 = vmatprep.subr.mxu0 0.0
    %5107 = vmatpush1.msra.mxu0 0.0
    %5108 = vmatprep.subr.mxu0 0.0
    %5109 = vmatpush1.msra.mxu0 0.0
    %5110 = vmatprep.subr.mxu0 0.0
    %5111 = vmatpush1.msra.mxu0 0.0
    %5112 = vmatprep.subr.mxu0 0.0
    %5113 = vmatpush1.msra.mxu0 0.0
    %5114 = vmatprep.subr.mxu0 0.0
    %5115 = vmatpush1.msra.mxu0 0.0
    %5116 = vmatprep.subr.mxu0 0.0
    %5117 = vmatpush1.msra.mxu0 0.0
    %5118 = vmatprep.subr.mxu0 0.0
    %5119 = vmatpush1.msra.mxu0 0.0
    %5120 = vmatprep.subr.mxu0 0.0
    %5121 = vmatpush1.msra.mxu0 0.0
    %5122 = vmatprep.subr.mxu0 0.0
    %5123 = vmatpush1.msra.mxu0 0.0
    %5124 = vmatprep.subr.mxu0 0.0
    %5125 = vmatpush1.msra.mxu0 0.0
    %5126 = vmatprep.subr.mxu0 0.0
    %5127 = vmatpush1.msra.mxu0 0.0
    %5128 = vmatprep.subr.mxu0 0.0
    %5129 = vmatpush1.msra.mxu0 0.0
    %5130 = vmatprep.subr.mxu0 0.0
    %5131 = vmatpush1.msra.mxu0 0.0
    %5132 = vmatprep.subr.mxu0 0.0
    %5133 = vmatpush1.msra.mxu0 0.0
    %5134 = vmatprep.subr.mxu0 0.0
    %5135 = vmatpush1.msra.mxu0 0.0
    %5136 = vmatprep.subr.mxu0 0.0
    %5137 = vmatpush1.msra.mxu0 0.0
    %5138 = vmatprep.subr.mxu0 0.0
    %5139 = vmatpush1.msra.mxu0 0.0
    %5140 = vmatprep.subr.mxu0 0.0
    %5141 = vmatpush1.msra.mxu0 0.0
    %5142 = vmatprep.subr.mxu0 0.0
    %5143 = vmatpush1.msra.mxu0 0.0
    %5144 = vmatprep.subr.mxu0 0.0
    %5145 = vmatpush1.msra.mxu0 0.0
    %5146 = vmatprep.subr.mxu0 0.0
    %5147 = vmatpush1.msra.mxu0 0.0
    %5148 = vmatprep.mubr.f32.mxu0 0.0
    %5149 = vmatmul.mubr.f32.gmra.mrb[0].mxu0 %v5082
    %v5150 = vpop.f32.mrb[0].mxu0
    %v5151 = vadd.f32 0.0, %v5150
    %v5152 = vpop.f32.mrb[0].mxu0
    %5153 = vdwg.mxu0
    %v5154 = vadd.f32 %v4542, %v4640
    %v5155 = vadd.f32 %v4566, %v4713
    %v5156 = vadd.f32 %v4549, %v4786
    %v5157 = vadd.f32 %v4567, %v4859
    %v5158 = vadd.f32 %v4558, %v4932
    %v5159 = vadd.f32 %v4568, %v5005
    %v5160 = vadd.f32 %v4565, %v5078
    %v5161 = vadd.f32 %v4569, %v5151
    %v5162 = vmul.f32 %v5154, 0.35355338
    %v5163 = vmul.f32 %v5155, 0.35355338
    %v5164 = vmul.f32 %v5156, 0.35355338
    %v5165 = vmul.f32 %v5157, 0.35355338
    %v5166 = vmul.f32 %v5158, 0.35355338
    %v5167 = vmul.f32 %v5159, 0.35355338
    %v5168 = vmul.f32 %v5160, 0.35355338
    %v5169 = vmul.f32 %v5161, 0.35355338
    %s5170 = scalar_lea.vmem [#allocation5], 8
    %v5171 = vld [vmem:[%s5170] sm:$0xff]
    %v5173 = vcombine.high %v5171, %v5171
    %v5175 = vunpack.c.l.s4 1966171168
    %v5176 = vunpack.c.0.s8 %v5175
    %v5177 = vlaneseq
    %v5178 = vshrl.u32 %v5177, 7
    %v5179 = vsub.s32 %v5176, %v5178
    %v5180 = vrot.slane %v5171, %v5179
    %v5182 = vunpack.c.l.s4 1966171168
    %v5183 = vunpack.c.0.s8 %v5182
    %v5184 = vlaneseq
    %v5185 = vshrl.u32 %v5184, 7
    %v5186 = vsub.s32 %v5183, %v5185
    %v5187 = vrot.slane %v5173, %v5186
    %v5188 = vcombine.high %v5180, %v5180
    %v5189 = vcombine.high %v5187, %v5187
    %v5191 = vunpack.c.l.s4 1966171168
    %v5192 = vunpack.c.0.s8 %v5191
    %v5193 = vlaneseq
    %v5194 = vshrl.u32 %v5193, 7
    %v5195 = vsub.s32 %v5192, %v5194
    %v5196 = vrot.slane %v5180, %v5195
    %v5198 = vunpack.c.l.s4 1966171168
    %v5199 = vunpack.c.0.s8 %v5198
    %v5200 = vlaneseq
    %v5201 = vshrl.u32 %v5200, 7
    %v5202 = vsub.s32 %v5199, %v5201
    %v5203 = vrot.slane %v5187, %v5202
    %v5205 = vunpack.c.l.s4 1966171168
    %v5206 = vunpack.c.0.s8 %v5205
    %v5207 = vlaneseq
    %v5208 = vshrl.u32 %v5207, 7
    %v5209 = vsub.s32 %v5206, %v5208
    %v5210 = vrot.slane %v5188, %v5209
    %v5212 = vunpack.c.l.s4 1966171168
    %v5213 = vunpack.c.0.s8 %v5212
    %v5214 = vlaneseq
    %v5215 = vshrl.u32 %v5214, 7
    %v5216 = vsub.s32 %v5213, %v5215
    %v5217 = vrot.slane %v5189, %v5216
    %v5218 = vcombine.high %v5196, %v5196
    %v5219 = vcombine.high %v5203, %v5203
    %v5220 = vcombine.high %v5210, %v5210
    %v5221 = vcombine.high %v5217, %v5217
    %v5222 = vlaneseq
    %v5223 = vshrl.u32 %v5222, 7
    %v5224 = vsub.s32 0, %v5223
    %v5225 = vrot.slane %v5196, %v5224
    %v5226 = vlaneseq
    %v5227 = vshrl.u32 %v5226, 7
    %v5228 = vsub.s32 0, %v5227
    %v5229 = vrot.slane %v5210, %v5228
    %v5230 = vlaneseq
    %v5231 = vshrl.u32 %v5230, 7
    %v5232 = vsub.s32 0, %v5231
    %v5233 = vrot.slane %v5218, %v5232
    %v5234 = vlaneseq
    %v5235 = vshrl.u32 %v5234, 7
    %v5236 = vsub.s32 0, %v5235
    %v5237 = vrot.slane %v5220, %v5236
    %v5238 = vlaneseq
    %v5239 = vshrl.u32 %v5238, 7
    %v5240 = vsub.s32 0, %v5239
    %v5241 = vrot.slane %v5203, %v5240
    %v5242 = vlaneseq
    %v5243 = vshrl.u32 %v5242, 7
    %v5244 = vsub.s32 0, %v5243
    %v5245 = vrot.slane %v5217, %v5244
    %v5246 = vlaneseq
    %v5247 = vshrl.u32 %v5246, 7
    %v5248 = vsub.s32 0, %v5247
    %v5249 = vrot.slane %v5219, %v5248
    %v5250 = vlaneseq
    %v5251 = vshrl.u32 %v5250, 7
    %v5252 = vsub.s32 0, %v5251
    %v5253 = vrot.slane %v5221, %v5252
    %v5262 = vadd.f32 %v5162, %v5225
    %v5263 = vadd.f32 %v5163, %v5229
    %v5264 = vadd.f32 %v5164, %v5233
    %v5265 = vadd.f32 %v5165, %v5237
    %v5266 = vadd.f32 %v5166, %v5241
    %v5267 = vadd.f32 %v5167, %v5245
    %v5268 = vadd.f32 %v5168, %v5249
    %v5269 = vadd.f32 %v5169, %v5253
    %v5270 = vsel %vm1679, %v5262, -inf
    %5271 = vmax.xlane.f32.xlu0 %v5270
    %v5272 = vpop.xlane.xlu0 %5271
    %v5273 = vsel %vm1679, %v5263, -inf
    %5274 = vmax.xlane.f32.xlu0 %v5273
    %v5275 = vpop.xlane.xlu0 %5274
    %v5276 = vsel %vm1679, %v5264, -inf
    %5277 = vmax.xlane.f32.xlu0 %v5276
    %v5278 = vpop.xlane.xlu0 %5277
    %v5279 = vsel %vm1679, %v5265, -inf
    %5280 = vmax.xlane.f32.xlu0 %v5279
    %v5281 = vpop.xlane.xlu0 %5280
    %v5282 = vsel %vm1679, %v5266, -inf
    %5283 = vmax.xlane.f32.xlu0 %v5282
    %v5284 = vpop.xlane.xlu0 %5283
    %v5285 = vsel %vm1679, %v5267, -inf
    %5286 = vmax.xlane.f32.xlu0 %v5285
    %v5287 = vpop.xlane.xlu0 %5286
    %v5288 = vsel %vm1679, %v5268, -inf
    %5289 = vmax.xlane.f32.xlu0 %v5288
    %v5290 = vpop.xlane.xlu0 %5289
    %v5291 = vsel %vm1679, %v5269, -inf
    %5292 = vmax.xlane.f32.xlu0 %v5291
    %v5293 = vpop.xlane.xlu0 %5292
    %v5294 = vsub.f32 %v5262, %v5272
    %v5295 = vsub.f32 %v5263, %v5275
    %v5296 = vsub.f32 %v5264, %v5278
    %v5297 = vsub.f32 %v5265, %v5281
    %v5298 = vsub.f32 %v5266, %v5284
    %v5299 = vsub.f32 %v5267, %v5287
    %v5300 = vsub.f32 %v5268, %v5290
    %v5301 = vsub.f32 %v5269, %v5293
    %v5302 = vmul.f32 %v5294, 1.442695
    %v5303 = vpow.pop %v5302
    %v5304 = vmul.f32 %v5295, 1.442695
    %v5305 = vpow.pop %v5304
    %v5306 = vmul.f32 %v5296, 1.442695
    %v5307 = vpow.pop %v5306
    %v5308 = vmul.f32 %v5297, 1.442695
    %v5309 = vpow.pop %v5308
    %v5310 = vmul.f32 %v5298, 1.442695
    %v5311 = vpow.pop %v5310
    %v5312 = vmul.f32 %v5299, 1.442695
    %v5313 = vpow.pop %v5312
    %v5314 = vmul.f32 %v5300, 1.442695
    %v5315 = vpow.pop %v5314
    %v5316 = vmul.f32 %v5301, 1.442695
    %v5317 = vpow.pop %v5316
    %v5318 = vsel %vm1679, %v5303, 0.0
    %5319 = vadd.xlane.f32.xlu0 %v5318
    %v5320 = vpop.xlane.xlu0 %5319
    %v5321 = vsel %vm1679, %v5305, 0.0
    %5322 = vadd.xlane.f32.xlu0 %v5321
    %v5323 = vpop.xlane.xlu0 %5322
    %v5324 = vsel %vm1679, %v5307, 0.0
    %5325 = vadd.xlane.f32.xlu0 %v5324
    %v5326 = vpop.xlane.xlu0 %5325
    %v5327 = vsel %vm1679, %v5309, 0.0
    %5328 = vadd.xlane.f32.xlu0 %v5327
    %v5329 = vpop.xlane.xlu0 %5328
    %v5330 = vsel %vm1679, %v5311, 0.0
    %5331 = vadd.xlane.f32.xlu0 %v5330
    %v5332 = vpop.xlane.xlu0 %5331
    %v5333 = vsel %vm1679, %v5313, 0.0
    %5334 = vadd.xlane.f32.xlu0 %v5333
    %v5335 = vpop.xlane.xlu0 %5334
    %v5336 = vsel %vm1679, %v5315, 0.0
    %5337 = vadd.xlane.f32.xlu0 %v5336
    %v5338 = vpop.xlane.xlu0 %5337
    %v5339 = vsel %vm1679, %v5317, 0.0
    %5340 = vadd.xlane.f32.xlu0 %v5339
    %v5341 = vpop.xlane.xlu0 %5340
    %v5342 = vrcp.pop %v5320
    %v5343 = vmul.f32 %v5303, %v5342
    %v5344 = vrcp.pop %v5323
    %v5345 = vmul.f32 %v5305, %v5344
    %v5346 = vrcp.pop %v5326
    %v5347 = vmul.f32 %v5307, %v5346
    %v5348 = vrcp.pop %v5329
    %v5349 = vmul.f32 %v5309, %v5348
    %v5350 = vrcp.pop %v5332
    %v5351 = vmul.f32 %v5311, %v5350
    %v5352 = vrcp.pop %v5335
    %v5353 = vmul.f32 %v5313, %v5352
    %v5354 = vrcp.pop %v5338
    %v5355 = vmul.f32 %v5315, %v5354
    %v5356 = vrcp.pop %v5341
    %v5357 = vmul.f32 %v5317, %v5356
    %5358 = vrot.lane.b32.xlu0 %v278, 64
    %v5359 = vpop.permute.xlu0 %5358
    %5360 = vrot.lane.b32.xlu0 %v3874, 64
    %v5361 = vpop.permute.xlu0 %5360
    %5362 = vrot.lane.b32.xlu0 %v3877, 64
    %v5363 = vpop.permute.xlu0 %5362
    %5364 = vrot.lane.b32.xlu0 %v3880, 64
    %v5365 = vpop.permute.xlu0 %5364
    %5370 = vxpose.xlu0.b32.start [1/16] %v5359, 128
    %5371 = vxpose.xlu0.b32.cont [2/16] 0.0, 128
    %5372 = vxpose.xlu0.b32.cont [3/16] 0.0, 128
    %5373 = vxpose.xlu0.b32.cont [4/16] 0.0, 128
    %5374 = vxpose.xlu0.b32.cont [5/16] 0.0, 128
    %5375 = vxpose.xlu0.b32.cont [6/16] 0.0, 128
    %5376 = vxpose.xlu0.b32.cont [7/16] 0.0, 128
    %5377 = vxpose.xlu0.b32.cont [8/16] 0.0, 128
    %5378 = vxpose.xlu0.b32.cont [9/16] 0.0, 128
    %5379 = vxpose.xlu0.b32.cont [10/16] 0.0, 128
    %5380 = vxpose.xlu0.b32.cont [11/16] 0.0, 128
    %5381 = vxpose.xlu0.b32.cont [12/16] 0.0, 128
    %5382 = vxpose.xlu0.b32.cont [13/16] 0.0, 128
    %5383 = vxpose.xlu0.b32.cont [14/16] 0.0, 128
    %5384 = vxpose.xlu0.b32.cont [15/16] 0.0, 128
    %5385 = vxpose.xlu0.b32.end [16/16] 0.0, 128
    %v5386 = vpop.trf.xlu0
    %v5387 = vpop.trf.xlu0
    %v5388 = vpop.trf.xlu0
    %v5389 = vpop.trf.xlu0
    %v5390 = vpop.trf.xlu0
    %v5391 = vpop.trf.xlu0
    %v5392 = vpop.trf.xlu0
    %v5393 = vpop.trf.xlu0
    %v5394 = vpop.trf.xlu0
    %v5395 = vpop.trf.xlu0
    %v5396 = vpop.trf.xlu0
    %v5397 = vpop.trf.xlu0
    %v5398 = vpop.trf.xlu0
    %v5399 = vpop.trf.xlu0
    %v5400 = vpop.trf.xlu0
    %v5401 = vpop.trf.xlu0
    %5402 = vxpose.xlu0.b32.start [1/16] %v5361, 128
    %5403 = vxpose.xlu0.b32.cont [2/16] 0.0, 128
    %5404 = vxpose.xlu0.b32.cont [3/16] 0.0, 128
    %5405 = vxpose.xlu0.b32.cont [4/16] 0.0, 128
    %5406 = vxpose.xlu0.b32.cont [5/16] 0.0, 128
    %5407 = vxpose.xlu0.b32.cont [6/16] 0.0, 128
    %5408 = vxpose.xlu0.b32.cont [7/16] 0.0, 128
    %5409 = vxpose.xlu0.b32.cont [8/16] 0.0, 128
    %5410 = vxpose.xlu0.b32.cont [9/16] 0.0, 128
    %5411 = vxpose.xlu0.b32.cont [10/16] 0.0, 128
    %5412 = vxpose.xlu0.b32.cont [11/16] 0.0, 128
    %5413 = vxpose.xlu0.b32.cont [12/16] 0.0, 128
    %5414 = vxpose.xlu0.b32.cont [13/16] 0.0, 128
    %5415 = vxpose.xlu0.b32.cont [14/16] 0.0, 128
    %5416 = vxpose.xlu0.b32.cont [15/16] 0.0, 128
    %5417 = vxpose.xlu0.b32.end [16/16] 0.0, 128
    %v5418 = vpop.trf.xlu0
    %v5419 = vpop.trf.xlu0
    %v5420 = vpop.trf.xlu0
    %v5421 = vpop.trf.xlu0
    %v5422 = vpop.trf.xlu0
    %v5423 = vpop.trf.xlu0
    %v5424 = vpop.trf.xlu0
    %v5425 = vpop.trf.xlu0
    %v5426 = vpop.trf.xlu0
    %v5427 = vpop.trf.xlu0
    %v5428 = vpop.trf.xlu0
    %v5429 = vpop.trf.xlu0
    %v5430 = vpop.trf.xlu0
    %v5431 = vpop.trf.xlu0
    %v5432 = vpop.trf.xlu0
    %v5433 = vpop.trf.xlu0
    %5434 = vxpose.xlu0.b32.start [1/16] %v5363, 128
    %5435 = vxpose.xlu0.b32.cont [2/16] 0.0, 128
    %5436 = vxpose.xlu0.b32.cont [3/16] 0.0, 128
    %5437 = vxpose.xlu0.b32.cont [4/16] 0.0, 128
    %5438 = vxpose.xlu0.b32.cont [5/16] 0.0, 128
    %5439 = vxpose.xlu0.b32.cont [6/16] 0.0, 128
    %5440 = vxpose.xlu0.b32.cont [7/16] 0.0, 128
    %5441 = vxpose.xlu0.b32.cont [8/16] 0.0, 128
    %5442 = vxpose.xlu0.b32.cont [9/16] 0.0, 128
    %5443 = vxpose.xlu0.b32.cont [10/16] 0.0, 128
    %5444 = vxpose.xlu0.b32.cont [11/16] 0.0, 128
    %5445 = vxpose.xlu0.b32.cont [12/16] 0.0, 128
    %5446 = vxpose.xlu0.b32.cont [13/16] 0.0, 128
    %5447 = vxpose.xlu0.b32.cont [14/16] 0.0, 128
    %5448 = vxpose.xlu0.b32.cont [15/16] 0.0, 128
    %5449 = vxpose.xlu0.b32.end [16/16] 0.0, 128
    %v5450 = vpop.trf.xlu0
    %v5451 = vpop.trf.xlu0
    %v5452 = vpop.trf.xlu0
    %v5453 = vpop.trf.xlu0
    %v5454 = vpop.trf.xlu0
    %v5455 = vpop.trf.xlu0
    %v5456 = vpop.trf.xlu0
    %v5457 = vpop.trf.xlu0
    %v5458 = vpop.trf.xlu0
    %v5459 = vpop.trf.xlu0
    %v5460 = vpop.trf.xlu0
    %v5461 = vpop.trf.xlu0
    %v5462 = vpop.trf.xlu0
    %v5463 = vpop.trf.xlu0
    %v5464 = vpop.trf.xlu0
    %v5465 = vpop.trf.xlu0
    %5466 = vxpose.xlu0.b32.start [1/16] %v5365, 128
    %5467 = vxpose.xlu0.b32.cont [2/16] 0.0, 128
    %5468 = vxpose.xlu0.b32.cont [3/16] 0.0, 128
    %5469 = vxpose.xlu0.b32.cont [4/16] 0.0, 128
    %5470 = vxpose.xlu0.b32.cont [5/16] 0.0, 128
    %5471 = vxpose.xlu0.b32.cont [6/16] 0.0, 128
    %5472 = vxpose.xlu0.b32.cont [7/16] 0.0, 128
    %5473 = vxpose.xlu0.b32.cont [8/16] 0.0, 128
    %5474 = vxpose.xlu0.b32.cont [9/16] 0.0, 128
    %5475 = vxpose.xlu0.b32.cont [10/16] 0.0, 128
    %5476 = vxpose.xlu0.b32.cont [11/16] 0.0, 128
    %5477 = vxpose.xlu0.b32.cont [12/16] 0.0, 128
    %5478 = vxpose.xlu0.b32.cont [13/16] 0.0, 128
    %5479 = vxpose.xlu0.b32.cont [14/16] 0.0, 128
    %5480 = vxpose.xlu0.b32.cont [15/16] 0.0, 128
    %5481 = vxpose.xlu0.b32.end [16/16] 0.0, 128
    %v5482 = vpop.trf.xlu0
    %v5483 = vpop.trf.xlu0
    %v5484 = vpop.trf.xlu0
    %v5485 = vpop.trf.xlu0
    %v5486 = vpop.trf.xlu0
    %v5487 = vpop.trf.xlu0
    %v5488 = vpop.trf.xlu0
    %v5489 = vpop.trf.xlu0
    %v5490 = vpop.trf.xlu0
    %v5491 = vpop.trf.xlu0
    %v5492 = vpop.trf.xlu0
    %v5493 = vpop.trf.xlu0
    %v5494 = vpop.trf.xlu0
    %v5495 = vpop.trf.xlu0
    %v5496 = vpop.trf.xlu0
    %v5497 = vpop.trf.xlu0
    %5498 = vxpose.xlu0.b32.start [1/16] %v5343, 128
    %5499 = vxpose.xlu0.b32.cont [2/16] 0.0, 128
    %5500 = vxpose.xlu0.b32.cont [3/16] 0.0, 128
    %5501 = vxpose.xlu0.b32.cont [4/16] 0.0, 128
    %5502 = vxpose.xlu0.b32.cont [5/16] 0.0, 128
    %5503 = vxpose.xlu0.b32.cont [6/16] 0.0, 128
    %5504 = vxpose.xlu0.b32.cont [7/16] 0.0, 128
    %5505 = vxpose.xlu0.b32.cont [8/16] 0.0, 128
    %5506 = vxpose.xlu0.b32.cont [9/16] 0.0, 128
    %5507 = vxpose.xlu0.b32.cont [10/16] 0.0, 128
    %5508 = vxpose.xlu0.b32.cont [11/16] 0.0, 128
    %5509 = vxpose.xlu0.b32.cont [12/16] 0.0, 128
    %5510 = vxpose.xlu0.b32.cont [13/16] 0.0, 128
    %5511 = vxpose.xlu0.b32.cont [14/16] 0.0, 128
    %5512 = vxpose.xlu0.b32.cont [15/16] 0.0, 128
    %5513 = vxpose.xlu0.b32.end [16/16] 0.0, 128
    %v5514 = vpop.trf.xlu0
    %v5515 = vpop.trf.xlu0
    %v5516 = vpop.trf.xlu0
    %v5517 = vpop.trf.xlu0
    %v5518 = vpop.trf.xlu0
    %v5519 = vpop.trf.xlu0
    %v5520 = vpop.trf.xlu0
    %v5521 = vpop.trf.xlu0
    %v5522 = vpop.trf.xlu0
    %v5523 = vpop.trf.xlu0
    %v5524 = vpop.trf.xlu0
    %v5525 = vpop.trf.xlu0
    %v5526 = vpop.trf.xlu0
    %v5527 = vpop.trf.xlu0
    %v5528 = vpop.trf.xlu0
    %v5529 = vpop.trf.xlu0
    %5530 = vxpose.xlu0.b32.start [1/16] %v5345, 128
    %5531 = vxpose.xlu0.b32.cont [2/16] 0.0, 128
    %5532 = vxpose.xlu0.b32.cont [3/16] 0.0, 128
    %5533 = vxpose.xlu0.b32.cont [4/16] 0.0, 128
    %5534 = vxpose.xlu0.b32.cont [5/16] 0.0, 128
    %5535 = vxpose.xlu0.b32.cont [6/16] 0.0, 128
    %5536 = vxpose.xlu0.b32.cont [7/16] 0.0, 128
    %5537 = vxpose.xlu0.b32.cont [8/16] 0.0, 128
    %5538 = vxpose.xlu0.b32.cont [9/16] 0.0, 128
    %5539 = vxpose.xlu0.b32.cont [10/16] 0.0, 128
    %5540 = vxpose.xlu0.b32.cont [11/16] 0.0, 128
    %5541 = vxpose.xlu0.b32.cont [12/16] 0.0, 128
    %5542 = vxpose.xlu0.b32.cont [13/16] 0.0, 128
    %5543 = vxpose.xlu0.b32.cont [14/16] 0.0, 128
    %5544 = vxpose.xlu0.b32.cont [15/16] 0.0, 128
    %5545 = vxpose.xlu0.b32.end [16/16] 0.0, 128
    %v5546 = vpop.trf.xlu0
    %v5547 = vpop.trf.xlu0
    %v5548 = vpop.trf.xlu0
    %v5549 = vpop.trf.xlu0
    %v5550 = vpop.trf.xlu0
    %v5551 = vpop.trf.xlu0
    %v5552 = vpop.trf.xlu0
    %v5553 = vpop.trf.xlu0
    %v5554 = vpop.trf.xlu0
    %v5555 = vpop.trf.xlu0
    %v5556 = vpop.trf.xlu0
    %v5557 = vpop.trf.xlu0
    %v5558 = vpop.trf.xlu0
    %v5559 = vpop.trf.xlu0
    %v5560 = vpop.trf.xlu0
    %v5561 = vpop.trf.xlu0
    %5562 = vxpose.xlu0.b32.start [1/16] %v5347, 128
    %5563 = vxpose.xlu0.b32.cont [2/16] 0.0, 128
    %5564 = vxpose.xlu0.b32.cont [3/16] 0.0, 128
    %5565 = vxpose.xlu0.b32.cont [4/16] 0.0, 128
    %5566 = vxpose.xlu0.b32.cont [5/16] 0.0, 128
    %5567 = vxpose.xlu0.b32.cont [6/16] 0.0, 128
    %5568 = vxpose.xlu0.b32.cont [7/16] 0.0, 128
    %5569 = vxpose.xlu0.b32.cont [8/16] 0.0, 128
    %5570 = vxpose.xlu0.b32.cont [9/16] 0.0, 128
    %5571 = vxpose.xlu0.b32.cont [10/16] 0.0, 128
    %5572 = vxpose.xlu0.b32.cont [11/16] 0.0, 128
    %5573 = vxpose.xlu0.b32.cont [12/16] 0.0, 128
    %5574 = vxpose.xlu0.b32.cont [13/16] 0.0, 128
    %5575 = vxpose.xlu0.b32.cont [14/16] 0.0, 128
    %5576 = vxpose.xlu0.b32.cont [15/16] 0.0, 128
    %5577 = vxpose.xlu0.b32.end [16/16] 0.0, 128
    %v5578 = vpop.trf.xlu0
    %v5579 = vpop.trf.xlu0
    %v5580 = vpop.trf.xlu0
    %v5581 = vpop.trf.xlu0
    %v5582 = vpop.trf.xlu0
    %v5583 = vpop.trf.xlu0
    %v5584 = vpop.trf.xlu0
    %v5585 = vpop.trf.xlu0
    %v5586 = vpop.trf.xlu0
    %v5587 = vpop.trf.xlu0
    %v5588 = vpop.trf.xlu0
    %v5589 = vpop.trf.xlu0
    %v5590 = vpop.trf.xlu0
    %v5591 = vpop.trf.xlu0
    %v5592 = vpop.trf.xlu0
    %v5593 = vpop.trf.xlu0
    %5594 = vxpose.xlu0.b32.start [1/16] %v5349, 128
    %5595 = vxpose.xlu0.b32.cont [2/16] 0.0, 128
    %5596 = vxpose.xlu0.b32.cont [3/16] 0.0, 128
    %5597 = vxpose.xlu0.b32.cont [4/16] 0.0, 128
    %5598 = vxpose.xlu0.b32.cont [5/16] 0.0, 128
    %5599 = vxpose.xlu0.b32.cont [6/16] 0.0, 128
    %5600 = vxpose.xlu0.b32.cont [7/16] 0.0, 128
    %5601 = vxpose.xlu0.b32.cont [8/16] 0.0, 128
    %5602 = vxpose.xlu0.b32.cont [9/16] 0.0, 128
    %5603 = vxpose.xlu0.b32.cont [10/16] 0.0, 128
    %5604 = vxpose.xlu0.b32.cont [11/16] 0.0, 128
    %5605 = vxpose.xlu0.b32.cont [12/16] 0.0, 128
    %5606 = vxpose.xlu0.b32.cont [13/16] 0.0, 128
    %5607 = vxpose.xlu0.b32.cont [14/16] 0.0, 128
    %5608 = vxpose.xlu0.b32.cont [15/16] 0.0, 128
    %5609 = vxpose.xlu0.b32.end [16/16] 0.0, 128
    %v5610 = vpop.trf.xlu0
    %v5611 = vpop.trf.xlu0
    %v5612 = vpop.trf.xlu0
    %v5613 = vpop.trf.xlu0
    %v5614 = vpop.trf.xlu0
    %v5615 = vpop.trf.xlu0
    %v5616 = vpop.trf.xlu0
    %v5617 = vpop.trf.xlu0
    %v5618 = vpop.trf.xlu0
    %v5619 = vpop.trf.xlu0
    %v5620 = vpop.trf.xlu0
    %v5621 = vpop.trf.xlu0
    %v5622 = vpop.trf.xlu0
    %v5623 = vpop.trf.xlu0
    %v5624 = vpop.trf.xlu0
    %v5625 = vpop.trf.xlu0
    %5626 = vxpose.xlu0.b32.start [1/16] %v5351, 128
    %5627 = vxpose.xlu0.b32.cont [2/16] 0.0, 128
    %5628 = vxpose.xlu0.b32.cont [3/16] 0.0, 128
    %5629 = vxpose.xlu0.b32.cont [4/16] 0.0, 128
    %5630 = vxpose.xlu0.b32.cont [5/16] 0.0, 128
    %5631 = vxpose.xlu0.b32.cont [6/16] 0.0, 128
    %5632 = vxpose.xlu0.b32.cont [7/16] 0.0, 128
    %5633 = vxpose.xlu0.b32.cont [8/16] 0.0, 128
    %5634 = vxpose.xlu0.b32.cont [9/16] 0.0, 128
    %5635 = vxpose.xlu0.b32.cont [10/16] 0.0, 128
    %5636 = vxpose.xlu0.b32.cont [11/16] 0.0, 128
    %5637 = vxpose.xlu0.b32.cont [12/16] 0.0, 128
    %5638 = vxpose.xlu0.b32.cont [13/16] 0.0, 128
    %5639 = vxpose.xlu0.b32.cont [14/16] 0.0, 128
    %5640 = vxpose.xlu0.b32.cont [15/16] 0.0, 128
    %5641 = vxpose.xlu0.b32.end [16/16] 0.0, 128
    %v5642 = vpop.trf.xlu0
    %v5643 = vpop.trf.xlu0
    %v5644 = vpop.trf.xlu0
    %v5645 = vpop.trf.xlu0
    %v5646 = vpop.trf.xlu0
    %v5647 = vpop.trf.xlu0
    %v5648 = vpop.trf.xlu0
    %v5649 = vpop.trf.xlu0
    %v5650 = vpop.trf.xlu0
    %v5651 = vpop.trf.xlu0
    %v5652 = vpop.trf.xlu0
    %v5653 = vpop.trf.xlu0
    %v5654 = vpop.trf.xlu0
    %v5655 = vpop.trf.xlu0
    %v5656 = vpop.trf.xlu0
    %v5657 = vpop.trf.xlu0
    %5658 = vxpose.xlu0.b32.start [1/16] %v5353, 128
    %5659 = vxpose.xlu0.b32.cont [2/16] 0.0, 128
    %5660 = vxpose.xlu0.b32.cont [3/16] 0.0, 128
    %5661 = vxpose.xlu0.b32.cont [4/16] 0.0, 128
    %5662 = vxpose.xlu0.b32.cont [5/16] 0.0, 128
    %5663 = vxpose.xlu0.b32.cont [6/16] 0.0, 128
    %5664 = vxpose.xlu0.b32.cont [7/16] 0.0, 128
    %5665 = vxpose.xlu0.b32.cont [8/16] 0.0, 128
    %5666 = vxpose.xlu0.b32.cont [9/16] 0.0, 128
    %5667 = vxpose.xlu0.b32.cont [10/16] 0.0, 128
    %5668 = vxpose.xlu0.b32.cont [11/16] 0.0, 128
    %5669 = vxpose.xlu0.b32.cont [12/16] 0.0, 128
    %5670 = vxpose.xlu0.b32.cont [13/16] 0.0, 128
    %5671 = vxpose.xlu0.b32.cont [14/16] 0.0, 128
    %5672 = vxpose.xlu0.b32.cont [15/16] 0.0, 128
    %5673 = vxpose.xlu0.b32.end [16/16] 0.0, 128
    %v5674 = vpop.trf.xlu0
    %v5675 = vpop.trf.xlu0
    %v5676 = vpop.trf.xlu0
    %v5677 = vpop.trf.xlu0
    %v5678 = vpop.trf.xlu0
    %v5679 = vpop.trf.xlu0
    %v5680 = vpop.trf.xlu0
    %v5681 = vpop.trf.xlu0
    %v5682 = vpop.trf.xlu0
    %v5683 = vpop.trf.xlu0
    %v5684 = vpop.trf.xlu0
    %v5685 = vpop.trf.xlu0
    %v5686 = vpop.trf.xlu0
    %v5687 = vpop.trf.xlu0
    %v5688 = vpop.trf.xlu0
    %v5689 = vpop.trf.xlu0
    %5690 = vxpose.xlu0.b32.start [1/16] %v5355, 128
    %5691 = vxpose.xlu0.b32.cont [2/16] 0.0, 128
    %5692 = vxpose.xlu0.b32.cont [3/16] 0.0, 128
    %5693 = vxpose.xlu0.b32.cont [4/16] 0.0, 128
    %5694 = vxpose.xlu0.b32.cont [5/16] 0.0, 128
    %5695 = vxpose.xlu0.b32.cont [6/16] 0.0, 128
    %5696 = vxpose.xlu0.b32.cont [7/16] 0.0, 128
    %5697 = vxpose.xlu0.b32.cont [8/16] 0.0, 128
    %5698 = vxpose.xlu0.b32.cont [9/16] 0.0, 128
    %5699 = vxpose.xlu0.b32.cont [10/16] 0.0, 128
    %5700 = vxpose.xlu0.b32.cont [11/16] 0.0, 128
    %5701 = vxpose.xlu0.b32.cont [12/16] 0.0, 128
    %5702 = vxpose.xlu0.b32.cont [13/16] 0.0, 128
    %5703 = vxpose.xlu0.b32.cont [14/16] 0.0, 128
    %5704 = vxpose.xlu0.b32.cont [15/16] 0.0, 128
    %5705 = vxpose.xlu0.b32.end [16/16] 0.0, 128
    %v5706 = vpop.trf.xlu0
    %v5707 = vpop.trf.xlu0
    %v5708 = vpop.trf.xlu0
    %v5709 = vpop.trf.xlu0
    %v5710 = vpop.trf.xlu0
    %v5711 = vpop.trf.xlu0
    %v5712 = vpop.trf.xlu0
    %v5713 = vpop.trf.xlu0
    %v5714 = vpop.trf.xlu0
    %v5715 = vpop.trf.xlu0
    %v5716 = vpop.trf.xlu0
    %v5717 = vpop.trf.xlu0
    %v5718 = vpop.trf.xlu0
    %v5719 = vpop.trf.xlu0
    %v5720 = vpop.trf.xlu0
    %v5721 = vpop.trf.xlu0
    %5722 = vxpose.xlu0.b32.start [1/16] %v5357, 128
    %5723 = vxpose.xlu0.b32.cont [2/16] 0.0, 128
    %5724 = vxpose.xlu0.b32.cont [3/16] 0.0, 128
    %5725 = vxpose.xlu0.b32.cont [4/16] 0.0, 128
    %5726 = vxpose.xlu0.b32.cont [5/16] 0.0, 128
    %5727 = vxpose.xlu0.b32.cont [6/16] 0.0, 128
    %5728 = vxpose.xlu0.b32.cont [7/16] 0.0, 128
    %5729 = vxpose.xlu0.b32.cont [8/16] 0.0, 128
    %5730 = vxpose.xlu0.b32.cont [9/16] 0.0, 128
    %5731 = vxpose.xlu0.b32.cont [10/16] 0.0, 128
    %5732 = vxpose.xlu0.b32.cont [11/16] 0.0, 128
    %5733 = vxpose.xlu0.b32.cont [12/16] 0.0, 128
    %5734 = vxpose.xlu0.b32.cont [13/16] 0.0, 128
    %5735 = vxpose.xlu0.b32.cont [14/16] 0.0, 128
    %5736 = vxpose.xlu0.b32.cont [15/16] 0.0, 128
    %5737 = vxpose.xlu0.b32.end [16/16] 0.0, 128
    %v5738 = vpop.trf.xlu0
    %v5739 = vpop.trf.xlu0
    %v5740 = vpop.trf.xlu0
    %v5741 = vpop.trf.xlu0
    %v5742 = vpop.trf.xlu0
    %v5743 = vpop.trf.xlu0
    %v5744 = vpop.trf.xlu0
    %v5745 = vpop.trf.xlu0
    %v5746 = vpop.trf.xlu0
    %v5747 = vpop.trf.xlu0
    %v5748 = vpop.trf.xlu0
    %v5749 = vpop.trf.xlu0
    %v5750 = vpop.trf.xlu0
    %v5751 = vpop.trf.xlu0
    %v5752 = vpop.trf.xlu0
    %v5753 = vpop.trf.xlu0
    %v5754 = vcombine.low %v5514, %v5578
    %v5755 = vcombine.high %v5514, %v5578
    %v5757 = vunpack.c.l.s4 1983009808
    %v5758 = vunpack.c.0.s8 %v5757
    %v5759 = vlaneseq
    %v5760 = vshrl.u32 %v5759, 7
    %v5761 = vsub.s32 %v5758, %v5760
    %v5762 = vrot.slane %v5754, %v5761
    %v5764 = vunpack.c.l.s4 1983009808
    %v5765 = vunpack.c.0.s8 %v5764
    %v5766 = vlaneseq
    %v5767 = vshrl.u32 %v5766, 7
    %v5768 = vsub.s32 %v5765, %v5767
    %v5769 = vrot.slane %v5755, %v5768
    %v5770 = vcombine.low %v5546, %v5610
    %v5771 = vcombine.high %v5546, %v5610
    %v5773 = vunpack.c.l.s4 1983009808
    %v5774 = vunpack.c.0.s8 %v5773
    %v5775 = vlaneseq
    %v5776 = vshrl.u32 %v5775, 7
    %v5777 = vsub.s32 %v5774, %v5776
    %v5778 = vrot.slane %v5770, %v5777
    %v5780 = vunpack.c.l.s4 1983009808
    %v5781 = vunpack.c.0.s8 %v5780
    %v5782 = vlaneseq
    %v5783 = vshrl.u32 %v5782, 7
    %v5784 = vsub.s32 %v5781, %v5783
    %v5785 = vrot.slane %v5771, %v5784
    %v5786 = vcombine.low %v5642, %v5706
    %v5787 = vcombine.high %v5642, %v5706
    %v5789 = vunpack.c.l.s4 1983009808
    %v5790 = vunpack.c.0.s8 %v5789
    %v5791 = vlaneseq
    %v5792 = vshrl.u32 %v5791, 7
    %v5793 = vsub.s32 %v5790, %v5792
    %v5794 = vrot.slane %v5786, %v5793
    %v5796 = vunpack.c.l.s4 1983009808
    %v5797 = vunpack.c.0.s8 %v5796
    %v5798 = vlaneseq
    %v5799 = vshrl.u32 %v5798, 7
    %v5800 = vsub.s32 %v5797, %v5799
    %v5801 = vrot.slane %v5787, %v5800
    %v5802 = vcombine.low %v5674, %v5738
    %v5803 = vcombine.high %v5674, %v5738
    %v5805 = vunpack.c.l.s4 1983009808
    %v5806 = vunpack.c.0.s8 %v5805
    %v5807 = vlaneseq
    %v5808 = vshrl.u32 %v5807, 7
    %v5809 = vsub.s32 %v5806, %v5808
    %v5810 = vrot.slane %v5802, %v5809
    %v5812 = vunpack.c.l.s4 1983009808
    %v5813 = vunpack.c.0.s8 %v5812
    %v5814 = vlaneseq
    %v5815 = vshrl.u32 %v5814, 7
    %v5816 = vsub.s32 %v5813, %v5815
    %v5817 = vrot.slane %v5803, %v5816
    %v5818 = vcombine.low %v5762, %v5778
    %v5819 = vcombine.high %v5762, %v5778
    %v5821 = vunpack.c.l.s4 1934713408
    %v5822 = vunpack.c.0.s8 %v5821
    %v5823 = vlaneseq
    %v5824 = vshrl.u32 %v5823, 7
    %v5825 = vsub.s32 %v5822, %v5824
    %v5826 = vrot.slane %v5818, %v5825
    %v5828 = vunpack.c.l.s4 1934713408
    %v5829 = vunpack.c.0.s8 %v5828
    %v5830 = vlaneseq
    %v5831 = vshrl.u32 %v5830, 7
    %v5832 = vsub.s32 %v5829, %v5831
    %v5833 = vrot.slane %v5819, %v5832
    %v5834 = vcombine.low %v5769, %v5785
    %v5835 = vcombine.high %v5769, %v5785
    %v5837 = vunpack.c.l.s4 1934713408
    %v5838 = vunpack.c.0.s8 %v5837
    %v5839 = vlaneseq
    %v5840 = vshrl.u32 %v5839, 7
    %v5841 = vsub.s32 %v5838, %v5840
    %v5842 = vrot.slane %v5834, %v5841
    %v5844 = vunpack.c.l.s4 1934713408
    %v5845 = vunpack.c.0.s8 %v5844
    %v5846 = vlaneseq
    %v5847 = vshrl.u32 %v5846, 7
    %v5848 = vsub.s32 %v5845, %v5847
    %v5849 = vrot.slane %v5835, %v5848
    %v5850 = vcombine.low %v5794, %v5810
    %v5851 = vcombine.high %v5794, %v5810
    %v5853 = vunpack.c.l.s4 1934713408
    %v5854 = vunpack.c.0.s8 %v5853
    %v5855 = vlaneseq
    %v5856 = vshrl.u32 %v5855, 7
    %v5857 = vsub.s32 %v5854, %v5856
    %v5858 = vrot.slane %v5850, %v5857
    %v5860 = vunpack.c.l.s4 1934713408
    %v5861 = vunpack.c.0.s8 %v5860
    %v5862 = vlaneseq
    %v5863 = vshrl.u32 %v5862, 7
    %v5864 = vsub.s32 %v5861, %v5863
    %v5865 = vrot.slane %v5851, %v5864
    %v5866 = vcombine.low %v5801, %v5817
    %v5867 = vcombine.high %v5801, %v5817
    %v5869 = vunpack.c.l.s4 1934713408
    %v5870 = vunpack.c.0.s8 %v5869
    %v5871 = vlaneseq
    %v5872 = vshrl.u32 %v5871, 7
    %v5873 = vsub.s32 %v5870, %v5872
    %v5874 = vrot.slane %v5866, %v5873
    %v5876 = vunpack.c.l.s4 1934713408
    %v5877 = vunpack.c.0.s8 %v5876
    %v5878 = vlaneseq
    %v5879 = vshrl.u32 %v5878, 7
    %v5880 = vsub.s32 %v5877, %v5879
    %v5881 = vrot.slane %v5867, %v5880
    %v5882 = vcombine.low %v5826, %v5858
    %v5883 = vcombine.high %v5826, %v5858
    %v5884 = vcombine.low %v5833, %v5865
    %v5885 = vcombine.high %v5833, %v5865
    %v5886 = vcombine.low %v5842, %v5874
    %v5887 = vcombine.high %v5842, %v5874
    %v5888 = vcombine.low %v5849, %v5881
    %v5889 = vcombine.high %v5849, %v5881
    %5890 = vxpose.xlu0.b32.start [1/16] %v5882, 128
    %5891 = vxpose.xlu0.b32.cont [2/16] 0.0, 128
    %5892 = vxpose.xlu0.b32.cont [3/16] 0.0, 128
    %5893 = vxpose.xlu0.b32.cont [4/16] 0.0, 128
    %5894 = vxpose.xlu0.b32.cont [5/16] 0.0, 128
    %5895 = vxpose.xlu0.b32.cont [6/16] 0.0, 128
    %5896 = vxpose.xlu0.b32.cont [7/16] 0.0, 128
    %5897 = vxpose.xlu0.b32.cont [8/16] 0.0, 128
    %5898 = vxpose.xlu0.b32.cont [9/16] 0.0, 128
    %5899 = vxpose.xlu0.b32.cont [10/16] 0.0, 128
    %5900 = vxpose.xlu0.b32.cont [11/16] 0.0, 128
    %5901 = vxpose.xlu0.b32.cont [12/16] 0.0, 128
    %5902 = vxpose.xlu0.b32.cont [13/16] 0.0, 128
    %5903 = vxpose.xlu0.b32.cont [14/16] 0.0, 128
    %5904 = vxpose.xlu0.b32.cont [15/16] 0.0, 128
    %5905 = vxpose.xlu0.b32.end [16/16] 0.0, 128
    %v5906 = vpop.trf.xlu0
    %v5907 = vpop.trf.xlu0
    %v5908 = vpop.trf.xlu0
    %v5909 = vpop.trf.xlu0
    %v5910 = vpop.trf.xlu0
    %v5911 = vpop.trf.xlu0
    %v5912 = vpop.trf.xlu0
    %v5913 = vpop.trf.xlu0
    %v5914 = vpop.trf.xlu0
    %v5915 = vpop.trf.xlu0
    %v5916 = vpop.trf.xlu0
    %v5917 = vpop.trf.xlu0
    %v5918 = vpop.trf.xlu0
    %v5919 = vpop.trf.xlu0
    %v5920 = vpop.trf.xlu0
    %v5921 = vpop.trf.xlu0
    %5922 = vxpose.xlu0.b32.start [1/16] %v5883, 128
    %5923 = vxpose.xlu0.b32.cont [2/16] 0.0, 128
    %5924 = vxpose.xlu0.b32.cont [3/16] 0.0, 128
    %5925 = vxpose.xlu0.b32.cont [4/16] 0.0, 128
    %5926 = vxpose.xlu0.b32.cont [5/16] 0.0, 128
    %5927 = vxpose.xlu0.b32.cont [6/16] 0.0, 128
    %5928 = vxpose.xlu0.b32.cont [7/16] 0.0, 128
    %5929 = vxpose.xlu0.b32.cont [8/16] 0.0, 128
    %5930 = vxpose.xlu0.b32.cont [9/16] 0.0, 128
    %5931 = vxpose.xlu0.b32.cont [10/16] 0.0, 128
    %5932 = vxpose.xlu0.b32.cont [11/16] 0.0, 128
    %5933 = vxpose.xlu0.b32.cont [12/16] 0.0, 128
    %5934 = vxpose.xlu0.b32.cont [13/16] 0.0, 128
    %5935 = vxpose.xlu0.b32.cont [14/16] 0.0, 128
    %5936 = vxpose.xlu0.b32.cont [15/16] 0.0, 128
    %5937 = vxpose.xlu0.b32.end [16/16] 0.0, 128
    %v5938 = vpop.trf.xlu0
    %v5939 = vpop.trf.xlu0
    %v5940 = vpop.trf.xlu0
    %v5941 = vpop.trf.xlu0
    %v5942 = vpop.trf.xlu0
    %v5943 = vpop.trf.xlu0
    %v5944 = vpop.trf.xlu0
    %v5945 = vpop.trf.xlu0
    %v5946 = vpop.trf.xlu0
    %v5947 = vpop.trf.xlu0
    %v5948 = vpop.trf.xlu0
    %v5949 = vpop.trf.xlu0
    %v5950 = vpop.trf.xlu0
    %v5951 = vpop.trf.xlu0
    %v5952 = vpop.trf.xlu0
    %v5953 = vpop.trf.xlu0
    %5954 = vxpose.xlu0.b32.start [1/16] %v5884, 128
    %5955 = vxpose.xlu0.b32.cont [2/16] 0.0, 128
    %5956 = vxpose.xlu0.b32.cont [3/16] 0.0, 128
    %5957 = vxpose.xlu0.b32.cont [4/16] 0.0, 128
    %5958 = vxpose.xlu0.b32.cont [5/16] 0.0, 128
    %5959 = vxpose.xlu0.b32.cont [6/16] 0.0, 128
    %5960 = vxpose.xlu0.b32.cont [7/16] 0.0, 128
    %5961 = vxpose.xlu0.b32.cont [8/16] 0.0, 128
    %5962 = vxpose.xlu0.b32.cont [9/16] 0.0, 128
    %5963 = vxpose.xlu0.b32.cont [10/16] 0.0, 128
    %5964 = vxpose.xlu0.b32.cont [11/16] 0.0, 128
    %5965 = vxpose.xlu0.b32.cont [12/16] 0.0, 128
    %5966 = vxpose.xlu0.b32.cont [13/16] 0.0, 128
    %5967 = vxpose.xlu0.b32.cont [14/16] 0.0, 128
    %5968 = vxpose.xlu0.b32.cont [15/16] 0.0, 128
    %5969 = vxpose.xlu0.b32.end [16/16] 0.0, 128
    %v5970 = vpop.trf.xlu0
    %v5971 = vpop.trf.xlu0
    %v5972 = vpop.trf.xlu0
    %v5973 = vpop.trf.xlu0
    %v5974 = vpop.trf.xlu0
    %v5975 = vpop.trf.xlu0
    %v5976 = vpop.trf.xlu0
    %v5977 = vpop.trf.xlu0
    %v5978 = vpop.trf.xlu0
    %v5979 = vpop.trf.xlu0
    %v5980 = vpop.trf.xlu0
    %v5981 = vpop.trf.xlu0
    %v5982 = vpop.trf.xlu0
    %v5983 = vpop.trf.xlu0
    %v5984 = vpop.trf.xlu0
    %v5985 = vpop.trf.xlu0
    %5986 = vxpose.xlu0.b32.start [1/16] %v5885, 128
    %5987 = vxpose.xlu0.b32.cont [2/16] 0.0, 128
    %5988 = vxpose.xlu0.b32.cont [3/16] 0.0, 128
    %5989 = vxpose.xlu0.b32.cont [4/16] 0.0, 128
    %5990 = vxpose.xlu0.b32.cont [5/16] 0.0, 128
    %5991 = vxpose.xlu0.b32.cont [6/16] 0.0, 128
    %5992 = vxpose.xlu0.b32.cont [7/16] 0.0, 128
    %5993 = vxpose.xlu0.b32.cont [8/16] 0.0, 128
    %5994 = vxpose.xlu0.b32.cont [9/16] 0.0, 128
    %5995 = vxpose.xlu0.b32.cont [10/16] 0.0, 128
    %5996 = vxpose.xlu0.b32.cont [11/16] 0.0, 128
    %5997 = vxpose.xlu0.b32.cont [12/16] 0.0, 128
    %5998 = vxpose.xlu0.b32.cont [13/16] 0.0, 128
    %5999 = vxpose.xlu0.b32.cont [14/16] 0.0, 128
    %6000 = vxpose.xlu0.b32.cont [15/16] 0.0, 128
    %6001 = vxpose.xlu0.b32.end [16/16] 0.0, 128
    %v6002 = vpop.trf.xlu0
    %v6003 = vpop.trf.xlu0
    %v6004 = vpop.trf.xlu0
    %v6005 = vpop.trf.xlu0
    %v6006 = vpop.trf.xlu0
    %v6007 = vpop.trf.xlu0
    %v6008 = vpop.trf.xlu0
    %v6009 = vpop.trf.xlu0
    %v6010 = vpop.trf.xlu0
    %v6011 = vpop.trf.xlu0
    %v6012 = vpop.trf.xlu0
    %v6013 = vpop.trf.xlu0
    %v6014 = vpop.trf.xlu0
    %v6015 = vpop.trf.xlu0
    %v6016 = vpop.trf.xlu0
    %v6017 = vpop.trf.xlu0
    %6018 = vxpose.xlu0.b32.start [1/16] %v5886, 128
    %6019 = vxpose.xlu0.b32.cont [2/16] 0.0, 128
    %6020 = vxpose.xlu0.b32.cont [3/16] 0.0, 128
    %6021 = vxpose.xlu0.b32.cont [4/16] 0.0, 128
    %6022 = vxpose.xlu0.b32.cont [5/16] 0.0, 128
    %6023 = vxpose.xlu0.b32.cont [6/16] 0.0, 128
    %6024 = vxpose.xlu0.b32.cont [7/16] 0.0, 128
    %6025 = vxpose.xlu0.b32.cont [8/16] 0.0, 128
    %6026 = vxpose.xlu0.b32.cont [9/16] 0.0, 128
    %6027 = vxpose.xlu0.b32.cont [10/16] 0.0, 128
    %6028 = vxpose.xlu0.b32.cont [11/16] 0.0, 128
    %6029 = vxpose.xlu0.b32.cont [12/16] 0.0, 128
    %6030 = vxpose.xlu0.b32.cont [13/16] 0.0, 128
    %6031 = vxpose.xlu0.b32.cont [14/16] 0.0, 128
    %6032 = vxpose.xlu0.b32.cont [15/16] 0.0, 128
    %6033 = vxpose.xlu0.b32.end [16/16] 0.0, 128
    %v6034 = vpop.trf.xlu0
    %v6035 = vpop.trf.xlu0
    %v6036 = vpop.trf.xlu0
    %v6037 = vpop.trf.xlu0
    %v6038 = vpop.trf.xlu0
    %v6039 = vpop.trf.xlu0
    %v6040 = vpop.trf.xlu0
    %v6041 = vpop.trf.xlu0
    %v6042 = vpop.trf.xlu0
    %v6043 = vpop.trf.xlu0
    %v6044 = vpop.trf.xlu0
    %v6045 = vpop.trf.xlu0
    %v6046 = vpop.trf.xlu0
    %v6047 = vpop.trf.xlu0
    %v6048 = vpop.trf.xlu0
    %v6049 = vpop.trf.xlu0
    %6050 = vxpose.xlu0.b32.start [1/16] %v5887, 128
    %6051 = vxpose.xlu0.b32.cont [2/16] 0.0, 128
    %6052 = vxpose.xlu0.b32.cont [3/16] 0.0, 128
    %6053 = vxpose.xlu0.b32.cont [4/16] 0.0, 128
    %6054 = vxpose.xlu0.b32.cont [5/16] 0.0, 128
    %6055 = vxpose.xlu0.b32.cont [6/16] 0.0, 128
    %6056 = vxpose.xlu0.b32.cont [7/16] 0.0, 128
    %6057 = vxpose.xlu0.b32.cont [8/16] 0.0, 128
    %6058 = vxpose.xlu0.b32.cont [9/16] 0.0, 128
    %6059 = vxpose.xlu0.b32.cont [10/16] 0.0, 128
    %6060 = vxpose.xlu0.b32.cont [11/16] 0.0, 128
    %6061 = vxpose.xlu0.b32.cont [12/16] 0.0, 128
    %6062 = vxpose.xlu0.b32.cont [13/16] 0.0, 128
    %6063 = vxpose.xlu0.b32.cont [14/16] 0.0, 128
    %6064 = vxpose.xlu0.b32.cont [15/16] 0.0, 128
    %6065 = vxpose.xlu0.b32.end [16/16] 0.0, 128
    %v6066 = vpop.trf.xlu0
    %v6067 = vpop.trf.xlu0
    %v6068 = vpop.trf.xlu0
    %v6069 = vpop.trf.xlu0
    %v6070 = vpop.trf.xlu0
    %v6071 = vpop.trf.xlu0
    %v6072 = vpop.trf.xlu0
    %v6073 = vpop.trf.xlu0
    %v6074 = vpop.trf.xlu0
    %v6075 = vpop.trf.xlu0
    %v6076 = vpop.trf.xlu0
    %v6077 = vpop.trf.xlu0
    %v6078 = vpop.trf.xlu0
    %v6079 = vpop.trf.xlu0
    %v6080 = vpop.trf.xlu0
    %v6081 = vpop.trf.xlu0
    %6082 = vxpose.xlu0.b32.start [1/16] %v5888, 128
    %6083 = vxpose.xlu0.b32.cont [2/16] 0.0, 128
    %6084 = vxpose.xlu0.b32.cont [3/16] 0.0, 128
    %6085 = vxpose.xlu0.b32.cont [4/16] 0.0, 128
    %6086 = vxpose.xlu0.b32.cont [5/16] 0.0, 128
    %6087 = vxpose.xlu0.b32.cont [6/16] 0.0, 128
    %6088 = vxpose.xlu0.b32.cont [7/16] 0.0, 128
    %6089 = vxpose.xlu0.b32.cont [8/16] 0.0, 128
    %6090 = vxpose.xlu0.b32.cont [9/16] 0.0, 128
    %6091 = vxpose.xlu0.b32.cont [10/16] 0.0, 128
    %6092 = vxpose.xlu0.b32.cont [11/16] 0.0, 128
    %6093 = vxpose.xlu0.b32.cont [12/16] 0.0, 128
    %6094 = vxpose.xlu0.b32.cont [13/16] 0.0, 128
    %6095 = vxpose.xlu0.b32.cont [14/16] 0.0, 128
    %6096 = vxpose.xlu0.b32.cont [15/16] 0.0, 128
    %6097 = vxpose.xlu0.b32.end [16/16] 0.0, 128
    %v6098 = vpop.trf.xlu0
    %v6099 = vpop.trf.xlu0
    %v6100 = vpop.trf.xlu0
    %v6101 = vpop.trf.xlu0
    %v6102 = vpop.trf.xlu0
    %v6103 = vpop.trf.xlu0
    %v6104 = vpop.trf.xlu0
    %v6105 = vpop.trf.xlu0
    %v6106 = vpop.trf.xlu0
    %v6107 = vpop.trf.xlu0
    %v6108 = vpop.trf.xlu0
    %v6109 = vpop.trf.xlu0
    %v6110 = vpop.trf.xlu0
    %v6111 = vpop.trf.xlu0
    %v6112 = vpop.trf.xlu0
    %v6113 = vpop.trf.xlu0
    %6114 = vxpose.xlu0.b32.start [1/16] %v5889, 128
    %6115 = vxpose.xlu0.b32.cont [2/16] 0.0, 128
    %6116 = vxpose.xlu0.b32.cont [3/16] 0.0, 128
    %6117 = vxpose.xlu0.b32.cont [4/16] 0.0, 128
    %6118 = vxpose.xlu0.b32.cont [5/16] 0.0, 128
    %6119 = vxpose.xlu0.b32.cont [6/16] 0.0, 128
    %6120 = vxpose.xlu0.b32.cont [7/16] 0.0, 128
    %6121 = vxpose.xlu0.b32.cont [8/16] 0.0, 128
    %6122 = vxpose.xlu0.b32.cont [9/16] 0.0, 128
    %6123 = vxpose.xlu0.b32.cont [10/16] 0.0, 128
    %6124 = vxpose.xlu0.b32.cont [11/16] 0.0, 128
    %6125 = vxpose.xlu0.b32.cont [12/16] 0.0, 128
    %6126 = vxpose.xlu0.b32.cont [13/16] 0.0, 128
    %6127 = vxpose.xlu0.b32.cont [14/16] 0.0, 128
    %6128 = vxpose.xlu0.b32.cont [15/16] 0.0, 128
    %6129 = vxpose.xlu0.b32.end [16/16] 0.0, 128
    %v6130 = vpop.trf.xlu0
    %v6131 = vpop.trf.xlu0
    %v6132 = vpop.trf.xlu0
    %v6133 = vpop.trf.xlu0
    %v6134 = vpop.trf.xlu0
    %v6135 = vpop.trf.xlu0
    %v6136 = vpop.trf.xlu0
    %v6137 = vpop.trf.xlu0
    %v6138 = vpop.trf.xlu0
    %v6139 = vpop.trf.xlu0
    %v6140 = vpop.trf.xlu0
    %v6141 = vpop.trf.xlu0
    %v6142 = vpop.trf.xlu0
    %v6143 = vpop.trf.xlu0
    %v6144 = vpop.trf.xlu0
    %v6145 = vpop.trf.xlu0
    %v6146 = vcombine.low %v5906, %v5970
    %v6148 = vunpack.c.l.s4 1983009808
    %v6149 = vunpack.c.0.s8 %v6148
    %v6150 = vlaneseq
    %v6151 = vshrl.u32 %v6150, 7
    %v6152 = vsub.s32 %v6149, %v6151
    %v6153 = vrot.slane %v6146, %v6152
    %v6154 = vcombine.low %v5938, %v6002
    %v6156 = vunpack.c.l.s4 1983009808
    %v6157 = vunpack.c.0.s8 %v6156
    %v6158 = vlaneseq
    %v6159 = vshrl.u32 %v6158, 7
    %v6160 = vsub.s32 %v6157, %v6159
    %v6161 = vrot.slane %v6154, %v6160
    %v6162 = vcombine.low %v6034, %v6098
    %v6164 = vunpack.c.l.s4 1983009808
    %v6165 = vunpack.c.0.s8 %v6164
    %v6166 = vlaneseq
    %v6167 = vshrl.u32 %v6166, 7
    %v6168 = vsub.s32 %v6165, %v6167
    %v6169 = vrot.slane %v6162, %v6168
    %v6170 = vcombine.low %v6066, %v6130
    %v6172 = vunpack.c.l.s4 1983009808
    %v6173 = vunpack.c.0.s8 %v6172
    %v6174 = vlaneseq
    %v6175 = vshrl.u32 %v6174, 7
    %v6176 = vsub.s32 %v6173, %v6175
    %v6177 = vrot.slane %v6170, %v6176
    %v6178 = vcombine.low %v6153, %v6161
    %v6179 = vcombine.high %v6153, %v6161
    %v6181 = vunpack.c.l.s4 1934713408
    %v6182 = vunpack.c.0.s8 %v6181
    %v6183 = vlaneseq
    %v6184 = vshrl.u32 %v6183, 7
    %v6185 = vsub.s32 %v6182, %v6184
    %v6186 = vrot.slane %v6178, %v6185
    %v6188 = vunpack.c.l.s4 1934713408
    %v6189 = vunpack.c.0.s8 %v6188
    %v6190 = vlaneseq
    %v6191 = vshrl.u32 %v6190, 7
    %v6192 = vsub.s32 %v6189, %v6191
    %v6193 = vrot.slane %v6179, %v6192
    %v6194 = vcombine.low %v6169, %v6177
    %v6195 = vcombine.high %v6169, %v6177
    %v6197 = vunpack.c.l.s4 1934713408
    %v6198 = vunpack.c.0.s8 %v6197
    %v6199 = vlaneseq
    %v6200 = vshrl.u32 %v6199, 7
    %v6201 = vsub.s32 %v6198, %v6200
    %v6202 = vrot.slane %v6194, %v6201
    %v6204 = vunpack.c.l.s4 1934713408
    %v6205 = vunpack.c.0.s8 %v6204
    %v6206 = vlaneseq
    %v6207 = vshrl.u32 %v6206, 7
    %v6208 = vsub.s32 %v6205, %v6207
    %v6209 = vrot.slane %v6195, %v6208
    %v6210 = vcombine.low %v6186, %v6202
    %v6211 = vcombine.high %v6186, %v6202
    %v6212 = vcombine.low %v6193, %v6209
    %v6213 = vcombine.high %v6193, %v6209
    %v6215 = vsel %vm489, %v5386, 0
    %6217 = vmatprep.subr.mxu0 0.0
    %6218 = vmatpush1.msra.mxu0 %v6210
    %6219 = vmatprep.subr.mxu0 0.0
    %6220 = vmatpush1.msra.mxu0 0.0
    %6221 = vmatprep.subr.mxu0 0.0
    %6222 = vmatpush1.msra.mxu0 0.0
    %6223 = vmatprep.subr.mxu0 0.0
    %6224 = vmatpush1.msra.mxu0 0.0
    %6225 = vmatprep.subr.mxu0 0.0
    %6226 = vmatpush1.msra.mxu0 0.0
    %6227 = vmatprep.subr.mxu0 0.0
    %6228 = vmatpush1.msra.mxu0 0.0
    %6229 = vmatprep.subr.mxu0 0.0
    %6230 = vmatpush1.msra.mxu0 0.0
    %6231 = vmatprep.subr.mxu0 0.0
    %6232 = vmatpush1.msra.mxu0 0.0
    %6233 = vmatprep.subr.mxu0 0.0
    %6234 = vmatpush1.msra.mxu0 0.0
    %6235 = vmatprep.subr.mxu0 0.0
    %6236 = vmatpush1.msra.mxu0 0.0
    %6237 = vmatprep.subr.mxu0 0.0
    %6238 = vmatpush1.msra.mxu0 0.0
    %6239 = vmatprep.subr.mxu0 0.0
    %6240 = vmatpush1.msra.mxu0 0.0
    %6241 = vmatprep.subr.mxu0 0.0
    %6242 = vmatpush1.msra.mxu0 0.0
    %6243 = vmatprep.subr.mxu0 0.0
    %6244 = vmatpush1.msra.mxu0 0.0
    %6245 = vmatprep.subr.mxu0 0.0
    %6246 = vmatpush1.msra.mxu0 0.0
    %6247 = vmatprep.subr.mxu0 0.0
    %6248 = vmatpush1.msra.mxu0 0.0
    %6249 = vmatprep.subr.mxu0 0.0
    %6250 = vmatpush1.msra.mxu0 0.0
    %6251 = vmatprep.subr.mxu0 0.0
    %6252 = vmatpush1.msra.mxu0 0.0
    %6253 = vmatprep.subr.mxu0 0.0
    %6254 = vmatpush1.msra.mxu0 0.0
    %6255 = vmatprep.subr.mxu0 0.0
    %6256 = vmatpush1.msra.mxu0 0.0
    %6257 = vmatprep.subr.mxu0 0.0
    %6258 = vmatpush1.msra.mxu0 0.0
    %6259 = vmatprep.subr.mxu0 0.0
    %6260 = vmatpush1.msra.mxu0 0.0
    %6261 = vmatprep.subr.mxu0 0.0
    %6262 = vmatpush1.msra.mxu0 0.0
    %6263 = vmatprep.subr.mxu0 0.0
    %6264 = vmatpush1.msra.mxu0 0.0
    %6265 = vmatprep.subr.mxu0 0.0
    %6266 = vmatpush1.msra.mxu0 0.0
    %6267 = vmatprep.subr.mxu0 0.0
    %6268 = vmatpush1.msra.mxu0 0.0
    %6269 = vmatprep.subr.mxu0 0.0
    %6270 = vmatpush1.msra.mxu0 0.0
    %6271 = vmatprep.subr.mxu0 0.0
    %6272 = vmatpush1.msra.mxu0 0.0
    %6273 = vmatprep.subr.mxu0 0.0
    %6274 = vmatpush1.msra.mxu0 0.0
    %6275 = vmatprep.subr.mxu0 0.0
    %6276 = vmatpush1.msra.mxu0 0.0
    %6277 = vmatprep.subr.mxu0 0.0
    %6278 = vmatpush1.msra.mxu0 0.0
    %6279 = vmatprep.subr.mxu0 0.0
    %6280 = vmatpush1.msra.mxu0 0.0
    %6281 = vmatprep.mubr.f32.mxu0 0.0
    %6282 = vmatmul.mubr.f32.gmra.mrb[0].mxu0 %v6215
    %v6283 = vpop.f32.mrb[0].mxu0
    %v6284 = vadd.f32 0.0, %v6283
    %v6285 = vpop.f32.mrb[0].mxu0
    %6286 = vdwg.mxu0
    %v6288 = vsel %vm489, %v5418, 0
    %6290 = vmatprep.subr.mxu0 0.0
    %6291 = vmatpush1.msra.mxu0 %v6211
    %6292 = vmatprep.subr.mxu0 0.0
    %6293 = vmatpush1.msra.mxu0 0.0
    %6294 = vmatprep.subr.mxu0 0.0
    %6295 = vmatpush1.msra.mxu0 0.0
    %6296 = vmatprep.subr.mxu0 0.0
    %6297 = vmatpush1.msra.mxu0 0.0
    %6298 = vmatprep.subr.mxu0 0.0
    %6299 = vmatpush1.msra.mxu0 0.0
    %6300 = vmatprep.subr.mxu0 0.0
    %6301 = vmatpush1.msra.mxu0 0.0
    %6302 = vmatprep.subr.mxu0 0.0
    %6303 = vmatpush1.msra.mxu0 0.0
    %6304 = vmatprep.subr.mxu0 0.0
    %6305 = vmatpush1.msra.mxu0 0.0
    %6306 = vmatprep.subr.mxu0 0.0
    %6307 = vmatpush1.msra.mxu0 0.0
    %6308 = vmatprep.subr.mxu0 0.0
    %6309 = vmatpush1.msra.mxu0 0.0
    %6310 = vmatprep.subr.mxu0 0.0
    %6311 = vmatpush1.msra.mxu0 0.0
    %6312 = vmatprep.subr.mxu0 0.0
    %6313 = vmatpush1.msra.mxu0 0.0
    %6314 = vmatprep.subr.mxu0 0.0
    %6315 = vmatpush1.msra.mxu0 0.0
    %6316 = vmatprep.subr.mxu0 0.0
    %6317 = vmatpush1.msra.mxu0 0.0
    %6318 = vmatprep.subr.mxu0 0.0
    %6319 = vmatpush1.msra.mxu0 0.0
    %6320 = vmatprep.subr.mxu0 0.0
    %6321 = vmatpush1.msra.mxu0 0.0
    %6322 = vmatprep.subr.mxu0 0.0
    %6323 = vmatpush1.msra.mxu0 0.0
    %6324 = vmatprep.subr.mxu0 0.0
    %6325 = vmatpush1.msra.mxu0 0.0
    %6326 = vmatprep.subr.mxu0 0.0
    %6327 = vmatpush1.msra.mxu0 0.0
    %6328 = vmatprep.subr.mxu0 0.0
    %6329 = vmatpush1.msra.mxu0 0.0
    %6330 = vmatprep.subr.mxu0 0.0
    %6331 = vmatpush1.msra.mxu0 0.0
    %6332 = vmatprep.subr.mxu0 0.0
    %6333 = vmatpush1.msra.mxu0 0.0
    %6334 = vmatprep.subr.mxu0 0.0
    %6335 = vmatpush1.msra.mxu0 0.0
    %6336 = vmatprep.subr.mxu0 0.0
    %6337 = vmatpush1.msra.mxu0 0.0
    %6338 = vmatprep.subr.mxu0 0.0
    %6339 = vmatpush1.msra.mxu0 0.0
    %6340 = vmatprep.subr.mxu0 0.0
    %6341 = vmatpush1.msra.mxu0 0.0
    %6342 = vmatprep.subr.mxu0 0.0
    %6343 = vmatpush1.msra.mxu0 0.0
    %6344 = vmatprep.subr.mxu0 0.0
    %6345 = vmatpush1.msra.mxu0 0.0
    %6346 = vmatprep.subr.mxu0 0.0
    %6347 = vmatpush1.msra.mxu0 0.0
    %6348 = vmatprep.subr.mxu0 0.0
    %6349 = vmatpush1.msra.mxu0 0.0
    %6350 = vmatprep.subr.mxu0 0.0
    %6351 = vmatpush1.msra.mxu0 0.0
    %6352 = vmatprep.subr.mxu0 0.0
    %6353 = vmatpush1.msra.mxu0 0.0
    %6354 = vmatprep.mubr.f32.mxu0 0.0
    %6355 = vmatmul.mubr.f32.gmra.mrb[0].mxu0 %v6288
    %v6356 = vpop.f32.mrb[0].mxu0
    %v6357 = vadd.f32 0.0, %v6356
    %v6358 = vpop.f32.mrb[0].mxu0
    %6359 = vdwg.mxu0
    %v6361 = vsel %vm489, %v5450, 0
    %6363 = vmatprep.subr.mxu0 0.0
    %6364 = vmatpush1.msra.mxu0 %v6212
    %6365 = vmatprep.subr.mxu0 0.0
    %6366 = vmatpush1.msra.mxu0 0.0
    %6367 = vmatprep.subr.mxu0 0.0
    %6368 = vmatpush1.msra.mxu0 0.0
    %6369 = vmatprep.subr.mxu0 0.0
    %6370 = vmatpush1.msra.mxu0 0.0
    %6371 = vmatprep.subr.mxu0 0.0
    %6372 = vmatpush1.msra.mxu0 0.0
    %6373 = vmatprep.subr.mxu0 0.0
    %6374 = vmatpush1.msra.mxu0 0.0
    %6375 = vmatprep.subr.mxu0 0.0
    %6376 = vmatpush1.msra.mxu0 0.0
    %6377 = vmatprep.subr.mxu0 0.0
    %6378 = vmatpush1.msra.mxu0 0.0
    %6379 = vmatprep.subr.mxu0 0.0
    %6380 = vmatpush1.msra.mxu0 0.0
    %6381 = vmatprep.subr.mxu0 0.0
    %6382 = vmatpush1.msra.mxu0 0.0
    %6383 = vmatprep.subr.mxu0 0.0
    %6384 = vmatpush1.msra.mxu0 0.0
    %6385 = vmatprep.subr.mxu0 0.0
    %6386 = vmatpush1.msra.mxu0 0.0
    %6387 = vmatprep.subr.mxu0 0.0
    %6388 = vmatpush1.msra.mxu0 0.0
    %6389 = vmatprep.subr.mxu0 0.0
    %6390 = vmatpush1.msra.mxu0 0.0
    %6391 = vmatprep.subr.mxu0 0.0
    %6392 = vmatpush1.msra.mxu0 0.0
    %6393 = vmatprep.subr.mxu0 0.0
    %6394 = vmatpush1.msra.mxu0 0.0
    %6395 = vmatprep.subr.mxu0 0.0
    %6396 = vmatpush1.msra.mxu0 0.0
    %6397 = vmatprep.subr.mxu0 0.0
    %6398 = vmatpush1.msra.mxu0 0.0
    %6399 = vmatprep.subr.mxu0 0.0
    %6400 = vmatpush1.msra.mxu0 0.0
    %6401 = vmatprep.subr.mxu0 0.0
    %6402 = vmatpush1.msra.mxu0 0.0
    %6403 = vmatprep.subr.mxu0 0.0
    %6404 = vmatpush1.msra.mxu0 0.0
    %6405 = vmatprep.subr.mxu0 0.0
    %6406 = vmatpush1.msra.mxu0 0.0
    %6407 = vmatprep.subr.mxu0 0.0
    %6408 = vmatpush1.msra.mxu0 0.0
    %6409 = vmatprep.subr.mxu0 0.0
    %6410 = vmatpush1.msra.mxu0 0.0
    %6411 = vmatprep.subr.mxu0 0.0
    %6412 = vmatpush1.msra.mxu0 0.0
    %6413 = vmatprep.subr.mxu0 0.0
    %6414 = vmatpush1.msra.mxu0 0.0
    %6415 = vmatprep.subr.mxu0 0.0
    %6416 = vmatpush1.msra.mxu0 0.0
    %6417 = vmatprep.subr.mxu0 0.0
    %6418 = vmatpush1.msra.mxu0 0.0
    %6419 = vmatprep.subr.mxu0 0.0
    %6420 = vmatpush1.msra.mxu0 0.0
    %6421 = vmatprep.subr.mxu0 0.0
    %6422 = vmatpush1.msra.mxu0 0.0
    %6423 = vmatprep.subr.mxu0 0.0
    %6424 = vmatpush1.msra.mxu0 0.0
    %6425 = vmatprep.subr.mxu0 0.0
    %6426 = vmatpush1.msra.mxu0 0.0
    %6427 = vmatprep.mubr.f32.mxu0 0.0
    %6428 = vmatmul.mubr.f32.gmra.mrb[0].mxu0 %v6361
    %v6429 = vpop.f32.mrb[0].mxu0
    %v6430 = vadd.f32 0.0, %v6429
    %v6431 = vpop.f32.mrb[0].mxu0
    %6432 = vdwg.mxu0
    %v6434 = vsel %vm489, %v5482, 0
    %6436 = vmatprep.subr.mxu0 0.0
    %6437 = vmatpush1.msra.mxu0 %v6213
    %6438 = vmatprep.subr.mxu0 0.0
    %6439 = vmatpush1.msra.mxu0 0.0
    %6440 = vmatprep.subr.mxu0 0.0
    %6441 = vmatpush1.msra.mxu0 0.0
    %6442 = vmatprep.subr.mxu0 0.0
    %6443 = vmatpush1.msra.mxu0 0.0
    %6444 = vmatprep.subr.mxu0 0.0
    %6445 = vmatpush1.msra.mxu0 0.0
    %6446 = vmatprep.subr.mxu0 0.0
    %6447 = vmatpush1.msra.mxu0 0.0
    %6448 = vmatprep.subr.mxu0 0.0
    %6449 = vmatpush1.msra.mxu0 0.0
    %6450 = vmatprep.subr.mxu0 0.0
    %6451 = vmatpush1.msra.mxu0 0.0
    %6452 = vmatprep.subr.mxu0 0.0
    %6453 = vmatpush1.msra.mxu0 0.0
    %6454 = vmatprep.subr.mxu0 0.0
    %6455 = vmatpush1.msra.mxu0 0.0
    %6456 = vmatprep.subr.mxu0 0.0
    %6457 = vmatpush1.msra.mxu0 0.0
    %6458 = vmatprep.subr.mxu0 0.0
    %6459 = vmatpush1.msra.mxu0 0.0
    %6460 = vmatprep.subr.mxu0 0.0
    %6461 = vmatpush1.msra.mxu0 0.0
    %6462 = vmatprep.subr.mxu0 0.0
    %6463 = vmatpush1.msra.mxu0 0.0
    %6464 = vmatprep.subr.mxu0 0.0
    %6465 = vmatpush1.msra.mxu0 0.0
    %6466 = vmatprep.subr.mxu0 0.0
    %6467 = vmatpush1.msra.mxu0 0.0
    %6468 = vmatprep.subr.mxu0 0.0
    %6469 = vmatpush1.msra.mxu0 0.0
    %6470 = vmatprep.subr.mxu0 0.0
    %6471 = vmatpush1.msra.mxu0 0.0
    %6472 = vmatprep.subr.mxu0 0.0
    %6473 = vmatpush1.msra.mxu0 0.0
    %6474 = vmatprep.subr.mxu0 0.0
    %6475 = vmatpush1.msra.mxu0 0.0
    %6476 = vmatprep.subr.mxu0 0.0
    %6477 = vmatpush1.msra.mxu0 0.0
    %6478 = vmatprep.subr.mxu0 0.0
    %6479 = vmatpush1.msra.mxu0 0.0
    %6480 = vmatprep.subr.mxu0 0.0
    %6481 = vmatpush1.msra.mxu0 0.0
    %6482 = vmatprep.subr.mxu0 0.0
    %6483 = vmatpush1.msra.mxu0 0.0
    %6484 = vmatprep.subr.mxu0 0.0
    %6485 = vmatpush1.msra.mxu0 0.0
    %6486 = vmatprep.subr.mxu0 0.0
    %6487 = vmatpush1.msra.mxu0 0.0
    %6488 = vmatprep.subr.mxu0 0.0
    %6489 = vmatpush1.msra.mxu0 0.0
    %6490 = vmatprep.subr.mxu0 0.0
    %6491 = vmatpush1.msra.mxu0 0.0
    %6492 = vmatprep.subr.mxu0 0.0
    %6493 = vmatpush1.msra.mxu0 0.0
    %6494 = vmatprep.subr.mxu0 0.0
    %6495 = vmatpush1.msra.mxu0 0.0
    %6496 = vmatprep.subr.mxu0 0.0
    %6497 = vmatpush1.msra.mxu0 0.0
    %6498 = vmatprep.subr.mxu0 0.0
    %6499 = vmatpush1.msra.mxu0 0.0
    %6500 = vmatprep.mubr.f32.mxu0 0.0
    %6501 = vmatmul.mubr.f32.gmra.mrb[0].mxu0 %v6434
    %v6502 = vpop.f32.mrb[0].mxu0
    %v6503 = vadd.f32 0.0, %v6502
    %v6504 = vpop.f32.mrb[0].mxu0
    %6505 = vdwg.mxu0
    %6506 = vxpose.xlu0.b32.start [1/16] %v6284, 128
    %6507 = vxpose.xlu0.b32.cont [2/16] 0.0, 128
    %6508 = vxpose.xlu0.b32.cont [3/16] 0.0, 128
    %6509 = vxpose.xlu0.b32.cont [4/16] 0.0, 128
    %6510 = vxpose.xlu0.b32.cont [5/16] 0.0, 128
    %6511 = vxpose.xlu0.b32.cont [6/16] 0.0, 128
    %6512 = vxpose.xlu0.b32.cont [7/16] 0.0, 128
    %6513 = vxpose.xlu0.b32.cont [8/16] 0.0, 128
    %6514 = vxpose.xlu0.b32.cont [9/16] 0.0, 128
    %6515 = vxpose.xlu0.b32.cont [10/16] 0.0, 128
    %6516 = vxpose.xlu0.b32.cont [11/16] 0.0, 128
    %6517 = vxpose.xlu0.b32.cont [12/16] 0.0, 128
    %6518 = vxpose.xlu0.b32.cont [13/16] 0.0, 128
    %6519 = vxpose.xlu0.b32.cont [14/16] 0.0, 128
    %6520 = vxpose.xlu0.b32.cont [15/16] 0.0, 128
    %6521 = vxpose.xlu0.b32.end [16/16] 0.0, 128
    %v6522 = vpop.trf.xlu0
    %v6523 = vpop.trf.xlu0
    %v6524 = vpop.trf.xlu0
    %v6525 = vpop.trf.xlu0
    %v6526 = vpop.trf.xlu0
    %v6527 = vpop.trf.xlu0
    %v6528 = vpop.trf.xlu0
    %v6529 = vpop.trf.xlu0
    %v6530 = vpop.trf.xlu0
    %v6531 = vpop.trf.xlu0
    %v6532 = vpop.trf.xlu0
    %v6533 = vpop.trf.xlu0
    %v6534 = vpop.trf.xlu0
    %v6535 = vpop.trf.xlu0
    %v6536 = vpop.trf.xlu0
    %v6537 = vpop.trf.xlu0
    %6538 = vxpose.xlu0.b32.start [1/16] %v6357, 128
    %6539 = vxpose.xlu0.b32.cont [2/16] 0.0, 128
    %6540 = vxpose.xlu0.b32.cont [3/16] 0.0, 128
    %6541 = vxpose.xlu0.b32.cont [4/16] 0.0, 128
    %6542 = vxpose.xlu0.b32.cont [5/16] 0.0, 128
    %6543 = vxpose.xlu0.b32.cont [6/16] 0.0, 128
    %6544 = vxpose.xlu0.b32.cont [7/16] 0.0, 128
    %6545 = vxpose.xlu0.b32.cont [8/16] 0.0, 128
    %6546 = vxpose.xlu0.b32.cont [9/16] 0.0, 128
    %6547 = vxpose.xlu0.b32.cont [10/16] 0.0, 128
    %6548 = vxpose.xlu0.b32.cont [11/16] 0.0, 128
    %6549 = vxpose.xlu0.b32.cont [12/16] 0.0, 128
    %6550 = vxpose.xlu0.b32.cont [13/16] 0.0, 128
    %6551 = vxpose.xlu0.b32.cont [14/16] 0.0, 128
    %6552 = vxpose.xlu0.b32.cont [15/16] 0.0, 128
    %6553 = vxpose.xlu0.b32.end [16/16] 0.0, 128
    %v6554 = vpop.trf.xlu0
    %v6555 = vpop.trf.xlu0
    %v6556 = vpop.trf.xlu0
    %v6557 = vpop.trf.xlu0
    %v6558 = vpop.trf.xlu0
    %v6559 = vpop.trf.xlu0
    %v6560 = vpop.trf.xlu0
    %v6561 = vpop.trf.xlu0
    %v6562 = vpop.trf.xlu0
    %v6563 = vpop.trf.xlu0
    %v6564 = vpop.trf.xlu0
    %v6565 = vpop.trf.xlu0
    %v6566 = vpop.trf.xlu0
    %v6567 = vpop.trf.xlu0
    %v6568 = vpop.trf.xlu0
    %v6569 = vpop.trf.xlu0
    %6570 = vxpose.xlu0.b32.start [1/16] %v6430, 128
    %6571 = vxpose.xlu0.b32.cont [2/16] 0.0, 128
    %6572 = vxpose.xlu0.b32.cont [3/16] 0.0, 128
    %6573 = vxpose.xlu0.b32.cont [4/16] 0.0, 128
    %6574 = vxpose.xlu0.b32.cont [5/16] 0.0, 128
    %6575 = vxpose.xlu0.b32.cont [6/16] 0.0, 128
    %6576 = vxpose.xlu0.b32.cont [7/16] 0.0, 128
    %6577 = vxpose.xlu0.b32.cont [8/16] 0.0, 128
    %6578 = vxpose.xlu0.b32.cont [9/16] 0.0, 128
    %6579 = vxpose.xlu0.b32.cont [10/16] 0.0, 128
    %6580 = vxpose.xlu0.b32.cont [11/16] 0.0, 128
    %6581 = vxpose.xlu0.b32.cont [12/16] 0.0, 128
    %6582 = vxpose.xlu0.b32.cont [13/16] 0.0, 128
    %6583 = vxpose.xlu0.b32.cont [14/16] 0.0, 128
    %6584 = vxpose.xlu0.b32.cont [15/16] 0.0, 128
    %6585 = vxpose.xlu0.b32.end [16/16] 0.0, 128
    %v6586 = vpop.trf.xlu0
    %v6587 = vpop.trf.xlu0
    %v6588 = vpop.trf.xlu0
    %v6589 = vpop.trf.xlu0
    %v6590 = vpop.trf.xlu0
    %v6591 = vpop.trf.xlu0
    %v6592 = vpop.trf.xlu0
    %v6593 = vpop.trf.xlu0
    %v6594 = vpop.trf.xlu0
    %v6595 = vpop.trf.xlu0
    %v6596 = vpop.trf.xlu0
    %v6597 = vpop.trf.xlu0
    %v6598 = vpop.trf.xlu0
    %v6599 = vpop.trf.xlu0
    %v6600 = vpop.trf.xlu0
    %v6601 = vpop.trf.xlu0
    %6602 = vxpose.xlu0.b32.start [1/16] %v6503, 128
    %6603 = vxpose.xlu0.b32.cont [2/16] 0.0, 128
    %6604 = vxpose.xlu0.b32.cont [3/16] 0.0, 128
    %6605 = vxpose.xlu0.b32.cont [4/16] 0.0, 128
    %6606 = vxpose.xlu0.b32.cont [5/16] 0.0, 128
    %6607 = vxpose.xlu0.b32.cont [6/16] 0.0, 128
    %6608 = vxpose.xlu0.b32.cont [7/16] 0.0, 128
    %6609 = vxpose.xlu0.b32.cont [8/16] 0.0, 128
    %6610 = vxpose.xlu0.b32.cont [9/16] 0.0, 128
    %6611 = vxpose.xlu0.b32.cont [10/16] 0.0, 128
    %6612 = vxpose.xlu0.b32.cont [11/16] 0.0, 128
    %6613 = vxpose.xlu0.b32.cont [12/16] 0.0, 128
    %6614 = vxpose.xlu0.b32.cont [13/16] 0.0, 128
    %6615 = vxpose.xlu0.b32.cont [14/16] 0.0, 128
    %6616 = vxpose.xlu0.b32.cont [15/16] 0.0, 128
    %6617 = vxpose.xlu0.b32.end [16/16] 0.0, 128
    %v6618 = vpop.trf.xlu0
    %v6619 = vpop.trf.xlu0
    %v6620 = vpop.trf.xlu0
    %v6621 = vpop.trf.xlu0
    %v6622 = vpop.trf.xlu0
    %v6623 = vpop.trf.xlu0
    %v6624 = vpop.trf.xlu0
    %v6625 = vpop.trf.xlu0
    %v6626 = vpop.trf.xlu0
    %v6627 = vpop.trf.xlu0
    %v6628 = vpop.trf.xlu0
    %v6629 = vpop.trf.xlu0
    %v6630 = vpop.trf.xlu0
    %v6631 = vpop.trf.xlu0
    %v6632 = vpop.trf.xlu0
    %v6633 = vpop.trf.xlu0
    %v6634 = vcombine.low %v6522, %v6586
    %v6635 = vcombine.high %v6522, %v6586
    %v6637 = vunpack.c.l.s4 1983009808
    %v6638 = vunpack.c.0.s8 %v6637
    %v6639 = vlaneseq
    %v6640 = vshrl.u32 %v6639, 7
    %v6641 = vsub.s32 %v6638, %v6640
    %v6642 = vrot.slane %v6634, %v6641
    %v6644 = vunpack.c.l.s4 1983009808
    %v6645 = vunpack.c.0.s8 %v6644
    %v6646 = vlaneseq
    %v6647 = vshrl.u32 %v6646, 7
    %v6648 = vsub.s32 %v6645, %v6647
    %v6649 = vrot.slane %v6635, %v6648
    %v6650 = vcombine.low %v6554, %v6618
    %v6651 = vcombine.high %v6554, %v6618
    %v6653 = vunpack.c.l.s4 1983009808
    %v6654 = vunpack.c.0.s8 %v6653
    %v6655 = vlaneseq
    %v6656 = vshrl.u32 %v6655, 7
    %v6657 = vsub.s32 %v6654, %v6656
    %v6658 = vrot.slane %v6650, %v6657
    %v6660 = vunpack.c.l.s4 1983009808
    %v6661 = vunpack.c.0.s8 %v6660
    %v6662 = vlaneseq
    %v6663 = vshrl.u32 %v6662, 7
    %v6664 = vsub.s32 %v6661, %v6663
    %v6665 = vrot.slane %v6651, %v6664
    %v6666 = vcombine.low %v6642, %v6658
    %v6667 = vcombine.high %v6642, %v6658
    %v6669 = vunpack.c.l.s4 1934713408
    %v6670 = vunpack.c.0.s8 %v6669
    %v6671 = vlaneseq
    %v6672 = vshrl.u32 %v6671, 7
    %v6673 = vsub.s32 %v6670, %v6672
    %v6674 = vrot.slane %v6666, %v6673
    %v6676 = vunpack.c.l.s4 1934713408
    %v6677 = vunpack.c.0.s8 %v6676
    %v6678 = vlaneseq
    %v6679 = vshrl.u32 %v6678, 7
    %v6680 = vsub.s32 %v6677, %v6679
    %v6681 = vrot.slane %v6667, %v6680
    %v6682 = vcombine.low %v6649, %v6665
    %v6683 = vcombine.high %v6649, %v6665
    %v6685 = vunpack.c.l.s4 1934713408
    %v6686 = vunpack.c.0.s8 %v6685
    %v6687 = vlaneseq
    %v6688 = vshrl.u32 %v6687, 7
    %v6689 = vsub.s32 %v6686, %v6688
    %v6690 = vrot.slane %v6682, %v6689
    %v6692 = vunpack.c.l.s4 1934713408
    %v6693 = vunpack.c.0.s8 %v6692
    %v6694 = vlaneseq
    %v6695 = vshrl.u32 %v6694, 7
    %v6696 = vsub.s32 %v6693, %v6695
    %v6697 = vrot.slane %v6683, %v6696
    %v6698 = vcombine.high %v6674, 0.0
    %v6699 = vcombine.high %v6681, 0.0
    %v6700 = vcombine.high %v6690, 0.0
    %v6701 = vcombine.high %v6697, 0.0
    %v6703 = vsel %vm489, %v5343, 0
    %6705 = vmatprep.subr.mxu0 0.0
    %6706 = vmatpush1.msra.mxu0 %v135
    %6707 = vmatprep.subr.mxu0 0.0
    %6708 = vmatpush1.msra.mxu0 0.0
    %6709 = vmatprep.subr.mxu0 0.0
    %6710 = vmatpush1.msra.mxu0 0.0
    %6711 = vmatprep.subr.mxu0 0.0
    %6712 = vmatpush1.msra.mxu0 0.0
    %6713 = vmatprep.subr.mxu0 0.0
    %6714 = vmatpush1.msra.mxu0 0.0
    %6715 = vmatprep.subr.mxu0 0.0
    %6716 = vmatpush1.msra.mxu0 0.0
    %6717 = vmatprep.subr.mxu0 0.0
    %6718 = vmatpush1.msra.mxu0 0.0
    %6719 = vmatprep.subr.mxu0 0.0
    %6720 = vmatpush1.msra.mxu0 0.0
    %6721 = vmatprep.subr.mxu0 0.0
    %6722 = vmatpush1.msra.mxu0 0.0
    %6723 = vmatprep.subr.mxu0 0.0
    %6724 = vmatpush1.msra.mxu0 0.0
    %6725 = vmatprep.subr.mxu0 0.0
    %6726 = vmatpush1.msra.mxu0 0.0
    %6727 = vmatprep.subr.mxu0 0.0
    %6728 = vmatpush1.msra.mxu0 0.0
    %6729 = vmatprep.subr.mxu0 0.0
    %6730 = vmatpush1.msra.mxu0 0.0
    %6731 = vmatprep.subr.mxu0 0.0
    %6732 = vmatpush1.msra.mxu0 0.0
    %6733 = vmatprep.subr.mxu0 0.0
    %6734 = vmatpush1.msra.mxu0 0.0
    %6735 = vmatprep.subr.mxu0 0.0
    %6736 = vmatpush1.msra.mxu0 0.0
    %6737 = vmatprep.subr.mxu0 0.0
    %6738 = vmatpush1.msra.mxu0 0.0
    %6739 = vmatprep.subr.mxu0 0.0
    %6740 = vmatpush1.msra.mxu0 0.0
    %6741 = vmatprep.subr.mxu0 0.0
    %6742 = vmatpush1.msra.mxu0 0.0
    %6743 = vmatprep.subr.mxu0 0.0
    %6744 = vmatpush1.msra.mxu0 0.0
    %6745 = vmatprep.subr.mxu0 0.0
    %6746 = vmatpush1.msra.mxu0 0.0
    %6747 = vmatprep.subr.mxu0 0.0
    %6748 = vmatpush1.msra.mxu0 0.0
    %6749 = vmatprep.subr.mxu0 0.0
    %6750 = vmatpush1.msra.mxu0 0.0
    %6751 = vmatprep.subr.mxu0 0.0
    %6752 = vmatpush1.msra.mxu0 0.0
    %6753 = vmatprep.subr.mxu0 0.0
    %6754 = vmatpush1.msra.mxu0 0.0
    %6755 = vmatprep.subr.mxu0 0.0
    %6756 = vmatpush1.msra.mxu0 0.0
    %6757 = vmatprep.subr.mxu0 0.0
    %6758 = vmatpush1.msra.mxu0 0.0
    %6759 = vmatprep.subr.mxu0 0.0
    %6760 = vmatpush1.msra.mxu0 0.0
    %6761 = vmatprep.subr.mxu0 0.0
    %6762 = vmatpush1.msra.mxu0 0.0
    %6763 = vmatprep.subr.mxu0 0.0
    %6764 = vmatpush1.msra.mxu0 0.0
    %6765 = vmatprep.subr.mxu0 0.0
    %6766 = vmatpush1.msra.mxu0 0.0
    %6767 = vmatprep.subr.mxu0 0.0
    %6768 = vmatpush1.msra.mxu0 0.0
    %6769 = vmatprep.mubr.f32.mxu0 0.0
    %6770 = vmatmul.mubr.f32.gmra.mrb[0].mxu0 %v6703
    %v6771 = vpop.f32.mrb[0].mxu0
    %v6772 = vadd.f32 0.0, %v6771
    %v6773 = vpop.f32.mrb[0].mxu0
    %6774 = vdwg.mxu0
    %v6776 = vsel %vm489, %v5345, 0
    %6778 = vmatprep.subr.mxu0 0.0
    %6779 = vmatpush1.msra.mxu0 %v136
    %6780 = vmatprep.subr.mxu0 0.0
    %6781 = vmatpush1.msra.mxu0 0.0
    %6782 = vmatprep.subr.mxu0 0.0
    %6783 = vmatpush1.msra.mxu0 0.0
    %6784 = vmatprep.subr.mxu0 0.0
    %6785 = vmatpush1.msra.mxu0 0.0
    %6786 = vmatprep.subr.mxu0 0.0
    %6787 = vmatpush1.msra.mxu0 0.0
    %6788 = vmatprep.subr.mxu0 0.0
    %6789 = vmatpush1.msra.mxu0 0.0
    %6790 = vmatprep.subr.mxu0 0.0
    %6791 = vmatpush1.msra.mxu0 0.0
    %6792 = vmatprep.subr.mxu0 0.0
    %6793 = vmatpush1.msra.mxu0 0.0
    %6794 = vmatprep.subr.mxu0 0.0
    %6795 = vmatpush1.msra.mxu0 0.0
    %6796 = vmatprep.subr.mxu0 0.0
    %6797 = vmatpush1.msra.mxu0 0.0
    %6798 = vmatprep.subr.mxu0 0.0
    %6799 = vmatpush1.msra.mxu0 0.0
    %6800 = vmatprep.subr.mxu0 0.0
    %6801 = vmatpush1.msra.mxu0 0.0
    %6802 = vmatprep.subr.mxu0 0.0
    %6803 = vmatpush1.msra.mxu0 0.0
    %6804 = vmatprep.subr.mxu0 0.0
    %6805 = vmatpush1.msra.mxu0 0.0
    %6806 = vmatprep.subr.mxu0 0.0
    %6807 = vmatpush1.msra.mxu0 0.0
    %6808 = vmatprep.subr.mxu0 0.0
    %6809 = vmatpush1.msra.mxu0 0.0
    %6810 = vmatprep.subr.mxu0 0.0
    %6811 = vmatpush1.msra.mxu0 0.0
    %6812 = vmatprep.subr.mxu0 0.0
    %6813 = vmatpush1.msra.mxu0 0.0
    %6814 = vmatprep.subr.mxu0 0.0
    %6815 = vmatpush1.msra.mxu0 0.0
    %6816 = vmatprep.subr.mxu0 0.0
    %6817 = vmatpush1.msra.mxu0 0.0
    %6818 = vmatprep.subr.mxu0 0.0
    %6819 = vmatpush1.msra.mxu0 0.0
    %6820 = vmatprep.subr.mxu0 0.0
    %6821 = vmatpush1.msra.mxu0 0.0
    %6822 = vmatprep.subr.mxu0 0.0
    %6823 = vmatpush1.msra.mxu0 0.0
    %6824 = vmatprep.subr.mxu0 0.0
    %6825 = vmatpush1.msra.mxu0 0.0
    %6826 = vmatprep.subr.mxu0 0.0
    %6827 = vmatpush1.msra.mxu0 0.0
    %6828 = vmatprep.subr.mxu0 0.0
    %6829 = vmatpush1.msra.mxu0 0.0
    %6830 = vmatprep.subr.mxu0 0.0
    %6831 = vmatpush1.msra.mxu0 0.0
    %6832 = vmatprep.subr.mxu0 0.0
    %6833 = vmatpush1.msra.mxu0 0.0
    %6834 = vmatprep.subr.mxu0 0.0
    %6835 = vmatpush1.msra.mxu0 0.0
    %6836 = vmatprep.subr.mxu0 0.0
    %6837 = vmatpush1.msra.mxu0 0.0
    %6838 = vmatprep.subr.mxu0 0.0
    %6839 = vmatpush1.msra.mxu0 0.0
    %6840 = vmatprep.subr.mxu0 0.0
    %6841 = vmatpush1.msra.mxu0 0.0
    %6842 = vmatprep.mubr.f32.mxu0 0.0
    %6843 = vmatmul.mubr.f32.gmra.mrb[0].mxu0 %v6776
    %v6844 = vpop.f32.mrb[0].mxu0
    %v6845 = vadd.f32 0.0, %v6844
    %v6846 = vpop.f32.mrb[0].mxu0
    %6847 = vdwg.mxu0
    %v6849 = vsel %vm489, %v5347, 0
    %6851 = vmatprep.subr.mxu0 0.0
    %6852 = vmatpush1.msra.mxu0 %v137
    %6853 = vmatprep.subr.mxu0 0.0
    %6854 = vmatpush1.msra.mxu0 0.0
    %6855 = vmatprep.subr.mxu0 0.0
    %6856 = vmatpush1.msra.mxu0 0.0
    %6857 = vmatprep.subr.mxu0 0.0
    %6858 = vmatpush1.msra.mxu0 0.0
    %6859 = vmatprep.subr.mxu0 0.0
    %6860 = vmatpush1.msra.mxu0 0.0
    %6861 = vmatprep.subr.mxu0 0.0
    %6862 = vmatpush1.msra.mxu0 0.0
    %6863 = vmatprep.subr.mxu0 0.0
    %6864 = vmatpush1.msra.mxu0 0.0
    %6865 = vmatprep.subr.mxu0 0.0
    %6866 = vmatpush1.msra.mxu0 0.0
    %6867 = vmatprep.subr.mxu0 0.0
    %6868 = vmatpush1.msra.mxu0 0.0
    %6869 = vmatprep.subr.mxu0 0.0
    %6870 = vmatpush1.msra.mxu0 0.0
    %6871 = vmatprep.subr.mxu0 0.0
    %6872 = vmatpush1.msra.mxu0 0.0
    %6873 = vmatprep.subr.mxu0 0.0
    %6874 = vmatpush1.msra.mxu0 0.0
    %6875 = vmatprep.subr.mxu0 0.0
    %6876 = vmatpush1.msra.mxu0 0.0
    %6877 = vmatprep.subr.mxu0 0.0
    %6878 = vmatpush1.msra.mxu0 0.0
    %6879 = vmatprep.subr.mxu0 0.0
    %6880 = vmatpush1.msra.mxu0 0.0
    %6881 = vmatprep.subr.mxu0 0.0
    %6882 = vmatpush1.msra.mxu0 0.0
    %6883 = vmatprep.subr.mxu0 0.0
    %6884 = vmatpush1.msra.mxu0 0.0
    %6885 = vmatprep.subr.mxu0 0.0
    %6886 = vmatpush1.msra.mxu0 0.0
    %6887 = vmatprep.subr.mxu0 0.0
    %6888 = vmatpush1.msra.mxu0 0.0
    %6889 = vmatprep.subr.mxu0 0.0
    %6890 = vmatpush1.msra.mxu0 0.0
    %6891 = vmatprep.subr.mxu0 0.0
    %6892 = vmatpush1.msra.mxu0 0.0
    %6893 = vmatprep.subr.mxu0 0.0
    %6894 = vmatpush1.msra.mxu0 0.0
    %6895 = vmatprep.subr.mxu0 0.0
    %6896 = vmatpush1.msra.mxu0 0.0
    %6897 = vmatprep.subr.mxu0 0.0
    %6898 = vmatpush1.msra.mxu0 0.0
    %6899 = vmatprep.subr.mxu0 0.0
    %6900 = vmatpush1.msra.mxu0 0.0
    %6901 = vmatprep.subr.mxu0 0.0
    %6902 = vmatpush1.msra.mxu0 0.0
    %6903 = vmatprep.subr.mxu0 0.0
    %6904 = vmatpush1.msra.mxu0 0.0
    %6905 = vmatprep.subr.mxu0 0.0
    %6906 = vmatpush1.msra.mxu0 0.0
    %6907 = vmatprep.subr.mxu0 0.0
    %6908 = vmatpush1.msra.mxu0 0.0
    %6909 = vmatprep.subr.mxu0 0.0
    %6910 = vmatpush1.msra.mxu0 0.0
    %6911 = vmatprep.subr.mxu0 0.0
    %6912 = vmatpush1.msra.mxu0 0.0
    %6913 = vmatprep.subr.mxu0 0.0
    %6914 = vmatpush1.msra.mxu0 0.0
    %6915 = vmatprep.mubr.f32.mxu0 0.0
    %6916 = vmatmul.mubr.f32.gmra.mrb[0].mxu0 %v6849
    %v6917 = vpop.f32.mrb[0].mxu0
    %v6918 = vadd.f32 0.0, %v6917
    %v6919 = vpop.f32.mrb[0].mxu0
    %6920 = vdwg.mxu0
    %v6922 = vsel %vm489, %v5349, 0
    %6924 = vmatprep.subr.mxu0 0.0
    %6925 = vmatpush1.msra.mxu0 %v138
    %6926 = vmatprep.subr.mxu0 0.0
    %6927 = vmatpush1.msra.mxu0 0.0
    %6928 = vmatprep.subr.mxu0 0.0
    %6929 = vmatpush1.msra.mxu0 0.0
    %6930 = vmatprep.subr.mxu0 0.0
    %6931 = vmatpush1.msra.mxu0 0.0
    %6932 = vmatprep.subr.mxu0 0.0
    %6933 = vmatpush1.msra.mxu0 0.0
    %6934 = vmatprep.subr.mxu0 0.0
    %6935 = vmatpush1.msra.mxu0 0.0
    %6936 = vmatprep.subr.mxu0 0.0
    %6937 = vmatpush1.msra.mxu0 0.0
    %6938 = vmatprep.subr.mxu0 0.0
    %6939 = vmatpush1.msra.mxu0 0.0
    %6940 = vmatprep.subr.mxu0 0.0
    %6941 = vmatpush1.msra.mxu0 0.0
    %6942 = vmatprep.subr.mxu0 0.0
    %6943 = vmatpush1.msra.mxu0 0.0
    %6944 = vmatprep.subr.mxu0 0.0
    %6945 = vmatpush1.msra.mxu0 0.0
    %6946 = vmatprep.subr.mxu0 0.0
    %6947 = vmatpush1.msra.mxu0 0.0
    %6948 = vmatprep.subr.mxu0 0.0
    %6949 = vmatpush1.msra.mxu0 0.0
    %6950 = vmatprep.subr.mxu0 0.0
    %6951 = vmatpush1.msra.mxu0 0.0
    %6952 = vmatprep.subr.mxu0 0.0
    %6953 = vmatpush1.msra.mxu0 0.0
    %6954 = vmatprep.subr.mxu0 0.0
    %6955 = vmatpush1.msra.mxu0 0.0
    %6956 = vmatprep.subr.mxu0 0.0
    %6957 = vmatpush1.msra.mxu0 0.0
    %6958 = vmatprep.subr.mxu0 0.0
    %6959 = vmatpush1.msra.mxu0 0.0
    %6960 = vmatprep.subr.mxu0 0.0
    %6961 = vmatpush1.msra.mxu0 0.0
    %6962 = vmatprep.subr.mxu0 0.0
    %6963 = vmatpush1.msra.mxu0 0.0
    %6964 = vmatprep.subr.mxu0 0.0
    %6965 = vmatpush1.msra.mxu0 0.0
    %6966 = vmatprep.subr.mxu0 0.0
    %6967 = vmatpush1.msra.mxu0 0.0
    %6968 = vmatprep.subr.mxu0 0.0
    %6969 = vmatpush1.msra.mxu0 0.0
    %6970 = vmatprep.subr.mxu0 0.0
    %6971 = vmatpush1.msra.mxu0 0.0
    %6972 = vmatprep.subr.mxu0 0.0
    %6973 = vmatpush1.msra.mxu0 0.0
    %6974 = vmatprep.subr.mxu0 0.0
    %6975 = vmatpush1.msra.mxu0 0.0
    %6976 = vmatprep.subr.mxu0 0.0
    %6977 = vmatpush1.msra.mxu0 0.0
    %6978 = vmatprep.subr.mxu0 0.0
    %6979 = vmatpush1.msra.mxu0 0.0
    %6980 = vmatprep.subr.mxu0 0.0
    %6981 = vmatpush1.msra.mxu0 0.0
    %6982 = vmatprep.subr.mxu0 0.0
    %6983 = vmatpush1.msra.mxu0 0.0
    %6984 = vmatprep.subr.mxu0 0.0
    %6985 = vmatpush1.msra.mxu0 0.0
    %6986 = vmatprep.subr.mxu0 0.0
    %6987 = vmatpush1.msra.mxu0 0.0
    %6988 = vmatprep.mubr.f32.mxu0 0.0
    %6989 = vmatmul.mubr.f32.gmra.mrb[0].mxu0 %v6922
    %v6990 = vpop.f32.mrb[0].mxu0
    %v6991 = vadd.f32 0.0, %v6990
    %v6992 = vpop.f32.mrb[0].mxu0
    %6993 = vdwg.mxu0
    %v6995 = vsel %vm489, %v5351, 0
    %6997 = vmatprep.subr.mxu0 0.0
    %6998 = vmatpush1.msra.mxu0 %v139
    %6999 = vmatprep.subr.mxu0 0.0
    %7000 = vmatpush1.msra.mxu0 0.0
    %7001 = vmatprep.subr.mxu0 0.0
    %7002 = vmatpush1.msra.mxu0 0.0
    %7003 = vmatprep.subr.mxu0 0.0
    %7004 = vmatpush1.msra.mxu0 0.0
    %7005 = vmatprep.subr.mxu0 0.0
    %7006 = vmatpush1.msra.mxu0 0.0
    %7007 = vmatprep.subr.mxu0 0.0
    %7008 = vmatpush1.msra.mxu0 0.0
    %7009 = vmatprep.subr.mxu0 0.0
    %7010 = vmatpush1.msra.mxu0 0.0
    %7011 = vmatprep.subr.mxu0 0.0
    %7012 = vmatpush1.msra.mxu0 0.0
    %7013 = vmatprep.subr.mxu0 0.0
    %7014 = vmatpush1.msra.mxu0 0.0
    %7015 = vmatprep.subr.mxu0 0.0
    %7016 = vmatpush1.msra.mxu0 0.0
    %7017 = vmatprep.subr.mxu0 0.0
    %7018 = vmatpush1.msra.mxu0 0.0
    %7019 = vmatprep.subr.mxu0 0.0
    %7020 = vmatpush1.msra.mxu0 0.0
    %7021 = vmatprep.subr.mxu0 0.0
    %7022 = vmatpush1.msra.mxu0 0.0
    %7023 = vmatprep.subr.mxu0 0.0
    %7024 = vmatpush1.msra.mxu0 0.0
    %7025 = vmatprep.subr.mxu0 0.0
    %7026 = vmatpush1.msra.mxu0 0.0
    %7027 = vmatprep.subr.mxu0 0.0
    %7028 = vmatpush1.msra.mxu0 0.0
    %7029 = vmatprep.subr.mxu0 0.0
    %7030 = vmatpush1.msra.mxu0 0.0
    %7031 = vmatprep.subr.mxu0 0.0
    %7032 = vmatpush1.msra.mxu0 0.0
    %7033 = vmatprep.subr.mxu0 0.0
    %7034 = vmatpush1.msra.mxu0 0.0
    %7035 = vmatprep.subr.mxu0 0.0
    %7036 = vmatpush1.msra.mxu0 0.0
    %7037 = vmatprep.subr.mxu0 0.0
    %7038 = vmatpush1.msra.mxu0 0.0
    %7039 = vmatprep.subr.mxu0 0.0
    %7040 = vmatpush1.msra.mxu0 0.0
    %7041 = vmatprep.subr.mxu0 0.0
    %7042 = vmatpush1.msra.mxu0 0.0
    %7043 = vmatprep.subr.mxu0 0.0
    %7044 = vmatpush1.msra.mxu0 0.0
    %7045 = vmatprep.subr.mxu0 0.0
    %7046 = vmatpush1.msra.mxu0 0.0
    %7047 = vmatprep.subr.mxu0 0.0
    %7048 = vmatpush1.msra.mxu0 0.0
    %7049 = vmatprep.subr.mxu0 0.0
    %7050 = vmatpush1.msra.mxu0 0.0
    %7051 = vmatprep.subr.mxu0 0.0
    %7052 = vmatpush1.msra.mxu0 0.0
    %7053 = vmatprep.subr.mxu0 0.0
    %7054 = vmatpush1.msra.mxu0 0.0
    %7055 = vmatprep.subr.mxu0 0.0
    %7056 = vmatpush1.msra.mxu0 0.0
    %7057 = vmatprep.subr.mxu0 0.0
    %7058 = vmatpush1.msra.mxu0 0.0
    %7059 = vmatprep.subr.mxu0 0.0
    %7060 = vmatpush1.msra.mxu0 0.0
    %7061 = vmatprep.mubr.f32.mxu0 0.0
    %7062 = vmatmul.mubr.f32.gmra.mrb[0].mxu0 %v6995
    %v7063 = vpop.f32.mrb[0].mxu0
    %v7064 = vadd.f32 0.0, %v7063
    %v7065 = vpop.f32.mrb[0].mxu0
    %7066 = vdwg.mxu0
    %v7068 = vsel %vm489, %v5353, 0
    %7070 = vmatprep.subr.mxu0 0.0
    %7071 = vmatpush1.msra.mxu0 %v140
    %7072 = vmatprep.subr.mxu0 0.0
    %7073 = vmatpush1.msra.mxu0 0.0
    %7074 = vmatprep.subr.mxu0 0.0
    %7075 = vmatpush1.msra.mxu0 0.0
    %7076 = vmatprep.subr.mxu0 0.0
    %7077 = vmatpush1.msra.mxu0 0.0
    %7078 = vmatprep.subr.mxu0 0.0
    %7079 = vmatpush1.msra.mxu0 0.0
    %7080 = vmatprep.subr.mxu0 0.0
    %7081 = vmatpush1.msra.mxu0 0.0
    %7082 = vmatprep.subr.mxu0 0.0
    %7083 = vmatpush1.msra.mxu0 0.0
    %7084 = vmatprep.subr.mxu0 0.0
    %7085 = vmatpush1.msra.mxu0 0.0
    %7086 = vmatprep.subr.mxu0 0.0
    %7087 = vmatpush1.msra.mxu0 0.0
    %7088 = vmatprep.subr.mxu0 0.0
    %7089 = vmatpush1.msra.mxu0 0.0
    %7090 = vmatprep.subr.mxu0 0.0
    %7091 = vmatpush1.msra.mxu0 0.0
    %7092 = vmatprep.subr.mxu0 0.0
    %7093 = vmatpush1.msra.mxu0 0.0
    %7094 = vmatprep.subr.mxu0 0.0
    %7095 = vmatpush1.msra.mxu0 0.0
    %7096 = vmatprep.subr.mxu0 0.0
    %7097 = vmatpush1.msra.mxu0 0.0
    %7098 = vmatprep.subr.mxu0 0.0
    %7099 = vmatpush1.msra.mxu0 0.0
    %7100 = vmatprep.subr.mxu0 0.0
    %7101 = vmatpush1.msra.mxu0 0.0
    %7102 = vmatprep.subr.mxu0 0.0
    %7103 = vmatpush1.msra.mxu0 0.0
    %7104 = vmatprep.subr.mxu0 0.0
    %7105 = vmatpush1.msra.mxu0 0.0
    %7106 = vmatprep.subr.mxu0 0.0
    %7107 = vmatpush1.msra.mxu0 0.0
    %7108 = vmatprep.subr.mxu0 0.0
    %7109 = vmatpush1.msra.mxu0 0.0
    %7110 = vmatprep.subr.mxu0 0.0
    %7111 = vmatpush1.msra.mxu0 0.0
    %7112 = vmatprep.subr.mxu0 0.0
    %7113 = vmatpush1.msra.mxu0 0.0
    %7114 = vmatprep.subr.mxu0 0.0
    %7115 = vmatpush1.msra.mxu0 0.0
    %7116 = vmatprep.subr.mxu0 0.0
    %7117 = vmatpush1.msra.mxu0 0.0
    %7118 = vmatprep.subr.mxu0 0.0
    %7119 = vmatpush1.msra.mxu0 0.0
    %7120 = vmatprep.subr.mxu0 0.0
    %7121 = vmatpush1.msra.mxu0 0.0
    %7122 = vmatprep.subr.mxu0 0.0
    %7123 = vmatpush1.msra.mxu0 0.0
    %7124 = vmatprep.subr.mxu0 0.0
    %7125 = vmatpush1.msra.mxu0 0.0
    %7126 = vmatprep.subr.mxu0 0.0
    %7127 = vmatpush1.msra.mxu0 0.0
    %7128 = vmatprep.subr.mxu0 0.0
    %7129 = vmatpush1.msra.mxu0 0.0
    %7130 = vmatprep.subr.mxu0 0.0
    %7131 = vmatpush1.msra.mxu0 0.0
    %7132 = vmatprep.subr.mxu0 0.0
    %7133 = vmatpush1.msra.mxu0 0.0
    %7134 = vmatprep.mubr.f32.mxu0 0.0
    %7135 = vmatmul.mubr.f32.gmra.mrb[0].mxu0 %v7068
    %v7136 = vpop.f32.mrb[0].mxu0
    %v7137 = vadd.f32 0.0, %v7136
    %v7138 = vpop.f32.mrb[0].mxu0
    %7139 = vdwg.mxu0
    %v7141 = vsel %vm489, %v5355, 0
    %7143 = vmatprep.subr.mxu0 0.0
    %7144 = vmatpush1.msra.mxu0 %v141
    %7145 = vmatprep.subr.mxu0 0.0
    %7146 = vmatpush1.msra.mxu0 0.0
    %7147 = vmatprep.subr.mxu0 0.0
    %7148 = vmatpush1.msra.mxu0 0.0
    %7149 = vmatprep.subr.mxu0 0.0
    %7150 = vmatpush1.msra.mxu0 0.0
    %7151 = vmatprep.subr.mxu0 0.0
    %7152 = vmatpush1.msra.mxu0 0.0
    %7153 = vmatprep.subr.mxu0 0.0
    %7154 = vmatpush1.msra.mxu0 0.0
    %7155 = vmatprep.subr.mxu0 0.0
    %7156 = vmatpush1.msra.mxu0 0.0
    %7157 = vmatprep.subr.mxu0 0.0
    %7158 = vmatpush1.msra.mxu0 0.0
    %7159 = vmatprep.subr.mxu0 0.0
    %7160 = vmatpush1.msra.mxu0 0.0
    %7161 = vmatprep.subr.mxu0 0.0
    %7162 = vmatpush1.msra.mxu0 0.0
    %7163 = vmatprep.subr.mxu0 0.0
    %7164 = vmatpush1.msra.mxu0 0.0
    %7165 = vmatprep.subr.mxu0 0.0
    %7166 = vmatpush1.msra.mxu0 0.0
    %7167 = vmatprep.subr.mxu0 0.0
    %7168 = vmatpush1.msra.mxu0 0.0
    %7169 = vmatprep.subr.mxu0 0.0
    %7170 = vmatpush1.msra.mxu0 0.0
    %7171 = vmatprep.subr.mxu0 0.0
    %7172 = vmatpush1.msra.mxu0 0.0
    %7173 = vmatprep.subr.mxu0 0.0
    %7174 = vmatpush1.msra.mxu0 0.0
    %7175 = vmatprep.subr.mxu0 0.0
    %7176 = vmatpush1.msra.mxu0 0.0
    %7177 = vmatprep.subr.mxu0 0.0
    %7178 = vmatpush1.msra.mxu0 0.0
    %7179 = vmatprep.subr.mxu0 0.0
    %7180 = vmatpush1.msra.mxu0 0.0
    %7181 = vmatprep.subr.mxu0 0.0
    %7182 = vmatpush1.msra.mxu0 0.0
    %7183 = vmatprep.subr.mxu0 0.0
    %7184 = vmatpush1.msra.mxu0 0.0
    %7185 = vmatprep.subr.mxu0 0.0
    %7186 = vmatpush1.msra.mxu0 0.0
    %7187 = vmatprep.subr.mxu0 0.0
    %7188 = vmatpush1.msra.mxu0 0.0
    %7189 = vmatprep.subr.mxu0 0.0
    %7190 = vmatpush1.msra.mxu0 0.0
    %7191 = vmatprep.subr.mxu0 0.0
    %7192 = vmatpush1.msra.mxu0 0.0
    %7193 = vmatprep.subr.mxu0 0.0
    %7194 = vmatpush1.msra.mxu0 0.0
    %7195 = vmatprep.subr.mxu0 0.0
    %7196 = vmatpush1.msra.mxu0 0.0
    %7197 = vmatprep.subr.mxu0 0.0
    %7198 = vmatpush1.msra.mxu0 0.0
    %7199 = vmatprep.subr.mxu0 0.0
    %7200 = vmatpush1.msra.mxu0 0.0
    %7201 = vmatprep.subr.mxu0 0.0
    %7202 = vmatpush1.msra.mxu0 0.0
    %7203 = vmatprep.subr.mxu0 0.0
    %7204 = vmatpush1.msra.mxu0 0.0
    %7205 = vmatprep.subr.mxu0 0.0
    %7206 = vmatpush1.msra.mxu0 0.0
    %7207 = vmatprep.mubr.f32.mxu0 0.0
    %7208 = vmatmul.mubr.f32.gmra.mrb[0].mxu0 %v7141
    %v7209 = vpop.f32.mrb[0].mxu0
    %v7210 = vadd.f32 0.0, %v7209
    %v7211 = vpop.f32.mrb[0].mxu0
    %7212 = vdwg.mxu0
    %v7214 = vsel %vm489, %v5357, 0
    %7216 = vmatprep.subr.mxu0 0.0
    %7217 = vmatpush1.msra.mxu0 %v142
    %7218 = vmatprep.subr.mxu0 0.0
    %7219 = vmatpush1.msra.mxu0 0.0
    %7220 = vmatprep.subr.mxu0 0.0
    %7221 = vmatpush1.msra.mxu0 0.0
    %7222 = vmatprep.subr.mxu0 0.0
    %7223 = vmatpush1.msra.mxu0 0.0
    %7224 = vmatprep.subr.mxu0 0.0
    %7225 = vmatpush1.msra.mxu0 0.0
    %7226 = vmatprep.subr.mxu0 0.0
    %7227 = vmatpush1.msra.mxu0 0.0
    %7228 = vmatprep.subr.mxu0 0.0
    %7229 = vmatpush1.msra.mxu0 0.0
    %7230 = vmatprep.subr.mxu0 0.0
    %7231 = vmatpush1.msra.mxu0 0.0
    %7232 = vmatprep.subr.mxu0 0.0
    %7233 = vmatpush1.msra.mxu0 0.0
    %7234 = vmatprep.subr.mxu0 0.0
    %7235 = vmatpush1.msra.mxu0 0.0
    %7236 = vmatprep.subr.mxu0 0.0
    %7237 = vmatpush1.msra.mxu0 0.0
    %7238 = vmatprep.subr.mxu0 0.0
    %7239 = vmatpush1.msra.mxu0 0.0
    %7240 = vmatprep.subr.mxu0 0.0
    %7241 = vmatpush1.msra.mxu0 0.0
    %7242 = vmatprep.subr.mxu0 0.0
    %7243 = vmatpush1.msra.mxu0 0.0
    %7244 = vmatprep.subr.mxu0 0.0
    %7245 = vmatpush1.msra.mxu0 0.0
    %7246 = vmatprep.subr.mxu0 0.0
    %7247 = vmatpush1.msra.mxu0 0.0
    %7248 = vmatprep.subr.mxu0 0.0
    %7249 = vmatpush1.msra.mxu0 0.0
    %7250 = vmatprep.subr.mxu0 0.0
    %7251 = vmatpush1.msra.mxu0 0.0
    %7252 = vmatprep.subr.mxu0 0.0
    %7253 = vmatpush1.msra.mxu0 0.0
    %7254 = vmatprep.subr.mxu0 0.0
    %7255 = vmatpush1.msra.mxu0 0.0
    %7256 = vmatprep.subr.mxu0 0.0
    %7257 = vmatpush1.msra.mxu0 0.0
    %7258 = vmatprep.subr.mxu0 0.0
    %7259 = vmatpush1.msra.mxu0 0.0
    %7260 = vmatprep.subr.mxu0 0.0
    %7261 = vmatpush1.msra.mxu0 0.0
    %7262 = vmatprep.subr.mxu0 0.0
    %7263 = vmatpush1.msra.mxu0 0.0
    %7264 = vmatprep.subr.mxu0 0.0
    %7265 = vmatpush1.msra.mxu0 0.0
    %7266 = vmatprep.subr.mxu0 0.0
    %7267 = vmatpush1.msra.mxu0 0.0
    %7268 = vmatprep.subr.mxu0 0.0
    %7269 = vmatpush1.msra.mxu0 0.0
    %7270 = vmatprep.subr.mxu0 0.0
    %7271 = vmatpush1.msra.mxu0 0.0
    %7272 = vmatprep.subr.mxu0 0.0
    %7273 = vmatpush1.msra.mxu0 0.0
    %7274 = vmatprep.subr.mxu0 0.0
    %7275 = vmatpush1.msra.mxu0 0.0
    %7276 = vmatprep.subr.mxu0 0.0
    %7277 = vmatpush1.msra.mxu0 0.0
    %7278 = vmatprep.subr.mxu0 0.0
    %7279 = vmatpush1.msra.mxu0 0.0
    %7280 = vmatprep.mubr.f32.mxu0 0.0
    %7281 = vmatmul.mubr.f32.gmra.mrb[0].mxu0 %v7214
    %v7282 = vpop.f32.mrb[0].mxu0
    %v7283 = vadd.f32 0.0, %v7282
    %v7284 = vpop.f32.mrb[0].mxu0
    %7285 = vdwg.mxu0
    %v7286 = vadd.f32 %v6674, %v6772
    %v7287 = vadd.f32 %v6698, %v6845
    %v7288 = vadd.f32 %v6681, %v6918
    %v7289 = vadd.f32 %v6699, %v6991
    %v7290 = vadd.f32 %v6690, %v7064
    %v7291 = vadd.f32 %v6700, %v7137
    %v7292 = vadd.f32 %v6697, %v7210
    %v7293 = vadd.f32 %v6701, %v7283
    %v7294 = vcombine.low %v7286, %v7288
    %v7296 = vunpack.c.l.s4 1983009808
    %v7297 = vunpack.c.0.s8 %v7296
    %v7298 = vlaneseq
    %v7299 = vshrl.u32 %v7298, 7
    %v7300 = vsub.s32 %v7297, %v7299
    %v7301 = vrot.slane %v7294, %v7300
    %v7302 = vcombine.low %v7287, %v7289
    %v7304 = vunpack.c.l.s4 1983009808
    %v7305 = vunpack.c.0.s8 %v7304
    %v7306 = vlaneseq
    %v7307 = vshrl.u32 %v7306, 7
    %v7308 = vsub.s32 %v7305, %v7307
    %v7309 = vrot.slane %v7302, %v7308
    %v7310 = vcombine.low %v7290, %v7292
    %v7312 = vunpack.c.l.s4 1983009808
    %v7313 = vunpack.c.0.s8 %v7312
    %v7314 = vlaneseq
    %v7315 = vshrl.u32 %v7314, 7
    %v7316 = vsub.s32 %v7313, %v7315
    %v7317 = vrot.slane %v7310, %v7316
    %v7318 = vcombine.low %v7291, %v7293
    %v7320 = vunpack.c.l.s4 1983009808
    %v7321 = vunpack.c.0.s8 %v7320
    %v7322 = vlaneseq
    %v7323 = vshrl.u32 %v7322, 7
    %v7324 = vsub.s32 %v7321, %v7323
    %v7325 = vrot.slane %v7318, %v7324
    %v7326 = vcombine.low %v7301, %v7309
    %v7327 = vcombine.high %v7301, %v7309
    %v7329 = vunpack.c.l.s4 1934713408
    %v7330 = vunpack.c.0.s8 %v7329
    %v7331 = vlaneseq
    %v7332 = vshrl.u32 %v7331, 7
    %v7333 = vsub.s32 %v7330, %v7332
    %v7334 = vrot.slane %v7326, %v7333
    %v7336 = vunpack.c.l.s4 1934713408
    %v7337 = vunpack.c.0.s8 %v7336
    %v7338 = vlaneseq
    %v7339 = vshrl.u32 %v7338, 7
    %v7340 = vsub.s32 %v7337, %v7339
    %v7341 = vrot.slane %v7327, %v7340
    %v7342 = vcombine.low %v7317, %v7325
    %v7343 = vcombine.high %v7317, %v7325
    %v7345 = vunpack.c.l.s4 1934713408
    %v7346 = vunpack.c.0.s8 %v7345
    %v7347 = vlaneseq
    %v7348 = vshrl.u32 %v7347, 7
    %v7349 = vsub.s32 %v7346, %v7348
    %v7350 = vrot.slane %v7342, %v7349
    %v7352 = vunpack.c.l.s4 1934713408
    %v7353 = vunpack.c.0.s8 %v7352
    %v7354 = vlaneseq
    %v7355 = vshrl.u32 %v7354, 7
    %v7356 = vsub.s32 %v7353, %v7355
    %v7357 = vrot.slane %v7343, %v7356
    %v7358 = vcombine.low %v7334, %v7350
    %v7359 = vcombine.high %v7334, %v7350
    %v7360 = vcombine.low %v7341, %v7357
    %v7361 = vcombine.high %v7341, %v7357
    %7363 = vrot.lane.b32.xlu0 %v7359, 8
    %v7364 = vpop.permute.xlu0 %7363
    %7367 = vrot.lane.b32.xlu0 %v7360, 16
    %v7368 = vpop.permute.xlu0 %7367
    %7371 = vrot.lane.b32.xlu0 %v7361, 24
    %v7372 = vpop.permute.xlu0 %7371
    %v7374 = vsel %vm489, %v7358, %v7364
    %v7375 = vsel %vm3785, %v7374, %v7368
    %v7376 = vsel %vm3787, %v7375, %v7372
    %v7377 = vcombine.low %v5343, %v5347
    %v7379 = vunpack.c.l.s4 1983009808
    %v7380 = vunpack.c.0.s8 %v7379
    %v7381 = vlaneseq
    %v7382 = vshrl.u32 %v7381, 7
    %v7383 = vsub.s32 %v7380, %v7382
    %v7384 = vrot.slane %v7377, %v7383
    %v7385 = vcombine.low %v5345, %v5349
    %v7387 = vunpack.c.l.s4 1983009808
    %v7388 = vunpack.c.0.s8 %v7387
    %v7389 = vlaneseq
    %v7390 = vshrl.u32 %v7389, 7
    %v7391 = vsub.s32 %v7388, %v7390
    %v7392 = vrot.slane %v7385, %v7391
    %v7393 = vcombine.low %v5351, %v5355
    %v7395 = vunpack.c.l.s4 1983009808
    %v7396 = vunpack.c.0.s8 %v7395
    %v7397 = vlaneseq
    %v7398 = vshrl.u32 %v7397, 7
    %v7399 = vsub.s32 %v7396, %v7398
    %v7400 = vrot.slane %v7393, %v7399
    %v7401 = vcombine.low %v5353, %v5357
    %v7403 = vunpack.c.l.s4 1983009808
    %v7404 = vunpack.c.0.s8 %v7403
    %v7405 = vlaneseq
    %v7406 = vshrl.u32 %v7405, 7
    %v7407 = vsub.s32 %v7404, %v7406
    %v7408 = vrot.slane %v7401, %v7407
    %v7409 = vcombine.low %v7384, %v7392
    %v7410 = vcombine.high %v7384, %v7392
    %v7412 = vunpack.c.l.s4 1934713408
    %v7413 = vunpack.c.0.s8 %v7412
    %v7414 = vlaneseq
    %v7415 = vshrl.u32 %v7414, 7
    %v7416 = vsub.s32 %v7413, %v7415
    %v7417 = vrot.slane %v7409, %v7416
    %v7419 = vunpack.c.l.s4 1934713408
    %v7420 = vunpack.c.0.s8 %v7419
    %v7421 = vlaneseq
    %v7422 = vshrl.u32 %v7421, 7
    %v7423 = vsub.s32 %v7420, %v7422
    %v7424 = vrot.slane %v7410, %v7423
    %v7425 = vcombine.low %v7400, %v7408
    %v7426 = vcombine.high %v7400, %v7408
    %v7428 = vunpack.c.l.s4 1934713408
    %v7429 = vunpack.c.0.s8 %v7428
    %v7430 = vlaneseq
    %v7431 = vshrl.u32 %v7430, 7
    %v7432 = vsub.s32 %v7429, %v7431
    %v7433 = vrot.slane %v7425, %v7432
    %v7435 = vunpack.c.l.s4 1934713408
    %v7436 = vunpack.c.0.s8 %v7435
    %v7437 = vlaneseq
    %v7438 = vshrl.u32 %v7437, 7
    %v7439 = vsub.s32 %v7436, %v7438
    %v7440 = vrot.slane %v7426, %v7439
    %v7441 = vcombine.low %v7417, %v7433
    %v7442 = vcombine.high %v7417, %v7433
    %v7443 = vcombine.low %v7424, %v7440
    %v7444 = vcombine.high %v7424, %v7440
    %7446 = vrot.lane.b32.xlu0 %v7442, 8
    %v7447 = vpop.permute.xlu0 %7446
    %7450 = vrot.lane.b32.xlu0 %v7443, 16
    %v7451 = vpop.permute.xlu0 %7450
    %7454 = vrot.lane.b32.xlu0 %v7444, 24
    %v7455 = vpop.permute.xlu0 %7454
    %v7457 = vsel %vm489, %v7441, %v7447
    %v7458 = vsel %vm3785, %v7457, %v7451
    %v7459 = vsel %vm3787, %v7458, %v7455
    %7460 = vst.msk [vmem:[#allocation12] sm:$0xff] %vm145, %v3871
    %7461 = vst.msk [vmem:[#allocation12 + $0x8] sm:$0xff] %vm145, %v7459
    %v7462 = vld [vmem:[#allocation8] sm:$0xff]
    %v7463 = vld [vmem:[#allocation8 + $0x8] sm:$0xff]
    %v7464 = vld [vmem:[#allocation8 + $0x10] sm:$0xff]
    %v7465 = vld [vmem:[#allocation8 + $0x18] sm:$0xff]
    %v7466 = vld [vmem:[%s7] sm:$0x1]
    %v7468 = vlaneseq
    %v7469 = vshrl.u32 %v7468, 7
    %v7470 = vsub.s32 0, %v7469
    %v7471 = vrot.slane %v7466, %v7470
    %v7474 = vsel %vm145, %v3788, 0
    %v7477 = vsel %vm145, %v7376, 0
    %7479 = vmatprep.subr.mxu0 0.0
    %7480 = vmatpush1.msra.mxu0 %v7462
    %7481 = vmatprep.subr.mxu0 0.0
    %7482 = vmatpush1.msra.mxu0 %v7463
    %7483 = vmatprep.subr.mxu0 0.0
    %7484 = vmatpush1.msra.mxu0 %v7464
    %7485 = vmatprep.subr.mxu0 0.0
    %7486 = vmatpush1.msra.mxu0 %v7465
    %7487 = vmatprep.subr.mxu0 0.0
    %7488 = vmatpush1.msra.mxu0 0.0
    %7489 = vmatprep.subr.mxu0 0.0
    %7490 = vmatpush1.msra.mxu0 0.0
    %7491 = vmatprep.subr.mxu0 0.0
    %7492 = vmatpush1.msra.mxu0 0.0
    %7493 = vmatprep.subr.mxu0 0.0
    %7494 = vmatpush1.msra.mxu0 0.0
    %7495 = vmatprep.subr.mxu0 0.0
    %7496 = vmatpush1.msra.mxu0 0.0
    %7497 = vmatprep.subr.mxu0 0.0
    %7498 = vmatpush1.msra.mxu0 0.0
    %7499 = vmatprep.subr.mxu0 0.0
    %7500 = vmatpush1.msra.mxu0 0.0
    %7501 = vmatprep.subr.mxu0 0.0
    %7502 = vmatpush1.msra.mxu0 0.0
    %7503 = vmatprep.subr.mxu0 0.0
    %7504 = vmatpush1.msra.mxu0 0.0
    %7505 = vmatprep.subr.mxu0 0.0
    %7506 = vmatpush1.msra.mxu0 0.0
    %7507 = vmatprep.subr.mxu0 0.0
    %7508 = vmatpush1.msra.mxu0 0.0
    %7509 = vmatprep.subr.mxu0 0.0
    %7510 = vmatpush1.msra.mxu0 0.0
    %7511 = vmatprep.subr.mxu0 0.0
    %7512 = vmatpush1.msra.mxu0 0.0
    %7513 = vmatprep.subr.mxu0 0.0
    %7514 = vmatpush1.msra.mxu0 0.0
    %7515 = vmatprep.subr.mxu0 0.0
    %7516 = vmatpush1.msra.mxu0 0.0
    %7517 = vmatprep.subr.mxu0 0.0
    %7518 = vmatpush1.msra.mxu0 0.0
    %7519 = vmatprep.subr.mxu0 0.0
    %7520 = vmatpush1.msra.mxu0 0.0
    %7521 = vmatprep.subr.mxu0 0.0
    %7522 = vmatpush1.msra.mxu0 0.0
    %7523 = vmatprep.subr.mxu0 0.0
    %7524 = vmatpush1.msra.mxu0 0.0
    %7525 = vmatprep.subr.mxu0 0.0
    %7526 = vmatpush1.msra.mxu0 0.0
    %7527 = vmatprep.subr.mxu0 0.0
    %7528 = vmatpush1.msra.mxu0 0.0
    %7529 = vmatprep.subr.mxu0 0.0
    %7530 = vmatpush1.msra.mxu0 0.0
    %7531 = vmatprep.subr.mxu0 0.0
    %7532 = vmatpush1.msra.mxu0 0.0
    %7533 = vmatprep.subr.mxu0 0.0
    %7534 = vmatpush1.msra.mxu0 0.0
    %7535 = vmatprep.subr.mxu0 0.0
    %7536 = vmatpush1.msra.mxu0 0.0
    %7537 = vmatprep.subr.mxu0 0.0
    %7538 = vmatpush1.msra.mxu0 0.0
    %7539 = vmatprep.subr.mxu0 0.0
    %7540 = vmatpush1.msra.mxu0 0.0
    %7541 = vmatprep.subr.mxu0 0.0
    %7542 = vmatpush1.msra.mxu0 0.0
    %7543 = vmatprep.mubr.f32.mxu0 0.0
    %7544 = vmatmul.mubr.f32.gmra.mrb[0].mxu0 %v7474
    %v7545 = vpop.f32.mrb[0].mxu0
    %v7546 = vadd.f32 %v7471, %v7545
    %v7547 = vpop.f32.mrb[0].mxu0
    %7548 = vmatprep.mubr.f32.mxu0 0.0
    %7549 = vmatmul.mubr.f32.gmra.mrb[0].mxu0 %v7477
    %v7550 = vpop.f32.mrb[0].mxu0
    %v7551 = vadd.f32 %v7471, %v7550
    %v7552 = vpop.f32.mrb[0].mxu0
    %7553 = vdwg.mxu0
    %v7554 = vadd.f32 %v125, %v7546
    %v7555 = vadd.f32 %v126, %v7551
    %v7556 = vld [vmem:[%s10] sm:$0x1]
    %v7557 = vld [vmem:[%s11] sm:$0x1]
    %v7558 = vsel %vm145, %v7554, 0.0
    %7559 = vadd.xlane.f32.xlu0 %v7558
    %v7560 = vpop.xlane.xlu0 %7559
    %v7561 = vsel %vm145, %v7555, 0.0
    %7562 = vadd.xlane.f32.xlu0 %v7561
    %v7563 = vpop.xlane.xlu0 %7562
    %v7564 = vmul.f32 %v7560, %v152
    %v7565 = vmul.f32 %v7563, %v152
    %v7566 = vsub.f32 %v7554, %v7564
    %v7567 = vsub.f32 %v7555, %v7565
    %v7568 = vmul.f32 %v7566, %v7566
    %v7569 = vmul.f32 %v7567, %v7567
    %v7570 = vsel %vm145, %v7568, 0.0
    %7571 = vadd.xlane.f32.xlu0 %v7570
    %v7572 = vpop.xlane.xlu0 %7571
    %v7573 = vsel %vm145, %v7569, 0.0
    %7574 = vadd.xlane.f32.xlu0 %v7573
    %v7575 = vpop.xlane.xlu0 %7574
    %v7576 = vmul.f32 %v7572, %v152
    %v7577 = vmul.f32 %v7575, %v152
    %v7578 = vadd.f32 %v7576, 1e-05
    %v7579 = vadd.f32 %v7577, 1e-05
    %v7580 = vrsqrt.pop %v7578
    %v7581 = vrsqrt.pop %v7579
    %v7582 = vmul.f32 %v7566, %v7580
    %v7583 = vmul.f32 %v7567, %v7581
    %v7585 = vlaneseq
    %v7586 = vshrl.u32 %v7585, 7
    %v7587 = vsub.s32 0, %v7586
    %v7588 = vrot.slane %v7556, %v7587
    %v7590 = vmul.f32 %v7582, %v7588
    %v7591 = vmul.f32 %v7583, %v7588
    %v7593 = vlaneseq
    %v7594 = vshrl.u32 %v7593, 7
    %v7595 = vsub.s32 0, %v7594
    %v7596 = vrot.slane %v7557, %v7595
    %v7598 = vadd.f32 %v7590, %v7596
    %v7599 = vadd.f32 %v7591, %v7596
    %v7600 = vld [vmem:[#allocation10] sm:$0xff]
    %v7601 = vld [vmem:[#allocation10 + $0x8] sm:$0xff]
    %v7602 = vld [vmem:[#allocation10 + $0x10] sm:$0xff]
    %v7603 = vld [vmem:[#allocation10 + $0x18] sm:$0xff]
    %v7604 = vld [vmem:[%s13] sm:$0x1]
    %v7606 = vlaneseq
    %v7607 = vshrl.u32 %v7606, 7
    %v7608 = vsub.s32 0, %v7607
    %v7609 = vrot.slane %v7604, %v7608
    %v7612 = vsel %vm145, %v7598, 0
    %v7615 = vsel %vm145, %v7599, 0
    %7617 = vmatprep.subr.mxu0 0.0
    %7618 = vmatpush1.msra.mxu0 %v7600
    %7619 = vmatprep.subr.mxu0 0.0
    %7620 = vmatpush1.msra.mxu0 %v7601
    %7621 = vmatprep.subr.mxu0 0.0
    %7622 = vmatpush1.msra.mxu0 %v7602
    %7623 = vmatprep.subr.mxu0 0.0
    %7624 = vmatpush1.msra.mxu0 %v7603
    %7625 = vmatprep.subr.mxu0 0.0
    %7626 = vmatpush1.msra.mxu0 0.0
    %7627 = vmatprep.subr.mxu0 0.0
    %7628 = vmatpush1.msra.mxu0 0.0
    %7629 = vmatprep.subr.mxu0 0.0
    %7630 = vmatpush1.msra.mxu0 0.0
    %7631 = vmatprep.subr.mxu0 0.0
    %7632 = vmatpush1.msra.mxu0 0.0
    %7633 = vmatprep.subr.mxu0 0.0
    %7634 = vmatpush1.msra.mxu0 0.0
    %7635 = vmatprep.subr.mxu0 0.0
    %7636 = vmatpush1.msra.mxu0 0.0
    %7637 = vmatprep.subr.mxu0 0.0
    %7638 = vmatpush1.msra.mxu0 0.0
    %7639 = vmatprep.subr.mxu0 0.0
    %7640 = vmatpush1.msra.mxu0 0.0
    %7641 = vmatprep.subr.mxu0 0.0
    %7642 = vmatpush1.msra.mxu0 0.0
    %7643 = vmatprep.subr.mxu0 0.0
    %7644 = vmatpush1.msra.mxu0 0.0
    %7645 = vmatprep.subr.mxu0 0.0
    %7646 = vmatpush1.msra.mxu0 0.0
    %7647 = vmatprep.subr.mxu0 0.0
    %7648 = vmatpush1.msra.mxu0 0.0
    %7649 = vmatprep.subr.mxu0 0.0
    %7650 = vmatpush1.msra.mxu0 0.0
    %7651 = vmatprep.subr.mxu0 0.0
    %7652 = vmatpush1.msra.mxu0 0.0
    %7653 = vmatprep.subr.mxu0 0.0
    %7654 = vmatpush1.msra.mxu0 0.0
    %7655 = vmatprep.subr.mxu0 0.0
    %7656 = vmatpush1.msra.mxu0 0.0
    %7657 = vmatprep.subr.mxu0 0.0
    %7658 = vmatpush1.msra.mxu0 0.0
    %7659 = vmatprep.subr.mxu0 0.0
    %7660 = vmatpush1.msra.mxu0 0.0
    %7661 = vmatprep.subr.mxu0 0.0
    %7662 = vmatpush1.msra.mxu0 0.0
    %7663 = vmatprep.subr.mxu0 0.0
    %7664 = vmatpush1.msra.mxu0 0.0
    %7665 = vmatprep.subr.mxu0 0.0
    %7666 = vmatpush1.msra.mxu0 0.0
    %7667 = vmatprep.subr.mxu0 0.0
    %7668 = vmatpush1.msra.mxu0 0.0
    %7669 = vmatprep.subr.mxu0 0.0
    %7670 = vmatpush1.msra.mxu0 0.0
    %7671 = vmatprep.subr.mxu0 0.0
    %7672 = vmatpush1.msra.mxu0 0.0
    %7673 = vmatprep.subr.mxu0 0.0
    %7674 = vmatpush1.msra.mxu0 0.0
    %7675 = vmatprep.subr.mxu0 0.0
    %7676 = vmatpush1.msra.mxu0 0.0
    %7677 = vmatprep.subr.mxu0 0.0
    %7678 = vmatpush1.msra.mxu0 0.0
    %7679 = vmatprep.subr.mxu0 0.0
    %7680 = vmatpush1.msra.mxu0 0.0
    %7681 = vmatprep.mubr.f32.mxu0 0.0
    %7682 = vmatmul.mubr.f32.gmra.mrb[0].mxu0 %v7612
    %v7683 = vpop.f32.mrb[0].mxu0
    %v7684 = vadd.f32 %v7609, %v7683
    %v7685 = vpop.f32.mrb[0].mxu0
    %7686 = vmatprep.mubr.f32.mxu0 0.0
    %7687 = vmatmul.mubr.f32.gmra.mrb[0].mxu0 %v7615
    %v7688 = vpop.f32.mrb[0].mxu0
    %v7689 = vadd.f32 %v7609, %v7688
    %v7690 = vpop.f32.mrb[0].mxu0
    %7691 = vdwg.mxu0
    %v7692 = vmax.f32 %v7684, 0.0
    %v7693 = vmax.f32 %v7689, 0.0
    %v7694 = vld [vmem:[%s14] sm:$0xff]
    %v7695 = vld [vmem:[%s14 + $0x8] sm:$0xff]
    %v7696 = vld [vmem:[%s14 + $0x10] sm:$0xff]
    %v7697 = vld [vmem:[%s14 + $0x18] sm:$0xff]
    %v7698 = vld [vmem:[%s14 + $0x20] sm:$0xff]
    %v7699 = vld [vmem:[%s14 + $0x28] sm:$0xff]
    %v7700 = vld [vmem:[%s14 + $0x30] sm:$0xff]
    %v7701 = vld [vmem:[%s14 + $0x38] sm:$0xff]
    %v7702 = vld [vmem:[%s15] sm:$0x1]
    %v7704 = vlaneseq
    %v7705 = vshrl.u32 %v7704, 7
    %v7706 = vsub.s32 0, %v7705
    %v7707 = vrot.slane %v7702, %v7706
    %vm7709 = vcmask 523264
    %v7711 = vsel %vm7709, %v7692, 0
    %v7714 = vsel %vm7709, %v7693, 0
    %7716 = vmatprep.subr.mxu0 0.0
    %7717 = vmatpush1.msra.mxu0 %v7694
    %7718 = vmatprep.subr.mxu0 0.0
    %7719 = vmatpush1.msra.mxu0 %v7695
    %7720 = vmatprep.subr.mxu0 0.0
    %7721 = vmatpush1.msra.mxu0 %v7696
    %7722 = vmatprep.subr.mxu0 0.0
    %7723 = vmatpush1.msra.mxu0 %v7697
    %7724 = vmatprep.subr.mxu0 0.0
    %7725 = vmatpush1.msra.mxu0 %v7698
    %7726 = vmatprep.subr.mxu0 0.0
    %7727 = vmatpush1.msra.mxu0 %v7699
    %7728 = vmatprep.subr.mxu0 0.0
    %7729 = vmatpush1.msra.mxu0 %v7700
    %7730 = vmatprep.subr.mxu0 0.0
    %7731 = vmatpush1.msra.mxu0 %v7701
    %7732 = vmatprep.subr.mxu0 0.0
    %7733 = vmatpush1.msra.mxu0 0.0
    %7734 = vmatprep.subr.mxu0 0.0
    %7735 = vmatpush1.msra.mxu0 0.0
    %7736 = vmatprep.subr.mxu0 0.0
    %7737 = vmatpush1.msra.mxu0 0.0
    %7738 = vmatprep.subr.mxu0 0.0
    %7739 = vmatpush1.msra.mxu0 0.0
    %7740 = vmatprep.subr.mxu0 0.0
    %7741 = vmatpush1.msra.mxu0 0.0
    %7742 = vmatprep.subr.mxu0 0.0
    %7743 = vmatpush1.msra.mxu0 0.0
    %7744 = vmatprep.subr.mxu0 0.0
    %7745 = vmatpush1.msra.mxu0 0.0
    %7746 = vmatprep.subr.mxu0 0.0
    %7747 = vmatpush1.msra.mxu0 0.0
    %7748 = vmatprep.subr.mxu0 0.0
    %7749 = vmatpush1.msra.mxu0 0.0
    %7750 = vmatprep.subr.mxu0 0.0
    %7751 = vmatpush1.msra.mxu0 0.0
    %7752 = vmatprep.subr.mxu0 0.0
    %7753 = vmatpush1.msra.mxu0 0.0
    %7754 = vmatprep.subr.mxu0 0.0
    %7755 = vmatpush1.msra.mxu0 0.0
    %7756 = vmatprep.subr.mxu0 0.0
    %7757 = vmatpush1.msra.mxu0 0.0
    %7758 = vmatprep.subr.mxu0 0.0
    %7759 = vmatpush1.msra.mxu0 0.0
    %7760 = vmatprep.subr.mxu0 0.0
    %7761 = vmatpush1.msra.mxu0 0.0
    %7762 = vmatprep.subr.mxu0 0.0
    %7763 = vmatpush1.msra.mxu0 0.0
    %7764 = vmatprep.subr.mxu0 0.0
    %7765 = vmatpush1.msra.mxu0 0.0
    %7766 = vmatprep.subr.mxu0 0.0
    %7767 = vmatpush1.msra.mxu0 0.0
    %7768 = vmatprep.subr.mxu0 0.0
    %7769 = vmatpush1.msra.mxu0 0.0
    %7770 = vmatprep.subr.mxu0 0.0
    %7771 = vmatpush1.msra.mxu0 0.0
    %7772 = vmatprep.subr.mxu0 0.0
    %7773 = vmatpush1.msra.mxu0 0.0
    %7774 = vmatprep.subr.mxu0 0.0
    %7775 = vmatpush1.msra.mxu0 0.0
    %7776 = vmatprep.subr.mxu0 0.0
    %7777 = vmatpush1.msra.mxu0 0.0
    %7778 = vmatprep.subr.mxu0 0.0
    %7779 = vmatpush1.msra.mxu0 0.0
    %7780 = vmatprep.mubr.f32.mxu0 0.0
    %7781 = vmatmul.mubr.f32.gmra.mrb[0].mxu0 %v7711
    %v7782 = vpop.f32.mrb[0].mxu0
    %v7783 = vadd.f32 %v7707, %v7782
    %v7784 = vpop.f32.mrb[0].mxu0
    %7785 = vmatprep.mubr.f32.mxu0 0.0
    %7786 = vmatmul.mubr.f32.gmra.mrb[0].mxu0 %v7714
    %v7787 = vpop.f32.mrb[0].mxu0
    %v7788 = vadd.f32 %v7707, %v7787
    %v7789 = vpop.f32.mrb[0].mxu0
    %7790 = vdwg.mxu0
    %v7791 = vadd.f32 %v7554, %v7783
    %v7792 = vadd.f32 %v7555, %v7788
    %7793 = vst.msk [vmem:[#allocation11] sm:$0xff] %vm145, %v7791
    %7794 = vst.msk [vmem:[#allocation11 + $0x8] sm:$0xff] %vm145, %v7792
    // Predicated region
    $region86: #{tpu_custom_call.1} parent=1 // pred_check
      _
    $region87: #{tpu_custom_call.1} parent=1 // pred_check_branch
      %7796 = sbr.rel (0) target = $region89
    $region88: #{tpu_custom_call.1} parent=1 // pred_region
      %s7798 = ssub.s32 256, 256
      %7799 = vsyncadd [#allocation4], %s7798
      %s7800 = sshll.u32 [#allocation11], 4
      %s7801 = int_to_ptr.vmem [resolvable:$true] %s7800
      %7806 = dma.vmem_to_hbm [thread:$0]  %s7801, 256, %s16, [#allocation4], 128, 128, 8
    $region89: #{tpu_custom_call.1} parent=1 // pred_fallthru
      _
    // Predicated region
    $region90: #{tpu_custom_call.1} parent=1 // pred_check
      _
    $region91: #{tpu_custom_call.1} parent=1 // pred_check_branch
      %7808 = sbr.rel (0) target = $region93
    $region92: #{tpu_custom_call.1} parent=1 // pred_region
      %s7810 = ssub.s32 256, 256
      %7811 = vsyncadd [#allocation13], %s7810
      %s7812 = sshll.u32 [#allocation12], 4
      %s7813 = int_to_ptr.vmem [resolvable:$true] %s7812
      %7818 = dma.vmem_to_hbm [thread:$0]  %s7813, 256, %s17, [#allocation13], 128, 128, 8
    $region93: #{tpu_custom_call.1} parent=1 // pred_fallthru
      _
    // Predicated region
    $region94: #{tpu_custom_call.1} parent=1 // pred_check
      _
    $region95: #{tpu_custom_call.1} parent=1 // pred_check_branch
      %7820 = sbr.rel (0) target = $region97
    $region96: #{tpu_custom_call.1} parent=1 // pred_region
      %7821 = dma.done [#allocation4], 256
    $region97: #{tpu_custom_call.1} parent=1 // pred_fallthru
      _
    // Predicated region
    $region98: #{tpu_custom_call.1} parent=1 // pred_check
      _
    $region99: #{tpu_custom_call.1} parent=1 // pred_check_branch
      %7823 = sbr.rel (0) target = $region101
    $region100: #{tpu_custom_call.1} parent=1 // pred_region
      %7824 = dma.done [#allocation13], 256
    $region101: #{tpu_custom_call.1} parent=1 // pred_fallthru
      _
    %7825 = vsyncpa [#allocation3], 1
    %7826 = vsyncpa [#allocation6], 1
    %7827 = vsyncpa [#allocation9], 1
    %7828 = vsyncpa [#allocation4], 1
    %7829 = vsyncpa [#allocation13], 1

</llo_original>
